<compile_context>
chip_gen: v7x
topology: tpu7x:2x2x1
jax: 0.10.0
libtpu: 0.0.40
codegen_flags: <defaults>
</compile_context>

<pallas_src>
import functools

import jax
import jax.numpy as jnp
from jax.experimental import pallas as pl
from jax.experimental.pallas import tpu as pltpu


# (kernel_size, stride) of the module's three conv layers.
_CONV_CFG = ((5, 3), (4, 2), (3, 1))


# ---------------------------------------------------------------------------
# Pallas kernels
# ---------------------------------------------------------------------------
def _matmul_bias_relu_kernel(x_ref, w_ref, b_ref, o_ref):
    y = jnp.dot(x_ref[...], w_ref[...], preferred_element_type=jnp.float32)
    o_ref[...] = jnp.maximum(y + b_ref[...], 0.0).astype(o_ref.dtype)


def matmul_bias_relu(x, w, b_row):
    """relu(x @ w + b).  x:(M,K) f32, w:(K,N) f32, b_row:(1,N) f32."""
    M, K = x.shape
    K2, N = w.shape
    assert K == K2
    return pl.pallas_call(
        _matmul_bias_relu_kernel,
        out_shape=jax.ShapeDtypeStruct((M, N), jnp.float32),
        grid=(1,),
        in_specs=[
            pl.BlockSpec((M, K), lambda i: (0, 0)),
            pl.BlockSpec((K, N), lambda i: (0, 0)),
            pl.BlockSpec((1, N), lambda i: (0, 0)),
        ],
        out_specs=pl.BlockSpec((M, N), lambda i: (0, 0)),
    )(x, w, b_row)


def _fused_head_kernel(feat_ref, w1_ref, b1_ref, w2_ref, b2_ref, q_ref, *, n_actions):
    # FC1 of both heads in one bf16 MXU matmul: columns [0:512]=A, [512:1024]=V.
    h = jnp.dot(feat_ref[...].astype(jnp.bfloat16), w1_ref[...],
                preferred_element_type=jnp.float32)
    h = jnp.maximum(h + b1_ref[...], 0.0)
    # Second linears of both heads as ONE block-diagonal matmul:
    #   y[:, :n] = hA @ wA2 + bA2   (advantages)
    #   y[:,  n] = hV @ wV2 + bV2   (value)
    y = jnp.dot(h, w2_ref[...], preferred_element_type=jnp.float32) + b2_ref[...]
    A = y[:, :n_actions]
    V = y[:, n_actions:]
    mean_A = jnp.mean(A, axis=-1, keepdims=True)
    # broadcasting of V (B,1) and mean_A (B,1) reproduces .repeat(1, n_actions)
    q_ref[...] = (A + V - mean_A).astype(q_ref.dtype)


def dueling_heads(feat, w1, b1, w2, b2, n_actions):
    B, K = feat.shape
    N1 = w1.shape[1]
    H2, N2 = w2.shape
    kernel = functools.partial(_fused_head_kernel, n_actions=n_actions)
    return pl.pallas_call(
        kernel,
        out_shape=jax.ShapeDtypeStruct((B, n_actions), jnp.float32),
        grid=(1,),
        in_specs=[
            pl.BlockSpec((B, K), lambda i: (0, 0)),
            pl.BlockSpec((K, N1), lambda i: (0, 0)),
            pl.BlockSpec((1, N1), lambda i: (0, 0)),
            pl.BlockSpec((H2, N2), lambda i: (0, 0)),
            pl.BlockSpec((1, N2), lambda i: (0, 0)),
        ],
        out_specs=pl.BlockSpec((B, n_actions), lambda i: (0, 0)),
        compiler_params=pltpu.CompilerParams(vmem_limit_bytes=32 * 1024 * 1024),
    )(feat, w1, b1, w2, b2)


# ---------------------------------------------------------------------------
# Conv glue (NHWC throughout, patches feed the Pallas matmul kernel)
# ---------------------------------------------------------------------------
def conv2d_relu_nhwc(x, w_km, b_row, k, stride):
    """x:(B,H,W,C) NHWC, w_km:(k*k*C, OC) with rows ordered (kh,kw,c), b_row:(1,OC)."""
    B, H, W, C = x.shape
    oh = (H - k) // stride + 1
    ow = (W - k) // stride + 1
    # TODO(synk): patch extraction stays in XLA (strided static slices); a strided
    # im2col window is not expressible with a BlockSpec alone.
    slabs = []
    for dh in range(k):
        for dw in range(k):
            slabs.append(jax.lax.slice(
                x, (0, dh, dw, 0),
                (B, dh + (oh - 1) * stride + 1, dw + (ow - 1) * stride + 1, C),
                (1, stride, stride, 1)))
    patches = jnp.stack(slabs, axis=3).reshape(B * oh * ow, k * k * C)
    y = matmul_bias_relu(patches, w_km, b_row)          # (B*oh*ow, OC) on the MXU
    return y.reshape(B, oh, ow, w_km.shape[1])          # stays NHWC, no transpose


# ---------------------------------------------------------------------------
# Parameter init (PyTorch layouts) and one-time kernel-layout preparation
# ---------------------------------------------------------------------------
def _linear_init(key, fan_in, fan_out):
    kw_, kb_ = jax.random.split(key)
    bound = 1.0 / float(fan_in) ** 0.5
    w = jax.random.uniform(kw_, (fan_out, fan_in), jnp.float32, -bound, bound)
    b = jax.random.uniform(kb_, (fan_out,), jnp.float32, -bound, bound)
    return w, b


def _conv_init(key, out_c, in_c, k):
    kw_, kb_ = jax.random.split(key)
    fan_in = in_c * k * k
    bound = 1.0 / float(fan_in) ** 0.5
    w = jax.random.uniform(kw_, (out_c, in_c, k, k), jnp.float32, -bound, bound)
    b = jax.random.uniform(kb_, (out_c,), jnp.float32, -bound, bound)
    return w, b


def init_params(key, state_dim, n_actions):
    keys = jax.random.split(key, 7)
    return {
        "conv1": _conv_init(keys[0], 16, state_dim, 5),
        "conv2": _conv_init(keys[1], 32, 16, 4),
        "conv3": _conv_init(keys[2], 64, 32, 3),
        "V1": _linear_init(keys[3], 64 * 49, 512),
        "V2": _linear_init(keys[4], 512, 1),
        "A1": _linear_init(keys[5], 64 * 49, 512),
        "A2": _linear_init(keys[6], 512, n_actions),
    }


def prepare_params(params, n_actions):
    """One-time conversion to kernel-friendly layouts (no per-forward .T / casts)."""
    prep = {}
    for name in ("conv1", "conv2", "conv3"):
        w, b = params[name]                               # (OC, IC, k, k) PyTorch layout
        oc, ic, kh, kw = w.shape
        w_km = jnp.transpose(w, (2, 3, 1, 0)).reshape(kh * kw * ic, oc)  # rows = (kh,kw,c)
        prep[name] = (w_km, b.reshape(1, oc))

    wA1, bA1 = params["A1"]                               # (512, 3136), (512,)
    wV1, bV1 = params["V1"]
    wA2, bA2 = params["A2"]                               # (n, 512), (n,)
    wV2, bV2 = params["V2"]                               # (1, 512), (1,)

    # Flatten-order fix: PyTorch flattens NCHW (index c*49 + hw); our feat is
    # flattened NHWC (index hw*64 + c).  Permute FC1 rows once to match exactly.
    C, HW = 64, 49
    perm = (jnp.arange(C)[None, :] * HW + jnp.arange(HW)[:, None]).reshape(-1)
    w1 = jnp.concatenate([wA1.T, wV1.T], axis=1)[perm].astype(jnp.bfloat16)  # (3136, 1024)
    b1 = jnp.concatenate([bA1, bV1]).reshape(1, -1)                          # (1, 1024) f32

    # Fold the (512,1) V2 matmul into the A2 matmul: block-diagonal (1024, n+1).
    Hh = wA2.shape[1]
    n = n_actions
    w2 = jnp.zeros((2 * Hh, n + 1), jnp.float32)
    w2 = w2.at[:Hh, :n].set(wA2.T)
    w2 = w2.at[Hh:, n].set(wV2.reshape(-1))
    b2 = jnp.concatenate([bA2, bV2]).reshape(1, n + 1)
    prep["head"] = (w1, b1, w2, b2)
    return prep


# ---------------------------------------------------------------------------
# Forward pass (Pallas) and pure-JAX reference
# ---------------------------------------------------------------------------
def dueling_q_forward(prep, x, *, n_actions):
    """x: (B, 4, 64, 64) NCHW float32 -> qvalues (B, n_actions) float32."""
    h = jnp.transpose(x, (0, 2, 3, 1))                    # NCHW -> NHWC, once
    for name, (k, s) in zip(("conv1", "conv2", "conv3"), _CONV_CFG):
        h = conv2d_relu_nhwc(h, *prep[name], k=k, stride=s)
    feat = h.reshape(x.shape[0], -1)                      # NHWC flatten (W1 rows permuted)
    return dueling_heads(feat, *prep["head"], n_actions=n_actions)


def reference_forward(params, x, n_actions):
    """Plain-JAX reference mirroring the PyTorch module (and the bf16 FC1 weights)."""
    hp = jax.lax.Precision.HIGHEST
    h = x
    for name, (_, s) in zip(("conv1", "conv2", "conv3"), _CONV_CFG):
        w, b = params[name]
        h = jax.lax.conv_general_dilated(h, w, (s, s), "VALID",
                                         dimension_numbers=("NCHW", "OIHW", "NCHW"),
                                         precision=hp)
        h = jax.nn.relu(h + b[None, :, None, None])
    feat = h.reshape(x.shape[0], -1)                      # PyTorch NCHW Flatten order
    wA1, bA1 = params["A1"]; wV1, bV1 = params["V1"]
    wA2, bA2 = params["A2"]; wV2, bV2 = params["V2"]
    f16 = feat.astype(jnp.bfloat16)
    hA = jax.nn.relu(jnp.dot(f16, wA1.T.astype(jnp.bfloat16),
                             preferred_element_type=jnp.float32) + bA1)
    hV = jax.nn.relu(jnp.dot(f16, wV1.T.astype(jnp.bfloat16),
                             preferred_element_type=jnp.float32) + bV1)
    A = jnp.dot(hA, wA2.T, precision=hp) + bA2
    V = jnp.dot(hV, wV2.T, precision=hp) + bV2
    return A + V - jnp.mean(A, axis=-1, keepdims=True)


if __name__ == "__main__":
    key = jax.random.PRNGKey(0)
    k_param, k_x = jax.random.split(key)

    # The module hardcodes Linear(64*49, ...) => conv output must be 7x7, which
    # requires 64x64 inputs (64 -> 20 -> 9 -> 7).
    state_shape = (4, 64, 64)
    n_actions = 6
    batch = 2

    params = init_params(k_param, state_shape[0], n_actions)
    prep = prepare_params(params, n_actions)
    x = jax.random.normal(k_x, (batch,) + state_shape, dtype=jnp.float32)

    fwd = jax.jit(functools.partial(dueling_q_forward, n_actions=n_actions))
    q = fwd(prep, x)
    jax.block_until_ready(q)

    assert q.shape == (batch, n_actions) and q.dtype == jnp.float32
    q_ref = reference_forward(params, x, n_actions)
    assert jnp.allclose(q, q_ref, rtol=1e-2, atol=2e-3), (q, q_ref)
    print("KERNEL_OK")
</pallas_src>

<mosaic_0001>
module attributes {stable_mosaic.version = 11 : i64} {
  func.func @_matmul_bias_relu_kernel(%arg0: i32, %arg1: memref<800x100xf32, #tpu.memory_space<vmem>>, %arg2: memref<100x16xf32, #tpu.memory_space<vmem>>, %arg3: memref<1x16xf32, #tpu.memory_space<vmem>>, %arg4: memref<800x16xf32, #tpu.memory_space<vmem>>) attributes {dimension_semantics = [#tpu.dimension_semantics<arbitrary>], iteration_bounds = array<i64: 1>, scalar_prefetch = 0 : i64, scratch_operands = 0 : i64, tpu.core_type = #tpu.core_type<tc>, window_params = [{pipeline_mode = #tpu.pipeline_mode<synchronous>, transform_indices = @transform_0, window_bounds = array<i64: 800, 100>}, {pipeline_mode = #tpu.pipeline_mode<synchronous>, transform_indices = @transform_1, window_bounds = array<i64: 100, 16>}, {pipeline_mode = #tpu.pipeline_mode<synchronous>, transform_indices = @transform_2, window_bounds = array<i64: 1, 16>}, {pipeline_mode = #tpu.pipeline_mode<synchronous>, transform_indices = @transform_3, window_bounds = array<i64: 800, 16>}]} {
    %c0 = arith.constant 0 : index
    %c0_0 = arith.constant 0 : index
    %0 = vector.load %arg1[%c0, %c0_0] : memref<800x100xf32, #tpu.memory_space<vmem>>, vector<800x100xf32>
    %c0_1 = arith.constant 0 : index
    %c0_2 = arith.constant 0 : index
    %1 = vector.load %arg2[%c0_1, %c0_2] : memref<100x16xf32, #tpu.memory_space<vmem>>, vector<100x16xf32>
    %cst = arith.constant dense<0.000000e+00> : vector<800x16xf32>
    %2 = tpu.matmul %0, %1, %cst {dimension_numbers = #tpu.dot_dimension_numbers<[1], [0], [0], [1], [0, 0, 1, 1], [], []>} : vector<800x100xf32>, vector<100x16xf32>, vector<800x16xf32> -> vector<800x16xf32>
    %c0_3 = arith.constant 0 : index
    %c0_4 = arith.constant 0 : index
    %3 = vector.load %arg3[%c0_3, %c0_4] : memref<1x16xf32, #tpu.memory_space<vmem>>, vector<1x16xf32>
    %4 = vector.broadcast %3 : vector<1x16xf32> to vector<800x16xf32>
    %5 = arith.addf %2, %4 : vector<800x16xf32>
    %cst_5 = arith.constant 0.000000e+00 : f32
    %6 = vector.broadcast %cst_5 : f32 to vector<800x16xf32>
    %7 = arith.maximumf %5, %6 : vector<800x16xf32>
    %c0_6 = arith.constant 0 : index
    %c0_7 = arith.constant 0 : index
    %8 = vector.load %arg4[%c0_6, %c0_7] : memref<800x16xf32, #tpu.memory_space<vmem>>, vector<800x16xf32>
    tpu.vector_store %arg4[%c0_6, %c0_7], %7 {strides = array<i32>} : memref<800x16xf32, #tpu.memory_space<vmem>>, vector<800x16xf32>,
    return
  }
  func.func @transform_0(%arg0: i32) -> (i32, i32) {
    %c0_i32 = arith.constant 0 : i32
    %c0_i32_0 = arith.constant 0 : i32
    %c0_i32_1 = arith.constant 0 : i32
    return %c0_i32, %c0_i32_0 : i32, i32
  }
  func.func @transform_1(%arg0: i32) -> (i32, i32) {
    %c0_i32 = arith.constant 0 : i32
    %c0_i32_0 = arith.constant 0 : i32
    %c0_i32_1 = arith.constant 0 : i32
    return %c0_i32, %c0_i32_0 : i32, i32
  }
  func.func @transform_2(%arg0: i32) -> (i32, i32) {
    %c0_i32 = arith.constant 0 : i32
    %c0_i32_0 = arith.constant 0 : i32
    %c0_i32_1 = arith.constant 0 : i32
    return %c0_i32, %c0_i32_0 : i32, i32
  }
  func.func @transform_3(%arg0: i32) -> (i32, i32) {
    %c0_i32 = arith.constant 0 : i32
    %c0_i32_0 = arith.constant 0 : i32
    %c0_i32_1 = arith.constant 0 : i32
    return %c0_i32, %c0_i32_0 : i32, i32
  }
}

module attributes {stable_mosaic.version = 11 : i64} {
  func.func @_matmul_bias_relu_kernel(%arg0: i32, %arg1: memref<162x256xf32, #tpu.memory_space<vmem>>, %arg2: memref<256x32xf32, #tpu.memory_space<vmem>>, %arg3: memref<1x32xf32, #tpu.memory_space<vmem>>, %arg4: memref<162x32xf32, #tpu.memory_space<vmem>>) attributes {dimension_semantics = [#tpu.dimension_semantics<arbitrary>], iteration_bounds = array<i64: 1>, scalar_prefetch = 0 : i64, scratch_operands = 0 : i64, tpu.core_type = #tpu.core_type<tc>, window_params = [{pipeline_mode = #tpu.pipeline_mode<synchronous>, transform_indices = @transform_0, window_bounds = array<i64: 162, 256>}, {pipeline_mode = #tpu.pipeline_mode<synchronous>, transform_indices = @transform_1, window_bounds = array<i64: 256, 32>}, {pipeline_mode = #tpu.pipeline_mode<synchronous>, transform_indices = @transform_2, window_bounds = array<i64: 1, 32>}, {pipeline_mode = #tpu.pipeline_mode<synchronous>, transform_indices = @transform_3, window_bounds = array<i64: 162, 32>}]} {
    %c0 = arith.constant 0 : index
    %c0_0 = arith.constant 0 : index
    %0 = vector.load %arg1[%c0, %c0_0] : memref<162x256xf32, #tpu.memory_space<vmem>>, vector<162x256xf32>
    %c0_1 = arith.constant 0 : index
    %c0_2 = arith.constant 0 : index
    %1 = vector.load %arg2[%c0_1, %c0_2] : memref<256x32xf32, #tpu.memory_space<vmem>>, vector<256x32xf32>
    %cst = arith.constant dense<0.000000e+00> : vector<162x32xf32>
    %2 = tpu.matmul %0, %1, %cst {dimension_numbers = #tpu.dot_dimension_numbers<[1], [0], [0], [1], [0, 0, 1, 1], [], []>} : vector<162x256xf32>, vector<256x32xf32>, vector<162x32xf32> -> vector<162x32xf32>
    %c0_3 = arith.constant 0 : index
    %c0_4 = arith.constant 0 : index
    %3 = vector.load %arg3[%c0_3, %c0_4] : memref<1x32xf32, #tpu.memory_space<vmem>>, vector<1x32xf32>
    %4 = vector.broadcast %3 : vector<1x32xf32> to vector<162x32xf32>
    %5 = arith.addf %2, %4 : vector<162x32xf32>
    %cst_5 = arith.constant 0.000000e+00 : f32
    %6 = vector.broadcast %cst_5 : f32 to vector<162x32xf32>
    %7 = arith.maximumf %5, %6 : vector<162x32xf32>
    %c0_6 = arith.constant 0 : index
    %c0_7 = arith.constant 0 : index
    %8 = vector.load %arg4[%c0_6, %c0_7] : memref<162x32xf32, #tpu.memory_space<vmem>>, vector<162x32xf32>
    tpu.vector_store %arg4[%c0_6, %c0_7], %7 {strides = array<i32>} : memref<162x32xf32, #tpu.memory_space<vmem>>, vector<162x32xf32>,
    return
  }
  func.func @transform_0(%arg0: i32) -> (i32, i32) {
    %c0_i32 = arith.constant 0 : i32
    %c0_i32_0 = arith.constant 0 : i32
    %c0_i32_1 = arith.constant 0 : i32
    return %c0_i32, %c0_i32_0 : i32, i32
  }
  func.func @transform_1(%arg0: i32) -> (i32, i32) {
    %c0_i32 = arith.constant 0 : i32
    %c0_i32_0 = arith.constant 0 : i32
    %c0_i32_1 = arith.constant 0 : i32
    return %c0_i32, %c0_i32_0 : i32, i32
  }
  func.func @transform_2(%arg0: i32) -> (i32, i32) {
    %c0_i32 = arith.constant 0 : i32
    %c0_i32_0 = arith.constant 0 : i32
    %c0_i32_1 = arith.constant 0 : i32
    return %c0_i32, %c0_i32_0 : i32, i32
  }
  func.func @transform_3(%arg0: i32) -> (i32, i32) {
    %c0_i32 = arith.constant 0 : i32
    %c0_i32_0 = arith.constant 0 : i32
    %c0_i32_1 = arith.constant 0 : i32
    return %c0_i32, %c0_i32_0 : i32, i32
  }
}

module attributes {stable_mosaic.version = 11 : i64} {
  func.func @_matmul_bias_relu_kernel(%arg0: i32, %arg1: memref<98x288xf32, #tpu.memory_space<vmem>>, %arg2: memref<288x64xf32, #tpu.memory_space<vmem>>, %arg3: memref<1x64xf32, #tpu.memory_space<vmem>>, %arg4: memref<98x64xf32, #tpu.memory_space<vmem>>) attributes {dimension_semantics = [#tpu.dimension_semantics<arbitrary>], iteration_bounds = array<i64: 1>, scalar_prefetch = 0 : i64, scratch_operands = 0 : i64, tpu.core_type = #tpu.core_type<tc>, window_params = [{pipeline_mode = #tpu.pipeline_mode<synchronous>, transform_indices = @transform_0, window_bounds = array<i64: 98, 288>}, {pipeline_mode = #tpu.pipeline_mode<synchronous>, transform_indices = @transform_1, window_bounds = array<i64: 288, 64>}, {pipeline_mode = #tpu.pipeline_mode<synchronous>, transform_indices = @transform_2, window_bounds = array<i64: 1, 64>}, {pipeline_mode = #tpu.pipeline_mode<synchronous>, transform_indices = @transform_3, window_bounds = array<i64: 98, 64>}]} {
    %c0 = arith.constant 0 : index
    %c0_0 = arith.constant 0 : index
    %0 = vector.load %arg1[%c0, %c0_0] : memref<98x288xf32, #tpu.memory_space<vmem>>, vector<98x288xf32>
    %c0_1 = arith.constant 0 : index
    %c0_2 = arith.constant 0 : index
    %1 = vector.load %arg2[%c0_1, %c0_2] : memref<288x64xf32, #tpu.memory_space<vmem>>, vector<288x64xf32>
    %cst = arith.constant dense<0.000000e+00> : vector<98x64xf32>
    %2 = tpu.matmul %0, %1, %cst {dimension_numbers = #tpu.dot_dimension_numbers<[1], [0], [0], [1], [0, 0, 1, 1], [], []>} : vector<98x288xf32>, vector<288x64xf32>, vector<98x64xf32> -> vector<98x64xf32>
    %c0_3 = arith.constant 0 : index
    %c0_4 = arith.constant 0 : index
    %3 = vector.load %arg3[%c0_3, %c0_4] : memref<1x64xf32, #tpu.memory_space<vmem>>, vector<1x64xf32>
    %4 = vector.broadcast %3 : vector<1x64xf32> to vector<98x64xf32>
    %5 = arith.addf %2, %4 : vector<98x64xf32>
    %cst_5 = arith.constant 0.000000e+00 : f32
    %6 = vector.broadcast %cst_5 : f32 to vector<98x64xf32>
    %7 = arith.maximumf %5, %6 : vector<98x64xf32>
    %c0_6 = arith.constant 0 : index
    %c0_7 = arith.constant 0 : index
    %8 = vector.load %arg4[%c0_6, %c0_7] : memref<98x64xf32, #tpu.memory_space<vmem>>, vector<98x64xf32>
    tpu.vector_store %arg4[%c0_6, %c0_7], %7 {strides = array<i32>} : memref<98x64xf32, #tpu.memory_space<vmem>>, vector<98x64xf32>,
    return
  }
  func.func @transform_0(%arg0: i32) -> (i32, i32) {
    %c0_i32 = arith.constant 0 : i32
    %c0_i32_0 = arith.constant 0 : i32
    %c0_i32_1 = arith.constant 0 : i32
    return %c0_i32, %c0_i32_0 : i32, i32
  }
  func.func @transform_1(%arg0: i32) -> (i32, i32) {
    %c0_i32 = arith.constant 0 : i32
    %c0_i32_0 = arith.constant 0 : i32
    %c0_i32_1 = arith.constant 0 : i32
    return %c0_i32, %c0_i32_0 : i32, i32
  }
  func.func @transform_2(%arg0: i32) -> (i32, i32) {
    %c0_i32 = arith.constant 0 : i32
    %c0_i32_0 = arith.constant 0 : i32
    %c0_i32_1 = arith.constant 0 : i32
    return %c0_i32, %c0_i32_0 : i32, i32
  }
  func.func @transform_3(%arg0: i32) -> (i32, i32) {
    %c0_i32 = arith.constant 0 : i32
    %c0_i32_0 = arith.constant 0 : i32
    %c0_i32_1 = arith.constant 0 : i32
    return %c0_i32, %c0_i32_0 : i32, i32
  }
}

module attributes {stable_mosaic.version = 11 : i64} {
  func.func @_fused_head_kernel(%arg0: i32, %arg1: memref<2x3136xf32, #tpu.memory_space<vmem>>, %arg2: memref<3136x1024xbf16, #tpu.memory_space<vmem>>, %arg3: memref<1x1024xf32, #tpu.memory_space<vmem>>, %arg4: memref<1024x7xf32, #tpu.memory_space<vmem>>, %arg5: memref<1x7xf32, #tpu.memory_space<vmem>>, %arg6: memref<2x6xf32, #tpu.memory_space<vmem>>) attributes {dimension_semantics = [#tpu.dimension_semantics<arbitrary>], iteration_bounds = array<i64: 1>, scalar_prefetch = 0 : i64, scratch_operands = 0 : i64, tpu.core_type = #tpu.core_type<tc>, window_params = [{pipeline_mode = #tpu.pipeline_mode<synchronous>, transform_indices = @transform_0, window_bounds = array<i64: 2, 3136>}, {pipeline_mode = #tpu.pipeline_mode<synchronous>, transform_indices = @transform_1, window_bounds = array<i64: 3136, 1024>}, {pipeline_mode = #tpu.pipeline_mode<synchronous>, transform_indices = @transform_2, window_bounds = array<i64: 1, 1024>}, {pipeline_mode = #tpu.pipeline_mode<synchronous>, transform_indices = @transform_3, window_bounds = array<i64: 1024, 7>}, {pipeline_mode = #tpu.pipeline_mode<synchronous>, transform_indices = @transform_4, window_bounds = array<i64: 1, 7>}, {pipeline_mode = #tpu.pipeline_mode<synchronous>, transform_indices = @transform_5, window_bounds = array<i64: 2, 6>}]} {
    %c0 = arith.constant 0 : index
    %c0_0 = arith.constant 0 : index
    %0 = vector.load %arg1[%c0, %c0_0] : memref<2x3136xf32, #tpu.memory_space<vmem>>, vector<2x3136xf32>
    %1 = arith.truncf %0 : vector<2x3136xf32> to vector<2x3136xbf16>
    %c0_1 = arith.constant 0 : index
    %c0_2 = arith.constant 0 : index
    %2 = vector.load %arg2[%c0_1, %c0_2] : memref<3136x1024xbf16, #tpu.memory_space<vmem>>, vector<3136x1024xbf16>
    %cst = arith.constant dense<0.000000e+00> : vector<2x1024xf32>
    %3 = tpu.matmul %1, %2, %cst {dimension_numbers = #tpu.dot_dimension_numbers<[1], [0], [0], [1], [0, 0, 1, 1], [], []>} : vector<2x3136xbf16>, vector<3136x1024xbf16>, vector<2x1024xf32> -> vector<2x1024xf32>
    %c0_3 = arith.constant 0 : index
    %c0_4 = arith.constant 0 : index
    %4 = vector.load %arg3[%c0_3, %c0_4] : memref<1x1024xf32, #tpu.memory_space<vmem>>, vector<1x1024xf32>
    %5 = vector.broadcast %4 : vector<1x1024xf32> to vector<2x1024xf32>
    %6 = arith.addf %3, %5 : vector<2x1024xf32>
    %cst_5 = arith.constant 0.000000e+00 : f32
    %7 = vector.broadcast %cst_5 : f32 to vector<2x1024xf32>
    %8 = arith.maximumf %6, %7 : vector<2x1024xf32>
    %c0_6 = arith.constant 0 : index
    %c0_7 = arith.constant 0 : index
    %9 = vector.load %arg4[%c0_6, %c0_7] : memref<1024x7xf32, #tpu.memory_space<vmem>>, vector<1024x7xf32>
    %cst_8 = arith.constant dense<0.000000e+00> : vector<2x7xf32>
    %10 = tpu.matmul %8, %9, %cst_8 {dimension_numbers = #tpu.dot_dimension_numbers<[1], [0], [0], [1], [0, 0, 1, 1], [], []>} : vector<2x1024xf32>, vector<1024x7xf32>, vector<2x7xf32> -> vector<2x7xf32>
    %c0_9 = arith.constant 0 : index
    %c0_10 = arith.constant 0 : index
    %11 = vector.load %arg5[%c0_9, %c0_10] : memref<1x7xf32, #tpu.memory_space<vmem>>, vector<1x7xf32>
    %12 = vector.broadcast %11 : vector<1x7xf32> to vector<2x7xf32>
    %13 = arith.addf %10, %12 : vector<2x7xf32>
    %14 = vector.extract_strided_slice %13 {offsets = [0, 0], sizes = [2, 6], strides = [1, 1]} : vector<2x7xf32> to vector<2x6xf32>
    %15 = vector.extract_strided_slice %13 {offsets = [0, 6], sizes = [2, 1], strides = [1, 1]} : vector<2x7xf32> to vector<2x1xf32>
    %cst_11 = arith.constant dense<0.000000e+00> : vector<2xf32>
    %16 = vector.multi_reduction <add>, %14, %cst_11 [1] : vector<2x6xf32> to vector<2xf32>
    %17 = vector.shape_cast %16 : vector<2xf32> to vector<2x1xf32>
    %cst_12 = arith.constant 6.000000e+00 : f32
    %18 = vector.broadcast %cst_12 : f32 to vector<2x1xf32>
    %19 = arith.divf %17, %18 : vector<2x1xf32>
    %20 = vector.broadcast %15 : vector<2x1xf32> to vector<2x6xf32>
    %21 = arith.addf %14, %20 : vector<2x6xf32>
    %22 = vector.broadcast %19 : vector<2x1xf32> to vector<2x6xf32>
    %23 = arith.subf %21, %22 : vector<2x6xf32>
    %c0_13 = arith.constant 0 : index
    %c0_14 = arith.constant 0 : index
    %24 = vector.load %arg6[%c0_13, %c0_14] : memref<2x6xf32, #tpu.memory_space<vmem>>, vector<2x6xf32>
    tpu.vector_store %arg6[%c0_13, %c0_14], %23 {strides = array<i32>} : memref<2x6xf32, #tpu.memory_space<vmem>>, vector<2x6xf32>,
    return
  }
  func.func @transform_0(%arg0: i32) -> (i32, i32) {
    %c0_i32 = arith.constant 0 : i32
    %c0_i32_0 = arith.constant 0 : i32
    %c0_i32_1 = arith.constant 0 : i32
    return %c0_i32, %c0_i32_0 : i32, i32
  }
  func.func @transform_1(%arg0: i32) -> (i32, i32) {
    %c0_i32 = arith.constant 0 : i32
    %c0_i32_0 = arith.constant 0 : i32
    %c0_i32_1 = arith.constant 0 : i32
    return %c0_i32, %c0_i32_0 : i32, i32
  }
  func.func @transform_2(%arg0: i32) -> (i32, i32) {
    %c0_i32 = arith.constant 0 : i32
    %c0_i32_0 = arith.constant 0 : i32
    %c0_i32_1 = arith.constant 0 : i32
    return %c0_i32, %c0_i32_0 : i32, i32
  }
  func.func @transform_3(%arg0: i32) -> (i32, i32) {
    %c0_i32 = arith.constant 0 : i32
    %c0_i32_0 = arith.constant 0 : i32
    %c0_i32_1 = arith.constant 0 : i32
    return %c0_i32, %c0_i32_0 : i32, i32
  }
  func.func @transform_4(%arg0: i32) -> (i32, i32) {
    %c0_i32 = arith.constant 0 : i32
    %c0_i32_0 = arith.constant 0 : i32
    %c0_i32_1 = arith.constant 0 : i32
    return %c0_i32, %c0_i32_0 : i32, i32
  }
  func.func @transform_5(%arg0: i32) -> (i32, i32) {
    %c0_i32 = arith.constant 0 : i32
    %c0_i32_0 = arith.constant 0 : i32
    %c0_i32_1 = arith.constant 0 : i32
    return %c0_i32, %c0_i32_0 : i32, i32
  }
}

</mosaic_0001>

<llo_original>
// kernel: dueling_q_forward.4
$region0: #{dueling_q_forward.4}
  #allocation0 [shape = 'u32[]', space=smem, size = 0x4, offset = 0x4, fixed_abs, tag = 'smem constant byte address 0x4 - core index']
  #allocation1 [shape = 'u32[144,128]{1,0:T(1,128)}', space=vmem, size = 0x12000, scoped, tag = 'internal scratch']
  %s0 = inlined_call_operand.vmem [shape: f32[800,100], index: 0, kind: input, shape index: {}]
  %s1 = inlined_call_operand.vmem [shape: f32[100,16], index: 1, kind: input, shape index: {}]
  %s2 = inlined_call_operand.vmem [shape: f32[1,16], index: 2, kind: input, shape index: {}]
  %s3 = inlined_call_operand.vmem [shape: f32[800,16], index: 3, kind: output, shape index: {}]
  %s4 = sld [smem:[#allocation0]]
  $region22: #{dueling_q_forward.4} parent=0
    _
  %s6 = ssub.s32 1, %s4
  %s7 = scalar_select 0, %s6, %s4
  // Predicated region
  $region2: #{dueling_q_forward.4} parent=0 // pred_check
    _
  $region3: #{dueling_q_forward.4} parent=0 // pred_check_branch
    %9 = sbr.rel (0) target = $region5
  $region4: #{dueling_q_forward.4} parent=0 // pred_region
    _
  $region5: #{dueling_q_forward.4} parent=0 // pred_fallthru
    _
  // Predicated region
  $region6: #{dueling_q_forward.4} parent=0 // pred_check
    _
  $region7: #{dueling_q_forward.4} parent=0 // pred_check_branch
    %11 = sbr.rel (0) target = $region9
  $region8: #{dueling_q_forward.4} parent=0 // pred_region
    _
  $region9: #{dueling_q_forward.4} parent=0 // pred_fallthru
    _
  // Predicated region
  $region10: #{dueling_q_forward.4} parent=0 // pred_check
    _
  $region11: #{dueling_q_forward.4} parent=0 // pred_check_branch
    %13 = sbr.rel (0) target = $region13
  $region12: #{dueling_q_forward.4} parent=0 // pred_region
    _
  $region13: #{dueling_q_forward.4} parent=0 // pred_fallthru
    _
  %v14 = vld [vmem:[%s0] sm:$0xff]
  %v15 = vld [vmem:[%s0 + $0x8] sm:$0xff]
  %v16 = vld [vmem:[%s0 + $0x10] sm:$0xff]
  %v17 = vld [vmem:[%s0 + $0x18] sm:$0xff]
  %v18 = vld [vmem:[%s0 + $0x20] sm:$0xff]
  %v19 = vld [vmem:[%s0 + $0x28] sm:$0xff]
  %v20 = vld [vmem:[%s0 + $0x30] sm:$0xff]
  %v21 = vld [vmem:[%s0 + $0x38] sm:$0xff]
  %v22 = vld [vmem:[%s0 + $0x40] sm:$0xff]
  %v23 = vld [vmem:[%s0 + $0x48] sm:$0xff]
  %v24 = vld [vmem:[%s0 + $0x50] sm:$0xff]
  %v25 = vld [vmem:[%s0 + $0x58] sm:$0xff]
  %v26 = vld [vmem:[%s0 + $0x60] sm:$0xff]
  %v27 = vld [vmem:[%s0 + $0x68] sm:$0xff]
  %v28 = vld [vmem:[%s0 + $0x70] sm:$0xff]
  %v29 = vld [vmem:[%s0 + $0x78] sm:$0xff]
  %v30 = vld [vmem:[%s0 + $0x80] sm:$0xff]
  %v31 = vld [vmem:[%s0 + $0x88] sm:$0xff]
  %v32 = vld [vmem:[%s0 + $0x90] sm:$0xff]
  %v33 = vld [vmem:[%s0 + $0x98] sm:$0xff]
  %v34 = vld [vmem:[%s0 + $0xa0] sm:$0xff]
  %v35 = vld [vmem:[%s0 + $0xa8] sm:$0xff]
  %v36 = vld [vmem:[%s0 + $0xb0] sm:$0xff]
  %v37 = vld [vmem:[%s0 + $0xb8] sm:$0xff]
  %v38 = vld [vmem:[%s0 + $0xc0] sm:$0xff]
  %v39 = vld [vmem:[%s0 + $0xc8] sm:$0xff]
  %v40 = vld [vmem:[%s0 + $0xd0] sm:$0xff]
  %v41 = vld [vmem:[%s0 + $0xd8] sm:$0xff]
  %v42 = vld [vmem:[%s0 + $0xe0] sm:$0xff]
  %v43 = vld [vmem:[%s0 + $0xe8] sm:$0xff]
  %v44 = vld [vmem:[%s0 + $0xf0] sm:$0xff]
  %v45 = vld [vmem:[%s0 + $0xf8] sm:$0xff]
  %v46 = vld [vmem:[%s0 + $0x100] sm:$0xff]
  %v47 = vld [vmem:[%s0 + $0x108] sm:$0xff]
  %v48 = vld [vmem:[%s0 + $0x110] sm:$0xff]
  %v49 = vld [vmem:[%s0 + $0x118] sm:$0xff]
  %v50 = vld [vmem:[%s0 + $0x120] sm:$0xff]
  %v51 = vld [vmem:[%s0 + $0x128] sm:$0xff]
  %v52 = vld [vmem:[%s0 + $0x130] sm:$0xff]
  %v53 = vld [vmem:[%s0 + $0x138] sm:$0xff]
  %v54 = vld [vmem:[%s0 + $0x140] sm:$0xff]
  %v55 = vld [vmem:[%s0 + $0x148] sm:$0xff]
  %v56 = vld [vmem:[%s0 + $0x150] sm:$0xff]
  %v57 = vld [vmem:[%s0 + $0x158] sm:$0xff]
  %v58 = vld [vmem:[%s0 + $0x160] sm:$0xff]
  %v59 = vld [vmem:[%s0 + $0x168] sm:$0xff]
  %v60 = vld [vmem:[%s0 + $0x170] sm:$0xff]
  %v61 = vld [vmem:[%s0 + $0x178] sm:$0xff]
  %v62 = vld [vmem:[%s0 + $0x180] sm:$0xff]
  %v63 = vld [vmem:[%s0 + $0x188] sm:$0xff]
  %v64 = vld [vmem:[%s0 + $0x190] sm:$0xff]
  %v65 = vld [vmem:[%s0 + $0x198] sm:$0xff]
  %v66 = vld [vmem:[%s0 + $0x1a0] sm:$0xff]
  %v67 = vld [vmem:[%s0 + $0x1a8] sm:$0xff]
  %v68 = vld [vmem:[%s0 + $0x1b0] sm:$0xff]
  %v69 = vld [vmem:[%s0 + $0x1b8] sm:$0xff]
  %v70 = vld [vmem:[%s0 + $0x1c0] sm:$0xff]
  %v71 = vld [vmem:[%s0 + $0x1c8] sm:$0xff]
  %v72 = vld [vmem:[%s0 + $0x1d0] sm:$0xff]
  %v73 = vld [vmem:[%s0 + $0x1d8] sm:$0xff]
  %v74 = vld [vmem:[%s0 + $0x1e0] sm:$0xff]
  %v75 = vld [vmem:[%s0 + $0x1e8] sm:$0xff]
  %v76 = vld [vmem:[%s0 + $0x1f0] sm:$0xff]
  %v77 = vld [vmem:[%s0 + $0x1f8] sm:$0xff]
  %v78 = vld [vmem:[%s0 + $0x200] sm:$0xff]
  %v79 = vld [vmem:[%s0 + $0x208] sm:$0xff]
  %v80 = vld [vmem:[%s0 + $0x210] sm:$0xff]
  %v81 = vld [vmem:[%s0 + $0x218] sm:$0xff]
  %v82 = vld [vmem:[%s0 + $0x220] sm:$0xff]
  %v83 = vld [vmem:[%s0 + $0x228] sm:$0xff]
  %v84 = vld [vmem:[%s0 + $0x230] sm:$0xff]
  %v85 = vld [vmem:[%s0 + $0x238] sm:$0xff]
  %v86 = vld [vmem:[%s0 + $0x240] sm:$0xff]
  %v87 = vld [vmem:[%s0 + $0x248] sm:$0xff]
  %v88 = vld [vmem:[%s0 + $0x250] sm:$0xff]
  %v89 = vld [vmem:[%s0 + $0x258] sm:$0xff]
  %v90 = vld [vmem:[%s0 + $0x260] sm:$0xff]
  %v91 = vld [vmem:[%s0 + $0x268] sm:$0xff]
  %v92 = vld [vmem:[%s0 + $0x270] sm:$0xff]
  %v93 = vld [vmem:[%s0 + $0x278] sm:$0xff]
  %v94 = vld [vmem:[%s0 + $0x280] sm:$0xff]
  %v95 = vld [vmem:[%s0 + $0x288] sm:$0xff]
  %v96 = vld [vmem:[%s0 + $0x290] sm:$0xff]
  %v97 = vld [vmem:[%s0 + $0x298] sm:$0xff]
  %v98 = vld [vmem:[%s0 + $0x2a0] sm:$0xff]
  %v99 = vld [vmem:[%s0 + $0x2a8] sm:$0xff]
  %v100 = vld [vmem:[%s0 + $0x2b0] sm:$0xff]
  %v101 = vld [vmem:[%s0 + $0x2b8] sm:$0xff]
  %v102 = vld [vmem:[%s0 + $0x2c0] sm:$0xff]
  %v103 = vld [vmem:[%s0 + $0x2c8] sm:$0xff]
  %v104 = vld [vmem:[%s0 + $0x2d0] sm:$0xff]
  %v105 = vld [vmem:[%s0 + $0x2d8] sm:$0xff]
  %v106 = vld [vmem:[%s0 + $0x2e0] sm:$0xff]
  %v107 = vld [vmem:[%s0 + $0x2e8] sm:$0xff]
  %v108 = vld [vmem:[%s0 + $0x2f0] sm:$0xff]
  %v109 = vld [vmem:[%s0 + $0x2f8] sm:$0xff]
  %v110 = vld [vmem:[%s0 + $0x300] sm:$0xff]
  %v111 = vld [vmem:[%s0 + $0x308] sm:$0xff]
  %v112 = vld [vmem:[%s0 + $0x310] sm:$0xff]
  %v113 = vld [vmem:[%s0 + $0x318] sm:$0xff]
  %v114 = vld [vmem:[%s1] sm:$0xff]
  %v115 = vld [vmem:[%s1 + $0x8] sm:$0xff]
  %v116 = vld [vmem:[%s1 + $0x10] sm:$0xff]
  %v117 = vld [vmem:[%s1 + $0x18] sm:$0xff]
  %v118 = vld [vmem:[%s1 + $0x20] sm:$0xff]
  %v119 = vld [vmem:[%s1 + $0x28] sm:$0xff]
  %v120 = vld [vmem:[%s1 + $0x30] sm:$0xff]
  %v121 = vld [vmem:[%s1 + $0x38] sm:$0xff]
  %v122 = vld [vmem:[%s1 + $0x40] sm:$0xff]
  %v123 = vld [vmem:[%s1 + $0x48] sm:$0xff]
  %v124 = vld [vmem:[%s1 + $0x50] sm:$0xff]
  %v125 = vld [vmem:[%s1 + $0x58] sm:$0xff]
  %v126 = vld [vmem:[%s1 + $0x60] sm:$0xf]
  %v127 = vld [vmem:[%s2] sm:$0x1]
  %v129 = vlaneseq
  %v130 = vshrl.u32 %v129, 7
  %v131 = vsub.s32 0, %v130
  %v132 = vrot.slane %v127, %v131
  %vm134 = vcmask 818176
  %v136 = vsel %vm134, %v14, 0
  %v139 = vsel %vm134, %v15, 0
  %v142 = vsel %vm134, %v16, 0
  %v145 = vsel %vm134, %v17, 0
  %v148 = vsel %vm134, %v18, 0
  %v151 = vsel %vm134, %v19, 0
  %v154 = vsel %vm134, %v20, 0
  %v157 = vsel %vm134, %v21, 0
  %v160 = vsel %vm134, %v22, 0
  %v163 = vsel %vm134, %v23, 0
  %v166 = vsel %vm134, %v24, 0
  %v169 = vsel %vm134, %v25, 0
  %v172 = vsel %vm134, %v26, 0
  %v175 = vsel %vm134, %v27, 0
  %v178 = vsel %vm134, %v28, 0
  %v181 = vsel %vm134, %v29, 0
  %v184 = vsel %vm134, %v30, 0
  %v187 = vsel %vm134, %v31, 0
  %v190 = vsel %vm134, %v32, 0
  %v193 = vsel %vm134, %v33, 0
  %v196 = vsel %vm134, %v34, 0
  %v199 = vsel %vm134, %v35, 0
  %v202 = vsel %vm134, %v36, 0
  %v205 = vsel %vm134, %v37, 0
  %v208 = vsel %vm134, %v38, 0
  %v211 = vsel %vm134, %v39, 0
  %v214 = vsel %vm134, %v40, 0
  %v217 = vsel %vm134, %v41, 0
  %v220 = vsel %vm134, %v42, 0
  %v223 = vsel %vm134, %v43, 0
  %v226 = vsel %vm134, %v44, 0
  %v229 = vsel %vm134, %v45, 0
  %v232 = vsel %vm134, %v46, 0
  %v235 = vsel %vm134, %v47, 0
  %v238 = vsel %vm134, %v48, 0
  %v241 = vsel %vm134, %v49, 0
  %v244 = vsel %vm134, %v50, 0
  %v247 = vsel %vm134, %v51, 0
  %v250 = vsel %vm134, %v52, 0
  %v253 = vsel %vm134, %v53, 0
  %v256 = vsel %vm134, %v54, 0
  %v259 = vsel %vm134, %v55, 0
  %v262 = vsel %vm134, %v56, 0
  %v265 = vsel %vm134, %v57, 0
  %v268 = vsel %vm134, %v58, 0
  %v271 = vsel %vm134, %v59, 0
  %v274 = vsel %vm134, %v60, 0
  %v277 = vsel %vm134, %v61, 0
  %v280 = vsel %vm134, %v62, 0
  %v283 = vsel %vm134, %v63, 0
  %v286 = vsel %vm134, %v64, 0
  %v289 = vsel %vm134, %v65, 0
  %v292 = vsel %vm134, %v66, 0
  %v295 = vsel %vm134, %v67, 0
  %v298 = vsel %vm134, %v68, 0
  %v301 = vsel %vm134, %v69, 0
  %v304 = vsel %vm134, %v70, 0
  %v307 = vsel %vm134, %v71, 0
  %v310 = vsel %vm134, %v72, 0
  %v313 = vsel %vm134, %v73, 0
  %v316 = vsel %vm134, %v74, 0
  %v319 = vsel %vm134, %v75, 0
  %v322 = vsel %vm134, %v76, 0
  %v325 = vsel %vm134, %v77, 0
  %v328 = vsel %vm134, %v78, 0
  %v331 = vsel %vm134, %v79, 0
  %v334 = vsel %vm134, %v80, 0
  %v337 = vsel %vm134, %v81, 0
  %v340 = vsel %vm134, %v82, 0
  %v343 = vsel %vm134, %v83, 0
  %v346 = vsel %vm134, %v84, 0
  %v349 = vsel %vm134, %v85, 0
  %v352 = vsel %vm134, %v86, 0
  %v355 = vsel %vm134, %v87, 0
  %v358 = vsel %vm134, %v88, 0
  %v361 = vsel %vm134, %v89, 0
  %v364 = vsel %vm134, %v90, 0
  %v367 = vsel %vm134, %v91, 0
  %v370 = vsel %vm134, %v92, 0
  %v373 = vsel %vm134, %v93, 0
  %v376 = vsel %vm134, %v94, 0
  %v379 = vsel %vm134, %v95, 0
  %v382 = vsel %vm134, %v96, 0
  %v385 = vsel %vm134, %v97, 0
  %v388 = vsel %vm134, %v98, 0
  %v391 = vsel %vm134, %v99, 0
  %v394 = vsel %vm134, %v100, 0
  %v397 = vsel %vm134, %v101, 0
  %v400 = vsel %vm134, %v102, 0
  %v403 = vsel %vm134, %v103, 0
  %v406 = vsel %vm134, %v104, 0
  %v409 = vsel %vm134, %v105, 0
  %v412 = vsel %vm134, %v106, 0
  %v415 = vsel %vm134, %v107, 0
  %v418 = vsel %vm134, %v108, 0
  %v421 = vsel %vm134, %v109, 0
  %v424 = vsel %vm134, %v110, 0
  %v427 = vsel %vm134, %v111, 0
  %v430 = vsel %vm134, %v112, 0
  %v433 = vsel %vm134, %v113, 0
  %vm435 = vcmask 1043456
  %v437 = vsel %vm435, %v126, 0
  %439 = vmatprep.subr.mxu0 0.0
  %440 = vmatpush1.msra.mxu0 %v114
  %441 = vmatprep.subr.mxu0 0.0
  %442 = vmatpush1.msra.mxu0 %v115
  %443 = vmatprep.subr.mxu0 0.0
  %444 = vmatpush1.msra.mxu0 %v116
  %445 = vmatprep.subr.mxu0 0.0
  %446 = vmatpush1.msra.mxu0 %v117
  %447 = vmatprep.subr.mxu0 0.0
  %448 = vmatpush1.msra.mxu0 %v118
  %449 = vmatprep.subr.mxu0 0.0
  %450 = vmatpush1.msra.mxu0 %v119
  %451 = vmatprep.subr.mxu0 0.0
  %452 = vmatpush1.msra.mxu0 %v120
  %453 = vmatprep.subr.mxu0 0.0
  %454 = vmatpush1.msra.mxu0 %v121
  %455 = vmatprep.subr.mxu0 0.0
  %456 = vmatpush1.msra.mxu0 %v122
  %457 = vmatprep.subr.mxu0 0.0
  %458 = vmatpush1.msra.mxu0 %v123
  %459 = vmatprep.subr.mxu0 0.0
  %460 = vmatpush1.msra.mxu0 %v124
  %461 = vmatprep.subr.mxu0 0.0
  %462 = vmatpush1.msra.mxu0 %v125
  %463 = vmatprep.subr.mxu0 0.0
  %464 = vmatpush1.msra.mxu0 %v437
  %465 = vmatprep.subr.mxu0 0.0
  %466 = vmatpush1.msra.mxu0 0.0
  %467 = vmatprep.subr.mxu0 0.0
  %468 = vmatpush1.msra.mxu0 0.0
  %469 = vmatprep.subr.mxu0 0.0
  %470 = vmatpush1.msra.mxu0 0.0
  %471 = vmatprep.subr.mxu0 0.0
  %472 = vmatpush1.msra.mxu0 0.0
  %473 = vmatprep.subr.mxu0 0.0
  %474 = vmatpush1.msra.mxu0 0.0
  %475 = vmatprep.subr.mxu0 0.0
  %476 = vmatpush1.msra.mxu0 0.0
  %477 = vmatprep.subr.mxu0 0.0
  %478 = vmatpush1.msra.mxu0 0.0
  %479 = vmatprep.subr.mxu0 0.0
  %480 = vmatpush1.msra.mxu0 0.0
  %481 = vmatprep.subr.mxu0 0.0
  %482 = vmatpush1.msra.mxu0 0.0
  %483 = vmatprep.subr.mxu0 0.0
  %484 = vmatpush1.msra.mxu0 0.0
  %485 = vmatprep.subr.mxu0 0.0
  %486 = vmatpush1.msra.mxu0 0.0
  %487 = vmatprep.subr.mxu0 0.0
  %488 = vmatpush1.msra.mxu0 0.0
  %489 = vmatprep.subr.mxu0 0.0
  %490 = vmatpush1.msra.mxu0 0.0
  %491 = vmatprep.subr.mxu0 0.0
  %492 = vmatpush1.msra.mxu0 0.0
  %493 = vmatprep.subr.mxu0 0.0
  %494 = vmatpush1.msra.mxu0 0.0
  %495 = vmatprep.subr.mxu0 0.0
  %496 = vmatpush1.msra.mxu0 0.0
  %497 = vmatprep.subr.mxu0 0.0
  %498 = vmatpush1.msra.mxu0 0.0
  %499 = vmatprep.subr.mxu0 0.0
  %500 = vmatpush1.msra.mxu0 0.0
  %501 = vmatprep.subr.mxu0 0.0
  %502 = vmatpush1.msra.mxu0 0.0
  %503 = vmatprep.mubr.f32.mxu0 0.0
  %504 = vmatmul.mubr.f32.gmra.mrb[0].mxu0 %v136
  %v505 = vpop.f32.mrb[0].mxu0
  %v506 = vadd.f32 %v132, %v505
  %v507 = vpop.f32.mrb[0].mxu0
  %508 = vmatprep.mubr.f32.mxu0 0.0
  %509 = vmatmul.mubr.f32.gmra.mrb[0].mxu0 %v139
  %v510 = vpop.f32.mrb[0].mxu0
  %v511 = vadd.f32 %v132, %v510
  %v512 = vpop.f32.mrb[0].mxu0
  %513 = vmatprep.mubr.f32.mxu0 0.0
  %514 = vmatmul.mubr.f32.gmra.mrb[0].mxu0 %v142
  %v515 = vpop.f32.mrb[0].mxu0
  %v516 = vadd.f32 %v132, %v515
  %v517 = vpop.f32.mrb[0].mxu0
  %518 = vmatprep.mubr.f32.mxu0 0.0
  %519 = vmatmul.mubr.f32.gmra.mrb[0].mxu0 %v145
  %v520 = vpop.f32.mrb[0].mxu0
  %v521 = vadd.f32 %v132, %v520
  %v522 = vpop.f32.mrb[0].mxu0
  %523 = vmatprep.mubr.f32.mxu0 0.0
  %524 = vmatmul.mubr.f32.gmra.mrb[0].mxu0 %v148
  %v525 = vpop.f32.mrb[0].mxu0
  %v526 = vadd.f32 %v132, %v525
  %v527 = vpop.f32.mrb[0].mxu0
  %528 = vmatprep.mubr.f32.mxu0 0.0
  %529 = vmatmul.mubr.f32.gmra.mrb[0].mxu0 %v151
  %v530 = vpop.f32.mrb[0].mxu0
  %v531 = vadd.f32 %v132, %v530
  %v532 = vpop.f32.mrb[0].mxu0
  %533 = vmatprep.mubr.f32.mxu0 0.0
  %534 = vmatmul.mubr.f32.gmra.mrb[0].mxu0 %v154
  %v535 = vpop.f32.mrb[0].mxu0
  %v536 = vadd.f32 %v132, %v535
  %v537 = vpop.f32.mrb[0].mxu0
  %538 = vmatprep.mubr.f32.mxu0 0.0
  %539 = vmatmul.mubr.f32.gmra.mrb[0].mxu0 %v157
  %v540 = vpop.f32.mrb[0].mxu0
  %v541 = vadd.f32 %v132, %v540
  %v542 = vpop.f32.mrb[0].mxu0
  %543 = vmatprep.mubr.f32.mxu0 0.0
  %544 = vmatmul.mubr.f32.gmra.mrb[0].mxu0 %v160
  %v545 = vpop.f32.mrb[0].mxu0
  %v546 = vadd.f32 %v132, %v545
  %v547 = vpop.f32.mrb[0].mxu0
  %548 = vmatprep.mubr.f32.mxu0 0.0
  %549 = vmatmul.mubr.f32.gmra.mrb[0].mxu0 %v163
  %v550 = vpop.f32.mrb[0].mxu0
  %v551 = vadd.f32 %v132, %v550
  %v552 = vpop.f32.mrb[0].mxu0
  %553 = vmatprep.mubr.f32.mxu0 0.0
  %554 = vmatmul.mubr.f32.gmra.mrb[0].mxu0 %v166
  %v555 = vpop.f32.mrb[0].mxu0
  %v556 = vadd.f32 %v132, %v555
  %v557 = vpop.f32.mrb[0].mxu0
  %558 = vmatprep.mubr.f32.mxu0 0.0
  %559 = vmatmul.mubr.f32.gmra.mrb[0].mxu0 %v169
  %v560 = vpop.f32.mrb[0].mxu0
  %v561 = vadd.f32 %v132, %v560
  %v562 = vpop.f32.mrb[0].mxu0
  %563 = vmatprep.mubr.f32.mxu0 0.0
  %564 = vmatmul.mubr.f32.gmra.mrb[0].mxu0 %v172
  %v565 = vpop.f32.mrb[0].mxu0
  %v566 = vadd.f32 %v132, %v565
  %v567 = vpop.f32.mrb[0].mxu0
  %568 = vmatprep.mubr.f32.mxu0 0.0
  %569 = vmatmul.mubr.f32.gmra.mrb[0].mxu0 %v175
  %v570 = vpop.f32.mrb[0].mxu0
  %v571 = vadd.f32 %v132, %v570
  %v572 = vpop.f32.mrb[0].mxu0
  %573 = vmatprep.mubr.f32.mxu0 0.0
  %574 = vmatmul.mubr.f32.gmra.mrb[0].mxu0 %v178
  %v575 = vpop.f32.mrb[0].mxu0
  %v576 = vadd.f32 %v132, %v575
  %v577 = vpop.f32.mrb[0].mxu0
  %578 = vmatprep.mubr.f32.mxu0 0.0
  %579 = vmatmul.mubr.f32.gmra.mrb[0].mxu0 %v181
  %v580 = vpop.f32.mrb[0].mxu0
  %v581 = vadd.f32 %v132, %v580
  %v582 = vpop.f32.mrb[0].mxu0
  %583 = vmatprep.mubr.f32.mxu0 0.0
  %584 = vmatmul.mubr.f32.gmra.mrb[0].mxu0 %v184
  %v585 = vpop.f32.mrb[0].mxu0
  %v586 = vadd.f32 %v132, %v585
  %v587 = vpop.f32.mrb[0].mxu0
  %588 = vmatprep.mubr.f32.mxu0 0.0
  %589 = vmatmul.mubr.f32.gmra.mrb[0].mxu0 %v187
  %v590 = vpop.f32.mrb[0].mxu0
  %v591 = vadd.f32 %v132, %v590
  %v592 = vpop.f32.mrb[0].mxu0
  %593 = vmatprep.mubr.f32.mxu0 0.0
  %594 = vmatmul.mubr.f32.gmra.mrb[0].mxu0 %v190
  %v595 = vpop.f32.mrb[0].mxu0
  %v596 = vadd.f32 %v132, %v595
  %v597 = vpop.f32.mrb[0].mxu0
  %598 = vmatprep.mubr.f32.mxu0 0.0
  %599 = vmatmul.mubr.f32.gmra.mrb[0].mxu0 %v193
  %v600 = vpop.f32.mrb[0].mxu0
  %v601 = vadd.f32 %v132, %v600
  %v602 = vpop.f32.mrb[0].mxu0
  %603 = vmatprep.mubr.f32.mxu0 0.0
  %604 = vmatmul.mubr.f32.gmra.mrb[0].mxu0 %v196
  %v605 = vpop.f32.mrb[0].mxu0
  %v606 = vadd.f32 %v132, %v605
  %v607 = vpop.f32.mrb[0].mxu0
  %608 = vmatprep.mubr.f32.mxu0 0.0
  %609 = vmatmul.mubr.f32.gmra.mrb[0].mxu0 %v199
  %v610 = vpop.f32.mrb[0].mxu0
  %v611 = vadd.f32 %v132, %v610
  %v612 = vpop.f32.mrb[0].mxu0
  %613 = vmatprep.mubr.f32.mxu0 0.0
  %614 = vmatmul.mubr.f32.gmra.mrb[0].mxu0 %v202
  %v615 = vpop.f32.mrb[0].mxu0
  %v616 = vadd.f32 %v132, %v615
  %v617 = vpop.f32.mrb[0].mxu0
  %618 = vmatprep.mubr.f32.mxu0 0.0
  %619 = vmatmul.mubr.f32.gmra.mrb[0].mxu0 %v205
  %v620 = vpop.f32.mrb[0].mxu0
  %v621 = vadd.f32 %v132, %v620
  %v622 = vpop.f32.mrb[0].mxu0
  %623 = vmatprep.mubr.f32.mxu0 0.0
  %624 = vmatmul.mubr.f32.gmra.mrb[0].mxu0 %v208
  %v625 = vpop.f32.mrb[0].mxu0
  %v626 = vadd.f32 %v132, %v625
  %v627 = vpop.f32.mrb[0].mxu0
  %628 = vmatprep.mubr.f32.mxu0 0.0
  %629 = vmatmul.mubr.f32.gmra.mrb[0].mxu0 %v211
  %v630 = vpop.f32.mrb[0].mxu0
  %v631 = vadd.f32 %v132, %v630
  %v632 = vpop.f32.mrb[0].mxu0
  %633 = vmatprep.mubr.f32.mxu0 0.0
  %634 = vmatmul.mubr.f32.gmra.mrb[0].mxu0 %v214
  %v635 = vpop.f32.mrb[0].mxu0
  %v636 = vadd.f32 %v132, %v635
  %v637 = vpop.f32.mrb[0].mxu0
  %638 = vmatprep.mubr.f32.mxu0 0.0
  %639 = vmatmul.mubr.f32.gmra.mrb[0].mxu0 %v217
  %v640 = vpop.f32.mrb[0].mxu0
  %v641 = vadd.f32 %v132, %v640
  %v642 = vpop.f32.mrb[0].mxu0
  %643 = vmatprep.mubr.f32.mxu0 0.0
  %644 = vmatmul.mubr.f32.gmra.mrb[0].mxu0 %v220
  %v645 = vpop.f32.mrb[0].mxu0
  %v646 = vadd.f32 %v132, %v645
  %v647 = vpop.f32.mrb[0].mxu0
  %648 = vmatprep.mubr.f32.mxu0 0.0
  %649 = vmatmul.mubr.f32.gmra.mrb[0].mxu0 %v223
  %v650 = vpop.f32.mrb[0].mxu0
  %v651 = vadd.f32 %v132, %v650
  %v652 = vpop.f32.mrb[0].mxu0
  %653 = vmatprep.mubr.f32.mxu0 0.0
  %654 = vmatmul.mubr.f32.gmra.mrb[0].mxu0 %v226
  %v655 = vpop.f32.mrb[0].mxu0
  %v656 = vadd.f32 %v132, %v655
  %v657 = vpop.f32.mrb[0].mxu0
  %658 = vmatprep.mubr.f32.mxu0 0.0
  %659 = vmatmul.mubr.f32.gmra.mrb[0].mxu0 %v229
  %v660 = vpop.f32.mrb[0].mxu0
  %v661 = vadd.f32 %v132, %v660
  %v662 = vpop.f32.mrb[0].mxu0
  %663 = vmatprep.mubr.f32.mxu0 0.0
  %664 = vmatmul.mubr.f32.gmra.mrb[0].mxu0 %v232
  %v665 = vpop.f32.mrb[0].mxu0
  %v666 = vadd.f32 %v132, %v665
  %v667 = vpop.f32.mrb[0].mxu0
  %668 = vmatprep.mubr.f32.mxu0 0.0
  %669 = vmatmul.mubr.f32.gmra.mrb[0].mxu0 %v235
  %v670 = vpop.f32.mrb[0].mxu0
  %v671 = vadd.f32 %v132, %v670
  %v672 = vpop.f32.mrb[0].mxu0
  %673 = vmatprep.mubr.f32.mxu0 0.0
  %674 = vmatmul.mubr.f32.gmra.mrb[0].mxu0 %v238
  %v675 = vpop.f32.mrb[0].mxu0
  %v676 = vadd.f32 %v132, %v675
  %v677 = vpop.f32.mrb[0].mxu0
  %678 = vmatprep.mubr.f32.mxu0 0.0
  %679 = vmatmul.mubr.f32.gmra.mrb[0].mxu0 %v241
  %v680 = vpop.f32.mrb[0].mxu0
  %v681 = vadd.f32 %v132, %v680
  %v682 = vpop.f32.mrb[0].mxu0
  %683 = vmatprep.mubr.f32.mxu0 0.0
  %684 = vmatmul.mubr.f32.gmra.mrb[0].mxu0 %v244
  %v685 = vpop.f32.mrb[0].mxu0
  %v686 = vadd.f32 %v132, %v685
  %v687 = vpop.f32.mrb[0].mxu0
  %688 = vmatprep.mubr.f32.mxu0 0.0
  %689 = vmatmul.mubr.f32.gmra.mrb[0].mxu0 %v247
  %v690 = vpop.f32.mrb[0].mxu0
  %v691 = vadd.f32 %v132, %v690
  %v692 = vpop.f32.mrb[0].mxu0
  %693 = vmatprep.mubr.f32.mxu0 0.0
  %694 = vmatmul.mubr.f32.gmra.mrb[0].mxu0 %v250
  %v695 = vpop.f32.mrb[0].mxu0
  %v696 = vadd.f32 %v132, %v695
  %v697 = vpop.f32.mrb[0].mxu0
  %698 = vmatprep.mubr.f32.mxu0 0.0
  %699 = vmatmul.mubr.f32.gmra.mrb[0].mxu0 %v253
  %v700 = vpop.f32.mrb[0].mxu0
  %v701 = vadd.f32 %v132, %v700
  %v702 = vpop.f32.mrb[0].mxu0
  %703 = vmatprep.mubr.f32.mxu0 0.0
  %704 = vmatmul.mubr.f32.gmra.mrb[0].mxu0 %v256
  %v705 = vpop.f32.mrb[0].mxu0
  %v706 = vadd.f32 %v132, %v705
  %v707 = vpop.f32.mrb[0].mxu0
  %708 = vmatprep.mubr.f32.mxu0 0.0
  %709 = vmatmul.mubr.f32.gmra.mrb[0].mxu0 %v259
  %v710 = vpop.f32.mrb[0].mxu0
  %v711 = vadd.f32 %v132, %v710
  %v712 = vpop.f32.mrb[0].mxu0
  %713 = vmatprep.mubr.f32.mxu0 0.0
  %714 = vmatmul.mubr.f32.gmra.mrb[0].mxu0 %v262
  %v715 = vpop.f32.mrb[0].mxu0
  %v716 = vadd.f32 %v132, %v715
  %v717 = vpop.f32.mrb[0].mxu0
  %718 = vmatprep.mubr.f32.mxu0 0.0
  %719 = vmatmul.mubr.f32.gmra.mrb[0].mxu0 %v265
  %v720 = vpop.f32.mrb[0].mxu0
  %v721 = vadd.f32 %v132, %v720
  %v722 = vpop.f32.mrb[0].mxu0
  %723 = vmatprep.mubr.f32.mxu0 0.0
  %724 = vmatmul.mubr.f32.gmra.mrb[0].mxu0 %v268
  %v725 = vpop.f32.mrb[0].mxu0
  %v726 = vadd.f32 %v132, %v725
  %v727 = vpop.f32.mrb[0].mxu0
  %728 = vmatprep.mubr.f32.mxu0 0.0
  %729 = vmatmul.mubr.f32.gmra.mrb[0].mxu0 %v271
  %v730 = vpop.f32.mrb[0].mxu0
  %v731 = vadd.f32 %v132, %v730
  %v732 = vpop.f32.mrb[0].mxu0
  %733 = vmatprep.mubr.f32.mxu0 0.0
  %734 = vmatmul.mubr.f32.gmra.mrb[0].mxu0 %v274
  %v735 = vpop.f32.mrb[0].mxu0
  %v736 = vadd.f32 %v132, %v735
  %v737 = vpop.f32.mrb[0].mxu0
  %738 = vmatprep.mubr.f32.mxu0 0.0
  %739 = vmatmul.mubr.f32.gmra.mrb[0].mxu0 %v277
  %v740 = vpop.f32.mrb[0].mxu0
  %v741 = vadd.f32 %v132, %v740
  %v742 = vpop.f32.mrb[0].mxu0
  %743 = vmatprep.mubr.f32.mxu0 0.0
  %744 = vmatmul.mubr.f32.gmra.mrb[0].mxu0 %v280
  %v745 = vpop.f32.mrb[0].mxu0
  %v746 = vadd.f32 %v132, %v745
  %v747 = vpop.f32.mrb[0].mxu0
  %748 = vmatprep.mubr.f32.mxu0 0.0
  %749 = vmatmul.mubr.f32.gmra.mrb[0].mxu0 %v283
  %v750 = vpop.f32.mrb[0].mxu0
  %v751 = vadd.f32 %v132, %v750
  %v752 = vpop.f32.mrb[0].mxu0
  %753 = vmatprep.mubr.f32.mxu0 0.0
  %754 = vmatmul.mubr.f32.gmra.mrb[0].mxu0 %v286
  %v755 = vpop.f32.mrb[0].mxu0
  %v756 = vadd.f32 %v132, %v755
  %v757 = vpop.f32.mrb[0].mxu0
  %758 = vmatprep.mubr.f32.mxu0 0.0
  %759 = vmatmul.mubr.f32.gmra.mrb[0].mxu0 %v289
  %v760 = vpop.f32.mrb[0].mxu0
  %v761 = vadd.f32 %v132, %v760
  %v762 = vpop.f32.mrb[0].mxu0
  %763 = vmatprep.mubr.f32.mxu0 0.0
  %764 = vmatmul.mubr.f32.gmra.mrb[0].mxu0 %v292
  %v765 = vpop.f32.mrb[0].mxu0
  %v766 = vadd.f32 %v132, %v765
  %v767 = vpop.f32.mrb[0].mxu0
  %768 = vmatprep.mubr.f32.mxu0 0.0
  %769 = vmatmul.mubr.f32.gmra.mrb[0].mxu0 %v295
  %v770 = vpop.f32.mrb[0].mxu0
  %v771 = vadd.f32 %v132, %v770
  %v772 = vpop.f32.mrb[0].mxu0
  %773 = vmatprep.mubr.f32.mxu0 0.0
  %774 = vmatmul.mubr.f32.gmra.mrb[0].mxu0 %v298
  %v775 = vpop.f32.mrb[0].mxu0
  %v776 = vadd.f32 %v132, %v775
  %v777 = vpop.f32.mrb[0].mxu0
  %778 = vmatprep.mubr.f32.mxu0 0.0
  %779 = vmatmul.mubr.f32.gmra.mrb[0].mxu0 %v301
  %v780 = vpop.f32.mrb[0].mxu0
  %v781 = vadd.f32 %v132, %v780
  %v782 = vpop.f32.mrb[0].mxu0
  %783 = vmatprep.mubr.f32.mxu0 0.0
  %784 = vmatmul.mubr.f32.gmra.mrb[0].mxu0 %v304
  %v785 = vpop.f32.mrb[0].mxu0
  %v786 = vadd.f32 %v132, %v785
  %v787 = vpop.f32.mrb[0].mxu0
  %788 = vmatprep.mubr.f32.mxu0 0.0
  %789 = vmatmul.mubr.f32.gmra.mrb[0].mxu0 %v307
  %v790 = vpop.f32.mrb[0].mxu0
  %v791 = vadd.f32 %v132, %v790
  %v792 = vpop.f32.mrb[0].mxu0
  %793 = vmatprep.mubr.f32.mxu0 0.0
  %794 = vmatmul.mubr.f32.gmra.mrb[0].mxu0 %v310
  %v795 = vpop.f32.mrb[0].mxu0
  %v796 = vadd.f32 %v132, %v795
  %v797 = vpop.f32.mrb[0].mxu0
  %798 = vmatprep.mubr.f32.mxu0 0.0
  %799 = vmatmul.mubr.f32.gmra.mrb[0].mxu0 %v313
  %v800 = vpop.f32.mrb[0].mxu0
  %v801 = vadd.f32 %v132, %v800
  %v802 = vpop.f32.mrb[0].mxu0
  %803 = vmatprep.mubr.f32.mxu0 0.0
  %804 = vmatmul.mubr.f32.gmra.mrb[0].mxu0 %v316
  %v805 = vpop.f32.mrb[0].mxu0
  %v806 = vadd.f32 %v132, %v805
  %v807 = vpop.f32.mrb[0].mxu0
  %808 = vmatprep.mubr.f32.mxu0 0.0
  %809 = vmatmul.mubr.f32.gmra.mrb[0].mxu0 %v319
  %v810 = vpop.f32.mrb[0].mxu0
  %v811 = vadd.f32 %v132, %v810
  %v812 = vpop.f32.mrb[0].mxu0
  %813 = vmatprep.mubr.f32.mxu0 0.0
  %814 = vmatmul.mubr.f32.gmra.mrb[0].mxu0 %v322
  %v815 = vpop.f32.mrb[0].mxu0
  %v816 = vadd.f32 %v132, %v815
  %v817 = vpop.f32.mrb[0].mxu0
  %818 = vmatprep.mubr.f32.mxu0 0.0
  %819 = vmatmul.mubr.f32.gmra.mrb[0].mxu0 %v325
  %v820 = vpop.f32.mrb[0].mxu0
  %v821 = vadd.f32 %v132, %v820
  %v822 = vpop.f32.mrb[0].mxu0
  %823 = vmatprep.mubr.f32.mxu0 0.0
  %824 = vmatmul.mubr.f32.gmra.mrb[0].mxu0 %v328
  %v825 = vpop.f32.mrb[0].mxu0
  %v826 = vadd.f32 %v132, %v825
  %v827 = vpop.f32.mrb[0].mxu0
  %828 = vmatprep.mubr.f32.mxu0 0.0
  %829 = vmatmul.mubr.f32.gmra.mrb[0].mxu0 %v331
  %v830 = vpop.f32.mrb[0].mxu0
  %v831 = vadd.f32 %v132, %v830
  %v832 = vpop.f32.mrb[0].mxu0
  %833 = vmatprep.mubr.f32.mxu0 0.0
  %834 = vmatmul.mubr.f32.gmra.mrb[0].mxu0 %v334
  %v835 = vpop.f32.mrb[0].mxu0
  %v836 = vadd.f32 %v132, %v835
  %v837 = vpop.f32.mrb[0].mxu0
  %838 = vmatprep.mubr.f32.mxu0 0.0
  %839 = vmatmul.mubr.f32.gmra.mrb[0].mxu0 %v337
  %v840 = vpop.f32.mrb[0].mxu0
  %v841 = vadd.f32 %v132, %v840
  %v842 = vpop.f32.mrb[0].mxu0
  %843 = vmatprep.mubr.f32.mxu0 0.0
  %844 = vmatmul.mubr.f32.gmra.mrb[0].mxu0 %v340
  %v845 = vpop.f32.mrb[0].mxu0
  %v846 = vadd.f32 %v132, %v845
  %v847 = vpop.f32.mrb[0].mxu0
  %848 = vmatprep.mubr.f32.mxu0 0.0
  %849 = vmatmul.mubr.f32.gmra.mrb[0].mxu0 %v343
  %v850 = vpop.f32.mrb[0].mxu0
  %v851 = vadd.f32 %v132, %v850
  %v852 = vpop.f32.mrb[0].mxu0
  %853 = vmatprep.mubr.f32.mxu0 0.0
  %854 = vmatmul.mubr.f32.gmra.mrb[0].mxu0 %v346
  %v855 = vpop.f32.mrb[0].mxu0
  %v856 = vadd.f32 %v132, %v855
  %v857 = vpop.f32.mrb[0].mxu0
  %858 = vmatprep.mubr.f32.mxu0 0.0
  %859 = vmatmul.mubr.f32.gmra.mrb[0].mxu0 %v349
  %v860 = vpop.f32.mrb[0].mxu0
  %v861 = vadd.f32 %v132, %v860
  %v862 = vpop.f32.mrb[0].mxu0
  %863 = vmatprep.mubr.f32.mxu0 0.0
  %864 = vmatmul.mubr.f32.gmra.mrb[0].mxu0 %v352
  %v865 = vpop.f32.mrb[0].mxu0
  %v866 = vadd.f32 %v132, %v865
  %v867 = vpop.f32.mrb[0].mxu0
  %868 = vmatprep.mubr.f32.mxu0 0.0
  %869 = vmatmul.mubr.f32.gmra.mrb[0].mxu0 %v355
  %v870 = vpop.f32.mrb[0].mxu0
  %v871 = vadd.f32 %v132, %v870
  %v872 = vpop.f32.mrb[0].mxu0
  %873 = vmatprep.mubr.f32.mxu0 0.0
  %874 = vmatmul.mubr.f32.gmra.mrb[0].mxu0 %v358
  %v875 = vpop.f32.mrb[0].mxu0
  %v876 = vadd.f32 %v132, %v875
  %v877 = vpop.f32.mrb[0].mxu0
  %878 = vmatprep.mubr.f32.mxu0 0.0
  %879 = vmatmul.mubr.f32.gmra.mrb[0].mxu0 %v361
  %v880 = vpop.f32.mrb[0].mxu0
  %v881 = vadd.f32 %v132, %v880
  %v882 = vpop.f32.mrb[0].mxu0
  %883 = vmatprep.mubr.f32.mxu0 0.0
  %884 = vmatmul.mubr.f32.gmra.mrb[0].mxu0 %v364
  %v885 = vpop.f32.mrb[0].mxu0
  %v886 = vadd.f32 %v132, %v885
  %v887 = vpop.f32.mrb[0].mxu0
  %888 = vmatprep.mubr.f32.mxu0 0.0
  %889 = vmatmul.mubr.f32.gmra.mrb[0].mxu0 %v367
  %v890 = vpop.f32.mrb[0].mxu0
  %v891 = vadd.f32 %v132, %v890
  %v892 = vpop.f32.mrb[0].mxu0
  %893 = vmatprep.mubr.f32.mxu0 0.0
  %894 = vmatmul.mubr.f32.gmra.mrb[0].mxu0 %v370
  %v895 = vpop.f32.mrb[0].mxu0
  %v896 = vadd.f32 %v132, %v895
  %v897 = vpop.f32.mrb[0].mxu0
  %898 = vmatprep.mubr.f32.mxu0 0.0
  %899 = vmatmul.mubr.f32.gmra.mrb[0].mxu0 %v373
  %v900 = vpop.f32.mrb[0].mxu0
  %v901 = vadd.f32 %v132, %v900
  %v902 = vpop.f32.mrb[0].mxu0
  %903 = vmatprep.mubr.f32.mxu0 0.0
  %904 = vmatmul.mubr.f32.gmra.mrb[0].mxu0 %v376
  %v905 = vpop.f32.mrb[0].mxu0
  %v906 = vadd.f32 %v132, %v905
  %v907 = vpop.f32.mrb[0].mxu0
  %908 = vmatprep.mubr.f32.mxu0 0.0
  %909 = vmatmul.mubr.f32.gmra.mrb[0].mxu0 %v379
  %v910 = vpop.f32.mrb[0].mxu0
  %v911 = vadd.f32 %v132, %v910
  %v912 = vpop.f32.mrb[0].mxu0
  %913 = vmatprep.mubr.f32.mxu0 0.0
  %914 = vmatmul.mubr.f32.gmra.mrb[0].mxu0 %v382
  %v915 = vpop.f32.mrb[0].mxu0
  %v916 = vadd.f32 %v132, %v915
  %v917 = vpop.f32.mrb[0].mxu0
  %918 = vmatprep.mubr.f32.mxu0 0.0
  %919 = vmatmul.mubr.f32.gmra.mrb[0].mxu0 %v385
  %v920 = vpop.f32.mrb[0].mxu0
  %v921 = vadd.f32 %v132, %v920
  %v922 = vpop.f32.mrb[0].mxu0
  %923 = vmatprep.mubr.f32.mxu0 0.0
  %924 = vmatmul.mubr.f32.gmra.mrb[0].mxu0 %v388
  %v925 = vpop.f32.mrb[0].mxu0
  %v926 = vadd.f32 %v132, %v925
  %v927 = vpop.f32.mrb[0].mxu0
  %928 = vmatprep.mubr.f32.mxu0 0.0
  %929 = vmatmul.mubr.f32.gmra.mrb[0].mxu0 %v391
  %v930 = vpop.f32.mrb[0].mxu0
  %v931 = vadd.f32 %v132, %v930
  %v932 = vpop.f32.mrb[0].mxu0
  %933 = vmatprep.mubr.f32.mxu0 0.0
  %934 = vmatmul.mubr.f32.gmra.mrb[0].mxu0 %v394
  %v935 = vpop.f32.mrb[0].mxu0
  %v936 = vadd.f32 %v132, %v935
  %v937 = vpop.f32.mrb[0].mxu0
  %938 = vmatprep.mubr.f32.mxu0 0.0
  %939 = vmatmul.mubr.f32.gmra.mrb[0].mxu0 %v397
  %v940 = vpop.f32.mrb[0].mxu0
  %v941 = vadd.f32 %v132, %v940
  %v942 = vpop.f32.mrb[0].mxu0
  %943 = vmatprep.mubr.f32.mxu0 0.0
  %944 = vmatmul.mubr.f32.gmra.mrb[0].mxu0 %v400
  %v945 = vpop.f32.mrb[0].mxu0
  %v946 = vadd.f32 %v132, %v945
  %v947 = vpop.f32.mrb[0].mxu0
  %948 = vmatprep.mubr.f32.mxu0 0.0
  %949 = vmatmul.mubr.f32.gmra.mrb[0].mxu0 %v403
  %v950 = vpop.f32.mrb[0].mxu0
  %v951 = vadd.f32 %v132, %v950
  %v952 = vpop.f32.mrb[0].mxu0
  %953 = vmatprep.mubr.f32.mxu0 0.0
  %954 = vmatmul.mubr.f32.gmra.mrb[0].mxu0 %v406
  %v955 = vpop.f32.mrb[0].mxu0
  %v956 = vadd.f32 %v132, %v955
  %v957 = vpop.f32.mrb[0].mxu0
  %958 = vmatprep.mubr.f32.mxu0 0.0
  %959 = vmatmul.mubr.f32.gmra.mrb[0].mxu0 %v409
  %v960 = vpop.f32.mrb[0].mxu0
  %v961 = vadd.f32 %v132, %v960
  %v962 = vpop.f32.mrb[0].mxu0
  %963 = vmatprep.mubr.f32.mxu0 0.0
  %964 = vmatmul.mubr.f32.gmra.mrb[0].mxu0 %v412
  %v965 = vpop.f32.mrb[0].mxu0
  %v966 = vadd.f32 %v132, %v965
  %v967 = vpop.f32.mrb[0].mxu0
  %968 = vmatprep.mubr.f32.mxu0 0.0
  %969 = vmatmul.mubr.f32.gmra.mrb[0].mxu0 %v415
  %v970 = vpop.f32.mrb[0].mxu0
  %v971 = vadd.f32 %v132, %v970
  %v972 = vpop.f32.mrb[0].mxu0
  %973 = vmatprep.mubr.f32.mxu0 0.0
  %974 = vmatmul.mubr.f32.gmra.mrb[0].mxu0 %v418
  %v975 = vpop.f32.mrb[0].mxu0
  %v976 = vadd.f32 %v132, %v975
  %v977 = vpop.f32.mrb[0].mxu0
  %978 = vmatprep.mubr.f32.mxu0 0.0
  %979 = vmatmul.mubr.f32.gmra.mrb[0].mxu0 %v421
  %v980 = vpop.f32.mrb[0].mxu0
  %v981 = vadd.f32 %v132, %v980
  %v982 = vpop.f32.mrb[0].mxu0
  %983 = vmatprep.mubr.f32.mxu0 0.0
  %984 = vmatmul.mubr.f32.gmra.mrb[0].mxu0 %v424
  %v985 = vpop.f32.mrb[0].mxu0
  %v986 = vadd.f32 %v132, %v985
  %v987 = vpop.f32.mrb[0].mxu0
  %988 = vmatprep.mubr.f32.mxu0 0.0
  %989 = vmatmul.mubr.f32.gmra.mrb[0].mxu0 %v427
  %v990 = vpop.f32.mrb[0].mxu0
  %v991 = vadd.f32 %v132, %v990
  %v992 = vpop.f32.mrb[0].mxu0
  %993 = vmatprep.mubr.f32.mxu0 0.0
  %994 = vmatmul.mubr.f32.gmra.mrb[0].mxu0 %v430
  %v995 = vpop.f32.mrb[0].mxu0
  %v996 = vadd.f32 %v132, %v995
  %v997 = vpop.f32.mrb[0].mxu0
  %998 = vmatprep.mubr.f32.mxu0 0.0
  %999 = vmatmul.mubr.f32.gmra.mrb[0].mxu0 %v433
  %v1000 = vpop.f32.mrb[0].mxu0
  %v1001 = vadd.f32 %v132, %v1000
  %v1002 = vpop.f32.mrb[0].mxu0
  %1003 = vdwg.mxu0
  %v1004 = vmax.f32 %v506, 0.0
  %v1005 = vmax.f32 %v511, 0.0
  %v1006 = vmax.f32 %v516, 0.0
  %v1007 = vmax.f32 %v521, 0.0
  %v1008 = vmax.f32 %v526, 0.0
  %v1009 = vmax.f32 %v531, 0.0
  %v1010 = vmax.f32 %v536, 0.0
  %v1011 = vmax.f32 %v541, 0.0
  %v1012 = vmax.f32 %v546, 0.0
  %v1013 = vmax.f32 %v551, 0.0
  %v1014 = vmax.f32 %v556, 0.0
  %v1015 = vmax.f32 %v561, 0.0
  %v1016 = vmax.f32 %v566, 0.0
  %v1017 = vmax.f32 %v571, 0.0
  %v1018 = vmax.f32 %v576, 0.0
  %v1019 = vmax.f32 %v581, 0.0
  %v1020 = vmax.f32 %v586, 0.0
  %v1021 = vmax.f32 %v591, 0.0
  %v1022 = vmax.f32 %v596, 0.0
  %v1023 = vmax.f32 %v601, 0.0
  %v1024 = vmax.f32 %v606, 0.0
  %v1025 = vmax.f32 %v611, 0.0
  %v1026 = vmax.f32 %v616, 0.0
  %v1027 = vmax.f32 %v621, 0.0
  %v1028 = vmax.f32 %v626, 0.0
  %v1029 = vmax.f32 %v631, 0.0
  %v1030 = vmax.f32 %v636, 0.0
  %v1031 = vmax.f32 %v641, 0.0
  %v1032 = vmax.f32 %v646, 0.0
  %v1033 = vmax.f32 %v651, 0.0
  %v1034 = vmax.f32 %v656, 0.0
  %v1035 = vmax.f32 %v661, 0.0
  %v1036 = vmax.f32 %v666, 0.0
  %v1037 = vmax.f32 %v671, 0.0
  %v1038 = vmax.f32 %v676, 0.0
  %v1039 = vmax.f32 %v681, 0.0
  %v1040 = vmax.f32 %v686, 0.0
  %v1041 = vmax.f32 %v691, 0.0
  %v1042 = vmax.f32 %v696, 0.0
  %v1043 = vmax.f32 %v701, 0.0
  %v1044 = vmax.f32 %v706, 0.0
  %v1045 = vmax.f32 %v711, 0.0
  %v1046 = vmax.f32 %v716, 0.0
  %v1047 = vmax.f32 %v721, 0.0
  %v1048 = vmax.f32 %v726, 0.0
  %v1049 = vmax.f32 %v731, 0.0
  %v1050 = vmax.f32 %v736, 0.0
  %v1051 = vmax.f32 %v741, 0.0
  %v1052 = vmax.f32 %v746, 0.0
  %v1053 = vmax.f32 %v751, 0.0
  %v1054 = vmax.f32 %v756, 0.0
  %v1055 = vmax.f32 %v761, 0.0
  %v1056 = vmax.f32 %v766, 0.0
  %v1057 = vmax.f32 %v771, 0.0
  %v1058 = vmax.f32 %v776, 0.0
  %v1059 = vmax.f32 %v781, 0.0
  %v1060 = vmax.f32 %v786, 0.0
  %v1061 = vmax.f32 %v791, 0.0
  %v1062 = vmax.f32 %v796, 0.0
  %v1063 = vmax.f32 %v801, 0.0
  %v1064 = vmax.f32 %v806, 0.0
  %v1065 = vmax.f32 %v811, 0.0
  %v1066 = vmax.f32 %v816, 0.0
  %v1067 = vmax.f32 %v821, 0.0
  %v1068 = vmax.f32 %v826, 0.0
  %v1069 = vmax.f32 %v831, 0.0
  %v1070 = vmax.f32 %v836, 0.0
  %v1071 = vmax.f32 %v841, 0.0
  %v1072 = vmax.f32 %v846, 0.0
  %v1073 = vmax.f32 %v851, 0.0
  %v1074 = vmax.f32 %v856, 0.0
  %v1075 = vmax.f32 %v861, 0.0
  %v1076 = vmax.f32 %v866, 0.0
  %v1077 = vmax.f32 %v871, 0.0
  %v1078 = vmax.f32 %v876, 0.0
  %v1079 = vmax.f32 %v881, 0.0
  %v1080 = vmax.f32 %v886, 0.0
  %v1081 = vmax.f32 %v891, 0.0
  %v1082 = vmax.f32 %v896, 0.0
  %v1083 = vmax.f32 %v901, 0.0
  %v1084 = vmax.f32 %v906, 0.0
  %v1085 = vmax.f32 %v911, 0.0
  %v1086 = vmax.f32 %v916, 0.0
  %v1087 = vmax.f32 %v921, 0.0
  %v1088 = vmax.f32 %v926, 0.0
  %v1089 = vmax.f32 %v931, 0.0
  %v1090 = vmax.f32 %v936, 0.0
  %v1091 = vmax.f32 %v941, 0.0
  %v1092 = vmax.f32 %v946, 0.0
  %v1093 = vmax.f32 %v951, 0.0
  %v1094 = vmax.f32 %v956, 0.0
  %v1095 = vmax.f32 %v961, 0.0
  %v1096 = vmax.f32 %v966, 0.0
  %v1097 = vmax.f32 %v971, 0.0
  %v1098 = vmax.f32 %v976, 0.0
  %v1099 = vmax.f32 %v981, 0.0
  %v1100 = vmax.f32 %v986, 0.0
  %v1101 = vmax.f32 %v991, 0.0
  %v1102 = vmax.f32 %v996, 0.0
  %v1103 = vmax.f32 %v1001, 0.0
  %vm1104 = vcmask 130048
  %1105 = vst.msk [vmem:[%s3] sm:$0xff] %vm1104, %v1004
  %1106 = vst.msk [vmem:[%s3 + $0x8] sm:$0xff] %vm1104, %v1005
  %1107 = vst.msk [vmem:[%s3 + $0x10] sm:$0xff] %vm1104, %v1006
  %1108 = vst.msk [vmem:[%s3 + $0x18] sm:$0xff] %vm1104, %v1007
  %1109 = vst.msk [vmem:[%s3 + $0x20] sm:$0xff] %vm1104, %v1008
  %1110 = vst.msk [vmem:[%s3 + $0x28] sm:$0xff] %vm1104, %v1009
  %1111 = vst.msk [vmem:[%s3 + $0x30] sm:$0xff] %vm1104, %v1010
  %1112 = vst.msk [vmem:[%s3 + $0x38] sm:$0xff] %vm1104, %v1011
  %1113 = vst.msk [vmem:[%s3 + $0x40] sm:$0xff] %vm1104, %v1012
  %1114 = vst.msk [vmem:[%s3 + $0x48] sm:$0xff] %vm1104, %v1013
  %1115 = vst.msk [vmem:[%s3 + $0x50] sm:$0xff] %vm1104, %v1014
  %1116 = vst.msk [vmem:[%s3 + $0x58] sm:$0xff] %vm1104, %v1015
  %1117 = vst.msk [vmem:[%s3 + $0x60] sm:$0xff] %vm1104, %v1016
  %1118 = vst.msk [vmem:[%s3 + $0x68] sm:$0xff] %vm1104, %v1017
  %1119 = vst.msk [vmem:[%s3 + $0x70] sm:$0xff] %vm1104, %v1018
  %1120 = vst.msk [vmem:[%s3 + $0x78] sm:$0xff] %vm1104, %v1019
  %1121 = vst.msk [vmem:[%s3 + $0x80] sm:$0xff] %vm1104, %v1020
  %1122 = vst.msk [vmem:[%s3 + $0x88] sm:$0xff] %vm1104, %v1021
  %1123 = vst.msk [vmem:[%s3 + $0x90] sm:$0xff] %vm1104, %v1022
  %1124 = vst.msk [vmem:[%s3 + $0x98] sm:$0xff] %vm1104, %v1023
  %1125 = vst.msk [vmem:[%s3 + $0xa0] sm:$0xff] %vm1104, %v1024
  %1126 = vst.msk [vmem:[%s3 + $0xa8] sm:$0xff] %vm1104, %v1025
  %1127 = vst.msk [vmem:[%s3 + $0xb0] sm:$0xff] %vm1104, %v1026
  %1128 = vst.msk [vmem:[%s3 + $0xb8] sm:$0xff] %vm1104, %v1027
  %1129 = vst.msk [vmem:[%s3 + $0xc0] sm:$0xff] %vm1104, %v1028
  %1130 = vst.msk [vmem:[%s3 + $0xc8] sm:$0xff] %vm1104, %v1029
  %1131 = vst.msk [vmem:[%s3 + $0xd0] sm:$0xff] %vm1104, %v1030
  %1132 = vst.msk [vmem:[%s3 + $0xd8] sm:$0xff] %vm1104, %v1031
  %1133 = vst.msk [vmem:[%s3 + $0xe0] sm:$0xff] %vm1104, %v1032
  %1134 = vst.msk [vmem:[%s3 + $0xe8] sm:$0xff] %vm1104, %v1033
  %1135 = vst.msk [vmem:[%s3 + $0xf0] sm:$0xff] %vm1104, %v1034
  %1136 = vst.msk [vmem:[%s3 + $0xf8] sm:$0xff] %vm1104, %v1035
  %1137 = vst.msk [vmem:[%s3 + $0x100] sm:$0xff] %vm1104, %v1036
  %1138 = vst.msk [vmem:[%s3 + $0x108] sm:$0xff] %vm1104, %v1037
  %1139 = vst.msk [vmem:[%s3 + $0x110] sm:$0xff] %vm1104, %v1038
  %1140 = vst.msk [vmem:[%s3 + $0x118] sm:$0xff] %vm1104, %v1039
  %1141 = vst.msk [vmem:[%s3 + $0x120] sm:$0xff] %vm1104, %v1040
  %1142 = vst.msk [vmem:[%s3 + $0x128] sm:$0xff] %vm1104, %v1041
  %1143 = vst.msk [vmem:[%s3 + $0x130] sm:$0xff] %vm1104, %v1042
  %1144 = vst.msk [vmem:[%s3 + $0x138] sm:$0xff] %vm1104, %v1043
  %1145 = vst.msk [vmem:[%s3 + $0x140] sm:$0xff] %vm1104, %v1044
  %1146 = vst.msk [vmem:[%s3 + $0x148] sm:$0xff] %vm1104, %v1045
  %1147 = vst.msk [vmem:[%s3 + $0x150] sm:$0xff] %vm1104, %v1046
  %1148 = vst.msk [vmem:[%s3 + $0x158] sm:$0xff] %vm1104, %v1047
  %1149 = vst.msk [vmem:[%s3 + $0x160] sm:$0xff] %vm1104, %v1048
  %1150 = vst.msk [vmem:[%s3 + $0x168] sm:$0xff] %vm1104, %v1049
  %1151 = vst.msk [vmem:[%s3 + $0x170] sm:$0xff] %vm1104, %v1050
  %1152 = vst.msk [vmem:[%s3 + $0x178] sm:$0xff] %vm1104, %v1051
  %1153 = vst.msk [vmem:[%s3 + $0x180] sm:$0xff] %vm1104, %v1052
  %1154 = vst.msk [vmem:[%s3 + $0x188] sm:$0xff] %vm1104, %v1053
  %1155 = vst.msk [vmem:[%s3 + $0x190] sm:$0xff] %vm1104, %v1054
  %1156 = vst.msk [vmem:[%s3 + $0x198] sm:$0xff] %vm1104, %v1055
  %1157 = vst.msk [vmem:[%s3 + $0x1a0] sm:$0xff] %vm1104, %v1056
  %1158 = vst.msk [vmem:[%s3 + $0x1a8] sm:$0xff] %vm1104, %v1057
  %1159 = vst.msk [vmem:[%s3 + $0x1b0] sm:$0xff] %vm1104, %v1058
  %1160 = vst.msk [vmem:[%s3 + $0x1b8] sm:$0xff] %vm1104, %v1059
  %1161 = vst.msk [vmem:[%s3 + $0x1c0] sm:$0xff] %vm1104, %v1060
  %1162 = vst.msk [vmem:[%s3 + $0x1c8] sm:$0xff] %vm1104, %v1061
  %1163 = vst.msk [vmem:[%s3 + $0x1d0] sm:$0xff] %vm1104, %v1062
  %1164 = vst.msk [vmem:[%s3 + $0x1d8] sm:$0xff] %vm1104, %v1063
  %1165 = vst.msk [vmem:[%s3 + $0x1e0] sm:$0xff] %vm1104, %v1064
  %1166 = vst.msk [vmem:[%s3 + $0x1e8] sm:$0xff] %vm1104, %v1065
  %1167 = vst.msk [vmem:[%s3 + $0x1f0] sm:$0xff] %vm1104, %v1066
  %1168 = vst.msk [vmem:[%s3 + $0x1f8] sm:$0xff] %vm1104, %v1067
  %1169 = vst.msk [vmem:[%s3 + $0x200] sm:$0xff] %vm1104, %v1068
  %1170 = vst.msk [vmem:[%s3 + $0x208] sm:$0xff] %vm1104, %v1069
  %1171 = vst.msk [vmem:[%s3 + $0x210] sm:$0xff] %vm1104, %v1070
  %1172 = vst.msk [vmem:[%s3 + $0x218] sm:$0xff] %vm1104, %v1071
  %1173 = vst.msk [vmem:[%s3 + $0x220] sm:$0xff] %vm1104, %v1072
  %1174 = vst.msk [vmem:[%s3 + $0x228] sm:$0xff] %vm1104, %v1073
  %1175 = vst.msk [vmem:[%s3 + $0x230] sm:$0xff] %vm1104, %v1074
  %1176 = vst.msk [vmem:[%s3 + $0x238] sm:$0xff] %vm1104, %v1075
  %1177 = vst.msk [vmem:[%s3 + $0x240] sm:$0xff] %vm1104, %v1076
  %1178 = vst.msk [vmem:[%s3 + $0x248] sm:$0xff] %vm1104, %v1077
  %1179 = vst.msk [vmem:[%s3 + $0x250] sm:$0xff] %vm1104, %v1078
  %1180 = vst.msk [vmem:[%s3 + $0x258] sm:$0xff] %vm1104, %v1079
  %1181 = vst.msk [vmem:[%s3 + $0x260] sm:$0xff] %vm1104, %v1080
  %1182 = vst.msk [vmem:[%s3 + $0x268] sm:$0xff] %vm1104, %v1081
  %1183 = vst.msk [vmem:[%s3 + $0x270] sm:$0xff] %vm1104, %v1082
  %1184 = vst.msk [vmem:[%s3 + $0x278] sm:$0xff] %vm1104, %v1083
  %1185 = vst.msk [vmem:[%s3 + $0x280] sm:$0xff] %vm1104, %v1084
  %1186 = vst.msk [vmem:[%s3 + $0x288] sm:$0xff] %vm1104, %v1085
  %1187 = vst.msk [vmem:[%s3 + $0x290] sm:$0xff] %vm1104, %v1086
  %1188 = vst.msk [vmem:[%s3 + $0x298] sm:$0xff] %vm1104, %v1087
  %1189 = vst.msk [vmem:[%s3 + $0x2a0] sm:$0xff] %vm1104, %v1088
  %1190 = vst.msk [vmem:[%s3 + $0x2a8] sm:$0xff] %vm1104, %v1089
  %1191 = vst.msk [vmem:[%s3 + $0x2b0] sm:$0xff] %vm1104, %v1090
  %1192 = vst.msk [vmem:[%s3 + $0x2b8] sm:$0xff] %vm1104, %v1091
  %1193 = vst.msk [vmem:[%s3 + $0x2c0] sm:$0xff] %vm1104, %v1092
  %1194 = vst.msk [vmem:[%s3 + $0x2c8] sm:$0xff] %vm1104, %v1093
  %1195 = vst.msk [vmem:[%s3 + $0x2d0] sm:$0xff] %vm1104, %v1094
  %1196 = vst.msk [vmem:[%s3 + $0x2d8] sm:$0xff] %vm1104, %v1095
  %1197 = vst.msk [vmem:[%s3 + $0x2e0] sm:$0xff] %vm1104, %v1096
  %1198 = vst.msk [vmem:[%s3 + $0x2e8] sm:$0xff] %vm1104, %v1097
  %1199 = vst.msk [vmem:[%s3 + $0x2f0] sm:$0xff] %vm1104, %v1098
  %1200 = vst.msk [vmem:[%s3 + $0x2f8] sm:$0xff] %vm1104, %v1099
  %1201 = vst.msk [vmem:[%s3 + $0x300] sm:$0xff] %vm1104, %v1100
  %1202 = vst.msk [vmem:[%s3 + $0x308] sm:$0xff] %vm1104, %v1101
  %1203 = vst.msk [vmem:[%s3 + $0x310] sm:$0xff] %vm1104, %v1102
  %1204 = vst.msk [vmem:[%s3 + $0x318] sm:$0xff] %vm1104, %v1103
  // Predicated region
  $region14: #{dueling_q_forward.4} parent=0 // pred_check
    _
  $region15: #{dueling_q_forward.4} parent=0 // pred_check_branch
    %1206 = sbr.rel (0) target = $region17
  $region16: #{dueling_q_forward.4} parent=0 // pred_region
    _
  $region17: #{dueling_q_forward.4} parent=0 // pred_fallthru
    _
  // Predicated region
  $region18: #{dueling_q_forward.4} parent=0 // pred_check
    _
  $region19: #{dueling_q_forward.4} parent=0 // pred_check_branch
    %1208 = sbr.rel (0) target = $region21
  $region20: #{dueling_q_forward.4} parent=0 // pred_region
    _
  $region21: #{dueling_q_forward.4} parent=0 // pred_fallthru
    _

// kernel: dueling_q_forward.5
$region0: #{dueling_q_forward.5}
  #allocation0 [shape = 'u32[]', space=smem, size = 0x4, offset = 0x4, fixed_abs, tag = 'smem constant byte address 0x4 - core index']
  #allocation1 [shape = 'u32[144,128]{1,0:T(1,128)}', space=vmem, size = 0x12000, scoped, tag = 'internal scratch']
  %s0 = inlined_call_operand.vmem [shape: f32[162,256], index: 0, kind: input, shape index: {}]
  %s1 = inlined_call_operand.vmem [shape: f32[256,32], index: 1, kind: input, shape index: {}]
  %s2 = inlined_call_operand.vmem [shape: f32[1,32], index: 2, kind: input, shape index: {}]
  %s3 = inlined_call_operand.vmem [shape: f32[162,32], index: 3, kind: output, shape index: {}]
  %s4 = sld [smem:[#allocation0]]
  $region22: #{dueling_q_forward.5} parent=0
    _
  %s6 = ssub.s32 1, %s4
  %s7 = scalar_select 0, %s6, %s4
  // Predicated region
  $region2: #{dueling_q_forward.5} parent=0 // pred_check
    _
  $region3: #{dueling_q_forward.5} parent=0 // pred_check_branch
    %9 = sbr.rel (0) target = $region5
  $region4: #{dueling_q_forward.5} parent=0 // pred_region
    _
  $region5: #{dueling_q_forward.5} parent=0 // pred_fallthru
    _
  // Predicated region
  $region6: #{dueling_q_forward.5} parent=0 // pred_check
    _
  $region7: #{dueling_q_forward.5} parent=0 // pred_check_branch
    %11 = sbr.rel (0) target = $region9
  $region8: #{dueling_q_forward.5} parent=0 // pred_region
    _
  $region9: #{dueling_q_forward.5} parent=0 // pred_fallthru
    _
  // Predicated region
  $region10: #{dueling_q_forward.5} parent=0 // pred_check
    _
  $region11: #{dueling_q_forward.5} parent=0 // pred_check_branch
    %13 = sbr.rel (0) target = $region13
  $region12: #{dueling_q_forward.5} parent=0 // pred_region
    _
  $region13: #{dueling_q_forward.5} parent=0 // pred_fallthru
    _
  %v14 = vld [vmem:[%s0] sm:$0xff]
  %v15 = vld [vmem:[%s0 + $0x8] sm:$0xff]
  %v16 = vld [vmem:[%s0 + $0x10] sm:$0xff]
  %v17 = vld [vmem:[%s0 + $0x18] sm:$0xff]
  %v18 = vld [vmem:[%s0 + $0x20] sm:$0xff]
  %v19 = vld [vmem:[%s0 + $0x28] sm:$0xff]
  %v20 = vld [vmem:[%s0 + $0x30] sm:$0xff]
  %v21 = vld [vmem:[%s0 + $0x38] sm:$0xff]
  %v22 = vld [vmem:[%s0 + $0x40] sm:$0xff]
  %v23 = vld [vmem:[%s0 + $0x48] sm:$0xff]
  %v24 = vld [vmem:[%s0 + $0x50] sm:$0xff]
  %v25 = vld [vmem:[%s0 + $0x58] sm:$0xff]
  %v26 = vld [vmem:[%s0 + $0x60] sm:$0xff]
  %v27 = vld [vmem:[%s0 + $0x68] sm:$0xff]
  %v28 = vld [vmem:[%s0 + $0x70] sm:$0xff]
  %v29 = vld [vmem:[%s0 + $0x78] sm:$0xff]
  %v30 = vld [vmem:[%s0 + $0x80] sm:$0xff]
  %v31 = vld [vmem:[%s0 + $0x88] sm:$0xff]
  %v32 = vld [vmem:[%s0 + $0x90] sm:$0xff]
  %v33 = vld [vmem:[%s0 + $0x98] sm:$0xff]
  %v34 = vld [vmem:[%s0 + $0xa0] sm:$0xff]
  %v35 = vld [vmem:[%s0 + $0xa8] sm:$0xff]
  %v36 = vld [vmem:[%s0 + $0xb0] sm:$0xff]
  %v37 = vld [vmem:[%s0 + $0xb8] sm:$0xff]
  %v38 = vld [vmem:[%s0 + $0xc0] sm:$0xff]
  %v39 = vld [vmem:[%s0 + $0xc8] sm:$0xff]
  %v40 = vld [vmem:[%s0 + $0xd0] sm:$0xff]
  %v41 = vld [vmem:[%s0 + $0xd8] sm:$0xff]
  %v42 = vld [vmem:[%s0 + $0xe0] sm:$0xff]
  %v43 = vld [vmem:[%s0 + $0xe8] sm:$0xff]
  %v44 = vld [vmem:[%s0 + $0xf0] sm:$0xff]
  %v45 = vld [vmem:[%s0 + $0xf8] sm:$0xff]
  %v46 = vld [vmem:[%s0 + $0x100] sm:$0xff]
  %v47 = vld [vmem:[%s0 + $0x108] sm:$0xff]
  %v48 = vld [vmem:[%s0 + $0x110] sm:$0xff]
  %v49 = vld [vmem:[%s0 + $0x118] sm:$0xff]
  %v50 = vld [vmem:[%s0 + $0x120] sm:$0xff]
  %v51 = vld [vmem:[%s0 + $0x128] sm:$0xff]
  %v52 = vld [vmem:[%s0 + $0x130] sm:$0xff]
  %v53 = vld [vmem:[%s0 + $0x138] sm:$0xff]
  %v54 = vld [vmem:[%s0 + $0x140] sm:$0x3]
  %v55 = vld [vmem:[%s0 + $0x148] sm:$0x3]
  %v56 = vld [vmem:[%s1] sm:$0xff]
  %v57 = vld [vmem:[%s1 + $0x8] sm:$0xff]
  %v58 = vld [vmem:[%s1 + $0x10] sm:$0xff]
  %v59 = vld [vmem:[%s1 + $0x18] sm:$0xff]
  %v60 = vld [vmem:[%s1 + $0x20] sm:$0xff]
  %v61 = vld [vmem:[%s1 + $0x28] sm:$0xff]
  %v62 = vld [vmem:[%s1 + $0x30] sm:$0xff]
  %v63 = vld [vmem:[%s1 + $0x38] sm:$0xff]
  %v64 = vld [vmem:[%s1 + $0x40] sm:$0xff]
  %v65 = vld [vmem:[%s1 + $0x48] sm:$0xff]
  %v66 = vld [vmem:[%s1 + $0x50] sm:$0xff]
  %v67 = vld [vmem:[%s1 + $0x58] sm:$0xff]
  %v68 = vld [vmem:[%s1 + $0x60] sm:$0xff]
  %v69 = vld [vmem:[%s1 + $0x68] sm:$0xff]
  %v70 = vld [vmem:[%s1 + $0x70] sm:$0xff]
  %v71 = vld [vmem:[%s1 + $0x78] sm:$0xff]
  %v72 = vld [vmem:[%s1 + $0x80] sm:$0xff]
  %v73 = vld [vmem:[%s1 + $0x88] sm:$0xff]
  %v74 = vld [vmem:[%s1 + $0x90] sm:$0xff]
  %v75 = vld [vmem:[%s1 + $0x98] sm:$0xff]
  %v76 = vld [vmem:[%s1 + $0xa0] sm:$0xff]
  %v77 = vld [vmem:[%s1 + $0xa8] sm:$0xff]
  %v78 = vld [vmem:[%s1 + $0xb0] sm:$0xff]
  %v79 = vld [vmem:[%s1 + $0xb8] sm:$0xff]
  %v80 = vld [vmem:[%s1 + $0xc0] sm:$0xff]
  %v81 = vld [vmem:[%s1 + $0xc8] sm:$0xff]
  %v82 = vld [vmem:[%s1 + $0xd0] sm:$0xff]
  %v83 = vld [vmem:[%s1 + $0xd8] sm:$0xff]
  %v84 = vld [vmem:[%s1 + $0xe0] sm:$0xff]
  %v85 = vld [vmem:[%s1 + $0xe8] sm:$0xff]
  %v86 = vld [vmem:[%s1 + $0xf0] sm:$0xff]
  %v87 = vld [vmem:[%s1 + $0xf8] sm:$0xff]
  %v88 = vld [vmem:[%s2] sm:$0x1]
  %v90 = vlaneseq
  %v91 = vshrl.u32 %v90, 7
  %v92 = vsub.s32 0, %v91
  %v93 = vrot.slane %v88, %v92
  %95 = vmatprep.subr.mxu0 0.0
  %96 = vmatpush1.msra.mxu0 %v56
  %97 = vmatprep.subr.mxu0 0.0
  %98 = vmatpush1.msra.mxu0 %v57
  %99 = vmatprep.subr.mxu0 0.0
  %100 = vmatpush1.msra.mxu0 %v58
  %101 = vmatprep.subr.mxu0 0.0
  %102 = vmatpush1.msra.mxu0 %v59
  %103 = vmatprep.subr.mxu0 0.0
  %104 = vmatpush1.msra.mxu0 %v60
  %105 = vmatprep.subr.mxu0 0.0
  %106 = vmatpush1.msra.mxu0 %v61
  %107 = vmatprep.subr.mxu0 0.0
  %108 = vmatpush1.msra.mxu0 %v62
  %109 = vmatprep.subr.mxu0 0.0
  %110 = vmatpush1.msra.mxu0 %v63
  %111 = vmatprep.subr.mxu0 0.0
  %112 = vmatpush1.msra.mxu0 %v64
  %113 = vmatprep.subr.mxu0 0.0
  %114 = vmatpush1.msra.mxu0 %v65
  %115 = vmatprep.subr.mxu0 0.0
  %116 = vmatpush1.msra.mxu0 %v66
  %117 = vmatprep.subr.mxu0 0.0
  %118 = vmatpush1.msra.mxu0 %v67
  %119 = vmatprep.subr.mxu0 0.0
  %120 = vmatpush1.msra.mxu0 %v68
  %121 = vmatprep.subr.mxu0 0.0
  %122 = vmatpush1.msra.mxu0 %v69
  %123 = vmatprep.subr.mxu0 0.0
  %124 = vmatpush1.msra.mxu0 %v70
  %125 = vmatprep.subr.mxu0 0.0
  %126 = vmatpush1.msra.mxu0 %v71
  %127 = vmatprep.subr.mxu0 0.0
  %128 = vmatpush1.msra.mxu0 %v72
  %129 = vmatprep.subr.mxu0 0.0
  %130 = vmatpush1.msra.mxu0 %v73
  %131 = vmatprep.subr.mxu0 0.0
  %132 = vmatpush1.msra.mxu0 %v74
  %133 = vmatprep.subr.mxu0 0.0
  %134 = vmatpush1.msra.mxu0 %v75
  %135 = vmatprep.subr.mxu0 0.0
  %136 = vmatpush1.msra.mxu0 %v76
  %137 = vmatprep.subr.mxu0 0.0
  %138 = vmatpush1.msra.mxu0 %v77
  %139 = vmatprep.subr.mxu0 0.0
  %140 = vmatpush1.msra.mxu0 %v78
  %141 = vmatprep.subr.mxu0 0.0
  %142 = vmatpush1.msra.mxu0 %v79
  %143 = vmatprep.subr.mxu0 0.0
  %144 = vmatpush1.msra.mxu0 %v80
  %145 = vmatprep.subr.mxu0 0.0
  %146 = vmatpush1.msra.mxu0 %v81
  %147 = vmatprep.subr.mxu0 0.0
  %148 = vmatpush1.msra.mxu0 %v82
  %149 = vmatprep.subr.mxu0 0.0
  %150 = vmatpush1.msra.mxu0 %v83
  %151 = vmatprep.subr.mxu0 0.0
  %152 = vmatpush1.msra.mxu0 %v84
  %153 = vmatprep.subr.mxu0 0.0
  %154 = vmatpush1.msra.mxu0 %v85
  %155 = vmatprep.subr.mxu0 0.0
  %156 = vmatpush1.msra.mxu0 %v86
  %157 = vmatprep.subr.mxu0 0.0
  %158 = vmatpush1.msra.mxu0 %v87
  %159 = vmatprep.mubr.f32.mxu0 %v15
  %160 = vmatmul.mubr.f32.gmra.mrb[0].mxu0 %v14
  %v161 = vpop.f32.mrb[0].mxu0
  %v162 = vadd.f32 %v93, %v161
  %v163 = vpop.f32.mrb[0].mxu0
  %164 = vmatprep.mubr.f32.mxu0 %v17
  %165 = vmatmul.mubr.f32.gmra.mrb[0].mxu0 %v16
  %v166 = vpop.f32.mrb[0].mxu0
  %v167 = vadd.f32 %v93, %v166
  %v168 = vpop.f32.mrb[0].mxu0
  %169 = vmatprep.mubr.f32.mxu0 %v19
  %170 = vmatmul.mubr.f32.gmra.mrb[0].mxu0 %v18
  %v171 = vpop.f32.mrb[0].mxu0
  %v172 = vadd.f32 %v93, %v171
  %v173 = vpop.f32.mrb[0].mxu0
  %174 = vmatprep.mubr.f32.mxu0 %v21
  %175 = vmatmul.mubr.f32.gmra.mrb[0].mxu0 %v20
  %v176 = vpop.f32.mrb[0].mxu0
  %v177 = vadd.f32 %v93, %v176
  %v178 = vpop.f32.mrb[0].mxu0
  %179 = vmatprep.mubr.f32.mxu0 %v23
  %180 = vmatmul.mubr.f32.gmra.mrb[0].mxu0 %v22
  %v181 = vpop.f32.mrb[0].mxu0
  %v182 = vadd.f32 %v93, %v181
  %v183 = vpop.f32.mrb[0].mxu0
  %184 = vmatprep.mubr.f32.mxu0 %v25
  %185 = vmatmul.mubr.f32.gmra.mrb[0].mxu0 %v24
  %v186 = vpop.f32.mrb[0].mxu0
  %v187 = vadd.f32 %v93, %v186
  %v188 = vpop.f32.mrb[0].mxu0
  %189 = vmatprep.mubr.f32.mxu0 %v27
  %190 = vmatmul.mubr.f32.gmra.mrb[0].mxu0 %v26
  %v191 = vpop.f32.mrb[0].mxu0
  %v192 = vadd.f32 %v93, %v191
  %v193 = vpop.f32.mrb[0].mxu0
  %194 = vmatprep.mubr.f32.mxu0 %v29
  %195 = vmatmul.mubr.f32.gmra.mrb[0].mxu0 %v28
  %v196 = vpop.f32.mrb[0].mxu0
  %v197 = vadd.f32 %v93, %v196
  %v198 = vpop.f32.mrb[0].mxu0
  %199 = vmatprep.mubr.f32.mxu0 %v31
  %200 = vmatmul.mubr.f32.gmra.mrb[0].mxu0 %v30
  %v201 = vpop.f32.mrb[0].mxu0
  %v202 = vadd.f32 %v93, %v201
  %v203 = vpop.f32.mrb[0].mxu0
  %204 = vmatprep.mubr.f32.mxu0 %v33
  %205 = vmatmul.mubr.f32.gmra.mrb[0].mxu0 %v32
  %v206 = vpop.f32.mrb[0].mxu0
  %v207 = vadd.f32 %v93, %v206
  %v208 = vpop.f32.mrb[0].mxu0
  %209 = vmatprep.mubr.f32.mxu0 %v35
  %210 = vmatmul.mubr.f32.gmra.mrb[0].mxu0 %v34
  %v211 = vpop.f32.mrb[0].mxu0
  %v212 = vadd.f32 %v93, %v211
  %v213 = vpop.f32.mrb[0].mxu0
  %214 = vmatprep.mubr.f32.mxu0 %v37
  %215 = vmatmul.mubr.f32.gmra.mrb[0].mxu0 %v36
  %v216 = vpop.f32.mrb[0].mxu0
  %v217 = vadd.f32 %v93, %v216
  %v218 = vpop.f32.mrb[0].mxu0
  %219 = vmatprep.mubr.f32.mxu0 %v39
  %220 = vmatmul.mubr.f32.gmra.mrb[0].mxu0 %v38
  %v221 = vpop.f32.mrb[0].mxu0
  %v222 = vadd.f32 %v93, %v221
  %v223 = vpop.f32.mrb[0].mxu0
  %224 = vmatprep.mubr.f32.mxu0 %v41
  %225 = vmatmul.mubr.f32.gmra.mrb[0].mxu0 %v40
  %v226 = vpop.f32.mrb[0].mxu0
  %v227 = vadd.f32 %v93, %v226
  %v228 = vpop.f32.mrb[0].mxu0
  %229 = vmatprep.mubr.f32.mxu0 %v43
  %230 = vmatmul.mubr.f32.gmra.mrb[0].mxu0 %v42
  %v231 = vpop.f32.mrb[0].mxu0
  %v232 = vadd.f32 %v93, %v231
  %v233 = vpop.f32.mrb[0].mxu0
  %234 = vmatprep.mubr.f32.mxu0 %v45
  %235 = vmatmul.mubr.f32.gmra.mrb[0].mxu0 %v44
  %v236 = vpop.f32.mrb[0].mxu0
  %v237 = vadd.f32 %v93, %v236
  %v238 = vpop.f32.mrb[0].mxu0
  %239 = vmatprep.mubr.f32.mxu0 %v47
  %240 = vmatmul.mubr.f32.gmra.mrb[0].mxu0 %v46
  %v241 = vpop.f32.mrb[0].mxu0
  %v242 = vadd.f32 %v93, %v241
  %v243 = vpop.f32.mrb[0].mxu0
  %244 = vmatprep.mubr.f32.mxu0 %v49
  %245 = vmatmul.mubr.f32.gmra.mrb[0].mxu0 %v48
  %v246 = vpop.f32.mrb[0].mxu0
  %v247 = vadd.f32 %v93, %v246
  %v248 = vpop.f32.mrb[0].mxu0
  %249 = vmatprep.mubr.f32.mxu0 %v51
  %250 = vmatmul.mubr.f32.gmra.mrb[0].mxu0 %v50
  %v251 = vpop.f32.mrb[0].mxu0
  %v252 = vadd.f32 %v93, %v251
  %v253 = vpop.f32.mrb[0].mxu0
  %254 = vmatprep.mubr.f32.mxu0 %v53
  %255 = vmatmul.mubr.f32.gmra.mrb[0].mxu0 %v52
  %v256 = vpop.f32.mrb[0].mxu0
  %v257 = vadd.f32 %v93, %v256
  %v258 = vpop.f32.mrb[0].mxu0
  %259 = vmatprep.mubr.f32.mxu0 %v55
  %260 = vmatmul.mubr.f32.gmra.mrb[0].mxu0 %v54
  %v261 = vpop.f32.mrb[0].mxu0
  %v262 = vadd.f32 %v93, %v261
  %v263 = vpop.f32.mrb[0].mxu0
  %264 = vdwg.mxu0
  %v265 = vmax.f32 %v162, 0.0
  %v266 = vmax.f32 %v167, 0.0
  %v267 = vmax.f32 %v172, 0.0
  %v268 = vmax.f32 %v177, 0.0
  %v269 = vmax.f32 %v182, 0.0
  %v270 = vmax.f32 %v187, 0.0
  %v271 = vmax.f32 %v192, 0.0
  %v272 = vmax.f32 %v197, 0.0
  %v273 = vmax.f32 %v202, 0.0
  %v274 = vmax.f32 %v207, 0.0
  %v275 = vmax.f32 %v212, 0.0
  %v276 = vmax.f32 %v217, 0.0
  %v277 = vmax.f32 %v222, 0.0
  %v278 = vmax.f32 %v227, 0.0
  %v279 = vmax.f32 %v232, 0.0
  %v280 = vmax.f32 %v237, 0.0
  %v281 = vmax.f32 %v242, 0.0
  %v282 = vmax.f32 %v247, 0.0
  %v283 = vmax.f32 %v252, 0.0
  %v284 = vmax.f32 %v257, 0.0
  %v285 = vmax.f32 %v262, 0.0
  %vm286 = vcmask 261120
  %287 = vst.msk [vmem:[%s3] sm:$0xff] %vm286, %v265
  %288 = vst.msk [vmem:[%s3 + $0x8] sm:$0xff] %vm286, %v266
  %289 = vst.msk [vmem:[%s3 + $0x10] sm:$0xff] %vm286, %v267
  %290 = vst.msk [vmem:[%s3 + $0x18] sm:$0xff] %vm286, %v268
  %291 = vst.msk [vmem:[%s3 + $0x20] sm:$0xff] %vm286, %v269
  %292 = vst.msk [vmem:[%s3 + $0x28] sm:$0xff] %vm286, %v270
  %293 = vst.msk [vmem:[%s3 + $0x30] sm:$0xff] %vm286, %v271
  %294 = vst.msk [vmem:[%s3 + $0x38] sm:$0xff] %vm286, %v272
  %295 = vst.msk [vmem:[%s3 + $0x40] sm:$0xff] %vm286, %v273
  %296 = vst.msk [vmem:[%s3 + $0x48] sm:$0xff] %vm286, %v274
  %297 = vst.msk [vmem:[%s3 + $0x50] sm:$0xff] %vm286, %v275
  %298 = vst.msk [vmem:[%s3 + $0x58] sm:$0xff] %vm286, %v276
  %299 = vst.msk [vmem:[%s3 + $0x60] sm:$0xff] %vm286, %v277
  %300 = vst.msk [vmem:[%s3 + $0x68] sm:$0xff] %vm286, %v278
  %301 = vst.msk [vmem:[%s3 + $0x70] sm:$0xff] %vm286, %v279
  %302 = vst.msk [vmem:[%s3 + $0x78] sm:$0xff] %vm286, %v280
  %303 = vst.msk [vmem:[%s3 + $0x80] sm:$0xff] %vm286, %v281
  %304 = vst.msk [vmem:[%s3 + $0x88] sm:$0xff] %vm286, %v282
  %305 = vst.msk [vmem:[%s3 + $0x90] sm:$0xff] %vm286, %v283
  %306 = vst.msk [vmem:[%s3 + $0x98] sm:$0xff] %vm286, %v284
  %vm307 = vcmask 254976
  %308 = vst.msk [vmem:[%s3 + $0xa0] sm:$0x3] %vm307, %v285
  // Predicated region
  $region14: #{dueling_q_forward.5} parent=0 // pred_check
    _
  $region15: #{dueling_q_forward.5} parent=0 // pred_check_branch
    %310 = sbr.rel (0) target = $region17
  $region16: #{dueling_q_forward.5} parent=0 // pred_region
    _
  $region17: #{dueling_q_forward.5} parent=0 // pred_fallthru
    _
  // Predicated region
  $region18: #{dueling_q_forward.5} parent=0 // pred_check
    _
  $region19: #{dueling_q_forward.5} parent=0 // pred_check_branch
    %312 = sbr.rel (0) target = $region21
  $region20: #{dueling_q_forward.5} parent=0 // pred_region
    _
  $region21: #{dueling_q_forward.5} parent=0 // pred_fallthru
    _

// kernel: dueling_q_forward.6
$region0: #{dueling_q_forward.6}
  #allocation0 [shape = 'u32[]', space=smem, size = 0x4, offset = 0x4, fixed_abs, tag = 'smem constant byte address 0x4 - core index']
  #allocation1 [shape = 'u32[144,128]{1,0:T(1,128)}', space=vmem, size = 0x12000, scoped, tag = 'internal scratch']
  %s0 = inlined_call_operand.vmem [shape: f32[98,288], index: 0, kind: input, shape index: {}]
  %s1 = inlined_call_operand.vmem [shape: f32[288,64], index: 1, kind: input, shape index: {}]
  %s2 = inlined_call_operand.vmem [shape: f32[1,64], index: 2, kind: input, shape index: {}]
  %s3 = inlined_call_operand.vmem [shape: f32[98,64], index: 3, kind: output, shape index: {}]
  %s4 = sld [smem:[#allocation0]]
  $region22: #{dueling_q_forward.6} parent=0
    _
  %s6 = ssub.s32 1, %s4
  %s7 = scalar_select 0, %s6, %s4
  // Predicated region
  $region2: #{dueling_q_forward.6} parent=0 // pred_check
    _
  $region3: #{dueling_q_forward.6} parent=0 // pred_check_branch
    %9 = sbr.rel (0) target = $region5
  $region4: #{dueling_q_forward.6} parent=0 // pred_region
    _
  $region5: #{dueling_q_forward.6} parent=0 // pred_fallthru
    _
  // Predicated region
  $region6: #{dueling_q_forward.6} parent=0 // pred_check
    _
  $region7: #{dueling_q_forward.6} parent=0 // pred_check_branch
    %11 = sbr.rel (0) target = $region9
  $region8: #{dueling_q_forward.6} parent=0 // pred_region
    _
  $region9: #{dueling_q_forward.6} parent=0 // pred_fallthru
    _
  // Predicated region
  $region10: #{dueling_q_forward.6} parent=0 // pred_check
    _
  $region11: #{dueling_q_forward.6} parent=0 // pred_check_branch
    %13 = sbr.rel (0) target = $region13
  $region12: #{dueling_q_forward.6} parent=0 // pred_region
    _
  $region13: #{dueling_q_forward.6} parent=0 // pred_fallthru
    _
  %v14 = vld [vmem:[%s0] sm:$0xff]
  %v15 = vld [vmem:[%s0 + $0x8] sm:$0xff]
  %v16 = vld [vmem:[%s0 + $0x10] sm:$0xff]
  %v17 = vld [vmem:[%s0 + $0x18] sm:$0xff]
  %v18 = vld [vmem:[%s0 + $0x20] sm:$0xff]
  %v19 = vld [vmem:[%s0 + $0x28] sm:$0xff]
  %v20 = vld [vmem:[%s0 + $0x30] sm:$0xff]
  %v21 = vld [vmem:[%s0 + $0x38] sm:$0xff]
  %v22 = vld [vmem:[%s0 + $0x40] sm:$0xff]
  %v23 = vld [vmem:[%s0 + $0x48] sm:$0xff]
  %v24 = vld [vmem:[%s0 + $0x50] sm:$0xff]
  %v25 = vld [vmem:[%s0 + $0x58] sm:$0xff]
  %v26 = vld [vmem:[%s0 + $0x60] sm:$0xff]
  %v27 = vld [vmem:[%s0 + $0x68] sm:$0xff]
  %v28 = vld [vmem:[%s0 + $0x70] sm:$0xff]
  %v29 = vld [vmem:[%s0 + $0x78] sm:$0xff]
  %v30 = vld [vmem:[%s0 + $0x80] sm:$0xff]
  %v31 = vld [vmem:[%s0 + $0x88] sm:$0xff]
  %v32 = vld [vmem:[%s0 + $0x90] sm:$0xff]
  %v33 = vld [vmem:[%s0 + $0x98] sm:$0xff]
  %v34 = vld [vmem:[%s0 + $0xa0] sm:$0xff]
  %v35 = vld [vmem:[%s0 + $0xa8] sm:$0xff]
  %v36 = vld [vmem:[%s0 + $0xb0] sm:$0xff]
  %v37 = vld [vmem:[%s0 + $0xb8] sm:$0xff]
  %v38 = vld [vmem:[%s0 + $0xc0] sm:$0xff]
  %v39 = vld [vmem:[%s0 + $0xc8] sm:$0xff]
  %v40 = vld [vmem:[%s0 + $0xd0] sm:$0xff]
  %v41 = vld [vmem:[%s0 + $0xd8] sm:$0xff]
  %v42 = vld [vmem:[%s0 + $0xe0] sm:$0xff]
  %v43 = vld [vmem:[%s0 + $0xe8] sm:$0xff]
  %v44 = vld [vmem:[%s0 + $0xf0] sm:$0xff]
  %v45 = vld [vmem:[%s0 + $0xf8] sm:$0xff]
  %v46 = vld [vmem:[%s0 + $0x100] sm:$0xff]
  %v47 = vld [vmem:[%s0 + $0x108] sm:$0xff]
  %v48 = vld [vmem:[%s0 + $0x110] sm:$0xff]
  %v49 = vld [vmem:[%s0 + $0x118] sm:$0xff]
  %v50 = vld [vmem:[%s0 + $0x120] sm:$0x3]
  %v51 = vld [vmem:[%s0 + $0x128] sm:$0x3]
  %v52 = vld [vmem:[%s0 + $0x130] sm:$0x3]
  %v53 = vld [vmem:[%s1] sm:$0xff]
  %v54 = vld [vmem:[%s1 + $0x8] sm:$0xff]
  %v55 = vld [vmem:[%s1 + $0x10] sm:$0xff]
  %v56 = vld [vmem:[%s1 + $0x18] sm:$0xff]
  %v57 = vld [vmem:[%s1 + $0x20] sm:$0xff]
  %v58 = vld [vmem:[%s1 + $0x28] sm:$0xff]
  %v59 = vld [vmem:[%s1 + $0x30] sm:$0xff]
  %v60 = vld [vmem:[%s1 + $0x38] sm:$0xff]
  %v61 = vld [vmem:[%s1 + $0x40] sm:$0xff]
  %v62 = vld [vmem:[%s1 + $0x48] sm:$0xff]
  %v63 = vld [vmem:[%s1 + $0x50] sm:$0xff]
  %v64 = vld [vmem:[%s1 + $0x58] sm:$0xff]
  %v65 = vld [vmem:[%s1 + $0x60] sm:$0xff]
  %v66 = vld [vmem:[%s1 + $0x68] sm:$0xff]
  %v67 = vld [vmem:[%s1 + $0x70] sm:$0xff]
  %v68 = vld [vmem:[%s1 + $0x78] sm:$0xff]
  %v69 = vld [vmem:[%s1 + $0x80] sm:$0xff]
  %v70 = vld [vmem:[%s1 + $0x88] sm:$0xff]
  %v71 = vld [vmem:[%s1 + $0x90] sm:$0xff]
  %v72 = vld [vmem:[%s1 + $0x98] sm:$0xff]
  %v73 = vld [vmem:[%s1 + $0xa0] sm:$0xff]
  %v74 = vld [vmem:[%s1 + $0xa8] sm:$0xff]
  %v75 = vld [vmem:[%s1 + $0xb0] sm:$0xff]
  %v76 = vld [vmem:[%s1 + $0xb8] sm:$0xff]
  %v77 = vld [vmem:[%s1 + $0xc0] sm:$0xff]
  %v78 = vld [vmem:[%s1 + $0xc8] sm:$0xff]
  %v79 = vld [vmem:[%s1 + $0xd0] sm:$0xff]
  %v80 = vld [vmem:[%s1 + $0xd8] sm:$0xff]
  %v81 = vld [vmem:[%s1 + $0xe0] sm:$0xff]
  %v82 = vld [vmem:[%s1 + $0xe8] sm:$0xff]
  %v83 = vld [vmem:[%s1 + $0xf0] sm:$0xff]
  %v84 = vld [vmem:[%s1 + $0xf8] sm:$0xff]
  %v85 = vld [vmem:[%s1 + $0x100] sm:$0xff]
  %v86 = vld [vmem:[%s1 + $0x108] sm:$0xff]
  %v87 = vld [vmem:[%s1 + $0x110] sm:$0xff]
  %v88 = vld [vmem:[%s1 + $0x118] sm:$0xff]
  %v89 = vld [vmem:[%s2] sm:$0x1]
  %v91 = vlaneseq
  %v92 = vshrl.u32 %v91, 7
  %v93 = vsub.s32 0, %v92
  %v94 = vrot.slane %v89, %v93
  %vm96 = vcmask 261120
  %v98 = vsel %vm96, %v16, 0
  %v101 = vsel %vm96, %v19, 0
  %v104 = vsel %vm96, %v22, 0
  %v107 = vsel %vm96, %v25, 0
  %v110 = vsel %vm96, %v28, 0
  %v113 = vsel %vm96, %v31, 0
  %v116 = vsel %vm96, %v34, 0
  %v119 = vsel %vm96, %v37, 0
  %v122 = vsel %vm96, %v40, 0
  %v125 = vsel %vm96, %v43, 0
  %v128 = vsel %vm96, %v46, 0
  %v131 = vsel %vm96, %v49, 0
  %v134 = vsel %vm96, %v52, 0
  %136 = vmatprep.subr.mxu0 0.0
  %137 = vmatpush1.msra.mxu0 %v53
  %138 = vmatprep.subr.mxu0 0.0
  %139 = vmatpush1.msra.mxu0 %v54
  %140 = vmatprep.subr.mxu0 0.0
  %141 = vmatpush1.msra.mxu0 %v55
  %142 = vmatprep.subr.mxu0 0.0
  %143 = vmatpush1.msra.mxu0 %v56
  %144 = vmatprep.subr.mxu0 0.0
  %145 = vmatpush1.msra.mxu0 %v57
  %146 = vmatprep.subr.mxu0 0.0
  %147 = vmatpush1.msra.mxu0 %v58
  %148 = vmatprep.subr.mxu0 0.0
  %149 = vmatpush1.msra.mxu0 %v59
  %150 = vmatprep.subr.mxu0 0.0
  %151 = vmatpush1.msra.mxu0 %v60
  %152 = vmatprep.subr.mxu0 0.0
  %153 = vmatpush1.msra.mxu0 %v61
  %154 = vmatprep.subr.mxu0 0.0
  %155 = vmatpush1.msra.mxu0 %v62
  %156 = vmatprep.subr.mxu0 0.0
  %157 = vmatpush1.msra.mxu0 %v63
  %158 = vmatprep.subr.mxu0 0.0
  %159 = vmatpush1.msra.mxu0 %v64
  %160 = vmatprep.subr.mxu0 0.0
  %161 = vmatpush1.msra.mxu0 %v65
  %162 = vmatprep.subr.mxu0 0.0
  %163 = vmatpush1.msra.mxu0 %v66
  %164 = vmatprep.subr.mxu0 0.0
  %165 = vmatpush1.msra.mxu0 %v67
  %166 = vmatprep.subr.mxu0 0.0
  %167 = vmatpush1.msra.mxu0 %v68
  %168 = vmatprep.subr.mxu0 0.0
  %169 = vmatpush1.msra.mxu0 %v69
  %170 = vmatprep.subr.mxu0 0.0
  %171 = vmatpush1.msra.mxu0 %v70
  %172 = vmatprep.subr.mxu0 0.0
  %173 = vmatpush1.msra.mxu0 %v71
  %174 = vmatprep.subr.mxu0 0.0
  %175 = vmatpush1.msra.mxu0 %v72
  %176 = vmatprep.subr.mxu0 0.0
  %177 = vmatpush1.msra.mxu0 %v73
  %178 = vmatprep.subr.mxu0 0.0
  %179 = vmatpush1.msra.mxu0 %v74
  %180 = vmatprep.subr.mxu0 0.0
  %181 = vmatpush1.msra.mxu0 %v75
  %182 = vmatprep.subr.mxu0 0.0
  %183 = vmatpush1.msra.mxu0 %v76
  %184 = vmatprep.subr.mxu0 0.0
  %185 = vmatpush1.msra.mxu0 %v77
  %186 = vmatprep.subr.mxu0 0.0
  %187 = vmatpush1.msra.mxu0 %v78
  %188 = vmatprep.subr.mxu0 0.0
  %189 = vmatpush1.msra.mxu0 %v79
  %190 = vmatprep.subr.mxu0 0.0
  %191 = vmatpush1.msra.mxu0 %v80
  %192 = vmatprep.subr.mxu0 0.0
  %193 = vmatpush1.msra.mxu0 %v81
  %194 = vmatprep.subr.mxu0 0.0
  %195 = vmatpush1.msra.mxu0 %v82
  %196 = vmatprep.subr.mxu0 0.0
  %197 = vmatpush1.msra.mxu0 %v83
  %198 = vmatprep.subr.mxu0 0.0
  %199 = vmatpush1.msra.mxu0 %v84
  %200 = vmatprep.mubr.f32.mxu0 %v15
  %201 = vmatmul.mubr.f32.gmra.mrb[0].mxu0 %v14
  %v202 = vpop.f32.mrb[0].mxu0
  %v203 = vadd.f32 %v94, %v202
  %v204 = vpop.f32.mrb[0].mxu0
  %205 = vmatprep.mubr.f32.mxu0 %v18
  %206 = vmatmul.mubr.f32.gmra.mrb[0].mxu0 %v17
  %v207 = vpop.f32.mrb[0].mxu0
  %v208 = vadd.f32 %v94, %v207
  %v209 = vpop.f32.mrb[0].mxu0
  %210 = vmatprep.mubr.f32.mxu0 %v21
  %211 = vmatmul.mubr.f32.gmra.mrb[0].mxu0 %v20
  %v212 = vpop.f32.mrb[0].mxu0
  %v213 = vadd.f32 %v94, %v212
  %v214 = vpop.f32.mrb[0].mxu0
  %215 = vmatprep.mubr.f32.mxu0 %v24
  %216 = vmatmul.mubr.f32.gmra.mrb[0].mxu0 %v23
  %v217 = vpop.f32.mrb[0].mxu0
  %v218 = vadd.f32 %v94, %v217
  %v219 = vpop.f32.mrb[0].mxu0
  %220 = vmatprep.mubr.f32.mxu0 %v27
  %221 = vmatmul.mubr.f32.gmra.mrb[0].mxu0 %v26
  %v222 = vpop.f32.mrb[0].mxu0
  %v223 = vadd.f32 %v94, %v222
  %v224 = vpop.f32.mrb[0].mxu0
  %225 = vmatprep.mubr.f32.mxu0 %v30
  %226 = vmatmul.mubr.f32.gmra.mrb[0].mxu0 %v29
  %v227 = vpop.f32.mrb[0].mxu0
  %v228 = vadd.f32 %v94, %v227
  %v229 = vpop.f32.mrb[0].mxu0
  %230 = vmatprep.mubr.f32.mxu0 %v33
  %231 = vmatmul.mubr.f32.gmra.mrb[0].mxu0 %v32
  %v232 = vpop.f32.mrb[0].mxu0
  %v233 = vadd.f32 %v94, %v232
  %v234 = vpop.f32.mrb[0].mxu0
  %235 = vmatprep.mubr.f32.mxu0 %v36
  %236 = vmatmul.mubr.f32.gmra.mrb[0].mxu0 %v35
  %v237 = vpop.f32.mrb[0].mxu0
  %v238 = vadd.f32 %v94, %v237
  %v239 = vpop.f32.mrb[0].mxu0
  %240 = vmatprep.mubr.f32.mxu0 %v39
  %241 = vmatmul.mubr.f32.gmra.mrb[0].mxu0 %v38
  %v242 = vpop.f32.mrb[0].mxu0
  %v243 = vadd.f32 %v94, %v242
  %v244 = vpop.f32.mrb[0].mxu0
  %245 = vmatprep.mubr.f32.mxu0 %v42
  %246 = vmatmul.mubr.f32.gmra.mrb[0].mxu0 %v41
  %v247 = vpop.f32.mrb[0].mxu0
  %v248 = vadd.f32 %v94, %v247
  %v249 = vpop.f32.mrb[0].mxu0
  %250 = vmatprep.mubr.f32.mxu0 %v45
  %251 = vmatmul.mubr.f32.gmra.mrb[0].mxu0 %v44
  %v252 = vpop.f32.mrb[0].mxu0
  %v253 = vadd.f32 %v94, %v252
  %v254 = vpop.f32.mrb[0].mxu0
  %255 = vmatprep.mubr.f32.mxu0 %v48
  %256 = vmatmul.mubr.f32.gmra.mrb[0].mxu0 %v47
  %v257 = vpop.f32.mrb[0].mxu0
  %v258 = vadd.f32 %v94, %v257
  %v259 = vpop.f32.mrb[0].mxu0
  %260 = vmatprep.mubr.f32.mxu0 %v51
  %261 = vmatmul.mubr.f32.gmra.mrb[0].mxu0 %v50
  %v262 = vpop.f32.mrb[0].mxu0
  %v263 = vadd.f32 %v94, %v262
  %v264 = vpop.f32.mrb[0].mxu0
  %265 = vdwg.mxu0
  %266 = vmatprep.subr.mxu0 0.0
  %267 = vmatpush1.msra.mxu0 %v85
  %268 = vmatprep.subr.mxu0 0.0
  %269 = vmatpush1.msra.mxu0 %v86
  %270 = vmatprep.subr.mxu0 0.0
  %271 = vmatpush1.msra.mxu0 %v87
  %272 = vmatprep.subr.mxu0 0.0
  %273 = vmatpush1.msra.mxu0 %v88
  %274 = vmatprep.subr.mxu0 0.0
  %275 = vmatpush1.msra.mxu0 0.0
  %276 = vmatprep.subr.mxu0 0.0
  %277 = vmatpush1.msra.mxu0 0.0
  %278 = vmatprep.subr.mxu0 0.0
  %279 = vmatpush1.msra.mxu0 0.0
  %280 = vmatprep.subr.mxu0 0.0
  %281 = vmatpush1.msra.mxu0 0.0
  %282 = vmatprep.subr.mxu0 0.0
  %283 = vmatpush1.msra.mxu0 0.0
  %284 = vmatprep.subr.mxu0 0.0
  %285 = vmatpush1.msra.mxu0 0.0
  %286 = vmatprep.subr.mxu0 0.0
  %287 = vmatpush1.msra.mxu0 0.0
  %288 = vmatprep.subr.mxu0 0.0
  %289 = vmatpush1.msra.mxu0 0.0
  %290 = vmatprep.subr.mxu0 0.0
  %291 = vmatpush1.msra.mxu0 0.0
  %292 = vmatprep.subr.mxu0 0.0
  %293 = vmatpush1.msra.mxu0 0.0
  %294 = vmatprep.subr.mxu0 0.0
  %295 = vmatpush1.msra.mxu0 0.0
  %296 = vmatprep.subr.mxu0 0.0
  %297 = vmatpush1.msra.mxu0 0.0
  %298 = vmatprep.subr.mxu0 0.0
  %299 = vmatpush1.msra.mxu0 0.0
  %300 = vmatprep.subr.mxu0 0.0
  %301 = vmatpush1.msra.mxu0 0.0
  %302 = vmatprep.subr.mxu0 0.0
  %303 = vmatpush1.msra.mxu0 0.0
  %304 = vmatprep.subr.mxu0 0.0
  %305 = vmatpush1.msra.mxu0 0.0
  %306 = vmatprep.subr.mxu0 0.0
  %307 = vmatpush1.msra.mxu0 0.0
  %308 = vmatprep.subr.mxu0 0.0
  %309 = vmatpush1.msra.mxu0 0.0
  %310 = vmatprep.subr.mxu0 0.0
  %311 = vmatpush1.msra.mxu0 0.0
  %312 = vmatprep.subr.mxu0 0.0
  %313 = vmatpush1.msra.mxu0 0.0
  %314 = vmatprep.subr.mxu0 0.0
  %315 = vmatpush1.msra.mxu0 0.0
  %316 = vmatprep.subr.mxu0 0.0
  %317 = vmatpush1.msra.mxu0 0.0
  %318 = vmatprep.subr.mxu0 0.0
  %319 = vmatpush1.msra.mxu0 0.0
  %320 = vmatprep.subr.mxu0 0.0
  %321 = vmatpush1.msra.mxu0 0.0
  %322 = vmatprep.subr.mxu0 0.0
  %323 = vmatpush1.msra.mxu0 0.0
  %324 = vmatprep.subr.mxu0 0.0
  %325 = vmatpush1.msra.mxu0 0.0
  %326 = vmatprep.subr.mxu0 0.0
  %327 = vmatpush1.msra.mxu0 0.0
  %328 = vmatprep.subr.mxu0 0.0
  %329 = vmatpush1.msra.mxu0 0.0
  %330 = vmatprep.mubr.f32.mxu0 0.0
  %331 = vmatmul.mubr.f32.gmra.mrb[0].mxu0 %v98
  %v332 = vpop.f32.mrb[0].mxu0
  %v333 = vadd.f32 %v203, %v332
  %v334 = vpop.f32.mrb[0].mxu0
  %335 = vmatprep.mubr.f32.mxu0 0.0
  %336 = vmatmul.mubr.f32.gmra.mrb[0].mxu0 %v101
  %v337 = vpop.f32.mrb[0].mxu0
  %v338 = vadd.f32 %v208, %v337
  %v339 = vpop.f32.mrb[0].mxu0
  %340 = vmatprep.mubr.f32.mxu0 0.0
  %341 = vmatmul.mubr.f32.gmra.mrb[0].mxu0 %v104
  %v342 = vpop.f32.mrb[0].mxu0
  %v343 = vadd.f32 %v213, %v342
  %v344 = vpop.f32.mrb[0].mxu0
  %345 = vmatprep.mubr.f32.mxu0 0.0
  %346 = vmatmul.mubr.f32.gmra.mrb[0].mxu0 %v107
  %v347 = vpop.f32.mrb[0].mxu0
  %v348 = vadd.f32 %v218, %v347
  %v349 = vpop.f32.mrb[0].mxu0
  %350 = vmatprep.mubr.f32.mxu0 0.0
  %351 = vmatmul.mubr.f32.gmra.mrb[0].mxu0 %v110
  %v352 = vpop.f32.mrb[0].mxu0
  %v353 = vadd.f32 %v223, %v352
  %v354 = vpop.f32.mrb[0].mxu0
  %355 = vmatprep.mubr.f32.mxu0 0.0
  %356 = vmatmul.mubr.f32.gmra.mrb[0].mxu0 %v113
  %v357 = vpop.f32.mrb[0].mxu0
  %v358 = vadd.f32 %v228, %v357
  %v359 = vpop.f32.mrb[0].mxu0
  %360 = vmatprep.mubr.f32.mxu0 0.0
  %361 = vmatmul.mubr.f32.gmra.mrb[0].mxu0 %v116
  %v362 = vpop.f32.mrb[0].mxu0
  %v363 = vadd.f32 %v233, %v362
  %v364 = vpop.f32.mrb[0].mxu0
  %365 = vmatprep.mubr.f32.mxu0 0.0
  %366 = vmatmul.mubr.f32.gmra.mrb[0].mxu0 %v119
  %v367 = vpop.f32.mrb[0].mxu0
  %v368 = vadd.f32 %v238, %v367
  %v369 = vpop.f32.mrb[0].mxu0
  %370 = vmatprep.mubr.f32.mxu0 0.0
  %371 = vmatmul.mubr.f32.gmra.mrb[0].mxu0 %v122
  %v372 = vpop.f32.mrb[0].mxu0
  %v373 = vadd.f32 %v243, %v372
  %v374 = vpop.f32.mrb[0].mxu0
  %375 = vmatprep.mubr.f32.mxu0 0.0
  %376 = vmatmul.mubr.f32.gmra.mrb[0].mxu0 %v125
  %v377 = vpop.f32.mrb[0].mxu0
  %v378 = vadd.f32 %v248, %v377
  %v379 = vpop.f32.mrb[0].mxu0
  %380 = vmatprep.mubr.f32.mxu0 0.0
  %381 = vmatmul.mubr.f32.gmra.mrb[0].mxu0 %v128
  %v382 = vpop.f32.mrb[0].mxu0
  %v383 = vadd.f32 %v253, %v382
  %v384 = vpop.f32.mrb[0].mxu0
  %385 = vmatprep.mubr.f32.mxu0 0.0
  %386 = vmatmul.mubr.f32.gmra.mrb[0].mxu0 %v131
  %v387 = vpop.f32.mrb[0].mxu0
  %v388 = vadd.f32 %v258, %v387
  %v389 = vpop.f32.mrb[0].mxu0
  %390 = vmatprep.mubr.f32.mxu0 0.0
  %391 = vmatmul.mubr.f32.gmra.mrb[0].mxu0 %v134
  %v392 = vpop.f32.mrb[0].mxu0
  %v393 = vadd.f32 %v263, %v392
  %v394 = vpop.f32.mrb[0].mxu0
  %395 = vdwg.mxu0
  %v396 = vmax.f32 %v333, 0.0
  %v397 = vmax.f32 %v338, 0.0
  %v398 = vmax.f32 %v343, 0.0
  %v399 = vmax.f32 %v348, 0.0
  %v400 = vmax.f32 %v353, 0.0
  %v401 = vmax.f32 %v358, 0.0
  %v402 = vmax.f32 %v363, 0.0
  %v403 = vmax.f32 %v368, 0.0
  %v404 = vmax.f32 %v373, 0.0
  %v405 = vmax.f32 %v378, 0.0
  %v406 = vmax.f32 %v383, 0.0
  %v407 = vmax.f32 %v388, 0.0
  %v408 = vmax.f32 %v393, 0.0
  %vm409 = vcmask 523264
  %410 = vst.msk [vmem:[%s3] sm:$0xff] %vm409, %v396
  %411 = vst.msk [vmem:[%s3 + $0x8] sm:$0xff] %vm409, %v397
  %412 = vst.msk [vmem:[%s3 + $0x10] sm:$0xff] %vm409, %v398
  %413 = vst.msk [vmem:[%s3 + $0x18] sm:$0xff] %vm409, %v399
  %414 = vst.msk [vmem:[%s3 + $0x20] sm:$0xff] %vm409, %v400
  %415 = vst.msk [vmem:[%s3 + $0x28] sm:$0xff] %vm409, %v401
  %416 = vst.msk [vmem:[%s3 + $0x30] sm:$0xff] %vm409, %v402
  %417 = vst.msk [vmem:[%s3 + $0x38] sm:$0xff] %vm409, %v403
  %418 = vst.msk [vmem:[%s3 + $0x40] sm:$0xff] %vm409, %v404
  %419 = vst.msk [vmem:[%s3 + $0x48] sm:$0xff] %vm409, %v405
  %420 = vst.msk [vmem:[%s3 + $0x50] sm:$0xff] %vm409, %v406
  %421 = vst.msk [vmem:[%s3 + $0x58] sm:$0xff] %vm409, %v407
  %vm422 = vcmask 517120
  %423 = vst.msk [vmem:[%s3 + $0x60] sm:$0x3] %vm422, %v408
  // Predicated region
  $region14: #{dueling_q_forward.6} parent=0 // pred_check
    _
  $region15: #{dueling_q_forward.6} parent=0 // pred_check_branch
    %425 = sbr.rel (0) target = $region17
  $region16: #{dueling_q_forward.6} parent=0 // pred_region
    _
  $region17: #{dueling_q_forward.6} parent=0 // pred_fallthru
    _
  // Predicated region
  $region18: #{dueling_q_forward.6} parent=0 // pred_check
    _
  $region19: #{dueling_q_forward.6} parent=0 // pred_check_branch
    %427 = sbr.rel (0) target = $region21
  $region20: #{dueling_q_forward.6} parent=0 // pred_region
    _
  $region21: #{dueling_q_forward.6} parent=0 // pred_fallthru
    _

// kernel: dueling_q_forward.7
$region0: #{dueling_q_forward.7}
  #allocation0 [shape = 'u32[]', space=smem, size = 0x4, offset = 0x4, fixed_abs, tag = 'smem constant byte address 0x4 - core index']
  #allocation1 [shape = 'u32[144,128]{1,0:T(1,128)}', space=vmem, size = 0x12000, scoped, tag = 'internal scratch']
  %s0 = inlined_call_operand.vmem [shape: f32[2,3136], index: 0, kind: input, shape index: {}]
  %s1 = inlined_call_operand.vmem [shape: bf16[3136,1024], index: 1, kind: input, shape index: {}]
  %s2 = inlined_call_operand.vmem [shape: f32[1,1024], index: 2, kind: input, shape index: {}]
  %s3 = inlined_call_operand.vmem [shape: f32[1024,7], index: 3, kind: input, shape index: {}]
  %s4 = inlined_call_operand.vmem [shape: f32[1,7], index: 4, kind: input, shape index: {}]
  %s5 = inlined_call_operand.hbm [shape: f32[2,6], index: 5, kind: output, shape index: {}]
  %s6 = sld [smem:[#allocation0]]
  $region30: #{dueling_q_forward.7} parent=0
    _
  %s8 = ssub.s32 1, %s6
  %s9 = scalar_select 0, %s8, %s6
  $region1: #{dueling_q_forward.7} parent=0
    #allocation2 [shape = 'u8[1024]{0}', space=vmem, size = 0x400, scoped, tag = 'output window, operand 0, single buffered']
    #allocation3 [shape = 's32[1]{0}', space=sflag, size = 0x4, scoped, tag = 'scoped memory for dueling_q_forward.7']
    %10 = vsyncpa [#allocation3], 0
    // Predicated region
    $region2: #{dueling_q_forward.7} parent=1 // pred_check
      _
    $region3: #{dueling_q_forward.7} parent=1 // pred_check_branch
      %12 = sbr.rel (0) target = $region5
    $region4: #{dueling_q_forward.7} parent=1 // pred_region
      _
    $region5: #{dueling_q_forward.7} parent=1 // pred_fallthru
      _
    // Predicated region
    $region6: #{dueling_q_forward.7} parent=1 // pred_check
      _
    $region7: #{dueling_q_forward.7} parent=1 // pred_check_branch
      %14 = sbr.rel (0) target = $region9
    $region8: #{dueling_q_forward.7} parent=1 // pred_region
      _
    $region9: #{dueling_q_forward.7} parent=1 // pred_fallthru
      _
    // Predicated region
    $region10: #{dueling_q_forward.7} parent=1 // pred_check
      _
    $region11: #{dueling_q_forward.7} parent=1 // pred_check_branch
      %16 = sbr.rel (0) target = $region13
    $region12: #{dueling_q_forward.7} parent=1 // pred_region
      _
    $region13: #{dueling_q_forward.7} parent=1 // pred_fallthru
      _
    // Predicated region
    $region14: #{dueling_q_forward.7} parent=1 // pred_check
      _
    $region15: #{dueling_q_forward.7} parent=1 // pred_check_branch
      %18 = sbr.rel (0) target = $region17
    $region16: #{dueling_q_forward.7} parent=1 // pred_region
      _
    $region17: #{dueling_q_forward.7} parent=1 // pred_fallthru
      _
    // Predicated region
    $region18: #{dueling_q_forward.7} parent=1 // pred_check
      _
    $region19: #{dueling_q_forward.7} parent=1 // pred_check_branch
      %20 = sbr.rel (0) target = $region21
    $region20: #{dueling_q_forward.7} parent=1 // pred_region
      _
    $region21: #{dueling_q_forward.7} parent=1 // pred_fallthru
      _
    %v22 = vld [vmem:[%s0] sm:$0xff]
    %v23 = vld [vmem:[%s0 + $0x8] sm:$0xff]
    %v24 = vld [vmem:[%s0 + $0x10] sm:$0xff]
    %v25 = vld [vmem:[%s0 + $0x18] sm:$0xff]
    %v26 = vld [vmem:[%s0 + $0x20] sm:$0xff]
    %v27 = vld [vmem:[%s0 + $0x28] sm:$0xff]
    %v28 = vld [vmem:[%s0 + $0x30] sm:$0x3]
    %v36 = vcombine.high %v22, %v22
    %v38 = vunpack.c.l.s4 1983009808
    %v39 = vunpack.c.0.s8 %v38
    %v40 = vlaneseq
    %v41 = vshrl.u32 %v40, 7
    %v42 = vsub.s32 %v39, %v41
    %v43 = vrot.slane %v22, %v42
    %v45 = vunpack.c.l.s4 1983009808
    %v46 = vunpack.c.0.s8 %v45
    %v47 = vlaneseq
    %v48 = vshrl.u32 %v47, 7
    %v49 = vsub.s32 %v46, %v48
    %v50 = vrot.slane %v36, %v49
    %v51 = vcombine.high %v43, %v43
    %v52 = vcombine.high %v50, %v50
    %v53 = vcombine.high %v23, %v23
    %v55 = vunpack.c.l.s4 1983009808
    %v56 = vunpack.c.0.s8 %v55
    %v57 = vlaneseq
    %v58 = vshrl.u32 %v57, 7
    %v59 = vsub.s32 %v56, %v58
    %v60 = vrot.slane %v23, %v59
    %v62 = vunpack.c.l.s4 1983009808
    %v63 = vunpack.c.0.s8 %v62
    %v64 = vlaneseq
    %v65 = vshrl.u32 %v64, 7
    %v66 = vsub.s32 %v63, %v65
    %v67 = vrot.slane %v53, %v66
    %v68 = vcombine.high %v60, %v60
    %v69 = vcombine.high %v67, %v67
    %v70 = vcombine.high %v24, %v24
    %v72 = vunpack.c.l.s4 1983009808
    %v73 = vunpack.c.0.s8 %v72
    %v74 = vlaneseq
    %v75 = vshrl.u32 %v74, 7
    %v76 = vsub.s32 %v73, %v75
    %v77 = vrot.slane %v24, %v76
    %v79 = vunpack.c.l.s4 1983009808
    %v80 = vunpack.c.0.s8 %v79
    %v81 = vlaneseq
    %v82 = vshrl.u32 %v81, 7
    %v83 = vsub.s32 %v80, %v82
    %v84 = vrot.slane %v70, %v83
    %v85 = vcombine.high %v77, %v77
    %v86 = vcombine.high %v84, %v84
    %v87 = vcombine.high %v25, %v25
    %v89 = vunpack.c.l.s4 1983009808
    %v90 = vunpack.c.0.s8 %v89
    %v91 = vlaneseq
    %v92 = vshrl.u32 %v91, 7
    %v93 = vsub.s32 %v90, %v92
    %v94 = vrot.slane %v25, %v93
    %v96 = vunpack.c.l.s4 1983009808
    %v97 = vunpack.c.0.s8 %v96
    %v98 = vlaneseq
    %v99 = vshrl.u32 %v98, 7
    %v100 = vsub.s32 %v97, %v99
    %v101 = vrot.slane %v87, %v100
    %v102 = vcombine.high %v94, %v94
    %v103 = vcombine.high %v101, %v101
    %v104 = vcombine.high %v26, %v26
    %v106 = vunpack.c.l.s4 1983009808
    %v107 = vunpack.c.0.s8 %v106
    %v108 = vlaneseq
    %v109 = vshrl.u32 %v108, 7
    %v110 = vsub.s32 %v107, %v109
    %v111 = vrot.slane %v26, %v110
    %v113 = vunpack.c.l.s4 1983009808
    %v114 = vunpack.c.0.s8 %v113
    %v115 = vlaneseq
    %v116 = vshrl.u32 %v115, 7
    %v117 = vsub.s32 %v114, %v116
    %v118 = vrot.slane %v104, %v117
    %v119 = vcombine.high %v111, %v111
    %v120 = vcombine.high %v118, %v118
    %v121 = vcombine.high %v27, %v27
    %v123 = vunpack.c.l.s4 1983009808
    %v124 = vunpack.c.0.s8 %v123
    %v125 = vlaneseq
    %v126 = vshrl.u32 %v125, 7
    %v127 = vsub.s32 %v124, %v126
    %v128 = vrot.slane %v27, %v127
    %v130 = vunpack.c.l.s4 1983009808
    %v131 = vunpack.c.0.s8 %v130
    %v132 = vlaneseq
    %v133 = vshrl.u32 %v132, 7
    %v134 = vsub.s32 %v131, %v133
    %v135 = vrot.slane %v121, %v134
    %v136 = vcombine.high %v128, %v128
    %v137 = vcombine.high %v135, %v135
    %v139 = vunpack.c.l.s4 1983009808
    %v140 = vunpack.c.0.s8 %v139
    %v141 = vlaneseq
    %v142 = vshrl.u32 %v141, 7
    %v143 = vsub.s32 %v140, %v142
    %v144 = vrot.slane %v28, %v143
    %v170 = vpack.c.bf16 %v43, %v43
    %v171 = vpack.c.bf16 %v51, %v51
    %v172 = vpack.c.bf16 %v50, %v50
    %v173 = vpack.c.bf16 %v52, %v52
    %v174 = vpack.c.bf16 %v60, %v60
    %v175 = vpack.c.bf16 %v68, %v68
    %v176 = vpack.c.bf16 %v67, %v67
    %v177 = vpack.c.bf16 %v69, %v69
    %v178 = vpack.c.bf16 %v77, %v77
    %v179 = vpack.c.bf16 %v85, %v85
    %v180 = vpack.c.bf16 %v84, %v84
    %v181 = vpack.c.bf16 %v86, %v86
    %v182 = vpack.c.bf16 %v94, %v94
    %v183 = vpack.c.bf16 %v102, %v102
    %v184 = vpack.c.bf16 %v101, %v101
    %v185 = vpack.c.bf16 %v103, %v103
    %v186 = vpack.c.bf16 %v111, %v111
    %v187 = vpack.c.bf16 %v119, %v119
    %v188 = vpack.c.bf16 %v118, %v118
    %v189 = vpack.c.bf16 %v120, %v120
    %v190 = vpack.c.bf16 %v128, %v128
    %v191 = vpack.c.bf16 %v136, %v136
    %v192 = vpack.c.bf16 %v135, %v135
    %v193 = vpack.c.bf16 %v137, %v137
    %v194 = vpack.c.bf16 %v144, %v144
    %v195 = vld [vmem:[%s1] sm:$0xff]
    %v196 = vld [vmem:[%s1 + $0x8] sm:$0xff]
    %v197 = vld [vmem:[%s1 + $0x10] sm:$0xff]
    %v198 = vld [vmem:[%s1 + $0x18] sm:$0xff]
    %v199 = vld [vmem:[%s1 + $0x20] sm:$0xff]
    %v200 = vld [vmem:[%s1 + $0x28] sm:$0xff]
    %v201 = vld [vmem:[%s1 + $0x30] sm:$0xff]
    %v202 = vld [vmem:[%s1 + $0x38] sm:$0xff]
    %v203 = vld [vmem:[%s1 + $0x40] sm:$0xff]
    %v204 = vld [vmem:[%s1 + $0x48] sm:$0xff]
    %v205 = vld [vmem:[%s1 + $0x50] sm:$0xff]
    %v206 = vld [vmem:[%s1 + $0x58] sm:$0xff]
    %v207 = vld [vmem:[%s1 + $0x60] sm:$0xff]
    %v208 = vld [vmem:[%s1 + $0x68] sm:$0xff]
    %v209 = vld [vmem:[%s1 + $0x70] sm:$0xff]
    %v210 = vld [vmem:[%s1 + $0x78] sm:$0xff]
    %v211 = vld [vmem:[%s1 + $0x80] sm:$0xff]
    %v212 = vld [vmem:[%s1 + $0x88] sm:$0xff]
    %v213 = vld [vmem:[%s1 + $0x90] sm:$0xff]
    %v214 = vld [vmem:[%s1 + $0x98] sm:$0xff]
    %v215 = vld [vmem:[%s1 + $0xa0] sm:$0xff]
    %v216 = vld [vmem:[%s1 + $0xa8] sm:$0xff]
    %v217 = vld [vmem:[%s1 + $0xb0] sm:$0xff]
    %v218 = vld [vmem:[%s1 + $0xb8] sm:$0xff]
    %v219 = vld [vmem:[%s1 + $0xc0] sm:$0xff]
    %v220 = vld [vmem:[%s1 + $0xc8] sm:$0xff]
    %v221 = vld [vmem:[%s1 + $0xd0] sm:$0xff]
    %v222 = vld [vmem:[%s1 + $0xd8] sm:$0xff]
    %v223 = vld [vmem:[%s1 + $0xe0] sm:$0xff]
    %v224 = vld [vmem:[%s1 + $0xe8] sm:$0xff]
    %v225 = vld [vmem:[%s1 + $0xf0] sm:$0xff]
    %v226 = vld [vmem:[%s1 + $0xf8] sm:$0xff]
    %v227 = vld [vmem:[%s1 + $0x100] sm:$0xff]
    %v228 = vld [vmem:[%s1 + $0x108] sm:$0xff]
    %v229 = vld [vmem:[%s1 + $0x110] sm:$0xff]
    %v230 = vld [vmem:[%s1 + $0x118] sm:$0xff]
    %v231 = vld [vmem:[%s1 + $0x120] sm:$0xff]
    %v232 = vld [vmem:[%s1 + $0x128] sm:$0xff]
    %v233 = vld [vmem:[%s1 + $0x130] sm:$0xff]
    %v234 = vld [vmem:[%s1 + $0x138] sm:$0xff]
    %v235 = vld [vmem:[%s1 + $0x140] sm:$0xff]
    %v236 = vld [vmem:[%s1 + $0x148] sm:$0xff]
    %v237 = vld [vmem:[%s1 + $0x150] sm:$0xff]
    %v238 = vld [vmem:[%s1 + $0x158] sm:$0xff]
    %v239 = vld [vmem:[%s1 + $0x160] sm:$0xff]
    %v240 = vld [vmem:[%s1 + $0x168] sm:$0xff]
    %v241 = vld [vmem:[%s1 + $0x170] sm:$0xff]
    %v242 = vld [vmem:[%s1 + $0x178] sm:$0xff]
    %v243 = vld [vmem:[%s1 + $0x180] sm:$0xff]
    %v244 = vld [vmem:[%s1 + $0x188] sm:$0xff]
    %v245 = vld [vmem:[%s1 + $0x190] sm:$0xff]
    %v246 = vld [vmem:[%s1 + $0x198] sm:$0xff]
    %v247 = vld [vmem:[%s1 + $0x1a0] sm:$0xff]
    %v248 = vld [vmem:[%s1 + $0x1a8] sm:$0xff]
    %v249 = vld [vmem:[%s1 + $0x1b0] sm:$0xff]
    %v250 = vld [vmem:[%s1 + $0x1b8] sm:$0xff]
    %v251 = vld [vmem:[%s1 + $0x1c0] sm:$0xff]
    %v252 = vld [vmem:[%s1 + $0x1c8] sm:$0xff]
    %v253 = vld [vmem:[%s1 + $0x1d0] sm:$0xff]
    %v254 = vld [vmem:[%s1 + $0x1d8] sm:$0xff]
    %v255 = vld [vmem:[%s1 + $0x1e0] sm:$0xff]
    %v256 = vld [vmem:[%s1 + $0x1e8] sm:$0xff]
    %v257 = vld [vmem:[%s1 + $0x1f0] sm:$0xff]
    %v258 = vld [vmem:[%s1 + $0x1f8] sm:$0xff]
    %v259 = vld [vmem:[%s1 + $0x200] sm:$0xff]
    %v260 = vld [vmem:[%s1 + $0x208] sm:$0xff]
    %v261 = vld [vmem:[%s1 + $0x210] sm:$0xff]
    %v262 = vld [vmem:[%s1 + $0x218] sm:$0xff]
    %v263 = vld [vmem:[%s1 + $0x220] sm:$0xff]
    %v264 = vld [vmem:[%s1 + $0x228] sm:$0xff]
    %v265 = vld [vmem:[%s1 + $0x230] sm:$0xff]
    %v266 = vld [vmem:[%s1 + $0x238] sm:$0xff]
    %v267 = vld [vmem:[%s1 + $0x240] sm:$0xff]
    %v268 = vld [vmem:[%s1 + $0x248] sm:$0xff]
    %v269 = vld [vmem:[%s1 + $0x250] sm:$0xff]
    %v270 = vld [vmem:[%s1 + $0x258] sm:$0xff]
    %v271 = vld [vmem:[%s1 + $0x260] sm:$0xff]
    %v272 = vld [vmem:[%s1 + $0x268] sm:$0xff]
    %v273 = vld [vmem:[%s1 + $0x270] sm:$0xff]
    %v274 = vld [vmem:[%s1 + $0x278] sm:$0xff]
    %v275 = vld [vmem:[%s1 + $0x280] sm:$0xff]
    %v276 = vld [vmem:[%s1 + $0x288] sm:$0xff]
    %v277 = vld [vmem:[%s1 + $0x290] sm:$0xff]
    %v278 = vld [vmem:[%s1 + $0x298] sm:$0xff]
    %v279 = vld [vmem:[%s1 + $0x2a0] sm:$0xff]
    %v280 = vld [vmem:[%s1 + $0x2a8] sm:$0xff]
    %v281 = vld [vmem:[%s1 + $0x2b0] sm:$0xff]
    %v282 = vld [vmem:[%s1 + $0x2b8] sm:$0xff]
    %v283 = vld [vmem:[%s1 + $0x2c0] sm:$0xff]
    %v284 = vld [vmem:[%s1 + $0x2c8] sm:$0xff]
    %v285 = vld [vmem:[%s1 + $0x2d0] sm:$0xff]
    %v286 = vld [vmem:[%s1 + $0x2d8] sm:$0xff]
    %v287 = vld [vmem:[%s1 + $0x2e0] sm:$0xff]
    %v288 = vld [vmem:[%s1 + $0x2e8] sm:$0xff]
    %v289 = vld [vmem:[%s1 + $0x2f0] sm:$0xff]
    %v290 = vld [vmem:[%s1 + $0x2f8] sm:$0xff]
    %v291 = vld [vmem:[%s1 + $0x300] sm:$0xff]
    %v292 = vld [vmem:[%s1 + $0x308] sm:$0xff]
    %v293 = vld [vmem:[%s1 + $0x310] sm:$0xff]
    %v294 = vld [vmem:[%s1 + $0x318] sm:$0xff]
    %v295 = vld [vmem:[%s1 + $0x320] sm:$0xff]
    %v296 = vld [vmem:[%s1 + $0x328] sm:$0xff]
    %v297 = vld [vmem:[%s1 + $0x330] sm:$0xff]
    %v298 = vld [vmem:[%s1 + $0x338] sm:$0xff]
    %v299 = vld [vmem:[%s1 + $0x340] sm:$0xff]
    %v300 = vld [vmem:[%s1 + $0x348] sm:$0xff]
    %v301 = vld [vmem:[%s1 + $0x350] sm:$0xff]
    %v302 = vld [vmem:[%s1 + $0x358] sm:$0xff]
    %v303 = vld [vmem:[%s1 + $0x360] sm:$0xff]
    %v304 = vld [vmem:[%s1 + $0x368] sm:$0xff]
    %v305 = vld [vmem:[%s1 + $0x370] sm:$0xff]
    %v306 = vld [vmem:[%s1 + $0x378] sm:$0xff]
    %v307 = vld [vmem:[%s1 + $0x380] sm:$0xff]
    %v308 = vld [vmem:[%s1 + $0x388] sm:$0xff]
    %v309 = vld [vmem:[%s1 + $0x390] sm:$0xff]
    %v310 = vld [vmem:[%s1 + $0x398] sm:$0xff]
    %v311 = vld [vmem:[%s1 + $0x3a0] sm:$0xff]
    %v312 = vld [vmem:[%s1 + $0x3a8] sm:$0xff]
    %v313 = vld [vmem:[%s1 + $0x3b0] sm:$0xff]
    %v314 = vld [vmem:[%s1 + $0x3b8] sm:$0xff]
    %v315 = vld [vmem:[%s1 + $0x3c0] sm:$0xff]
    %v316 = vld [vmem:[%s1 + $0x3c8] sm:$0xff]
    %v317 = vld [vmem:[%s1 + $0x3d0] sm:$0xff]
    %v318 = vld [vmem:[%s1 + $0x3d8] sm:$0xff]
    %v319 = vld [vmem:[%s1 + $0x3e0] sm:$0xff]
    %v320 = vld [vmem:[%s1 + $0x3e8] sm:$0xff]
    %v321 = vld [vmem:[%s1 + $0x3f0] sm:$0xff]
    %v322 = vld [vmem:[%s1 + $0x3f8] sm:$0xff]
    %v323 = vld [vmem:[%s1 + $0x400] sm:$0xff]
    %v324 = vld [vmem:[%s1 + $0x408] sm:$0xff]
    %v325 = vld [vmem:[%s1 + $0x410] sm:$0xff]
    %v326 = vld [vmem:[%s1 + $0x418] sm:$0xff]
    %v327 = vld [vmem:[%s1 + $0x420] sm:$0xff]
    %v328 = vld [vmem:[%s1 + $0x428] sm:$0xff]
    %v329 = vld [vmem:[%s1 + $0x430] sm:$0xff]
    %v330 = vld [vmem:[%s1 + $0x438] sm:$0xff]
    %v331 = vld [vmem:[%s1 + $0x440] sm:$0xff]
    %v332 = vld [vmem:[%s1 + $0x448] sm:$0xff]
    %v333 = vld [vmem:[%s1 + $0x450] sm:$0xff]
    %v334 = vld [vmem:[%s1 + $0x458] sm:$0xff]
    %v335 = vld [vmem:[%s1 + $0x460] sm:$0xff]
    %v336 = vld [vmem:[%s1 + $0x468] sm:$0xff]
    %v337 = vld [vmem:[%s1 + $0x470] sm:$0xff]
    %v338 = vld [vmem:[%s1 + $0x478] sm:$0xff]
    %v339 = vld [vmem:[%s1 + $0x480] sm:$0xff]
    %v340 = vld [vmem:[%s1 + $0x488] sm:$0xff]
    %v341 = vld [vmem:[%s1 + $0x490] sm:$0xff]
    %v342 = vld [vmem:[%s1 + $0x498] sm:$0xff]
    %v343 = vld [vmem:[%s1 + $0x4a0] sm:$0xff]
    %v344 = vld [vmem:[%s1 + $0x4a8] sm:$0xff]
    %v345 = vld [vmem:[%s1 + $0x4b0] sm:$0xff]
    %v346 = vld [vmem:[%s1 + $0x4b8] sm:$0xff]
    %v347 = vld [vmem:[%s1 + $0x4c0] sm:$0xff]
    %v348 = vld [vmem:[%s1 + $0x4c8] sm:$0xff]
    %v349 = vld [vmem:[%s1 + $0x4d0] sm:$0xff]
    %v350 = vld [vmem:[%s1 + $0x4d8] sm:$0xff]
    %v351 = vld [vmem:[%s1 + $0x4e0] sm:$0xff]
    %v352 = vld [vmem:[%s1 + $0x4e8] sm:$0xff]
    %v353 = vld [vmem:[%s1 + $0x4f0] sm:$0xff]
    %v354 = vld [vmem:[%s1 + $0x4f8] sm:$0xff]
    %v355 = vld [vmem:[%s1 + $0x500] sm:$0xff]
    %v356 = vld [vmem:[%s1 + $0x508] sm:$0xff]
    %v357 = vld [vmem:[%s1 + $0x510] sm:$0xff]
    %v358 = vld [vmem:[%s1 + $0x518] sm:$0xff]
    %v359 = vld [vmem:[%s1 + $0x520] sm:$0xff]
    %v360 = vld [vmem:[%s1 + $0x528] sm:$0xff]
    %v361 = vld [vmem:[%s1 + $0x530] sm:$0xff]
    %v362 = vld [vmem:[%s1 + $0x538] sm:$0xff]
    %v363 = vld [vmem:[%s1 + $0x540] sm:$0xff]
    %v364 = vld [vmem:[%s1 + $0x548] sm:$0xff]
    %v365 = vld [vmem:[%s1 + $0x550] sm:$0xff]
    %v366 = vld [vmem:[%s1 + $0x558] sm:$0xff]
    %v367 = vld [vmem:[%s1 + $0x560] sm:$0xff]
    %v368 = vld [vmem:[%s1 + $0x568] sm:$0xff]
    %v369 = vld [vmem:[%s1 + $0x570] sm:$0xff]
    %v370 = vld [vmem:[%s1 + $0x578] sm:$0xff]
    %v371 = vld [vmem:[%s1 + $0x580] sm:$0xff]
    %v372 = vld [vmem:[%s1 + $0x588] sm:$0xff]
    %v373 = vld [vmem:[%s1 + $0x590] sm:$0xff]
    %v374 = vld [vmem:[%s1 + $0x598] sm:$0xff]
    %v375 = vld [vmem:[%s1 + $0x5a0] sm:$0xff]
    %v376 = vld [vmem:[%s1 + $0x5a8] sm:$0xff]
    %v377 = vld [vmem:[%s1 + $0x5b0] sm:$0xff]
    %v378 = vld [vmem:[%s1 + $0x5b8] sm:$0xff]
    %v379 = vld [vmem:[%s1 + $0x5c0] sm:$0xff]
    %v380 = vld [vmem:[%s1 + $0x5c8] sm:$0xff]
    %v381 = vld [vmem:[%s1 + $0x5d0] sm:$0xff]
    %v382 = vld [vmem:[%s1 + $0x5d8] sm:$0xff]
    %v383 = vld [vmem:[%s1 + $0x5e0] sm:$0xff]
    %v384 = vld [vmem:[%s1 + $0x5e8] sm:$0xff]
    %v385 = vld [vmem:[%s1 + $0x5f0] sm:$0xff]
    %v386 = vld [vmem:[%s1 + $0x5f8] sm:$0xff]
    %v387 = vld [vmem:[%s1 + $0x600] sm:$0xff]
    %v388 = vld [vmem:[%s1 + $0x608] sm:$0xff]
    %v389 = vld [vmem:[%s1 + $0x610] sm:$0xff]
    %v390 = vld [vmem:[%s1 + $0x618] sm:$0xff]
    %v391 = vld [vmem:[%s1 + $0x620] sm:$0xff]
    %v392 = vld [vmem:[%s1 + $0x628] sm:$0xff]
    %v393 = vld [vmem:[%s1 + $0x630] sm:$0xff]
    %v394 = vld [vmem:[%s1 + $0x638] sm:$0xff]
    %v395 = vld [vmem:[%s1 + $0x640] sm:$0xff]
    %v396 = vld [vmem:[%s1 + $0x648] sm:$0xff]
    %v397 = vld [vmem:[%s1 + $0x650] sm:$0xff]
    %v398 = vld [vmem:[%s1 + $0x658] sm:$0xff]
    %v399 = vld [vmem:[%s1 + $0x660] sm:$0xff]
    %v400 = vld [vmem:[%s1 + $0x668] sm:$0xff]
    %v401 = vld [vmem:[%s1 + $0x670] sm:$0xff]
    %v402 = vld [vmem:[%s1 + $0x678] sm:$0xff]
    %v403 = vld [vmem:[%s1 + $0x680] sm:$0xff]
    %v404 = vld [vmem:[%s1 + $0x688] sm:$0xff]
    %v405 = vld [vmem:[%s1 + $0x690] sm:$0xff]
    %v406 = vld [vmem:[%s1 + $0x698] sm:$0xff]
    %v407 = vld [vmem:[%s1 + $0x6a0] sm:$0xff]
    %v408 = vld [vmem:[%s1 + $0x6a8] sm:$0xff]
    %v409 = vld [vmem:[%s1 + $0x6b0] sm:$0xff]
    %v410 = vld [vmem:[%s1 + $0x6b8] sm:$0xff]
    %v411 = vld [vmem:[%s1 + $0x6c0] sm:$0xff]
    %v412 = vld [vmem:[%s1 + $0x6c8] sm:$0xff]
    %v413 = vld [vmem:[%s1 + $0x6d0] sm:$0xff]
    %v414 = vld [vmem:[%s1 + $0x6d8] sm:$0xff]
    %v415 = vld [vmem:[%s1 + $0x6e0] sm:$0xff]
    %v416 = vld [vmem:[%s1 + $0x6e8] sm:$0xff]
    %v417 = vld [vmem:[%s1 + $0x6f0] sm:$0xff]
    %v418 = vld [vmem:[%s1 + $0x6f8] sm:$0xff]
    %v419 = vld [vmem:[%s1 + $0x700] sm:$0xff]
    %v420 = vld [vmem:[%s1 + $0x708] sm:$0xff]
    %v421 = vld [vmem:[%s1 + $0x710] sm:$0xff]
    %v422 = vld [vmem:[%s1 + $0x718] sm:$0xff]
    %v423 = vld [vmem:[%s1 + $0x720] sm:$0xff]
    %v424 = vld [vmem:[%s1 + $0x728] sm:$0xff]
    %v425 = vld [vmem:[%s1 + $0x730] sm:$0xff]
    %v426 = vld [vmem:[%s1 + $0x738] sm:$0xff]
    %v427 = vld [vmem:[%s1 + $0x740] sm:$0xff]
    %v428 = vld [vmem:[%s1 + $0x748] sm:$0xff]
    %v429 = vld [vmem:[%s1 + $0x750] sm:$0xff]
    %v430 = vld [vmem:[%s1 + $0x758] sm:$0xff]
    %v431 = vld [vmem:[%s1 + $0x760] sm:$0xff]
    %v432 = vld [vmem:[%s1 + $0x768] sm:$0xff]
    %v433 = vld [vmem:[%s1 + $0x770] sm:$0xff]
    %v434 = vld [vmem:[%s1 + $0x778] sm:$0xff]
    %v435 = vld [vmem:[%s1 + $0x780] sm:$0xff]
    %v436 = vld [vmem:[%s1 + $0x788] sm:$0xff]
    %v437 = vld [vmem:[%s1 + $0x790] sm:$0xff]
    %v438 = vld [vmem:[%s1 + $0x798] sm:$0xff]
    %v439 = vld [vmem:[%s1 + $0x7a0] sm:$0xff]
    %v440 = vld [vmem:[%s1 + $0x7a8] sm:$0xff]
    %v441 = vld [vmem:[%s1 + $0x7b0] sm:$0xff]
    %v442 = vld [vmem:[%s1 + $0x7b8] sm:$0xff]
    %v443 = vld [vmem:[%s1 + $0x7c0] sm:$0xff]
    %v444 = vld [vmem:[%s1 + $0x7c8] sm:$0xff]
    %v445 = vld [vmem:[%s1 + $0x7d0] sm:$0xff]
    %v446 = vld [vmem:[%s1 + $0x7d8] sm:$0xff]
    %v447 = vld [vmem:[%s1 + $0x7e0] sm:$0xff]
    %v448 = vld [vmem:[%s1 + $0x7e8] sm:$0xff]
    %v449 = vld [vmem:[%s1 + $0x7f0] sm:$0xff]
    %v450 = vld [vmem:[%s1 + $0x7f8] sm:$0xff]
    %v451 = vld [vmem:[%s1 + $0x800] sm:$0xff]
    %v452 = vld [vmem:[%s1 + $0x808] sm:$0xff]
    %v453 = vld [vmem:[%s1 + $0x810] sm:$0xff]
    %v454 = vld [vmem:[%s1 + $0x818] sm:$0xff]
    %v455 = vld [vmem:[%s1 + $0x820] sm:$0xff]
    %v456 = vld [vmem:[%s1 + $0x828] sm:$0xff]
    %v457 = vld [vmem:[%s1 + $0x830] sm:$0xff]
    %v458 = vld [vmem:[%s1 + $0x838] sm:$0xff]
    %v459 = vld [vmem:[%s1 + $0x840] sm:$0xff]
    %v460 = vld [vmem:[%s1 + $0x848] sm:$0xff]
    %v461 = vld [vmem:[%s1 + $0x850] sm:$0xff]
    %v462 = vld [vmem:[%s1 + $0x858] sm:$0xff]
    %v463 = vld [vmem:[%s1 + $0x860] sm:$0xff]
    %v464 = vld [vmem:[%s1 + $0x868] sm:$0xff]
    %v465 = vld [vmem:[%s1 + $0x870] sm:$0xff]
    %v466 = vld [vmem:[%s1 + $0x878] sm:$0xff]
    %v467 = vld [vmem:[%s1 + $0x880] sm:$0xff]
    %v468 = vld [vmem:[%s1 + $0x888] sm:$0xff]
    %v469 = vld [vmem:[%s1 + $0x890] sm:$0xff]
    %v470 = vld [vmem:[%s1 + $0x898] sm:$0xff]
    %v471 = vld [vmem:[%s1 + $0x8a0] sm:$0xff]
    %v472 = vld [vmem:[%s1 + $0x8a8] sm:$0xff]
    %v473 = vld [vmem:[%s1 + $0x8b0] sm:$0xff]
    %v474 = vld [vmem:[%s1 + $0x8b8] sm:$0xff]
    %v475 = vld [vmem:[%s1 + $0x8c0] sm:$0xff]
    %v476 = vld [vmem:[%s1 + $0x8c8] sm:$0xff]
    %v477 = vld [vmem:[%s1 + $0x8d0] sm:$0xff]
    %v478 = vld [vmem:[%s1 + $0x8d8] sm:$0xff]
    %v479 = vld [vmem:[%s1 + $0x8e0] sm:$0xff]
    %v480 = vld [vmem:[%s1 + $0x8e8] sm:$0xff]
    %v481 = vld [vmem:[%s1 + $0x8f0] sm:$0xff]
    %v482 = vld [vmem:[%s1 + $0x8f8] sm:$0xff]
    %v483 = vld [vmem:[%s1 + $0x900] sm:$0xff]
    %v484 = vld [vmem:[%s1 + $0x908] sm:$0xff]
    %v485 = vld [vmem:[%s1 + $0x910] sm:$0xff]
    %v486 = vld [vmem:[%s1 + $0x918] sm:$0xff]
    %v487 = vld [vmem:[%s1 + $0x920] sm:$0xff]
    %v488 = vld [vmem:[%s1 + $0x928] sm:$0xff]
    %v489 = vld [vmem:[%s1 + $0x930] sm:$0xff]
    %v490 = vld [vmem:[%s1 + $0x938] sm:$0xff]
    %v491 = vld [vmem:[%s1 + $0x940] sm:$0xff]
    %v492 = vld [vmem:[%s1 + $0x948] sm:$0xff]
    %v493 = vld [vmem:[%s1 + $0x950] sm:$0xff]
    %v494 = vld [vmem:[%s1 + $0x958] sm:$0xff]
    %v495 = vld [vmem:[%s1 + $0x960] sm:$0xff]
    %v496 = vld [vmem:[%s1 + $0x968] sm:$0xff]
    %v497 = vld [vmem:[%s1 + $0x970] sm:$0xff]
    %v498 = vld [vmem:[%s1 + $0x978] sm:$0xff]
    %v499 = vld [vmem:[%s1 + $0x980] sm:$0xff]
    %v500 = vld [vmem:[%s1 + $0x988] sm:$0xff]
    %v501 = vld [vmem:[%s1 + $0x990] sm:$0xff]
    %v502 = vld [vmem:[%s1 + $0x998] sm:$0xff]
    %v503 = vld [vmem:[%s1 + $0x9a0] sm:$0xff]
    %v504 = vld [vmem:[%s1 + $0x9a8] sm:$0xff]
    %v505 = vld [vmem:[%s1 + $0x9b0] sm:$0xff]
    %v506 = vld [vmem:[%s1 + $0x9b8] sm:$0xff]
    %v507 = vld [vmem:[%s1 + $0x9c0] sm:$0xff]
    %v508 = vld [vmem:[%s1 + $0x9c8] sm:$0xff]
    %v509 = vld [vmem:[%s1 + $0x9d0] sm:$0xff]
    %v510 = vld [vmem:[%s1 + $0x9d8] sm:$0xff]
    %v511 = vld [vmem:[%s1 + $0x9e0] sm:$0xff]
    %v512 = vld [vmem:[%s1 + $0x9e8] sm:$0xff]
    %v513 = vld [vmem:[%s1 + $0x9f0] sm:$0xff]
    %v514 = vld [vmem:[%s1 + $0x9f8] sm:$0xff]
    %v515 = vld [vmem:[%s1 + $0xa00] sm:$0xff]
    %v516 = vld [vmem:[%s1 + $0xa08] sm:$0xff]
    %v517 = vld [vmem:[%s1 + $0xa10] sm:$0xff]
    %v518 = vld [vmem:[%s1 + $0xa18] sm:$0xff]
    %v519 = vld [vmem:[%s1 + $0xa20] sm:$0xff]
    %v520 = vld [vmem:[%s1 + $0xa28] sm:$0xff]
    %v521 = vld [vmem:[%s1 + $0xa30] sm:$0xff]
    %v522 = vld [vmem:[%s1 + $0xa38] sm:$0xff]
    %v523 = vld [vmem:[%s1 + $0xa40] sm:$0xff]
    %v524 = vld [vmem:[%s1 + $0xa48] sm:$0xff]
    %v525 = vld [vmem:[%s1 + $0xa50] sm:$0xff]
    %v526 = vld [vmem:[%s1 + $0xa58] sm:$0xff]
    %v527 = vld [vmem:[%s1 + $0xa60] sm:$0xff]
    %v528 = vld [vmem:[%s1 + $0xa68] sm:$0xff]
    %v529 = vld [vmem:[%s1 + $0xa70] sm:$0xff]
    %v530 = vld [vmem:[%s1 + $0xa78] sm:$0xff]
    %v531 = vld [vmem:[%s1 + $0xa80] sm:$0xff]
    %v532 = vld [vmem:[%s1 + $0xa88] sm:$0xff]
    %v533 = vld [vmem:[%s1 + $0xa90] sm:$0xff]
    %v534 = vld [vmem:[%s1 + $0xa98] sm:$0xff]
    %v535 = vld [vmem:[%s1 + $0xaa0] sm:$0xff]
    %v536 = vld [vmem:[%s1 + $0xaa8] sm:$0xff]
    %v537 = vld [vmem:[%s1 + $0xab0] sm:$0xff]
    %v538 = vld [vmem:[%s1 + $0xab8] sm:$0xff]
    %v539 = vld [vmem:[%s1 + $0xac0] sm:$0xff]
    %v540 = vld [vmem:[%s1 + $0xac8] sm:$0xff]
    %v541 = vld [vmem:[%s1 + $0xad0] sm:$0xff]
    %v542 = vld [vmem:[%s1 + $0xad8] sm:$0xff]
    %v543 = vld [vmem:[%s1 + $0xae0] sm:$0xff]
    %v544 = vld [vmem:[%s1 + $0xae8] sm:$0xff]
    %v545 = vld [vmem:[%s1 + $0xaf0] sm:$0xff]
    %v546 = vld [vmem:[%s1 + $0xaf8] sm:$0xff]
    %v547 = vld [vmem:[%s1 + $0xb00] sm:$0xff]
    %v548 = vld [vmem:[%s1 + $0xb08] sm:$0xff]
    %v549 = vld [vmem:[%s1 + $0xb10] sm:$0xff]
    %v550 = vld [vmem:[%s1 + $0xb18] sm:$0xff]
    %v551 = vld [vmem:[%s1 + $0xb20] sm:$0xff]
    %v552 = vld [vmem:[%s1 + $0xb28] sm:$0xff]
    %v553 = vld [vmem:[%s1 + $0xb30] sm:$0xff]
    %v554 = vld [vmem:[%s1 + $0xb38] sm:$0xff]
    %v555 = vld [vmem:[%s1 + $0xb40] sm:$0xff]
    %v556 = vld [vmem:[%s1 + $0xb48] sm:$0xff]
    %v557 = vld [vmem:[%s1 + $0xb50] sm:$0xff]
    %v558 = vld [vmem:[%s1 + $0xb58] sm:$0xff]
    %v559 = vld [vmem:[%s1 + $0xb60] sm:$0xff]
    %v560 = vld [vmem:[%s1 + $0xb68] sm:$0xff]
    %v561 = vld [vmem:[%s1 + $0xb70] sm:$0xff]
    %v562 = vld [vmem:[%s1 + $0xb78] sm:$0xff]
    %v563 = vld [vmem:[%s1 + $0xb80] sm:$0xff]
    %v564 = vld [vmem:[%s1 + $0xb88] sm:$0xff]
    %v565 = vld [vmem:[%s1 + $0xb90] sm:$0xff]
    %v566 = vld [vmem:[%s1 + $0xb98] sm:$0xff]
    %v567 = vld [vmem:[%s1 + $0xba0] sm:$0xff]
    %v568 = vld [vmem:[%s1 + $0xba8] sm:$0xff]
    %v569 = vld [vmem:[%s1 + $0xbb0] sm:$0xff]
    %v570 = vld [vmem:[%s1 + $0xbb8] sm:$0xff]
    %v571 = vld [vmem:[%s1 + $0xbc0] sm:$0xff]
    %v572 = vld [vmem:[%s1 + $0xbc8] sm:$0xff]
    %v573 = vld [vmem:[%s1 + $0xbd0] sm:$0xff]
    %v574 = vld [vmem:[%s1 + $0xbd8] sm:$0xff]
    %v575 = vld [vmem:[%s1 + $0xbe0] sm:$0xff]
    %v576 = vld [vmem:[%s1 + $0xbe8] sm:$0xff]
    %v577 = vld [vmem:[%s1 + $0xbf0] sm:$0xff]
    %v578 = vld [vmem:[%s1 + $0xbf8] sm:$0xff]
    %v579 = vld [vmem:[%s1 + $0xc00] sm:$0xff]
    %v580 = vld [vmem:[%s1 + $0xc08] sm:$0xff]
    %v581 = vld [vmem:[%s1 + $0xc10] sm:$0xff]
    %v582 = vld [vmem:[%s1 + $0xc18] sm:$0xff]
    %v583 = vld [vmem:[%s1 + $0xc20] sm:$0xff]
    %v584 = vld [vmem:[%s1 + $0xc28] sm:$0xff]
    %v585 = vld [vmem:[%s1 + $0xc30] sm:$0xff]
    %v586 = vld [vmem:[%s1 + $0xc38] sm:$0xff]
    %v587 = vld [vmem:[%s1 + $0xc40] sm:$0xff]
    %v588 = vld [vmem:[%s1 + $0xc48] sm:$0xff]
    %v589 = vld [vmem:[%s1 + $0xc50] sm:$0xff]
    %v590 = vld [vmem:[%s1 + $0xc58] sm:$0xff]
    %v591 = vld [vmem:[%s1 + $0xc60] sm:$0xff]
    %v592 = vld [vmem:[%s1 + $0xc68] sm:$0xff]
    %v593 = vld [vmem:[%s1 + $0xc70] sm:$0xff]
    %v594 = vld [vmem:[%s1 + $0xc78] sm:$0xff]
    %v595 = vld [vmem:[%s1 + $0xc80] sm:$0xff]
    %v596 = vld [vmem:[%s1 + $0xc88] sm:$0xff]
    %v597 = vld [vmem:[%s1 + $0xc90] sm:$0xff]
    %v598 = vld [vmem:[%s1 + $0xc98] sm:$0xff]
    %v599 = vld [vmem:[%s1 + $0xca0] sm:$0xff]
    %v600 = vld [vmem:[%s1 + $0xca8] sm:$0xff]
    %v601 = vld [vmem:[%s1 + $0xcb0] sm:$0xff]
    %v602 = vld [vmem:[%s1 + $0xcb8] sm:$0xff]
    %v603 = vld [vmem:[%s1 + $0xcc0] sm:$0xff]
    %v604 = vld [vmem:[%s1 + $0xcc8] sm:$0xff]
    %v605 = vld [vmem:[%s1 + $0xcd0] sm:$0xff]
    %v606 = vld [vmem:[%s1 + $0xcd8] sm:$0xff]
    %v607 = vld [vmem:[%s1 + $0xce0] sm:$0xff]
    %v608 = vld [vmem:[%s1 + $0xce8] sm:$0xff]
    %v609 = vld [vmem:[%s1 + $0xcf0] sm:$0xff]
    %v610 = vld [vmem:[%s1 + $0xcf8] sm:$0xff]
    %v611 = vld [vmem:[%s1 + $0xd00] sm:$0xff]
    %v612 = vld [vmem:[%s1 + $0xd08] sm:$0xff]
    %v613 = vld [vmem:[%s1 + $0xd10] sm:$0xff]
    %v614 = vld [vmem:[%s1 + $0xd18] sm:$0xff]
    %v615 = vld [vmem:[%s1 + $0xd20] sm:$0xff]
    %v616 = vld [vmem:[%s1 + $0xd28] sm:$0xff]
    %v617 = vld [vmem:[%s1 + $0xd30] sm:$0xff]
    %v618 = vld [vmem:[%s1 + $0xd38] sm:$0xff]
    %v619 = vld [vmem:[%s1 + $0xd40] sm:$0xff]
    %v620 = vld [vmem:[%s1 + $0xd48] sm:$0xff]
    %v621 = vld [vmem:[%s1 + $0xd50] sm:$0xff]
    %v622 = vld [vmem:[%s1 + $0xd58] sm:$0xff]
    %v623 = vld [vmem:[%s1 + $0xd60] sm:$0xff]
    %v624 = vld [vmem:[%s1 + $0xd68] sm:$0xff]
    %v625 = vld [vmem:[%s1 + $0xd70] sm:$0xff]
    %v626 = vld [vmem:[%s1 + $0xd78] sm:$0xff]
    %v627 = vld [vmem:[%s1 + $0xd80] sm:$0xff]
    %v628 = vld [vmem:[%s1 + $0xd88] sm:$0xff]
    %v629 = vld [vmem:[%s1 + $0xd90] sm:$0xff]
    %v630 = vld [vmem:[%s1 + $0xd98] sm:$0xff]
    %v631 = vld [vmem:[%s1 + $0xda0] sm:$0xff]
    %v632 = vld [vmem:[%s1 + $0xda8] sm:$0xff]
    %v633 = vld [vmem:[%s1 + $0xdb0] sm:$0xff]
    %v634 = vld [vmem:[%s1 + $0xdb8] sm:$0xff]
    %v635 = vld [vmem:[%s1 + $0xdc0] sm:$0xff]
    %v636 = vld [vmem:[%s1 + $0xdc8] sm:$0xff]
    %v637 = vld [vmem:[%s1 + $0xdd0] sm:$0xff]
    %v638 = vld [vmem:[%s1 + $0xdd8] sm:$0xff]
    %v639 = vld [vmem:[%s1 + $0xde0] sm:$0xff]
    %v640 = vld [vmem:[%s1 + $0xde8] sm:$0xff]
    %v641 = vld [vmem:[%s1 + $0xdf0] sm:$0xff]
    %v642 = vld [vmem:[%s1 + $0xdf8] sm:$0xff]
    %v643 = vld [vmem:[%s1 + $0xe00] sm:$0xff]
    %v644 = vld [vmem:[%s1 + $0xe08] sm:$0xff]
    %v645 = vld [vmem:[%s1 + $0xe10] sm:$0xff]
    %v646 = vld [vmem:[%s1 + $0xe18] sm:$0xff]
    %v647 = vld [vmem:[%s1 + $0xe20] sm:$0xff]
    %v648 = vld [vmem:[%s1 + $0xe28] sm:$0xff]
    %v649 = vld [vmem:[%s1 + $0xe30] sm:$0xff]
    %v650 = vld [vmem:[%s1 + $0xe38] sm:$0xff]
    %v651 = vld [vmem:[%s1 + $0xe40] sm:$0xff]
    %v652 = vld [vmem:[%s1 + $0xe48] sm:$0xff]
    %v653 = vld [vmem:[%s1 + $0xe50] sm:$0xff]
    %v654 = vld [vmem:[%s1 + $0xe58] sm:$0xff]
    %v655 = vld [vmem:[%s1 + $0xe60] sm:$0xff]
    %v656 = vld [vmem:[%s1 + $0xe68] sm:$0xff]
    %v657 = vld [vmem:[%s1 + $0xe70] sm:$0xff]
    %v658 = vld [vmem:[%s1 + $0xe78] sm:$0xff]
    %v659 = vld [vmem:[%s1 + $0xe80] sm:$0xff]
    %v660 = vld [vmem:[%s1 + $0xe88] sm:$0xff]
    %v661 = vld [vmem:[%s1 + $0xe90] sm:$0xff]
    %v662 = vld [vmem:[%s1 + $0xe98] sm:$0xff]
    %v663 = vld [vmem:[%s1 + $0xea0] sm:$0xff]
    %v664 = vld [vmem:[%s1 + $0xea8] sm:$0xff]
    %v665 = vld [vmem:[%s1 + $0xeb0] sm:$0xff]
    %v666 = vld [vmem:[%s1 + $0xeb8] sm:$0xff]
    %v667 = vld [vmem:[%s1 + $0xec0] sm:$0xff]
    %v668 = vld [vmem:[%s1 + $0xec8] sm:$0xff]
    %v669 = vld [vmem:[%s1 + $0xed0] sm:$0xff]
    %v670 = vld [vmem:[%s1 + $0xed8] sm:$0xff]
    %v671 = vld [vmem:[%s1 + $0xee0] sm:$0xff]
    %v672 = vld [vmem:[%s1 + $0xee8] sm:$0xff]
    %v673 = vld [vmem:[%s1 + $0xef0] sm:$0xff]
    %v674 = vld [vmem:[%s1 + $0xef8] sm:$0xff]
    %v675 = vld [vmem:[%s1 + $0xf00] sm:$0xff]
    %v676 = vld [vmem:[%s1 + $0xf08] sm:$0xff]
    %v677 = vld [vmem:[%s1 + $0xf10] sm:$0xff]
    %v678 = vld [vmem:[%s1 + $0xf18] sm:$0xff]
    %v679 = vld [vmem:[%s1 + $0xf20] sm:$0xff]
    %v680 = vld [vmem:[%s1 + $0xf28] sm:$0xff]
    %v681 = vld [vmem:[%s1 + $0xf30] sm:$0xff]
    %v682 = vld [vmem:[%s1 + $0xf38] sm:$0xff]
    %v683 = vld [vmem:[%s1 + $0xf40] sm:$0xff]
    %v684 = vld [vmem:[%s1 + $0xf48] sm:$0xff]
    %v685 = vld [vmem:[%s1 + $0xf50] sm:$0xff]
    %v686 = vld [vmem:[%s1 + $0xf58] sm:$0xff]
    %v687 = vld [vmem:[%s1 + $0xf60] sm:$0xff]
    %v688 = vld [vmem:[%s1 + $0xf68] sm:$0xff]
    %v689 = vld [vmem:[%s1 + $0xf70] sm:$0xff]
    %v690 = vld [vmem:[%s1 + $0xf78] sm:$0xff]
    %v691 = vld [vmem:[%s1 + $0xf80] sm:$0xff]
    %v692 = vld [vmem:[%s1 + $0xf88] sm:$0xff]
    %v693 = vld [vmem:[%s1 + $0xf90] sm:$0xff]
    %v694 = vld [vmem:[%s1 + $0xf98] sm:$0xff]
    %v695 = vld [vmem:[%s1 + $0xfa0] sm:$0xff]
    %v696 = vld [vmem:[%s1 + $0xfa8] sm:$0xff]
    %v697 = vld [vmem:[%s1 + $0xfb0] sm:$0xff]
    %v698 = vld [vmem:[%s1 + $0xfb8] sm:$0xff]
    %v699 = vld [vmem:[%s1 + $0xfc0] sm:$0xff]
    %v700 = vld [vmem:[%s1 + $0xfc8] sm:$0xff]
    %v701 = vld [vmem:[%s1 + $0xfd0] sm:$0xff]
    %v702 = vld [vmem:[%s1 + $0xfd8] sm:$0xff]
    %v703 = vld [vmem:[%s1 + $0xfe0] sm:$0xff]
    %v704 = vld [vmem:[%s1 + $0xfe8] sm:$0xff]
    %v705 = vld [vmem:[%s1 + $0xff0] sm:$0xff]
    %v706 = vld [vmem:[%s1 + $0xff8] sm:$0xff]
    %v707 = vld [vmem:[%s1 + $0x1000] sm:$0xff]
    %v708 = vld [vmem:[%s1 + $0x1008] sm:$0xff]
    %v709 = vld [vmem:[%s1 + $0x1010] sm:$0xff]
    %v710 = vld [vmem:[%s1 + $0x1018] sm:$0xff]
    %v711 = vld [vmem:[%s1 + $0x1020] sm:$0xff]
    %v712 = vld [vmem:[%s1 + $0x1028] sm:$0xff]
    %v713 = vld [vmem:[%s1 + $0x1030] sm:$0xff]
    %v714 = vld [vmem:[%s1 + $0x1038] sm:$0xff]
    %v715 = vld [vmem:[%s1 + $0x1040] sm:$0xff]
    %v716 = vld [vmem:[%s1 + $0x1048] sm:$0xff]
    %v717 = vld [vmem:[%s1 + $0x1050] sm:$0xff]
    %v718 = vld [vmem:[%s1 + $0x1058] sm:$0xff]
    %v719 = vld [vmem:[%s1 + $0x1060] sm:$0xff]
    %v720 = vld [vmem:[%s1 + $0x1068] sm:$0xff]
    %v721 = vld [vmem:[%s1 + $0x1070] sm:$0xff]
    %v722 = vld [vmem:[%s1 + $0x1078] sm:$0xff]
    %v723 = vld [vmem:[%s1 + $0x1080] sm:$0xff]
    %v724 = vld [vmem:[%s1 + $0x1088] sm:$0xff]
    %v725 = vld [vmem:[%s1 + $0x1090] sm:$0xff]
    %v726 = vld [vmem:[%s1 + $0x1098] sm:$0xff]
    %v727 = vld [vmem:[%s1 + $0x10a0] sm:$0xff]
    %v728 = vld [vmem:[%s1 + $0x10a8] sm:$0xff]
    %v729 = vld [vmem:[%s1 + $0x10b0] sm:$0xff]
    %v730 = vld [vmem:[%s1 + $0x10b8] sm:$0xff]
    %v731 = vld [vmem:[%s1 + $0x10c0] sm:$0xff]
    %v732 = vld [vmem:[%s1 + $0x10c8] sm:$0xff]
    %v733 = vld [vmem:[%s1 + $0x10d0] sm:$0xff]
    %v734 = vld [vmem:[%s1 + $0x10d8] sm:$0xff]
    %v735 = vld [vmem:[%s1 + $0x10e0] sm:$0xff]
    %v736 = vld [vmem:[%s1 + $0x10e8] sm:$0xff]
    %v737 = vld [vmem:[%s1 + $0x10f0] sm:$0xff]
    %v738 = vld [vmem:[%s1 + $0x10f8] sm:$0xff]
    %v739 = vld [vmem:[%s1 + $0x1100] sm:$0xff]
    %v740 = vld [vmem:[%s1 + $0x1108] sm:$0xff]
    %v741 = vld [vmem:[%s1 + $0x1110] sm:$0xff]
    %v742 = vld [vmem:[%s1 + $0x1118] sm:$0xff]
    %v743 = vld [vmem:[%s1 + $0x1120] sm:$0xff]
    %v744 = vld [vmem:[%s1 + $0x1128] sm:$0xff]
    %v745 = vld [vmem:[%s1 + $0x1130] sm:$0xff]
    %v746 = vld [vmem:[%s1 + $0x1138] sm:$0xff]
    %v747 = vld [vmem:[%s1 + $0x1140] sm:$0xff]
    %v748 = vld [vmem:[%s1 + $0x1148] sm:$0xff]
    %v749 = vld [vmem:[%s1 + $0x1150] sm:$0xff]
    %v750 = vld [vmem:[%s1 + $0x1158] sm:$0xff]
    %v751 = vld [vmem:[%s1 + $0x1160] sm:$0xff]
    %v752 = vld [vmem:[%s1 + $0x1168] sm:$0xff]
    %v753 = vld [vmem:[%s1 + $0x1170] sm:$0xff]
    %v754 = vld [vmem:[%s1 + $0x1178] sm:$0xff]
    %v755 = vld [vmem:[%s1 + $0x1180] sm:$0xff]
    %v756 = vld [vmem:[%s1 + $0x1188] sm:$0xff]
    %v757 = vld [vmem:[%s1 + $0x1190] sm:$0xff]
    %v758 = vld [vmem:[%s1 + $0x1198] sm:$0xff]
    %v759 = vld [vmem:[%s1 + $0x11a0] sm:$0xff]
    %v760 = vld [vmem:[%s1 + $0x11a8] sm:$0xff]
    %v761 = vld [vmem:[%s1 + $0x11b0] sm:$0xff]
    %v762 = vld [vmem:[%s1 + $0x11b8] sm:$0xff]
    %v763 = vld [vmem:[%s1 + $0x11c0] sm:$0xff]
    %v764 = vld [vmem:[%s1 + $0x11c8] sm:$0xff]
    %v765 = vld [vmem:[%s1 + $0x11d0] sm:$0xff]
    %v766 = vld [vmem:[%s1 + $0x11d8] sm:$0xff]
    %v767 = vld [vmem:[%s1 + $0x11e0] sm:$0xff]
    %v768 = vld [vmem:[%s1 + $0x11e8] sm:$0xff]
    %v769 = vld [vmem:[%s1 + $0x11f0] sm:$0xff]
    %v770 = vld [vmem:[%s1 + $0x11f8] sm:$0xff]
    %v771 = vld [vmem:[%s1 + $0x1200] sm:$0xff]
    %v772 = vld [vmem:[%s1 + $0x1208] sm:$0xff]
    %v773 = vld [vmem:[%s1 + $0x1210] sm:$0xff]
    %v774 = vld [vmem:[%s1 + $0x1218] sm:$0xff]
    %v775 = vld [vmem:[%s1 + $0x1220] sm:$0xff]
    %v776 = vld [vmem:[%s1 + $0x1228] sm:$0xff]
    %v777 = vld [vmem:[%s1 + $0x1230] sm:$0xff]
    %v778 = vld [vmem:[%s1 + $0x1238] sm:$0xff]
    %v779 = vld [vmem:[%s1 + $0x1240] sm:$0xff]
    %v780 = vld [vmem:[%s1 + $0x1248] sm:$0xff]
    %v781 = vld [vmem:[%s1 + $0x1250] sm:$0xff]
    %v782 = vld [vmem:[%s1 + $0x1258] sm:$0xff]
    %v783 = vld [vmem:[%s1 + $0x1260] sm:$0xff]
    %v784 = vld [vmem:[%s1 + $0x1268] sm:$0xff]
    %v785 = vld [vmem:[%s1 + $0x1270] sm:$0xff]
    %v786 = vld [vmem:[%s1 + $0x1278] sm:$0xff]
    %v787 = vld [vmem:[%s1 + $0x1280] sm:$0xff]
    %v788 = vld [vmem:[%s1 + $0x1288] sm:$0xff]
    %v789 = vld [vmem:[%s1 + $0x1290] sm:$0xff]
    %v790 = vld [vmem:[%s1 + $0x1298] sm:$0xff]
    %v791 = vld [vmem:[%s1 + $0x12a0] sm:$0xff]
    %v792 = vld [vmem:[%s1 + $0x12a8] sm:$0xff]
    %v793 = vld [vmem:[%s1 + $0x12b0] sm:$0xff]
    %v794 = vld [vmem:[%s1 + $0x12b8] sm:$0xff]
    %v795 = vld [vmem:[%s1 + $0x12c0] sm:$0xff]
    %v796 = vld [vmem:[%s1 + $0x12c8] sm:$0xff]
    %v797 = vld [vmem:[%s1 + $0x12d0] sm:$0xff]
    %v798 = vld [vmem:[%s1 + $0x12d8] sm:$0xff]
    %v799 = vld [vmem:[%s1 + $0x12e0] sm:$0xff]
    %v800 = vld [vmem:[%s1 + $0x12e8] sm:$0xff]
    %v801 = vld [vmem:[%s1 + $0x12f0] sm:$0xff]
    %v802 = vld [vmem:[%s1 + $0x12f8] sm:$0xff]
    %v803 = vld [vmem:[%s1 + $0x1300] sm:$0xff]
    %v804 = vld [vmem:[%s1 + $0x1308] sm:$0xff]
    %v805 = vld [vmem:[%s1 + $0x1310] sm:$0xff]
    %v806 = vld [vmem:[%s1 + $0x1318] sm:$0xff]
    %v807 = vld [vmem:[%s1 + $0x1320] sm:$0xff]
    %v808 = vld [vmem:[%s1 + $0x1328] sm:$0xff]
    %v809 = vld [vmem:[%s1 + $0x1330] sm:$0xff]
    %v810 = vld [vmem:[%s1 + $0x1338] sm:$0xff]
    %v811 = vld [vmem:[%s1 + $0x1340] sm:$0xff]
    %v812 = vld [vmem:[%s1 + $0x1348] sm:$0xff]
    %v813 = vld [vmem:[%s1 + $0x1350] sm:$0xff]
    %v814 = vld [vmem:[%s1 + $0x1358] sm:$0xff]
    %v815 = vld [vmem:[%s1 + $0x1360] sm:$0xff]
    %v816 = vld [vmem:[%s1 + $0x1368] sm:$0xff]
    %v817 = vld [vmem:[%s1 + $0x1370] sm:$0xff]
    %v818 = vld [vmem:[%s1 + $0x1378] sm:$0xff]
    %v819 = vld [vmem:[%s1 + $0x1380] sm:$0xff]
    %v820 = vld [vmem:[%s1 + $0x1388] sm:$0xff]
    %v821 = vld [vmem:[%s1 + $0x1390] sm:$0xff]
    %v822 = vld [vmem:[%s1 + $0x1398] sm:$0xff]
    %v823 = vld [vmem:[%s1 + $0x13a0] sm:$0xff]
    %v824 = vld [vmem:[%s1 + $0x13a8] sm:$0xff]
    %v825 = vld [vmem:[%s1 + $0x13b0] sm:$0xff]
    %v826 = vld [vmem:[%s1 + $0x13b8] sm:$0xff]
    %v827 = vld [vmem:[%s1 + $0x13c0] sm:$0xff]
    %v828 = vld [vmem:[%s1 + $0x13c8] sm:$0xff]
    %v829 = vld [vmem:[%s1 + $0x13d0] sm:$0xff]
    %v830 = vld [vmem:[%s1 + $0x13d8] sm:$0xff]
    %v831 = vld [vmem:[%s1 + $0x13e0] sm:$0xff]
    %v832 = vld [vmem:[%s1 + $0x13e8] sm:$0xff]
    %v833 = vld [vmem:[%s1 + $0x13f0] sm:$0xff]
    %v834 = vld [vmem:[%s1 + $0x13f8] sm:$0xff]
    %v835 = vld [vmem:[%s1 + $0x1400] sm:$0xff]
    %v836 = vld [vmem:[%s1 + $0x1408] sm:$0xff]
    %v837 = vld [vmem:[%s1 + $0x1410] sm:$0xff]
    %v838 = vld [vmem:[%s1 + $0x1418] sm:$0xff]
    %v839 = vld [vmem:[%s1 + $0x1420] sm:$0xff]
    %v840 = vld [vmem:[%s1 + $0x1428] sm:$0xff]
    %v841 = vld [vmem:[%s1 + $0x1430] sm:$0xff]
    %v842 = vld [vmem:[%s1 + $0x1438] sm:$0xff]
    %v843 = vld [vmem:[%s1 + $0x1440] sm:$0xff]
    %v844 = vld [vmem:[%s1 + $0x1448] sm:$0xff]
    %v845 = vld [vmem:[%s1 + $0x1450] sm:$0xff]
    %v846 = vld [vmem:[%s1 + $0x1458] sm:$0xff]
    %v847 = vld [vmem:[%s1 + $0x1460] sm:$0xff]
    %v848 = vld [vmem:[%s1 + $0x1468] sm:$0xff]
    %v849 = vld [vmem:[%s1 + $0x1470] sm:$0xff]
    %v850 = vld [vmem:[%s1 + $0x1478] sm:$0xff]
    %v851 = vld [vmem:[%s1 + $0x1480] sm:$0xff]
    %v852 = vld [vmem:[%s1 + $0x1488] sm:$0xff]
    %v853 = vld [vmem:[%s1 + $0x1490] sm:$0xff]
    %v854 = vld [vmem:[%s1 + $0x1498] sm:$0xff]
    %v855 = vld [vmem:[%s1 + $0x14a0] sm:$0xff]
    %v856 = vld [vmem:[%s1 + $0x14a8] sm:$0xff]
    %v857 = vld [vmem:[%s1 + $0x14b0] sm:$0xff]
    %v858 = vld [vmem:[%s1 + $0x14b8] sm:$0xff]
    %v859 = vld [vmem:[%s1 + $0x14c0] sm:$0xff]
    %v860 = vld [vmem:[%s1 + $0x14c8] sm:$0xff]
    %v861 = vld [vmem:[%s1 + $0x14d0] sm:$0xff]
    %v862 = vld [vmem:[%s1 + $0x14d8] sm:$0xff]
    %v863 = vld [vmem:[%s1 + $0x14e0] sm:$0xff]
    %v864 = vld [vmem:[%s1 + $0x14e8] sm:$0xff]
    %v865 = vld [vmem:[%s1 + $0x14f0] sm:$0xff]
    %v866 = vld [vmem:[%s1 + $0x14f8] sm:$0xff]
    %v867 = vld [vmem:[%s1 + $0x1500] sm:$0xff]
    %v868 = vld [vmem:[%s1 + $0x1508] sm:$0xff]
    %v869 = vld [vmem:[%s1 + $0x1510] sm:$0xff]
    %v870 = vld [vmem:[%s1 + $0x1518] sm:$0xff]
    %v871 = vld [vmem:[%s1 + $0x1520] sm:$0xff]
    %v872 = vld [vmem:[%s1 + $0x1528] sm:$0xff]
    %v873 = vld [vmem:[%s1 + $0x1530] sm:$0xff]
    %v874 = vld [vmem:[%s1 + $0x1538] sm:$0xff]
    %v875 = vld [vmem:[%s1 + $0x1540] sm:$0xff]
    %v876 = vld [vmem:[%s1 + $0x1548] sm:$0xff]
    %v877 = vld [vmem:[%s1 + $0x1550] sm:$0xff]
    %v878 = vld [vmem:[%s1 + $0x1558] sm:$0xff]
    %v879 = vld [vmem:[%s1 + $0x1560] sm:$0xff]
    %v880 = vld [vmem:[%s1 + $0x1568] sm:$0xff]
    %v881 = vld [vmem:[%s1 + $0x1570] sm:$0xff]
    %v882 = vld [vmem:[%s1 + $0x1578] sm:$0xff]
    %v883 = vld [vmem:[%s1 + $0x1580] sm:$0xff]
    %v884 = vld [vmem:[%s1 + $0x1588] sm:$0xff]
    %v885 = vld [vmem:[%s1 + $0x1590] sm:$0xff]
    %v886 = vld [vmem:[%s1 + $0x1598] sm:$0xff]
    %v887 = vld [vmem:[%s1 + $0x15a0] sm:$0xff]
    %v888 = vld [vmem:[%s1 + $0x15a8] sm:$0xff]
    %v889 = vld [vmem:[%s1 + $0x15b0] sm:$0xff]
    %v890 = vld [vmem:[%s1 + $0x15b8] sm:$0xff]
    %v891 = vld [vmem:[%s1 + $0x15c0] sm:$0xff]
    %v892 = vld [vmem:[%s1 + $0x15c8] sm:$0xff]
    %v893 = vld [vmem:[%s1 + $0x15d0] sm:$0xff]
    %v894 = vld [vmem:[%s1 + $0x15d8] sm:$0xff]
    %v895 = vld [vmem:[%s1 + $0x15e0] sm:$0xff]
    %v896 = vld [vmem:[%s1 + $0x15e8] sm:$0xff]
    %v897 = vld [vmem:[%s1 + $0x15f0] sm:$0xff]
    %v898 = vld [vmem:[%s1 + $0x15f8] sm:$0xff]
    %v899 = vld [vmem:[%s1 + $0x1600] sm:$0xff]
    %v900 = vld [vmem:[%s1 + $0x1608] sm:$0xff]
    %v901 = vld [vmem:[%s1 + $0x1610] sm:$0xff]
    %v902 = vld [vmem:[%s1 + $0x1618] sm:$0xff]
    %v903 = vld [vmem:[%s1 + $0x1620] sm:$0xff]
    %v904 = vld [vmem:[%s1 + $0x1628] sm:$0xff]
    %v905 = vld [vmem:[%s1 + $0x1630] sm:$0xff]
    %v906 = vld [vmem:[%s1 + $0x1638] sm:$0xff]
    %v907 = vld [vmem:[%s1 + $0x1640] sm:$0xff]
    %v908 = vld [vmem:[%s1 + $0x1648] sm:$0xff]
    %v909 = vld [vmem:[%s1 + $0x1650] sm:$0xff]
    %v910 = vld [vmem:[%s1 + $0x1658] sm:$0xff]
    %v911 = vld [vmem:[%s1 + $0x1660] sm:$0xff]
    %v912 = vld [vmem:[%s1 + $0x1668] sm:$0xff]
    %v913 = vld [vmem:[%s1 + $0x1670] sm:$0xff]
    %v914 = vld [vmem:[%s1 + $0x1678] sm:$0xff]
    %v915 = vld [vmem:[%s1 + $0x1680] sm:$0xff]
    %v916 = vld [vmem:[%s1 + $0x1688] sm:$0xff]
    %v917 = vld [vmem:[%s1 + $0x1690] sm:$0xff]
    %v918 = vld [vmem:[%s1 + $0x1698] sm:$0xff]
    %v919 = vld [vmem:[%s1 + $0x16a0] sm:$0xff]
    %v920 = vld [vmem:[%s1 + $0x16a8] sm:$0xff]
    %v921 = vld [vmem:[%s1 + $0x16b0] sm:$0xff]
    %v922 = vld [vmem:[%s1 + $0x16b8] sm:$0xff]
    %v923 = vld [vmem:[%s1 + $0x16c0] sm:$0xff]
    %v924 = vld [vmem:[%s1 + $0x16c8] sm:$0xff]
    %v925 = vld [vmem:[%s1 + $0x16d0] sm:$0xff]
    %v926 = vld [vmem:[%s1 + $0x16d8] sm:$0xff]
    %v927 = vld [vmem:[%s1 + $0x16e0] sm:$0xff]
    %v928 = vld [vmem:[%s1 + $0x16e8] sm:$0xff]
    %v929 = vld [vmem:[%s1 + $0x16f0] sm:$0xff]
    %v930 = vld [vmem:[%s1 + $0x16f8] sm:$0xff]
    %v931 = vld [vmem:[%s1 + $0x1700] sm:$0xff]
    %v932 = vld [vmem:[%s1 + $0x1708] sm:$0xff]
    %v933 = vld [vmem:[%s1 + $0x1710] sm:$0xff]
    %v934 = vld [vmem:[%s1 + $0x1718] sm:$0xff]
    %v935 = vld [vmem:[%s1 + $0x1720] sm:$0xff]
    %v936 = vld [vmem:[%s1 + $0x1728] sm:$0xff]
    %v937 = vld [vmem:[%s1 + $0x1730] sm:$0xff]
    %v938 = vld [vmem:[%s1 + $0x1738] sm:$0xff]
    %v939 = vld [vmem:[%s1 + $0x1740] sm:$0xff]
    %v940 = vld [vmem:[%s1 + $0x1748] sm:$0xff]
    %v941 = vld [vmem:[%s1 + $0x1750] sm:$0xff]
    %v942 = vld [vmem:[%s1 + $0x1758] sm:$0xff]
    %v943 = vld [vmem:[%s1 + $0x1760] sm:$0xff]
    %v944 = vld [vmem:[%s1 + $0x1768] sm:$0xff]
    %v945 = vld [vmem:[%s1 + $0x1770] sm:$0xff]
    %v946 = vld [vmem:[%s1 + $0x1778] sm:$0xff]
    %v947 = vld [vmem:[%s1 + $0x1780] sm:$0xff]
    %v948 = vld [vmem:[%s1 + $0x1788] sm:$0xff]
    %v949 = vld [vmem:[%s1 + $0x1790] sm:$0xff]
    %v950 = vld [vmem:[%s1 + $0x1798] sm:$0xff]
    %v951 = vld [vmem:[%s1 + $0x17a0] sm:$0xff]
    %v952 = vld [vmem:[%s1 + $0x17a8] sm:$0xff]
    %v953 = vld [vmem:[%s1 + $0x17b0] sm:$0xff]
    %v954 = vld [vmem:[%s1 + $0x17b8] sm:$0xff]
    %v955 = vld [vmem:[%s1 + $0x17c0] sm:$0xff]
    %v956 = vld [vmem:[%s1 + $0x17c8] sm:$0xff]
    %v957 = vld [vmem:[%s1 + $0x17d0] sm:$0xff]
    %v958 = vld [vmem:[%s1 + $0x17d8] sm:$0xff]
    %v959 = vld [vmem:[%s1 + $0x17e0] sm:$0xff]
    %v960 = vld [vmem:[%s1 + $0x17e8] sm:$0xff]
    %v961 = vld [vmem:[%s1 + $0x17f0] sm:$0xff]
    %v962 = vld [vmem:[%s1 + $0x17f8] sm:$0xff]
    %v963 = vld [vmem:[%s1 + $0x1800] sm:$0xff]
    %v964 = vld [vmem:[%s1 + $0x1808] sm:$0xff]
    %v965 = vld [vmem:[%s1 + $0x1810] sm:$0xff]
    %v966 = vld [vmem:[%s1 + $0x1818] sm:$0xff]
    %v967 = vld [vmem:[%s1 + $0x1820] sm:$0xff]
    %v968 = vld [vmem:[%s1 + $0x1828] sm:$0xff]
    %v969 = vld [vmem:[%s1 + $0x1830] sm:$0xff]
    %v970 = vld [vmem:[%s1 + $0x1838] sm:$0xff]
    %v971 = vld [vmem:[%s1 + $0x1840] sm:$0xff]
    %v972 = vld [vmem:[%s1 + $0x1848] sm:$0xff]
    %v973 = vld [vmem:[%s1 + $0x1850] sm:$0xff]
    %v974 = vld [vmem:[%s1 + $0x1858] sm:$0xff]
    %v975 = vld [vmem:[%s1 + $0x1860] sm:$0xff]
    %v976 = vld [vmem:[%s1 + $0x1868] sm:$0xff]
    %v977 = vld [vmem:[%s1 + $0x1870] sm:$0xff]
    %v978 = vld [vmem:[%s1 + $0x1878] sm:$0xff]
    %v979 = vld [vmem:[%s1 + $0x1880] sm:$0xff]
    %v980 = vld [vmem:[%s1 + $0x1888] sm:$0xff]
    %v981 = vld [vmem:[%s1 + $0x1890] sm:$0xff]
    %v982 = vld [vmem:[%s1 + $0x1898] sm:$0xff]
    %v983 = vld [vmem:[%s1 + $0x18a0] sm:$0xff]
    %v984 = vld [vmem:[%s1 + $0x18a8] sm:$0xff]
    %v985 = vld [vmem:[%s1 + $0x18b0] sm:$0xff]
    %v986 = vld [vmem:[%s1 + $0x18b8] sm:$0xff]
    %v987 = vld [vmem:[%s1 + $0x18c0] sm:$0xff]
    %v988 = vld [vmem:[%s1 + $0x18c8] sm:$0xff]
    %v989 = vld [vmem:[%s1 + $0x18d0] sm:$0xff]
    %v990 = vld [vmem:[%s1 + $0x18d8] sm:$0xff]
    %v991 = vld [vmem:[%s1 + $0x18e0] sm:$0xff]
    %v992 = vld [vmem:[%s1 + $0x18e8] sm:$0xff]
    %v993 = vld [vmem:[%s1 + $0x18f0] sm:$0xff]
    %v994 = vld [vmem:[%s1 + $0x18f8] sm:$0xff]
    %v995 = vld [vmem:[%s1 + $0x1900] sm:$0xff]
    %v996 = vld [vmem:[%s1 + $0x1908] sm:$0xff]
    %v997 = vld [vmem:[%s1 + $0x1910] sm:$0xff]
    %v998 = vld [vmem:[%s1 + $0x1918] sm:$0xff]
    %v999 = vld [vmem:[%s1 + $0x1920] sm:$0xff]
    %v1000 = vld [vmem:[%s1 + $0x1928] sm:$0xff]
    %v1001 = vld [vmem:[%s1 + $0x1930] sm:$0xff]
    %v1002 = vld [vmem:[%s1 + $0x1938] sm:$0xff]
    %v1003 = vld [vmem:[%s1 + $0x1940] sm:$0xff]
    %v1004 = vld [vmem:[%s1 + $0x1948] sm:$0xff]
    %v1005 = vld [vmem:[%s1 + $0x1950] sm:$0xff]
    %v1006 = vld [vmem:[%s1 + $0x1958] sm:$0xff]
    %v1007 = vld [vmem:[%s1 + $0x1960] sm:$0xff]
    %v1008 = vld [vmem:[%s1 + $0x1968] sm:$0xff]
    %v1009 = vld [vmem:[%s1 + $0x1970] sm:$0xff]
    %v1010 = vld [vmem:[%s1 + $0x1978] sm:$0xff]
    %v1011 = vld [vmem:[%s1 + $0x1980] sm:$0xff]
    %v1012 = vld [vmem:[%s1 + $0x1988] sm:$0xff]
    %v1013 = vld [vmem:[%s1 + $0x1990] sm:$0xff]
    %v1014 = vld [vmem:[%s1 + $0x1998] sm:$0xff]
    %v1015 = vld [vmem:[%s1 + $0x19a0] sm:$0xff]
    %v1016 = vld [vmem:[%s1 + $0x19a8] sm:$0xff]
    %v1017 = vld [vmem:[%s1 + $0x19b0] sm:$0xff]
    %v1018 = vld [vmem:[%s1 + $0x19b8] sm:$0xff]
    %v1019 = vld [vmem:[%s1 + $0x19c0] sm:$0xff]
    %v1020 = vld [vmem:[%s1 + $0x19c8] sm:$0xff]
    %v1021 = vld [vmem:[%s1 + $0x19d0] sm:$0xff]
    %v1022 = vld [vmem:[%s1 + $0x19d8] sm:$0xff]
    %v1023 = vld [vmem:[%s1 + $0x19e0] sm:$0xff]
    %v1024 = vld [vmem:[%s1 + $0x19e8] sm:$0xff]
    %v1025 = vld [vmem:[%s1 + $0x19f0] sm:$0xff]
    %v1026 = vld [vmem:[%s1 + $0x19f8] sm:$0xff]
    %v1027 = vld [vmem:[%s1 + $0x1a00] sm:$0xff]
    %v1028 = vld [vmem:[%s1 + $0x1a08] sm:$0xff]
    %v1029 = vld [vmem:[%s1 + $0x1a10] sm:$0xff]
    %v1030 = vld [vmem:[%s1 + $0x1a18] sm:$0xff]
    %v1031 = vld [vmem:[%s1 + $0x1a20] sm:$0xff]
    %v1032 = vld [vmem:[%s1 + $0x1a28] sm:$0xff]
    %v1033 = vld [vmem:[%s1 + $0x1a30] sm:$0xff]
    %v1034 = vld [vmem:[%s1 + $0x1a38] sm:$0xff]
    %v1035 = vld [vmem:[%s1 + $0x1a40] sm:$0xff]
    %v1036 = vld [vmem:[%s1 + $0x1a48] sm:$0xff]
    %v1037 = vld [vmem:[%s1 + $0x1a50] sm:$0xff]
    %v1038 = vld [vmem:[%s1 + $0x1a58] sm:$0xff]
    %v1039 = vld [vmem:[%s1 + $0x1a60] sm:$0xff]
    %v1040 = vld [vmem:[%s1 + $0x1a68] sm:$0xff]
    %v1041 = vld [vmem:[%s1 + $0x1a70] sm:$0xff]
    %v1042 = vld [vmem:[%s1 + $0x1a78] sm:$0xff]
    %v1043 = vld [vmem:[%s1 + $0x1a80] sm:$0xff]
    %v1044 = vld [vmem:[%s1 + $0x1a88] sm:$0xff]
    %v1045 = vld [vmem:[%s1 + $0x1a90] sm:$0xff]
    %v1046 = vld [vmem:[%s1 + $0x1a98] sm:$0xff]
    %v1047 = vld [vmem:[%s1 + $0x1aa0] sm:$0xff]
    %v1048 = vld [vmem:[%s1 + $0x1aa8] sm:$0xff]
    %v1049 = vld [vmem:[%s1 + $0x1ab0] sm:$0xff]
    %v1050 = vld [vmem:[%s1 + $0x1ab8] sm:$0xff]
    %v1051 = vld [vmem:[%s1 + $0x1ac0] sm:$0xff]
    %v1052 = vld [vmem:[%s1 + $0x1ac8] sm:$0xff]
    %v1053 = vld [vmem:[%s1 + $0x1ad0] sm:$0xff]
    %v1054 = vld [vmem:[%s1 + $0x1ad8] sm:$0xff]
    %v1055 = vld [vmem:[%s1 + $0x1ae0] sm:$0xff]
    %v1056 = vld [vmem:[%s1 + $0x1ae8] sm:$0xff]
    %v1057 = vld [vmem:[%s1 + $0x1af0] sm:$0xff]
    %v1058 = vld [vmem:[%s1 + $0x1af8] sm:$0xff]
    %v1059 = vld [vmem:[%s1 + $0x1b00] sm:$0xff]
    %v1060 = vld [vmem:[%s1 + $0x1b08] sm:$0xff]
    %v1061 = vld [vmem:[%s1 + $0x1b10] sm:$0xff]
    %v1062 = vld [vmem:[%s1 + $0x1b18] sm:$0xff]
    %v1063 = vld [vmem:[%s1 + $0x1b20] sm:$0xff]
    %v1064 = vld [vmem:[%s1 + $0x1b28] sm:$0xff]
    %v1065 = vld [vmem:[%s1 + $0x1b30] sm:$0xff]
    %v1066 = vld [vmem:[%s1 + $0x1b38] sm:$0xff]
    %v1067 = vld [vmem:[%s1 + $0x1b40] sm:$0xff]
    %v1068 = vld [vmem:[%s1 + $0x1b48] sm:$0xff]
    %v1069 = vld [vmem:[%s1 + $0x1b50] sm:$0xff]
    %v1070 = vld [vmem:[%s1 + $0x1b58] sm:$0xff]
    %v1071 = vld [vmem:[%s1 + $0x1b60] sm:$0xff]
    %v1072 = vld [vmem:[%s1 + $0x1b68] sm:$0xff]
    %v1073 = vld [vmem:[%s1 + $0x1b70] sm:$0xff]
    %v1074 = vld [vmem:[%s1 + $0x1b78] sm:$0xff]
    %v1075 = vld [vmem:[%s1 + $0x1b80] sm:$0xff]
    %v1076 = vld [vmem:[%s1 + $0x1b88] sm:$0xff]
    %v1077 = vld [vmem:[%s1 + $0x1b90] sm:$0xff]
    %v1078 = vld [vmem:[%s1 + $0x1b98] sm:$0xff]
    %v1079 = vld [vmem:[%s1 + $0x1ba0] sm:$0xff]
    %v1080 = vld [vmem:[%s1 + $0x1ba8] sm:$0xff]
    %v1081 = vld [vmem:[%s1 + $0x1bb0] sm:$0xff]
    %v1082 = vld [vmem:[%s1 + $0x1bb8] sm:$0xff]
    %v1083 = vld [vmem:[%s1 + $0x1bc0] sm:$0xff]
    %v1084 = vld [vmem:[%s1 + $0x1bc8] sm:$0xff]
    %v1085 = vld [vmem:[%s1 + $0x1bd0] sm:$0xff]
    %v1086 = vld [vmem:[%s1 + $0x1bd8] sm:$0xff]
    %v1087 = vld [vmem:[%s1 + $0x1be0] sm:$0xff]
    %v1088 = vld [vmem:[%s1 + $0x1be8] sm:$0xff]
    %v1089 = vld [vmem:[%s1 + $0x1bf0] sm:$0xff]
    %v1090 = vld [vmem:[%s1 + $0x1bf8] sm:$0xff]
    %v1091 = vld [vmem:[%s1 + $0x1c00] sm:$0xff]
    %v1092 = vld [vmem:[%s1 + $0x1c08] sm:$0xff]
    %v1093 = vld [vmem:[%s1 + $0x1c10] sm:$0xff]
    %v1094 = vld [vmem:[%s1 + $0x1c18] sm:$0xff]
    %v1095 = vld [vmem:[%s1 + $0x1c20] sm:$0xff]
    %v1096 = vld [vmem:[%s1 + $0x1c28] sm:$0xff]
    %v1097 = vld [vmem:[%s1 + $0x1c30] sm:$0xff]
    %v1098 = vld [vmem:[%s1 + $0x1c38] sm:$0xff]
    %v1099 = vld [vmem:[%s1 + $0x1c40] sm:$0xff]
    %v1100 = vld [vmem:[%s1 + $0x1c48] sm:$0xff]
    %v1101 = vld [vmem:[%s1 + $0x1c50] sm:$0xff]
    %v1102 = vld [vmem:[%s1 + $0x1c58] sm:$0xff]
    %v1103 = vld [vmem:[%s1 + $0x1c60] sm:$0xff]
    %v1104 = vld [vmem:[%s1 + $0x1c68] sm:$0xff]
    %v1105 = vld [vmem:[%s1 + $0x1c70] sm:$0xff]
    %v1106 = vld [vmem:[%s1 + $0x1c78] sm:$0xff]
    %v1107 = vld [vmem:[%s1 + $0x1c80] sm:$0xff]
    %v1108 = vld [vmem:[%s1 + $0x1c88] sm:$0xff]
    %v1109 = vld [vmem:[%s1 + $0x1c90] sm:$0xff]
    %v1110 = vld [vmem:[%s1 + $0x1c98] sm:$0xff]
    %v1111 = vld [vmem:[%s1 + $0x1ca0] sm:$0xff]
    %v1112 = vld [vmem:[%s1 + $0x1ca8] sm:$0xff]
    %v1113 = vld [vmem:[%s1 + $0x1cb0] sm:$0xff]
    %v1114 = vld [vmem:[%s1 + $0x1cb8] sm:$0xff]
    %v1115 = vld [vmem:[%s1 + $0x1cc0] sm:$0xff]
    %v1116 = vld [vmem:[%s1 + $0x1cc8] sm:$0xff]
    %v1117 = vld [vmem:[%s1 + $0x1cd0] sm:$0xff]
    %v1118 = vld [vmem:[%s1 + $0x1cd8] sm:$0xff]
    %v1119 = vld [vmem:[%s1 + $0x1ce0] sm:$0xff]
    %v1120 = vld [vmem:[%s1 + $0x1ce8] sm:$0xff]
    %v1121 = vld [vmem:[%s1 + $0x1cf0] sm:$0xff]
    %v1122 = vld [vmem:[%s1 + $0x1cf8] sm:$0xff]
    %v1123 = vld [vmem:[%s1 + $0x1d00] sm:$0xff]
    %v1124 = vld [vmem:[%s1 + $0x1d08] sm:$0xff]
    %v1125 = vld [vmem:[%s1 + $0x1d10] sm:$0xff]
    %v1126 = vld [vmem:[%s1 + $0x1d18] sm:$0xff]
    %v1127 = vld [vmem:[%s1 + $0x1d20] sm:$0xff]
    %v1128 = vld [vmem:[%s1 + $0x1d28] sm:$0xff]
    %v1129 = vld [vmem:[%s1 + $0x1d30] sm:$0xff]
    %v1130 = vld [vmem:[%s1 + $0x1d38] sm:$0xff]
    %v1131 = vld [vmem:[%s1 + $0x1d40] sm:$0xff]
    %v1132 = vld [vmem:[%s1 + $0x1d48] sm:$0xff]
    %v1133 = vld [vmem:[%s1 + $0x1d50] sm:$0xff]
    %v1134 = vld [vmem:[%s1 + $0x1d58] sm:$0xff]
    %v1135 = vld [vmem:[%s1 + $0x1d60] sm:$0xff]
    %v1136 = vld [vmem:[%s1 + $0x1d68] sm:$0xff]
    %v1137 = vld [vmem:[%s1 + $0x1d70] sm:$0xff]
    %v1138 = vld [vmem:[%s1 + $0x1d78] sm:$0xff]
    %v1139 = vld [vmem:[%s1 + $0x1d80] sm:$0xff]
    %v1140 = vld [vmem:[%s1 + $0x1d88] sm:$0xff]
    %v1141 = vld [vmem:[%s1 + $0x1d90] sm:$0xff]
    %v1142 = vld [vmem:[%s1 + $0x1d98] sm:$0xff]
    %v1143 = vld [vmem:[%s1 + $0x1da0] sm:$0xff]
    %v1144 = vld [vmem:[%s1 + $0x1da8] sm:$0xff]
    %v1145 = vld [vmem:[%s1 + $0x1db0] sm:$0xff]
    %v1146 = vld [vmem:[%s1 + $0x1db8] sm:$0xff]
    %v1147 = vld [vmem:[%s1 + $0x1dc0] sm:$0xff]
    %v1148 = vld [vmem:[%s1 + $0x1dc8] sm:$0xff]
    %v1149 = vld [vmem:[%s1 + $0x1dd0] sm:$0xff]
    %v1150 = vld [vmem:[%s1 + $0x1dd8] sm:$0xff]
    %v1151 = vld [vmem:[%s1 + $0x1de0] sm:$0xff]
    %v1152 = vld [vmem:[%s1 + $0x1de8] sm:$0xff]
    %v1153 = vld [vmem:[%s1 + $0x1df0] sm:$0xff]
    %v1154 = vld [vmem:[%s1 + $0x1df8] sm:$0xff]
    %v1155 = vld [vmem:[%s1 + $0x1e00] sm:$0xff]
    %v1156 = vld [vmem:[%s1 + $0x1e08] sm:$0xff]
    %v1157 = vld [vmem:[%s1 + $0x1e10] sm:$0xff]
    %v1158 = vld [vmem:[%s1 + $0x1e18] sm:$0xff]
    %v1159 = vld [vmem:[%s1 + $0x1e20] sm:$0xff]
    %v1160 = vld [vmem:[%s1 + $0x1e28] sm:$0xff]
    %v1161 = vld [vmem:[%s1 + $0x1e30] sm:$0xff]
    %v1162 = vld [vmem:[%s1 + $0x1e38] sm:$0xff]
    %v1163 = vld [vmem:[%s1 + $0x1e40] sm:$0xff]
    %v1164 = vld [vmem:[%s1 + $0x1e48] sm:$0xff]
    %v1165 = vld [vmem:[%s1 + $0x1e50] sm:$0xff]
    %v1166 = vld [vmem:[%s1 + $0x1e58] sm:$0xff]
    %v1167 = vld [vmem:[%s1 + $0x1e60] sm:$0xff]
    %v1168 = vld [vmem:[%s1 + $0x1e68] sm:$0xff]
    %v1169 = vld [vmem:[%s1 + $0x1e70] sm:$0xff]
    %v1170 = vld [vmem:[%s1 + $0x1e78] sm:$0xff]
    %v1171 = vld [vmem:[%s1 + $0x1e80] sm:$0xff]
    %v1172 = vld [vmem:[%s1 + $0x1e88] sm:$0xff]
    %v1173 = vld [vmem:[%s1 + $0x1e90] sm:$0xff]
    %v1174 = vld [vmem:[%s1 + $0x1e98] sm:$0xff]
    %v1175 = vld [vmem:[%s1 + $0x1ea0] sm:$0xff]
    %v1176 = vld [vmem:[%s1 + $0x1ea8] sm:$0xff]
    %v1177 = vld [vmem:[%s1 + $0x1eb0] sm:$0xff]
    %v1178 = vld [vmem:[%s1 + $0x1eb8] sm:$0xff]
    %v1179 = vld [vmem:[%s1 + $0x1ec0] sm:$0xff]
    %v1180 = vld [vmem:[%s1 + $0x1ec8] sm:$0xff]
    %v1181 = vld [vmem:[%s1 + $0x1ed0] sm:$0xff]
    %v1182 = vld [vmem:[%s1 + $0x1ed8] sm:$0xff]
    %v1183 = vld [vmem:[%s1 + $0x1ee0] sm:$0xff]
    %v1184 = vld [vmem:[%s1 + $0x1ee8] sm:$0xff]
    %v1185 = vld [vmem:[%s1 + $0x1ef0] sm:$0xff]
    %v1186 = vld [vmem:[%s1 + $0x1ef8] sm:$0xff]
    %v1187 = vld [vmem:[%s1 + $0x1f00] sm:$0xff]
    %v1188 = vld [vmem:[%s1 + $0x1f08] sm:$0xff]
    %v1189 = vld [vmem:[%s1 + $0x1f10] sm:$0xff]
    %v1190 = vld [vmem:[%s1 + $0x1f18] sm:$0xff]
    %v1191 = vld [vmem:[%s1 + $0x1f20] sm:$0xff]
    %v1192 = vld [vmem:[%s1 + $0x1f28] sm:$0xff]
    %v1193 = vld [vmem:[%s1 + $0x1f30] sm:$0xff]
    %v1194 = vld [vmem:[%s1 + $0x1f38] sm:$0xff]
    %v1195 = vld [vmem:[%s1 + $0x1f40] sm:$0xff]
    %v1196 = vld [vmem:[%s1 + $0x1f48] sm:$0xff]
    %v1197 = vld [vmem:[%s1 + $0x1f50] sm:$0xff]
    %v1198 = vld [vmem:[%s1 + $0x1f58] sm:$0xff]
    %v1199 = vld [vmem:[%s1 + $0x1f60] sm:$0xff]
    %v1200 = vld [vmem:[%s1 + $0x1f68] sm:$0xff]
    %v1201 = vld [vmem:[%s1 + $0x1f70] sm:$0xff]
    %v1202 = vld [vmem:[%s1 + $0x1f78] sm:$0xff]
    %v1203 = vld [vmem:[%s1 + $0x1f80] sm:$0xff]
    %v1204 = vld [vmem:[%s1 + $0x1f88] sm:$0xff]
    %v1205 = vld [vmem:[%s1 + $0x1f90] sm:$0xff]
    %v1206 = vld [vmem:[%s1 + $0x1f98] sm:$0xff]
    %v1207 = vld [vmem:[%s1 + $0x1fa0] sm:$0xff]
    %v1208 = vld [vmem:[%s1 + $0x1fa8] sm:$0xff]
    %v1209 = vld [vmem:[%s1 + $0x1fb0] sm:$0xff]
    %v1210 = vld [vmem:[%s1 + $0x1fb8] sm:$0xff]
    %v1211 = vld [vmem:[%s1 + $0x1fc0] sm:$0xff]
    %v1212 = vld [vmem:[%s1 + $0x1fc8] sm:$0xff]
    %v1213 = vld [vmem:[%s1 + $0x1fd0] sm:$0xff]
    %v1214 = vld [vmem:[%s1 + $0x1fd8] sm:$0xff]
    %v1215 = vld [vmem:[%s1 + $0x1fe0] sm:$0xff]
    %v1216 = vld [vmem:[%s1 + $0x1fe8] sm:$0xff]
    %v1217 = vld [vmem:[%s1 + $0x1ff0] sm:$0xff]
    %v1218 = vld [vmem:[%s1 + $0x1ff8] sm:$0xff]
    %v1219 = vld [vmem:[%s1 + $0x2000] sm:$0xff]
    %v1220 = vld [vmem:[%s1 + $0x2008] sm:$0xff]
    %v1221 = vld [vmem:[%s1 + $0x2010] sm:$0xff]
    %v1222 = vld [vmem:[%s1 + $0x2018] sm:$0xff]
    %v1223 = vld [vmem:[%s1 + $0x2020] sm:$0xff]
    %v1224 = vld [vmem:[%s1 + $0x2028] sm:$0xff]
    %v1225 = vld [vmem:[%s1 + $0x2030] sm:$0xff]
    %v1226 = vld [vmem:[%s1 + $0x2038] sm:$0xff]
    %v1227 = vld [vmem:[%s1 + $0x2040] sm:$0xff]
    %v1228 = vld [vmem:[%s1 + $0x2048] sm:$0xff]
    %v1229 = vld [vmem:[%s1 + $0x2050] sm:$0xff]
    %v1230 = vld [vmem:[%s1 + $0x2058] sm:$0xff]
    %v1231 = vld [vmem:[%s1 + $0x2060] sm:$0xff]
    %v1232 = vld [vmem:[%s1 + $0x2068] sm:$0xff]
    %v1233 = vld [vmem:[%s1 + $0x2070] sm:$0xff]
    %v1234 = vld [vmem:[%s1 + $0x2078] sm:$0xff]
    %v1235 = vld [vmem:[%s1 + $0x2080] sm:$0xff]
    %v1236 = vld [vmem:[%s1 + $0x2088] sm:$0xff]
    %v1237 = vld [vmem:[%s1 + $0x2090] sm:$0xff]
    %v1238 = vld [vmem:[%s1 + $0x2098] sm:$0xff]
    %v1239 = vld [vmem:[%s1 + $0x20a0] sm:$0xff]
    %v1240 = vld [vmem:[%s1 + $0x20a8] sm:$0xff]
    %v1241 = vld [vmem:[%s1 + $0x20b0] sm:$0xff]
    %v1242 = vld [vmem:[%s1 + $0x20b8] sm:$0xff]
    %v1243 = vld [vmem:[%s1 + $0x20c0] sm:$0xff]
    %v1244 = vld [vmem:[%s1 + $0x20c8] sm:$0xff]
    %v1245 = vld [vmem:[%s1 + $0x20d0] sm:$0xff]
    %v1246 = vld [vmem:[%s1 + $0x20d8] sm:$0xff]
    %v1247 = vld [vmem:[%s1 + $0x20e0] sm:$0xff]
    %v1248 = vld [vmem:[%s1 + $0x20e8] sm:$0xff]
    %v1249 = vld [vmem:[%s1 + $0x20f0] sm:$0xff]
    %v1250 = vld [vmem:[%s1 + $0x20f8] sm:$0xff]
    %v1251 = vld [vmem:[%s1 + $0x2100] sm:$0xff]
    %v1252 = vld [vmem:[%s1 + $0x2108] sm:$0xff]
    %v1253 = vld [vmem:[%s1 + $0x2110] sm:$0xff]
    %v1254 = vld [vmem:[%s1 + $0x2118] sm:$0xff]
    %v1255 = vld [vmem:[%s1 + $0x2120] sm:$0xff]
    %v1256 = vld [vmem:[%s1 + $0x2128] sm:$0xff]
    %v1257 = vld [vmem:[%s1 + $0x2130] sm:$0xff]
    %v1258 = vld [vmem:[%s1 + $0x2138] sm:$0xff]
    %v1259 = vld [vmem:[%s1 + $0x2140] sm:$0xff]
    %v1260 = vld [vmem:[%s1 + $0x2148] sm:$0xff]
    %v1261 = vld [vmem:[%s1 + $0x2150] sm:$0xff]
    %v1262 = vld [vmem:[%s1 + $0x2158] sm:$0xff]
    %v1263 = vld [vmem:[%s1 + $0x2160] sm:$0xff]
    %v1264 = vld [vmem:[%s1 + $0x2168] sm:$0xff]
    %v1265 = vld [vmem:[%s1 + $0x2170] sm:$0xff]
    %v1266 = vld [vmem:[%s1 + $0x2178] sm:$0xff]
    %v1267 = vld [vmem:[%s1 + $0x2180] sm:$0xff]
    %v1268 = vld [vmem:[%s1 + $0x2188] sm:$0xff]
    %v1269 = vld [vmem:[%s1 + $0x2190] sm:$0xff]
    %v1270 = vld [vmem:[%s1 + $0x2198] sm:$0xff]
    %v1271 = vld [vmem:[%s1 + $0x21a0] sm:$0xff]
    %v1272 = vld [vmem:[%s1 + $0x21a8] sm:$0xff]
    %v1273 = vld [vmem:[%s1 + $0x21b0] sm:$0xff]
    %v1274 = vld [vmem:[%s1 + $0x21b8] sm:$0xff]
    %v1275 = vld [vmem:[%s1 + $0x21c0] sm:$0xff]
    %v1276 = vld [vmem:[%s1 + $0x21c8] sm:$0xff]
    %v1277 = vld [vmem:[%s1 + $0x21d0] sm:$0xff]
    %v1278 = vld [vmem:[%s1 + $0x21d8] sm:$0xff]
    %v1279 = vld [vmem:[%s1 + $0x21e0] sm:$0xff]
    %v1280 = vld [vmem:[%s1 + $0x21e8] sm:$0xff]
    %v1281 = vld [vmem:[%s1 + $0x21f0] sm:$0xff]
    %v1282 = vld [vmem:[%s1 + $0x21f8] sm:$0xff]
    %v1283 = vld [vmem:[%s1 + $0x2200] sm:$0xff]
    %v1284 = vld [vmem:[%s1 + $0x2208] sm:$0xff]
    %v1285 = vld [vmem:[%s1 + $0x2210] sm:$0xff]
    %v1286 = vld [vmem:[%s1 + $0x2218] sm:$0xff]
    %v1287 = vld [vmem:[%s1 + $0x2220] sm:$0xff]
    %v1288 = vld [vmem:[%s1 + $0x2228] sm:$0xff]
    %v1289 = vld [vmem:[%s1 + $0x2230] sm:$0xff]
    %v1290 = vld [vmem:[%s1 + $0x2238] sm:$0xff]
    %v1291 = vld [vmem:[%s1 + $0x2240] sm:$0xff]
    %v1292 = vld [vmem:[%s1 + $0x2248] sm:$0xff]
    %v1293 = vld [vmem:[%s1 + $0x2250] sm:$0xff]
    %v1294 = vld [vmem:[%s1 + $0x2258] sm:$0xff]
    %v1295 = vld [vmem:[%s1 + $0x2260] sm:$0xff]
    %v1296 = vld [vmem:[%s1 + $0x2268] sm:$0xff]
    %v1297 = vld [vmem:[%s1 + $0x2270] sm:$0xff]
    %v1298 = vld [vmem:[%s1 + $0x2278] sm:$0xff]
    %v1299 = vld [vmem:[%s1 + $0x2280] sm:$0xff]
    %v1300 = vld [vmem:[%s1 + $0x2288] sm:$0xff]
    %v1301 = vld [vmem:[%s1 + $0x2290] sm:$0xff]
    %v1302 = vld [vmem:[%s1 + $0x2298] sm:$0xff]
    %v1303 = vld [vmem:[%s1 + $0x22a0] sm:$0xff]
    %v1304 = vld [vmem:[%s1 + $0x22a8] sm:$0xff]
    %v1305 = vld [vmem:[%s1 + $0x22b0] sm:$0xff]
    %v1306 = vld [vmem:[%s1 + $0x22b8] sm:$0xff]
    %v1307 = vld [vmem:[%s1 + $0x22c0] sm:$0xff]
    %v1308 = vld [vmem:[%s1 + $0x22c8] sm:$0xff]
    %v1309 = vld [vmem:[%s1 + $0x22d0] sm:$0xff]
    %v1310 = vld [vmem:[%s1 + $0x22d8] sm:$0xff]
    %v1311 = vld [vmem:[%s1 + $0x22e0] sm:$0xff]
    %v1312 = vld [vmem:[%s1 + $0x22e8] sm:$0xff]
    %v1313 = vld [vmem:[%s1 + $0x22f0] sm:$0xff]
    %v1314 = vld [vmem:[%s1 + $0x22f8] sm:$0xff]
    %v1315 = vld [vmem:[%s1 + $0x2300] sm:$0xff]
    %v1316 = vld [vmem:[%s1 + $0x2308] sm:$0xff]
    %v1317 = vld [vmem:[%s1 + $0x2310] sm:$0xff]
    %v1318 = vld [vmem:[%s1 + $0x2318] sm:$0xff]
    %v1319 = vld [vmem:[%s1 + $0x2320] sm:$0xff]
    %v1320 = vld [vmem:[%s1 + $0x2328] sm:$0xff]
    %v1321 = vld [vmem:[%s1 + $0x2330] sm:$0xff]
    %v1322 = vld [vmem:[%s1 + $0x2338] sm:$0xff]
    %v1323 = vld [vmem:[%s1 + $0x2340] sm:$0xff]
    %v1324 = vld [vmem:[%s1 + $0x2348] sm:$0xff]
    %v1325 = vld [vmem:[%s1 + $0x2350] sm:$0xff]
    %v1326 = vld [vmem:[%s1 + $0x2358] sm:$0xff]
    %v1327 = vld [vmem:[%s1 + $0x2360] sm:$0xff]
    %v1328 = vld [vmem:[%s1 + $0x2368] sm:$0xff]
    %v1329 = vld [vmem:[%s1 + $0x2370] sm:$0xff]
    %v1330 = vld [vmem:[%s1 + $0x2378] sm:$0xff]
    %v1331 = vld [vmem:[%s1 + $0x2380] sm:$0xff]
    %v1332 = vld [vmem:[%s1 + $0x2388] sm:$0xff]
    %v1333 = vld [vmem:[%s1 + $0x2390] sm:$0xff]
    %v1334 = vld [vmem:[%s1 + $0x2398] sm:$0xff]
    %v1335 = vld [vmem:[%s1 + $0x23a0] sm:$0xff]
    %v1336 = vld [vmem:[%s1 + $0x23a8] sm:$0xff]
    %v1337 = vld [vmem:[%s1 + $0x23b0] sm:$0xff]
    %v1338 = vld [vmem:[%s1 + $0x23b8] sm:$0xff]
    %v1339 = vld [vmem:[%s1 + $0x23c0] sm:$0xff]
    %v1340 = vld [vmem:[%s1 + $0x23c8] sm:$0xff]
    %v1341 = vld [vmem:[%s1 + $0x23d0] sm:$0xff]
    %v1342 = vld [vmem:[%s1 + $0x23d8] sm:$0xff]
    %v1343 = vld [vmem:[%s1 + $0x23e0] sm:$0xff]
    %v1344 = vld [vmem:[%s1 + $0x23e8] sm:$0xff]
    %v1345 = vld [vmem:[%s1 + $0x23f0] sm:$0xff]
    %v1346 = vld [vmem:[%s1 + $0x23f8] sm:$0xff]
    %v1347 = vld [vmem:[%s1 + $0x2400] sm:$0xff]
    %v1348 = vld [vmem:[%s1 + $0x2408] sm:$0xff]
    %v1349 = vld [vmem:[%s1 + $0x2410] sm:$0xff]
    %v1350 = vld [vmem:[%s1 + $0x2418] sm:$0xff]
    %v1351 = vld [vmem:[%s1 + $0x2420] sm:$0xff]
    %v1352 = vld [vmem:[%s1 + $0x2428] sm:$0xff]
    %v1353 = vld [vmem:[%s1 + $0x2430] sm:$0xff]
    %v1354 = vld [vmem:[%s1 + $0x2438] sm:$0xff]
    %v1355 = vld [vmem:[%s1 + $0x2440] sm:$0xff]
    %v1356 = vld [vmem:[%s1 + $0x2448] sm:$0xff]
    %v1357 = vld [vmem:[%s1 + $0x2450] sm:$0xff]
    %v1358 = vld [vmem:[%s1 + $0x2458] sm:$0xff]
    %v1359 = vld [vmem:[%s1 + $0x2460] sm:$0xff]
    %v1360 = vld [vmem:[%s1 + $0x2468] sm:$0xff]
    %v1361 = vld [vmem:[%s1 + $0x2470] sm:$0xff]
    %v1362 = vld [vmem:[%s1 + $0x2478] sm:$0xff]
    %v1363 = vld [vmem:[%s1 + $0x2480] sm:$0xff]
    %v1364 = vld [vmem:[%s1 + $0x2488] sm:$0xff]
    %v1365 = vld [vmem:[%s1 + $0x2490] sm:$0xff]
    %v1366 = vld [vmem:[%s1 + $0x2498] sm:$0xff]
    %v1367 = vld [vmem:[%s1 + $0x24a0] sm:$0xff]
    %v1368 = vld [vmem:[%s1 + $0x24a8] sm:$0xff]
    %v1369 = vld [vmem:[%s1 + $0x24b0] sm:$0xff]
    %v1370 = vld [vmem:[%s1 + $0x24b8] sm:$0xff]
    %v1371 = vld [vmem:[%s1 + $0x24c0] sm:$0xff]
    %v1372 = vld [vmem:[%s1 + $0x24c8] sm:$0xff]
    %v1373 = vld [vmem:[%s1 + $0x24d0] sm:$0xff]
    %v1374 = vld [vmem:[%s1 + $0x24d8] sm:$0xff]
    %v1375 = vld [vmem:[%s1 + $0x24e0] sm:$0xff]
    %v1376 = vld [vmem:[%s1 + $0x24e8] sm:$0xff]
    %v1377 = vld [vmem:[%s1 + $0x24f0] sm:$0xff]
    %v1378 = vld [vmem:[%s1 + $0x24f8] sm:$0xff]
    %v1379 = vld [vmem:[%s1 + $0x2500] sm:$0xff]
    %v1380 = vld [vmem:[%s1 + $0x2508] sm:$0xff]
    %v1381 = vld [vmem:[%s1 + $0x2510] sm:$0xff]
    %v1382 = vld [vmem:[%s1 + $0x2518] sm:$0xff]
    %v1383 = vld [vmem:[%s1 + $0x2520] sm:$0xff]
    %v1384 = vld [vmem:[%s1 + $0x2528] sm:$0xff]
    %v1385 = vld [vmem:[%s1 + $0x2530] sm:$0xff]
    %v1386 = vld [vmem:[%s1 + $0x2538] sm:$0xff]
    %v1387 = vld [vmem:[%s1 + $0x2540] sm:$0xff]
    %v1388 = vld [vmem:[%s1 + $0x2548] sm:$0xff]
    %v1389 = vld [vmem:[%s1 + $0x2550] sm:$0xff]
    %v1390 = vld [vmem:[%s1 + $0x2558] sm:$0xff]
    %v1391 = vld [vmem:[%s1 + $0x2560] sm:$0xff]
    %v1392 = vld [vmem:[%s1 + $0x2568] sm:$0xff]
    %v1393 = vld [vmem:[%s1 + $0x2570] sm:$0xff]
    %v1394 = vld [vmem:[%s1 + $0x2578] sm:$0xff]
    %v1395 = vld [vmem:[%s1 + $0x2580] sm:$0xff]
    %v1396 = vld [vmem:[%s1 + $0x2588] sm:$0xff]
    %v1397 = vld [vmem:[%s1 + $0x2590] sm:$0xff]
    %v1398 = vld [vmem:[%s1 + $0x2598] sm:$0xff]
    %v1399 = vld [vmem:[%s1 + $0x25a0] sm:$0xff]
    %v1400 = vld [vmem:[%s1 + $0x25a8] sm:$0xff]
    %v1401 = vld [vmem:[%s1 + $0x25b0] sm:$0xff]
    %v1402 = vld [vmem:[%s1 + $0x25b8] sm:$0xff]
    %v1403 = vld [vmem:[%s1 + $0x25c0] sm:$0xff]
    %v1404 = vld [vmem:[%s1 + $0x25c8] sm:$0xff]
    %v1405 = vld [vmem:[%s1 + $0x25d0] sm:$0xff]
    %v1406 = vld [vmem:[%s1 + $0x25d8] sm:$0xff]
    %v1407 = vld [vmem:[%s1 + $0x25e0] sm:$0xff]
    %v1408 = vld [vmem:[%s1 + $0x25e8] sm:$0xff]
    %v1409 = vld [vmem:[%s1 + $0x25f0] sm:$0xff]
    %v1410 = vld [vmem:[%s1 + $0x25f8] sm:$0xff]
    %v1411 = vld [vmem:[%s1 + $0x2600] sm:$0xff]
    %v1412 = vld [vmem:[%s1 + $0x2608] sm:$0xff]
    %v1413 = vld [vmem:[%s1 + $0x2610] sm:$0xff]
    %v1414 = vld [vmem:[%s1 + $0x2618] sm:$0xff]
    %v1415 = vld [vmem:[%s1 + $0x2620] sm:$0xff]
    %v1416 = vld [vmem:[%s1 + $0x2628] sm:$0xff]
    %v1417 = vld [vmem:[%s1 + $0x2630] sm:$0xff]
    %v1418 = vld [vmem:[%s1 + $0x2638] sm:$0xff]
    %v1419 = vld [vmem:[%s1 + $0x2640] sm:$0xff]
    %v1420 = vld [vmem:[%s1 + $0x2648] sm:$0xff]
    %v1421 = vld [vmem:[%s1 + $0x2650] sm:$0xff]
    %v1422 = vld [vmem:[%s1 + $0x2658] sm:$0xff]
    %v1423 = vld [vmem:[%s1 + $0x2660] sm:$0xff]
    %v1424 = vld [vmem:[%s1 + $0x2668] sm:$0xff]
    %v1425 = vld [vmem:[%s1 + $0x2670] sm:$0xff]
    %v1426 = vld [vmem:[%s1 + $0x2678] sm:$0xff]
    %v1427 = vld [vmem:[%s1 + $0x2680] sm:$0xff]
    %v1428 = vld [vmem:[%s1 + $0x2688] sm:$0xff]
    %v1429 = vld [vmem:[%s1 + $0x2690] sm:$0xff]
    %v1430 = vld [vmem:[%s1 + $0x2698] sm:$0xff]
    %v1431 = vld [vmem:[%s1 + $0x26a0] sm:$0xff]
    %v1432 = vld [vmem:[%s1 + $0x26a8] sm:$0xff]
    %v1433 = vld [vmem:[%s1 + $0x26b0] sm:$0xff]
    %v1434 = vld [vmem:[%s1 + $0x26b8] sm:$0xff]
    %v1435 = vld [vmem:[%s1 + $0x26c0] sm:$0xff]
    %v1436 = vld [vmem:[%s1 + $0x26c8] sm:$0xff]
    %v1437 = vld [vmem:[%s1 + $0x26d0] sm:$0xff]
    %v1438 = vld [vmem:[%s1 + $0x26d8] sm:$0xff]
    %v1439 = vld [vmem:[%s1 + $0x26e0] sm:$0xff]
    %v1440 = vld [vmem:[%s1 + $0x26e8] sm:$0xff]
    %v1441 = vld [vmem:[%s1 + $0x26f0] sm:$0xff]
    %v1442 = vld [vmem:[%s1 + $0x26f8] sm:$0xff]
    %v1443 = vld [vmem:[%s1 + $0x2700] sm:$0xff]
    %v1444 = vld [vmem:[%s1 + $0x2708] sm:$0xff]
    %v1445 = vld [vmem:[%s1 + $0x2710] sm:$0xff]
    %v1446 = vld [vmem:[%s1 + $0x2718] sm:$0xff]
    %v1447 = vld [vmem:[%s1 + $0x2720] sm:$0xff]
    %v1448 = vld [vmem:[%s1 + $0x2728] sm:$0xff]
    %v1449 = vld [vmem:[%s1 + $0x2730] sm:$0xff]
    %v1450 = vld [vmem:[%s1 + $0x2738] sm:$0xff]
    %v1451 = vld [vmem:[%s1 + $0x2740] sm:$0xff]
    %v1452 = vld [vmem:[%s1 + $0x2748] sm:$0xff]
    %v1453 = vld [vmem:[%s1 + $0x2750] sm:$0xff]
    %v1454 = vld [vmem:[%s1 + $0x2758] sm:$0xff]
    %v1455 = vld [vmem:[%s1 + $0x2760] sm:$0xff]
    %v1456 = vld [vmem:[%s1 + $0x2768] sm:$0xff]
    %v1457 = vld [vmem:[%s1 + $0x2770] sm:$0xff]
    %v1458 = vld [vmem:[%s1 + $0x2778] sm:$0xff]
    %v1459 = vld [vmem:[%s1 + $0x2780] sm:$0xff]
    %v1460 = vld [vmem:[%s1 + $0x2788] sm:$0xff]
    %v1461 = vld [vmem:[%s1 + $0x2790] sm:$0xff]
    %v1462 = vld [vmem:[%s1 + $0x2798] sm:$0xff]
    %v1463 = vld [vmem:[%s1 + $0x27a0] sm:$0xff]
    %v1464 = vld [vmem:[%s1 + $0x27a8] sm:$0xff]
    %v1465 = vld [vmem:[%s1 + $0x27b0] sm:$0xff]
    %v1466 = vld [vmem:[%s1 + $0x27b8] sm:$0xff]
    %v1467 = vld [vmem:[%s1 + $0x27c0] sm:$0xff]
    %v1468 = vld [vmem:[%s1 + $0x27c8] sm:$0xff]
    %v1469 = vld [vmem:[%s1 + $0x27d0] sm:$0xff]
    %v1470 = vld [vmem:[%s1 + $0x27d8] sm:$0xff]
    %v1471 = vld [vmem:[%s1 + $0x27e0] sm:$0xff]
    %v1472 = vld [vmem:[%s1 + $0x27e8] sm:$0xff]
    %v1473 = vld [vmem:[%s1 + $0x27f0] sm:$0xff]
    %v1474 = vld [vmem:[%s1 + $0x27f8] sm:$0xff]
    %v1475 = vld [vmem:[%s1 + $0x2800] sm:$0xff]
    %v1476 = vld [vmem:[%s1 + $0x2808] sm:$0xff]
    %v1477 = vld [vmem:[%s1 + $0x2810] sm:$0xff]
    %v1478 = vld [vmem:[%s1 + $0x2818] sm:$0xff]
    %v1479 = vld [vmem:[%s1 + $0x2820] sm:$0xff]
    %v1480 = vld [vmem:[%s1 + $0x2828] sm:$0xff]
    %v1481 = vld [vmem:[%s1 + $0x2830] sm:$0xff]
    %v1482 = vld [vmem:[%s1 + $0x2838] sm:$0xff]
    %v1483 = vld [vmem:[%s1 + $0x2840] sm:$0xff]
    %v1484 = vld [vmem:[%s1 + $0x2848] sm:$0xff]
    %v1485 = vld [vmem:[%s1 + $0x2850] sm:$0xff]
    %v1486 = vld [vmem:[%s1 + $0x2858] sm:$0xff]
    %v1487 = vld [vmem:[%s1 + $0x2860] sm:$0xff]
    %v1488 = vld [vmem:[%s1 + $0x2868] sm:$0xff]
    %v1489 = vld [vmem:[%s1 + $0x2870] sm:$0xff]
    %v1490 = vld [vmem:[%s1 + $0x2878] sm:$0xff]
    %v1491 = vld [vmem:[%s1 + $0x2880] sm:$0xff]
    %v1492 = vld [vmem:[%s1 + $0x2888] sm:$0xff]
    %v1493 = vld [vmem:[%s1 + $0x2890] sm:$0xff]
    %v1494 = vld [vmem:[%s1 + $0x2898] sm:$0xff]
    %v1495 = vld [vmem:[%s1 + $0x28a0] sm:$0xff]
    %v1496 = vld [vmem:[%s1 + $0x28a8] sm:$0xff]
    %v1497 = vld [vmem:[%s1 + $0x28b0] sm:$0xff]
    %v1498 = vld [vmem:[%s1 + $0x28b8] sm:$0xff]
    %v1499 = vld [vmem:[%s1 + $0x28c0] sm:$0xff]
    %v1500 = vld [vmem:[%s1 + $0x28c8] sm:$0xff]
    %v1501 = vld [vmem:[%s1 + $0x28d0] sm:$0xff]
    %v1502 = vld [vmem:[%s1 + $0x28d8] sm:$0xff]
    %v1503 = vld [vmem:[%s1 + $0x28e0] sm:$0xff]
    %v1504 = vld [vmem:[%s1 + $0x28e8] sm:$0xff]
    %v1505 = vld [vmem:[%s1 + $0x28f0] sm:$0xff]
    %v1506 = vld [vmem:[%s1 + $0x28f8] sm:$0xff]
    %v1507 = vld [vmem:[%s1 + $0x2900] sm:$0xff]
    %v1508 = vld [vmem:[%s1 + $0x2908] sm:$0xff]
    %v1509 = vld [vmem:[%s1 + $0x2910] sm:$0xff]
    %v1510 = vld [vmem:[%s1 + $0x2918] sm:$0xff]
    %v1511 = vld [vmem:[%s1 + $0x2920] sm:$0xff]
    %v1512 = vld [vmem:[%s1 + $0x2928] sm:$0xff]
    %v1513 = vld [vmem:[%s1 + $0x2930] sm:$0xff]
    %v1514 = vld [vmem:[%s1 + $0x2938] sm:$0xff]
    %v1515 = vld [vmem:[%s1 + $0x2940] sm:$0xff]
    %v1516 = vld [vmem:[%s1 + $0x2948] sm:$0xff]
    %v1517 = vld [vmem:[%s1 + $0x2950] sm:$0xff]
    %v1518 = vld [vmem:[%s1 + $0x2958] sm:$0xff]
    %v1519 = vld [vmem:[%s1 + $0x2960] sm:$0xff]
    %v1520 = vld [vmem:[%s1 + $0x2968] sm:$0xff]
    %v1521 = vld [vmem:[%s1 + $0x2970] sm:$0xff]
    %v1522 = vld [vmem:[%s1 + $0x2978] sm:$0xff]
    %v1523 = vld [vmem:[%s1 + $0x2980] sm:$0xff]
    %v1524 = vld [vmem:[%s1 + $0x2988] sm:$0xff]
    %v1525 = vld [vmem:[%s1 + $0x2990] sm:$0xff]
    %v1526 = vld [vmem:[%s1 + $0x2998] sm:$0xff]
    %v1527 = vld [vmem:[%s1 + $0x29a0] sm:$0xff]
    %v1528 = vld [vmem:[%s1 + $0x29a8] sm:$0xff]
    %v1529 = vld [vmem:[%s1 + $0x29b0] sm:$0xff]
    %v1530 = vld [vmem:[%s1 + $0x29b8] sm:$0xff]
    %v1531 = vld [vmem:[%s1 + $0x29c0] sm:$0xff]
    %v1532 = vld [vmem:[%s1 + $0x29c8] sm:$0xff]
    %v1533 = vld [vmem:[%s1 + $0x29d0] sm:$0xff]
    %v1534 = vld [vmem:[%s1 + $0x29d8] sm:$0xff]
    %v1535 = vld [vmem:[%s1 + $0x29e0] sm:$0xff]
    %v1536 = vld [vmem:[%s1 + $0x29e8] sm:$0xff]
    %v1537 = vld [vmem:[%s1 + $0x29f0] sm:$0xff]
    %v1538 = vld [vmem:[%s1 + $0x29f8] sm:$0xff]
    %v1539 = vld [vmem:[%s1 + $0x2a00] sm:$0xff]
    %v1540 = vld [vmem:[%s1 + $0x2a08] sm:$0xff]
    %v1541 = vld [vmem:[%s1 + $0x2a10] sm:$0xff]
    %v1542 = vld [vmem:[%s1 + $0x2a18] sm:$0xff]
    %v1543 = vld [vmem:[%s1 + $0x2a20] sm:$0xff]
    %v1544 = vld [vmem:[%s1 + $0x2a28] sm:$0xff]
    %v1545 = vld [vmem:[%s1 + $0x2a30] sm:$0xff]
    %v1546 = vld [vmem:[%s1 + $0x2a38] sm:$0xff]
    %v1547 = vld [vmem:[%s1 + $0x2a40] sm:$0xff]
    %v1548 = vld [vmem:[%s1 + $0x2a48] sm:$0xff]
    %v1549 = vld [vmem:[%s1 + $0x2a50] sm:$0xff]
    %v1550 = vld [vmem:[%s1 + $0x2a58] sm:$0xff]
    %v1551 = vld [vmem:[%s1 + $0x2a60] sm:$0xff]
    %v1552 = vld [vmem:[%s1 + $0x2a68] sm:$0xff]
    %v1553 = vld [vmem:[%s1 + $0x2a70] sm:$0xff]
    %v1554 = vld [vmem:[%s1 + $0x2a78] sm:$0xff]
    %v1555 = vld [vmem:[%s1 + $0x2a80] sm:$0xff]
    %v1556 = vld [vmem:[%s1 + $0x2a88] sm:$0xff]
    %v1557 = vld [vmem:[%s1 + $0x2a90] sm:$0xff]
    %v1558 = vld [vmem:[%s1 + $0x2a98] sm:$0xff]
    %v1559 = vld [vmem:[%s1 + $0x2aa0] sm:$0xff]
    %v1560 = vld [vmem:[%s1 + $0x2aa8] sm:$0xff]
    %v1561 = vld [vmem:[%s1 + $0x2ab0] sm:$0xff]
    %v1562 = vld [vmem:[%s1 + $0x2ab8] sm:$0xff]
    %v1563 = vld [vmem:[%s1 + $0x2ac0] sm:$0xff]
    %v1564 = vld [vmem:[%s1 + $0x2ac8] sm:$0xff]
    %v1565 = vld [vmem:[%s1 + $0x2ad0] sm:$0xff]
    %v1566 = vld [vmem:[%s1 + $0x2ad8] sm:$0xff]
    %v1567 = vld [vmem:[%s1 + $0x2ae0] sm:$0xff]
    %v1568 = vld [vmem:[%s1 + $0x2ae8] sm:$0xff]
    %v1569 = vld [vmem:[%s1 + $0x2af0] sm:$0xff]
    %v1570 = vld [vmem:[%s1 + $0x2af8] sm:$0xff]
    %v1571 = vld [vmem:[%s1 + $0x2b00] sm:$0xff]
    %v1572 = vld [vmem:[%s1 + $0x2b08] sm:$0xff]
    %v1573 = vld [vmem:[%s1 + $0x2b10] sm:$0xff]
    %v1574 = vld [vmem:[%s1 + $0x2b18] sm:$0xff]
    %v1575 = vld [vmem:[%s1 + $0x2b20] sm:$0xff]
    %v1576 = vld [vmem:[%s1 + $0x2b28] sm:$0xff]
    %v1577 = vld [vmem:[%s1 + $0x2b30] sm:$0xff]
    %v1578 = vld [vmem:[%s1 + $0x2b38] sm:$0xff]
    %v1579 = vld [vmem:[%s1 + $0x2b40] sm:$0xff]
    %v1580 = vld [vmem:[%s1 + $0x2b48] sm:$0xff]
    %v1581 = vld [vmem:[%s1 + $0x2b50] sm:$0xff]
    %v1582 = vld [vmem:[%s1 + $0x2b58] sm:$0xff]
    %v1583 = vld [vmem:[%s1 + $0x2b60] sm:$0xff]
    %v1584 = vld [vmem:[%s1 + $0x2b68] sm:$0xff]
    %v1585 = vld [vmem:[%s1 + $0x2b70] sm:$0xff]
    %v1586 = vld [vmem:[%s1 + $0x2b78] sm:$0xff]
    %v1587 = vld [vmem:[%s1 + $0x2b80] sm:$0xff]
    %v1588 = vld [vmem:[%s1 + $0x2b88] sm:$0xff]
    %v1589 = vld [vmem:[%s1 + $0x2b90] sm:$0xff]
    %v1590 = vld [vmem:[%s1 + $0x2b98] sm:$0xff]
    %v1591 = vld [vmem:[%s1 + $0x2ba0] sm:$0xff]
    %v1592 = vld [vmem:[%s1 + $0x2ba8] sm:$0xff]
    %v1593 = vld [vmem:[%s1 + $0x2bb0] sm:$0xff]
    %v1594 = vld [vmem:[%s1 + $0x2bb8] sm:$0xff]
    %v1595 = vld [vmem:[%s1 + $0x2bc0] sm:$0xff]
    %v1596 = vld [vmem:[%s1 + $0x2bc8] sm:$0xff]
    %v1597 = vld [vmem:[%s1 + $0x2bd0] sm:$0xff]
    %v1598 = vld [vmem:[%s1 + $0x2bd8] sm:$0xff]
    %v1599 = vld [vmem:[%s1 + $0x2be0] sm:$0xff]
    %v1600 = vld [vmem:[%s1 + $0x2be8] sm:$0xff]
    %v1601 = vld [vmem:[%s1 + $0x2bf0] sm:$0xff]
    %v1602 = vld [vmem:[%s1 + $0x2bf8] sm:$0xff]
    %v1603 = vld [vmem:[%s1 + $0x2c00] sm:$0xff]
    %v1604 = vld [vmem:[%s1 + $0x2c08] sm:$0xff]
    %v1605 = vld [vmem:[%s1 + $0x2c10] sm:$0xff]
    %v1606 = vld [vmem:[%s1 + $0x2c18] sm:$0xff]
    %v1607 = vld [vmem:[%s1 + $0x2c20] sm:$0xff]
    %v1608 = vld [vmem:[%s1 + $0x2c28] sm:$0xff]
    %v1609 = vld [vmem:[%s1 + $0x2c30] sm:$0xff]
    %v1610 = vld [vmem:[%s1 + $0x2c38] sm:$0xff]
    %v1611 = vld [vmem:[%s1 + $0x2c40] sm:$0xff]
    %v1612 = vld [vmem:[%s1 + $0x2c48] sm:$0xff]
    %v1613 = vld [vmem:[%s1 + $0x2c50] sm:$0xff]
    %v1614 = vld [vmem:[%s1 + $0x2c58] sm:$0xff]
    %v1615 = vld [vmem:[%s1 + $0x2c60] sm:$0xff]
    %v1616 = vld [vmem:[%s1 + $0x2c68] sm:$0xff]
    %v1617 = vld [vmem:[%s1 + $0x2c70] sm:$0xff]
    %v1618 = vld [vmem:[%s1 + $0x2c78] sm:$0xff]
    %v1619 = vld [vmem:[%s1 + $0x2c80] sm:$0xff]
    %v1620 = vld [vmem:[%s1 + $0x2c88] sm:$0xff]
    %v1621 = vld [vmem:[%s1 + $0x2c90] sm:$0xff]
    %v1622 = vld [vmem:[%s1 + $0x2c98] sm:$0xff]
    %v1623 = vld [vmem:[%s1 + $0x2ca0] sm:$0xff]
    %v1624 = vld [vmem:[%s1 + $0x2ca8] sm:$0xff]
    %v1625 = vld [vmem:[%s1 + $0x2cb0] sm:$0xff]
    %v1626 = vld [vmem:[%s1 + $0x2cb8] sm:$0xff]
    %v1627 = vld [vmem:[%s1 + $0x2cc0] sm:$0xff]
    %v1628 = vld [vmem:[%s1 + $0x2cc8] sm:$0xff]
    %v1629 = vld [vmem:[%s1 + $0x2cd0] sm:$0xff]
    %v1630 = vld [vmem:[%s1 + $0x2cd8] sm:$0xff]
    %v1631 = vld [vmem:[%s1 + $0x2ce0] sm:$0xff]
    %v1632 = vld [vmem:[%s1 + $0x2ce8] sm:$0xff]
    %v1633 = vld [vmem:[%s1 + $0x2cf0] sm:$0xff]
    %v1634 = vld [vmem:[%s1 + $0x2cf8] sm:$0xff]
    %v1635 = vld [vmem:[%s1 + $0x2d00] sm:$0xff]
    %v1636 = vld [vmem:[%s1 + $0x2d08] sm:$0xff]
    %v1637 = vld [vmem:[%s1 + $0x2d10] sm:$0xff]
    %v1638 = vld [vmem:[%s1 + $0x2d18] sm:$0xff]
    %v1639 = vld [vmem:[%s1 + $0x2d20] sm:$0xff]
    %v1640 = vld [vmem:[%s1 + $0x2d28] sm:$0xff]
    %v1641 = vld [vmem:[%s1 + $0x2d30] sm:$0xff]
    %v1642 = vld [vmem:[%s1 + $0x2d38] sm:$0xff]
    %v1643 = vld [vmem:[%s1 + $0x2d40] sm:$0xff]
    %v1644 = vld [vmem:[%s1 + $0x2d48] sm:$0xff]
    %v1645 = vld [vmem:[%s1 + $0x2d50] sm:$0xff]
    %v1646 = vld [vmem:[%s1 + $0x2d58] sm:$0xff]
    %v1647 = vld [vmem:[%s1 + $0x2d60] sm:$0xff]
    %v1648 = vld [vmem:[%s1 + $0x2d68] sm:$0xff]
    %v1649 = vld [vmem:[%s1 + $0x2d70] sm:$0xff]
    %v1650 = vld [vmem:[%s1 + $0x2d78] sm:$0xff]
    %v1651 = vld [vmem:[%s1 + $0x2d80] sm:$0xff]
    %v1652 = vld [vmem:[%s1 + $0x2d88] sm:$0xff]
    %v1653 = vld [vmem:[%s1 + $0x2d90] sm:$0xff]
    %v1654 = vld [vmem:[%s1 + $0x2d98] sm:$0xff]
    %v1655 = vld [vmem:[%s1 + $0x2da0] sm:$0xff]
    %v1656 = vld [vmem:[%s1 + $0x2da8] sm:$0xff]
    %v1657 = vld [vmem:[%s1 + $0x2db0] sm:$0xff]
    %v1658 = vld [vmem:[%s1 + $0x2db8] sm:$0xff]
    %v1659 = vld [vmem:[%s1 + $0x2dc0] sm:$0xff]
    %v1660 = vld [vmem:[%s1 + $0x2dc8] sm:$0xff]
    %v1661 = vld [vmem:[%s1 + $0x2dd0] sm:$0xff]
    %v1662 = vld [vmem:[%s1 + $0x2dd8] sm:$0xff]
    %v1663 = vld [vmem:[%s1 + $0x2de0] sm:$0xff]
    %v1664 = vld [vmem:[%s1 + $0x2de8] sm:$0xff]
    %v1665 = vld [vmem:[%s1 + $0x2df0] sm:$0xff]
    %v1666 = vld [vmem:[%s1 + $0x2df8] sm:$0xff]
    %v1667 = vld [vmem:[%s1 + $0x2e00] sm:$0xff]
    %v1668 = vld [vmem:[%s1 + $0x2e08] sm:$0xff]
    %v1669 = vld [vmem:[%s1 + $0x2e10] sm:$0xff]
    %v1670 = vld [vmem:[%s1 + $0x2e18] sm:$0xff]
    %v1671 = vld [vmem:[%s1 + $0x2e20] sm:$0xff]
    %v1672 = vld [vmem:[%s1 + $0x2e28] sm:$0xff]
    %v1673 = vld [vmem:[%s1 + $0x2e30] sm:$0xff]
    %v1674 = vld [vmem:[%s1 + $0x2e38] sm:$0xff]
    %v1675 = vld [vmem:[%s1 + $0x2e40] sm:$0xff]
    %v1676 = vld [vmem:[%s1 + $0x2e48] sm:$0xff]
    %v1677 = vld [vmem:[%s1 + $0x2e50] sm:$0xff]
    %v1678 = vld [vmem:[%s1 + $0x2e58] sm:$0xff]
    %v1679 = vld [vmem:[%s1 + $0x2e60] sm:$0xff]
    %v1680 = vld [vmem:[%s1 + $0x2e68] sm:$0xff]
    %v1681 = vld [vmem:[%s1 + $0x2e70] sm:$0xff]
    %v1682 = vld [vmem:[%s1 + $0x2e78] sm:$0xff]
    %v1683 = vld [vmem:[%s1 + $0x2e80] sm:$0xff]
    %v1684 = vld [vmem:[%s1 + $0x2e88] sm:$0xff]
    %v1685 = vld [vmem:[%s1 + $0x2e90] sm:$0xff]
    %v1686 = vld [vmem:[%s1 + $0x2e98] sm:$0xff]
    %v1687 = vld [vmem:[%s1 + $0x2ea0] sm:$0xff]
    %v1688 = vld [vmem:[%s1 + $0x2ea8] sm:$0xff]
    %v1689 = vld [vmem:[%s1 + $0x2eb0] sm:$0xff]
    %v1690 = vld [vmem:[%s1 + $0x2eb8] sm:$0xff]
    %v1691 = vld [vmem:[%s1 + $0x2ec0] sm:$0xff]
    %v1692 = vld [vmem:[%s1 + $0x2ec8] sm:$0xff]
    %v1693 = vld [vmem:[%s1 + $0x2ed0] sm:$0xff]
    %v1694 = vld [vmem:[%s1 + $0x2ed8] sm:$0xff]
    %v1695 = vld [vmem:[%s1 + $0x2ee0] sm:$0xff]
    %v1696 = vld [vmem:[%s1 + $0x2ee8] sm:$0xff]
    %v1697 = vld [vmem:[%s1 + $0x2ef0] sm:$0xff]
    %v1698 = vld [vmem:[%s1 + $0x2ef8] sm:$0xff]
    %v1699 = vld [vmem:[%s1 + $0x2f00] sm:$0xff]
    %v1700 = vld [vmem:[%s1 + $0x2f08] sm:$0xff]
    %v1701 = vld [vmem:[%s1 + $0x2f10] sm:$0xff]
    %v1702 = vld [vmem:[%s1 + $0x2f18] sm:$0xff]
    %v1703 = vld [vmem:[%s1 + $0x2f20] sm:$0xff]
    %v1704 = vld [vmem:[%s1 + $0x2f28] sm:$0xff]
    %v1705 = vld [vmem:[%s1 + $0x2f30] sm:$0xff]
    %v1706 = vld [vmem:[%s1 + $0x2f38] sm:$0xff]
    %v1707 = vld [vmem:[%s1 + $0x2f40] sm:$0xff]
    %v1708 = vld [vmem:[%s1 + $0x2f48] sm:$0xff]
    %v1709 = vld [vmem:[%s1 + $0x2f50] sm:$0xff]
    %v1710 = vld [vmem:[%s1 + $0x2f58] sm:$0xff]
    %v1711 = vld [vmem:[%s1 + $0x2f60] sm:$0xff]
    %v1712 = vld [vmem:[%s1 + $0x2f68] sm:$0xff]
    %v1713 = vld [vmem:[%s1 + $0x2f70] sm:$0xff]
    %v1714 = vld [vmem:[%s1 + $0x2f78] sm:$0xff]
    %v1715 = vld [vmem:[%s1 + $0x2f80] sm:$0xff]
    %v1716 = vld [vmem:[%s1 + $0x2f88] sm:$0xff]
    %v1717 = vld [vmem:[%s1 + $0x2f90] sm:$0xff]
    %v1718 = vld [vmem:[%s1 + $0x2f98] sm:$0xff]
    %v1719 = vld [vmem:[%s1 + $0x2fa0] sm:$0xff]
    %v1720 = vld [vmem:[%s1 + $0x2fa8] sm:$0xff]
    %v1721 = vld [vmem:[%s1 + $0x2fb0] sm:$0xff]
    %v1722 = vld [vmem:[%s1 + $0x2fb8] sm:$0xff]
    %v1723 = vld [vmem:[%s1 + $0x2fc0] sm:$0xff]
    %v1724 = vld [vmem:[%s1 + $0x2fc8] sm:$0xff]
    %v1725 = vld [vmem:[%s1 + $0x2fd0] sm:$0xff]
    %v1726 = vld [vmem:[%s1 + $0x2fd8] sm:$0xff]
    %v1727 = vld [vmem:[%s1 + $0x2fe0] sm:$0xff]
    %v1728 = vld [vmem:[%s1 + $0x2fe8] sm:$0xff]
    %v1729 = vld [vmem:[%s1 + $0x2ff0] sm:$0xff]
    %v1730 = vld [vmem:[%s1 + $0x2ff8] sm:$0xff]
    %v1731 = vld [vmem:[%s1 + $0x3000] sm:$0xff]
    %v1732 = vld [vmem:[%s1 + $0x3008] sm:$0xff]
    %v1733 = vld [vmem:[%s1 + $0x3010] sm:$0xff]
    %v1734 = vld [vmem:[%s1 + $0x3018] sm:$0xff]
    %v1735 = vld [vmem:[%s1 + $0x3020] sm:$0xff]
    %v1736 = vld [vmem:[%s1 + $0x3028] sm:$0xff]
    %v1737 = vld [vmem:[%s1 + $0x3030] sm:$0xff]
    %v1738 = vld [vmem:[%s1 + $0x3038] sm:$0xff]
    %v1739 = vld [vmem:[%s1 + $0x3040] sm:$0xff]
    %v1740 = vld [vmem:[%s1 + $0x3048] sm:$0xff]
    %v1741 = vld [vmem:[%s1 + $0x3050] sm:$0xff]
    %v1742 = vld [vmem:[%s1 + $0x3058] sm:$0xff]
    %v1743 = vld [vmem:[%s1 + $0x3060] sm:$0xff]
    %v1744 = vld [vmem:[%s1 + $0x3068] sm:$0xff]
    %v1745 = vld [vmem:[%s1 + $0x3070] sm:$0xff]
    %v1746 = vld [vmem:[%s1 + $0x3078] sm:$0xff]
    %v1747 = vld [vmem:[%s1 + $0x3080] sm:$0xff]
    %v1748 = vld [vmem:[%s1 + $0x3088] sm:$0xff]
    %v1749 = vld [vmem:[%s1 + $0x3090] sm:$0xff]
    %v1750 = vld [vmem:[%s1 + $0x3098] sm:$0xff]
    %v1751 = vld [vmem:[%s1 + $0x30a0] sm:$0xff]
    %v1752 = vld [vmem:[%s1 + $0x30a8] sm:$0xff]
    %v1753 = vld [vmem:[%s1 + $0x30b0] sm:$0xff]
    %v1754 = vld [vmem:[%s1 + $0x30b8] sm:$0xff]
    %v1755 = vld [vmem:[%s1 + $0x30c0] sm:$0xff]
    %v1756 = vld [vmem:[%s1 + $0x30c8] sm:$0xff]
    %v1757 = vld [vmem:[%s1 + $0x30d0] sm:$0xff]
    %v1758 = vld [vmem:[%s1 + $0x30d8] sm:$0xff]
    %v1759 = vld [vmem:[%s1 + $0x30e0] sm:$0xff]
    %v1760 = vld [vmem:[%s1 + $0x30e8] sm:$0xff]
    %v1761 = vld [vmem:[%s1 + $0x30f0] sm:$0xff]
    %v1762 = vld [vmem:[%s1 + $0x30f8] sm:$0xff]
    %v1763 = vld [vmem:[%s2] sm:$0xff]
    %v1765 = vlaneseq
    %v1766 = vshrl.u32 %v1765, 7
    %v1767 = vsub.s32 0, %v1766
    %v1768 = vrot.slane %v1763, %v1767
    %v1769 = vlaneseq
    %v1770 = vshrl.u32 %v1769, 7
    %v1771 = vsub.s32 1, %v1770
    %v1772 = vrot.slane %v1763, %v1771
    %v1773 = vlaneseq
    %v1774 = vshrl.u32 %v1773, 7
    %v1775 = vsub.s32 2, %v1774
    %v1776 = vrot.slane %v1763, %v1775
    %v1777 = vlaneseq
    %v1778 = vshrl.u32 %v1777, 7
    %v1779 = vsub.s32 3, %v1778
    %v1780 = vrot.slane %v1763, %v1779
    %v1781 = vlaneseq
    %v1782 = vshrl.u32 %v1781, 7
    %v1783 = vsub.s32 4, %v1782
    %v1784 = vrot.slane %v1763, %v1783
    %v1785 = vlaneseq
    %v1786 = vshrl.u32 %v1785, 7
    %v1787 = vsub.s32 5, %v1786
    %v1788 = vrot.slane %v1763, %v1787
    %v1789 = vlaneseq
    %v1790 = vshrl.u32 %v1789, 7
    %v1791 = vsub.s32 6, %v1790
    %v1792 = vrot.slane %v1763, %v1791
    %v1793 = vlaneseq
    %v1794 = vshrl.u32 %v1793, 7
    %v1795 = vsub.s32 7, %v1794
    %v1796 = vrot.slane %v1763, %v1795
    %v3373 = vunpack.c.l.b16 %v195
    %v3374 = vunpack.c.h.b16 %v195
    %v3375 = vunpack.c.l.b16 %v196
    %v3376 = vunpack.c.h.b16 %v196
    %v3377 = vunpack.c.l.b16 %v197
    %v3378 = vunpack.c.h.b16 %v197
    %v3379 = vunpack.c.l.b16 %v198
    %v3380 = vunpack.c.h.b16 %v198
    %v3381 = vunpack.c.l.b16 %v199
    %v3382 = vunpack.c.h.b16 %v199
    %v3383 = vunpack.c.l.b16 %v200
    %v3384 = vunpack.c.h.b16 %v200
    %v3385 = vunpack.c.l.b16 %v201
    %v3386 = vunpack.c.h.b16 %v201
    %v3387 = vunpack.c.l.b16 %v202
    %v3388 = vunpack.c.h.b16 %v202
    %v3389 = vunpack.c.l.b16 %v203
    %v3390 = vunpack.c.h.b16 %v203
    %v3391 = vunpack.c.l.b16 %v204
    %v3392 = vunpack.c.h.b16 %v204
    %v3393 = vunpack.c.l.b16 %v205
    %v3394 = vunpack.c.h.b16 %v205
    %v3395 = vunpack.c.l.b16 %v206
    %v3396 = vunpack.c.h.b16 %v206
    %v3397 = vunpack.c.l.b16 %v207
    %v3398 = vunpack.c.h.b16 %v207
    %v3399 = vunpack.c.l.b16 %v208
    %v3400 = vunpack.c.h.b16 %v208
    %v3401 = vunpack.c.l.b16 %v209
    %v3402 = vunpack.c.h.b16 %v209
    %v3403 = vunpack.c.l.b16 %v210
    %v3404 = vunpack.c.h.b16 %v210
    %v3405 = vunpack.c.l.b16 %v211
    %v3406 = vunpack.c.h.b16 %v211
    %v3407 = vunpack.c.l.b16 %v212
    %v3408 = vunpack.c.h.b16 %v212
    %v3409 = vunpack.c.l.b16 %v213
    %v3410 = vunpack.c.h.b16 %v213
    %v3411 = vunpack.c.l.b16 %v214
    %v3412 = vunpack.c.h.b16 %v214
    %v3413 = vunpack.c.l.b16 %v215
    %v3414 = vunpack.c.h.b16 %v215
    %v3415 = vunpack.c.l.b16 %v216
    %v3416 = vunpack.c.h.b16 %v216
    %v3417 = vunpack.c.l.b16 %v217
    %v3418 = vunpack.c.h.b16 %v217
    %v3419 = vunpack.c.l.b16 %v218
    %v3420 = vunpack.c.h.b16 %v218
    %v3421 = vunpack.c.l.b16 %v219
    %v3422 = vunpack.c.h.b16 %v219
    %v3423 = vunpack.c.l.b16 %v220
    %v3424 = vunpack.c.h.b16 %v220
    %v3425 = vunpack.c.l.b16 %v221
    %v3426 = vunpack.c.h.b16 %v221
    %v3427 = vunpack.c.l.b16 %v222
    %v3428 = vunpack.c.h.b16 %v222
    %v3429 = vunpack.c.l.b16 %v223
    %v3430 = vunpack.c.h.b16 %v223
    %v3431 = vunpack.c.l.b16 %v224
    %v3432 = vunpack.c.h.b16 %v224
    %v3433 = vunpack.c.l.b16 %v225
    %v3434 = vunpack.c.h.b16 %v225
    %v3435 = vunpack.c.l.b16 %v226
    %v3436 = vunpack.c.h.b16 %v226
    %v3437 = vunpack.c.l.b16 %v227
    %v3438 = vunpack.c.h.b16 %v227
    %v3439 = vunpack.c.l.b16 %v228
    %v3440 = vunpack.c.h.b16 %v228
    %v3441 = vunpack.c.l.b16 %v229
    %v3442 = vunpack.c.h.b16 %v229
    %v3443 = vunpack.c.l.b16 %v230
    %v3444 = vunpack.c.h.b16 %v230
    %v3445 = vunpack.c.l.b16 %v231
    %v3446 = vunpack.c.h.b16 %v231
    %v3447 = vunpack.c.l.b16 %v232
    %v3448 = vunpack.c.h.b16 %v232
    %v3449 = vunpack.c.l.b16 %v233
    %v3450 = vunpack.c.h.b16 %v233
    %v3451 = vunpack.c.l.b16 %v234
    %v3452 = vunpack.c.h.b16 %v234
    %v3453 = vunpack.c.l.b16 %v235
    %v3454 = vunpack.c.h.b16 %v235
    %v3455 = vunpack.c.l.b16 %v236
    %v3456 = vunpack.c.h.b16 %v236
    %v3457 = vunpack.c.l.b16 %v237
    %v3458 = vunpack.c.h.b16 %v237
    %v3459 = vunpack.c.l.b16 %v238
    %v3460 = vunpack.c.h.b16 %v238
    %v3461 = vunpack.c.l.b16 %v239
    %v3462 = vunpack.c.h.b16 %v239
    %v3463 = vunpack.c.l.b16 %v240
    %v3464 = vunpack.c.h.b16 %v240
    %v3465 = vunpack.c.l.b16 %v241
    %v3466 = vunpack.c.h.b16 %v241
    %v3467 = vunpack.c.l.b16 %v242
    %v3468 = vunpack.c.h.b16 %v242
    %v3469 = vunpack.c.l.b16 %v243
    %v3470 = vunpack.c.h.b16 %v243
    %v3471 = vunpack.c.l.b16 %v244
    %v3472 = vunpack.c.h.b16 %v244
    %v3473 = vunpack.c.l.b16 %v245
    %v3474 = vunpack.c.h.b16 %v245
    %v3475 = vunpack.c.l.b16 %v246
    %v3476 = vunpack.c.h.b16 %v246
    %v3477 = vunpack.c.l.b16 %v247
    %v3478 = vunpack.c.h.b16 %v247
    %v3479 = vunpack.c.l.b16 %v248
    %v3480 = vunpack.c.h.b16 %v248
    %v3481 = vunpack.c.l.b16 %v249
    %v3482 = vunpack.c.h.b16 %v249
    %v3483 = vunpack.c.l.b16 %v250
    %v3484 = vunpack.c.h.b16 %v250
    %v3485 = vunpack.c.l.b16 %v251
    %v3486 = vunpack.c.h.b16 %v251
    %v3487 = vunpack.c.l.b16 %v252
    %v3488 = vunpack.c.h.b16 %v252
    %v3489 = vunpack.c.l.b16 %v253
    %v3490 = vunpack.c.h.b16 %v253
    %v3491 = vunpack.c.l.b16 %v254
    %v3492 = vunpack.c.h.b16 %v254
    %v3493 = vunpack.c.l.b16 %v255
    %v3494 = vunpack.c.h.b16 %v255
    %v3495 = vunpack.c.l.b16 %v256
    %v3496 = vunpack.c.h.b16 %v256
    %v3497 = vunpack.c.l.b16 %v257
    %v3498 = vunpack.c.h.b16 %v257
    %v3499 = vunpack.c.l.b16 %v258
    %v3500 = vunpack.c.h.b16 %v258
    %v3501 = vunpack.c.l.b16 %v259
    %v3502 = vunpack.c.h.b16 %v259
    %v3503 = vunpack.c.l.b16 %v260
    %v3504 = vunpack.c.h.b16 %v260
    %v3505 = vunpack.c.l.b16 %v261
    %v3506 = vunpack.c.h.b16 %v261
    %v3507 = vunpack.c.l.b16 %v262
    %v3508 = vunpack.c.h.b16 %v262
    %v3509 = vunpack.c.l.b16 %v263
    %v3510 = vunpack.c.h.b16 %v263
    %v3511 = vunpack.c.l.b16 %v264
    %v3512 = vunpack.c.h.b16 %v264
    %v3513 = vunpack.c.l.b16 %v265
    %v3514 = vunpack.c.h.b16 %v265
    %v3515 = vunpack.c.l.b16 %v266
    %v3516 = vunpack.c.h.b16 %v266
    %v3517 = vunpack.c.l.b16 %v267
    %v3518 = vunpack.c.h.b16 %v267
    %v3519 = vunpack.c.l.b16 %v268
    %v3520 = vunpack.c.h.b16 %v268
    %v3521 = vunpack.c.l.b16 %v269
    %v3522 = vunpack.c.h.b16 %v269
    %v3523 = vunpack.c.l.b16 %v270
    %v3524 = vunpack.c.h.b16 %v270
    %v3525 = vunpack.c.l.b16 %v271
    %v3526 = vunpack.c.h.b16 %v271
    %v3527 = vunpack.c.l.b16 %v272
    %v3528 = vunpack.c.h.b16 %v272
    %v3529 = vunpack.c.l.b16 %v273
    %v3530 = vunpack.c.h.b16 %v273
    %v3531 = vunpack.c.l.b16 %v274
    %v3532 = vunpack.c.h.b16 %v274
    %v3533 = vunpack.c.l.b16 %v275
    %v3534 = vunpack.c.h.b16 %v275
    %v3535 = vunpack.c.l.b16 %v276
    %v3536 = vunpack.c.h.b16 %v276
    %v3537 = vunpack.c.l.b16 %v277
    %v3538 = vunpack.c.h.b16 %v277
    %v3539 = vunpack.c.l.b16 %v278
    %v3540 = vunpack.c.h.b16 %v278
    %v3541 = vunpack.c.l.b16 %v279
    %v3542 = vunpack.c.h.b16 %v279
    %v3543 = vunpack.c.l.b16 %v280
    %v3544 = vunpack.c.h.b16 %v280
    %v3545 = vunpack.c.l.b16 %v281
    %v3546 = vunpack.c.h.b16 %v281
    %v3547 = vunpack.c.l.b16 %v282
    %v3548 = vunpack.c.h.b16 %v282
    %v3549 = vunpack.c.l.b16 %v283
    %v3550 = vunpack.c.h.b16 %v283
    %v3551 = vunpack.c.l.b16 %v284
    %v3552 = vunpack.c.h.b16 %v284
    %v3553 = vunpack.c.l.b16 %v285
    %v3554 = vunpack.c.h.b16 %v285
    %v3555 = vunpack.c.l.b16 %v286
    %v3556 = vunpack.c.h.b16 %v286
    %v3557 = vunpack.c.l.b16 %v287
    %v3558 = vunpack.c.h.b16 %v287
    %v3559 = vunpack.c.l.b16 %v288
    %v3560 = vunpack.c.h.b16 %v288
    %v3561 = vunpack.c.l.b16 %v289
    %v3562 = vunpack.c.h.b16 %v289
    %v3563 = vunpack.c.l.b16 %v290
    %v3564 = vunpack.c.h.b16 %v290
    %v3565 = vunpack.c.l.b16 %v291
    %v3566 = vunpack.c.h.b16 %v291
    %v3567 = vunpack.c.l.b16 %v292
    %v3568 = vunpack.c.h.b16 %v292
    %v3569 = vunpack.c.l.b16 %v293
    %v3570 = vunpack.c.h.b16 %v293
    %v3571 = vunpack.c.l.b16 %v294
    %v3572 = vunpack.c.h.b16 %v294
    %v3573 = vunpack.c.l.b16 %v295
    %v3574 = vunpack.c.h.b16 %v295
    %v3575 = vunpack.c.l.b16 %v296
    %v3576 = vunpack.c.h.b16 %v296
    %v3577 = vunpack.c.l.b16 %v297
    %v3578 = vunpack.c.h.b16 %v297
    %v3579 = vunpack.c.l.b16 %v298
    %v3580 = vunpack.c.h.b16 %v298
    %v3581 = vunpack.c.l.b16 %v299
    %v3582 = vunpack.c.h.b16 %v299
    %v3583 = vunpack.c.l.b16 %v300
    %v3584 = vunpack.c.h.b16 %v300
    %v3585 = vunpack.c.l.b16 %v301
    %v3586 = vunpack.c.h.b16 %v301
    %v3587 = vunpack.c.l.b16 %v302
    %v3588 = vunpack.c.h.b16 %v302
    %v3589 = vunpack.c.l.b16 %v303
    %v3590 = vunpack.c.h.b16 %v303
    %v3591 = vunpack.c.l.b16 %v304
    %v3592 = vunpack.c.h.b16 %v304
    %v3593 = vunpack.c.l.b16 %v305
    %v3594 = vunpack.c.h.b16 %v305
    %v3595 = vunpack.c.l.b16 %v306
    %v3596 = vunpack.c.h.b16 %v306
    %v3597 = vunpack.c.l.b16 %v307
    %v3598 = vunpack.c.h.b16 %v307
    %v3599 = vunpack.c.l.b16 %v308
    %v3600 = vunpack.c.h.b16 %v308
    %v3601 = vunpack.c.l.b16 %v309
    %v3602 = vunpack.c.h.b16 %v309
    %v3603 = vunpack.c.l.b16 %v310
    %v3604 = vunpack.c.h.b16 %v310
    %v3605 = vunpack.c.l.b16 %v311
    %v3606 = vunpack.c.h.b16 %v311
    %v3607 = vunpack.c.l.b16 %v312
    %v3608 = vunpack.c.h.b16 %v312
    %v3609 = vunpack.c.l.b16 %v313
    %v3610 = vunpack.c.h.b16 %v313
    %v3611 = vunpack.c.l.b16 %v314
    %v3612 = vunpack.c.h.b16 %v314
    %v3613 = vunpack.c.l.b16 %v315
    %v3614 = vunpack.c.h.b16 %v315
    %v3615 = vunpack.c.l.b16 %v316
    %v3616 = vunpack.c.h.b16 %v316
    %v3617 = vunpack.c.l.b16 %v317
    %v3618 = vunpack.c.h.b16 %v317
    %v3619 = vunpack.c.l.b16 %v318
    %v3620 = vunpack.c.h.b16 %v318
    %v3621 = vunpack.c.l.b16 %v319
    %v3622 = vunpack.c.h.b16 %v319
    %v3623 = vunpack.c.l.b16 %v320
    %v3624 = vunpack.c.h.b16 %v320
    %v3625 = vunpack.c.l.b16 %v321
    %v3626 = vunpack.c.h.b16 %v321
    %v3627 = vunpack.c.l.b16 %v322
    %v3628 = vunpack.c.h.b16 %v322
    %v3629 = vunpack.c.l.b16 %v323
    %v3630 = vunpack.c.h.b16 %v323
    %v3631 = vunpack.c.l.b16 %v324
    %v3632 = vunpack.c.h.b16 %v324
    %v3633 = vunpack.c.l.b16 %v325
    %v3634 = vunpack.c.h.b16 %v325
    %v3635 = vunpack.c.l.b16 %v326
    %v3636 = vunpack.c.h.b16 %v326
    %v3637 = vunpack.c.l.b16 %v327
    %v3638 = vunpack.c.h.b16 %v327
    %v3639 = vunpack.c.l.b16 %v328
    %v3640 = vunpack.c.h.b16 %v328
    %v3641 = vunpack.c.l.b16 %v329
    %v3642 = vunpack.c.h.b16 %v329
    %v3643 = vunpack.c.l.b16 %v330
    %v3644 = vunpack.c.h.b16 %v330
    %v3645 = vunpack.c.l.b16 %v331
    %v3646 = vunpack.c.h.b16 %v331
    %v3647 = vunpack.c.l.b16 %v332
    %v3648 = vunpack.c.h.b16 %v332
    %v3649 = vunpack.c.l.b16 %v333
    %v3650 = vunpack.c.h.b16 %v333
    %v3651 = vunpack.c.l.b16 %v334
    %v3652 = vunpack.c.h.b16 %v334
    %v3653 = vunpack.c.l.b16 %v335
    %v3654 = vunpack.c.h.b16 %v335
    %v3655 = vunpack.c.l.b16 %v336
    %v3656 = vunpack.c.h.b16 %v336
    %v3657 = vunpack.c.l.b16 %v337
    %v3658 = vunpack.c.h.b16 %v337
    %v3659 = vunpack.c.l.b16 %v338
    %v3660 = vunpack.c.h.b16 %v338
    %v3661 = vunpack.c.l.b16 %v339
    %v3662 = vunpack.c.h.b16 %v339
    %v3663 = vunpack.c.l.b16 %v340
    %v3664 = vunpack.c.h.b16 %v340
    %v3665 = vunpack.c.l.b16 %v341
    %v3666 = vunpack.c.h.b16 %v341
    %v3667 = vunpack.c.l.b16 %v342
    %v3668 = vunpack.c.h.b16 %v342
    %v3669 = vunpack.c.l.b16 %v343
    %v3670 = vunpack.c.h.b16 %v343
    %v3671 = vunpack.c.l.b16 %v344
    %v3672 = vunpack.c.h.b16 %v344
    %v3673 = vunpack.c.l.b16 %v345
    %v3674 = vunpack.c.h.b16 %v345
    %v3675 = vunpack.c.l.b16 %v346
    %v3676 = vunpack.c.h.b16 %v346
    %v3677 = vunpack.c.l.b16 %v347
    %v3678 = vunpack.c.h.b16 %v347
    %v3679 = vunpack.c.l.b16 %v348
    %v3680 = vunpack.c.h.b16 %v348
    %v3681 = vunpack.c.l.b16 %v349
    %v3682 = vunpack.c.h.b16 %v349
    %v3683 = vunpack.c.l.b16 %v350
    %v3684 = vunpack.c.h.b16 %v350
    %v3685 = vunpack.c.l.b16 %v351
    %v3686 = vunpack.c.h.b16 %v351
    %v3687 = vunpack.c.l.b16 %v352
    %v3688 = vunpack.c.h.b16 %v352
    %v3689 = vunpack.c.l.b16 %v353
    %v3690 = vunpack.c.h.b16 %v353
    %v3691 = vunpack.c.l.b16 %v354
    %v3692 = vunpack.c.h.b16 %v354
    %v3693 = vunpack.c.l.b16 %v355
    %v3694 = vunpack.c.h.b16 %v355
    %v3695 = vunpack.c.l.b16 %v356
    %v3696 = vunpack.c.h.b16 %v356
    %v3697 = vunpack.c.l.b16 %v357
    %v3698 = vunpack.c.h.b16 %v357
    %v3699 = vunpack.c.l.b16 %v358
    %v3700 = vunpack.c.h.b16 %v358
    %v3701 = vunpack.c.l.b16 %v359
    %v3702 = vunpack.c.h.b16 %v359
    %v3703 = vunpack.c.l.b16 %v360
    %v3704 = vunpack.c.h.b16 %v360
    %v3705 = vunpack.c.l.b16 %v361
    %v3706 = vunpack.c.h.b16 %v361
    %v3707 = vunpack.c.l.b16 %v362
    %v3708 = vunpack.c.h.b16 %v362
    %v3709 = vunpack.c.l.b16 %v363
    %v3710 = vunpack.c.h.b16 %v363
    %v3711 = vunpack.c.l.b16 %v364
    %v3712 = vunpack.c.h.b16 %v364
    %v3713 = vunpack.c.l.b16 %v365
    %v3714 = vunpack.c.h.b16 %v365
    %v3715 = vunpack.c.l.b16 %v366
    %v3716 = vunpack.c.h.b16 %v366
    %v3717 = vunpack.c.l.b16 %v367
    %v3718 = vunpack.c.h.b16 %v367
    %v3719 = vunpack.c.l.b16 %v368
    %v3720 = vunpack.c.h.b16 %v368
    %v3721 = vunpack.c.l.b16 %v369
    %v3722 = vunpack.c.h.b16 %v369
    %v3723 = vunpack.c.l.b16 %v370
    %v3724 = vunpack.c.h.b16 %v370
    %v3725 = vunpack.c.l.b16 %v371
    %v3726 = vunpack.c.h.b16 %v371
    %v3727 = vunpack.c.l.b16 %v372
    %v3728 = vunpack.c.h.b16 %v372
    %v3729 = vunpack.c.l.b16 %v373
    %v3730 = vunpack.c.h.b16 %v373
    %v3731 = vunpack.c.l.b16 %v374
    %v3732 = vunpack.c.h.b16 %v374
    %v3733 = vunpack.c.l.b16 %v375
    %v3734 = vunpack.c.h.b16 %v375
    %v3735 = vunpack.c.l.b16 %v376
    %v3736 = vunpack.c.h.b16 %v376
    %v3737 = vunpack.c.l.b16 %v377
    %v3738 = vunpack.c.h.b16 %v377
    %v3739 = vunpack.c.l.b16 %v378
    %v3740 = vunpack.c.h.b16 %v378
    %v3741 = vunpack.c.l.b16 %v379
    %v3742 = vunpack.c.h.b16 %v379
    %v3743 = vunpack.c.l.b16 %v380
    %v3744 = vunpack.c.h.b16 %v380
    %v3745 = vunpack.c.l.b16 %v381
    %v3746 = vunpack.c.h.b16 %v381
    %v3747 = vunpack.c.l.b16 %v382
    %v3748 = vunpack.c.h.b16 %v382
    %v3749 = vunpack.c.l.b16 %v383
    %v3750 = vunpack.c.h.b16 %v383
    %v3751 = vunpack.c.l.b16 %v384
    %v3752 = vunpack.c.h.b16 %v384
    %v3753 = vunpack.c.l.b16 %v385
    %v3754 = vunpack.c.h.b16 %v385
    %v3755 = vunpack.c.l.b16 %v386
    %v3756 = vunpack.c.h.b16 %v386
    %v3757 = vunpack.c.l.b16 %v387
    %v3758 = vunpack.c.h.b16 %v387
    %v3759 = vunpack.c.l.b16 %v388
    %v3760 = vunpack.c.h.b16 %v388
    %v3761 = vunpack.c.l.b16 %v389
    %v3762 = vunpack.c.h.b16 %v389
    %v3763 = vunpack.c.l.b16 %v390
    %v3764 = vunpack.c.h.b16 %v390
    %v3765 = vunpack.c.l.b16 %v391
    %v3766 = vunpack.c.h.b16 %v391
    %v3767 = vunpack.c.l.b16 %v392
    %v3768 = vunpack.c.h.b16 %v392
    %v3769 = vunpack.c.l.b16 %v393
    %v3770 = vunpack.c.h.b16 %v393
    %v3771 = vunpack.c.l.b16 %v394
    %v3772 = vunpack.c.h.b16 %v394
    %v3773 = vunpack.c.l.b16 %v395
    %v3774 = vunpack.c.h.b16 %v395
    %v3775 = vunpack.c.l.b16 %v396
    %v3776 = vunpack.c.h.b16 %v396
    %v3777 = vunpack.c.l.b16 %v397
    %v3778 = vunpack.c.h.b16 %v397
    %v3779 = vunpack.c.l.b16 %v398
    %v3780 = vunpack.c.h.b16 %v398
    %v3781 = vunpack.c.l.b16 %v399
    %v3782 = vunpack.c.h.b16 %v399
    %v3783 = vunpack.c.l.b16 %v400
    %v3784 = vunpack.c.h.b16 %v400
    %v3785 = vunpack.c.l.b16 %v401
    %v3786 = vunpack.c.h.b16 %v401
    %v3787 = vunpack.c.l.b16 %v402
    %v3788 = vunpack.c.h.b16 %v402
    %v3789 = vunpack.c.l.b16 %v403
    %v3790 = vunpack.c.h.b16 %v403
    %v3791 = vunpack.c.l.b16 %v404
    %v3792 = vunpack.c.h.b16 %v404
    %v3793 = vunpack.c.l.b16 %v405
    %v3794 = vunpack.c.h.b16 %v405
    %v3795 = vunpack.c.l.b16 %v406
    %v3796 = vunpack.c.h.b16 %v406
    %v3797 = vunpack.c.l.b16 %v407
    %v3798 = vunpack.c.h.b16 %v407
    %v3799 = vunpack.c.l.b16 %v408
    %v3800 = vunpack.c.h.b16 %v408
    %v3801 = vunpack.c.l.b16 %v409
    %v3802 = vunpack.c.h.b16 %v409
    %v3803 = vunpack.c.l.b16 %v410
    %v3804 = vunpack.c.h.b16 %v410
    %v3805 = vunpack.c.l.b16 %v411
    %v3806 = vunpack.c.h.b16 %v411
    %v3807 = vunpack.c.l.b16 %v412
    %v3808 = vunpack.c.h.b16 %v412
    %v3809 = vunpack.c.l.b16 %v413
    %v3810 = vunpack.c.h.b16 %v413
    %v3811 = vunpack.c.l.b16 %v414
    %v3812 = vunpack.c.h.b16 %v414
    %v3813 = vunpack.c.l.b16 %v415
    %v3814 = vunpack.c.h.b16 %v415
    %v3815 = vunpack.c.l.b16 %v416
    %v3816 = vunpack.c.h.b16 %v416
    %v3817 = vunpack.c.l.b16 %v417
    %v3818 = vunpack.c.h.b16 %v417
    %v3819 = vunpack.c.l.b16 %v418
    %v3820 = vunpack.c.h.b16 %v418
    %v3821 = vunpack.c.l.b16 %v419
    %v3822 = vunpack.c.h.b16 %v419
    %v3823 = vunpack.c.l.b16 %v420
    %v3824 = vunpack.c.h.b16 %v420
    %v3825 = vunpack.c.l.b16 %v421
    %v3826 = vunpack.c.h.b16 %v421
    %v3827 = vunpack.c.l.b16 %v422
    %v3828 = vunpack.c.h.b16 %v422
    %v3829 = vunpack.c.l.b16 %v423
    %v3830 = vunpack.c.h.b16 %v423
    %v3831 = vunpack.c.l.b16 %v424
    %v3832 = vunpack.c.h.b16 %v424
    %v3833 = vunpack.c.l.b16 %v425
    %v3834 = vunpack.c.h.b16 %v425
    %v3835 = vunpack.c.l.b16 %v426
    %v3836 = vunpack.c.h.b16 %v426
    %v3837 = vunpack.c.l.b16 %v427
    %v3838 = vunpack.c.h.b16 %v427
    %v3839 = vunpack.c.l.b16 %v428
    %v3840 = vunpack.c.h.b16 %v428
    %v3841 = vunpack.c.l.b16 %v429
    %v3842 = vunpack.c.h.b16 %v429
    %v3843 = vunpack.c.l.b16 %v430
    %v3844 = vunpack.c.h.b16 %v430
    %v3845 = vunpack.c.l.b16 %v431
    %v3846 = vunpack.c.h.b16 %v431
    %v3847 = vunpack.c.l.b16 %v432
    %v3848 = vunpack.c.h.b16 %v432
    %v3849 = vunpack.c.l.b16 %v433
    %v3850 = vunpack.c.h.b16 %v433
    %v3851 = vunpack.c.l.b16 %v434
    %v3852 = vunpack.c.h.b16 %v434
    %v3853 = vunpack.c.l.b16 %v435
    %v3854 = vunpack.c.h.b16 %v435
    %v3855 = vunpack.c.l.b16 %v436
    %v3856 = vunpack.c.h.b16 %v436
    %v3857 = vunpack.c.l.b16 %v437
    %v3858 = vunpack.c.h.b16 %v437
    %v3859 = vunpack.c.l.b16 %v438
    %v3860 = vunpack.c.h.b16 %v438
    %v3861 = vunpack.c.l.b16 %v439
    %v3862 = vunpack.c.h.b16 %v439
    %v3863 = vunpack.c.l.b16 %v440
    %v3864 = vunpack.c.h.b16 %v440
    %v3865 = vunpack.c.l.b16 %v441
    %v3866 = vunpack.c.h.b16 %v441
    %v3867 = vunpack.c.l.b16 %v442
    %v3868 = vunpack.c.h.b16 %v442
    %v3869 = vunpack.c.l.b16 %v443
    %v3870 = vunpack.c.h.b16 %v443
    %v3871 = vunpack.c.l.b16 %v444
    %v3872 = vunpack.c.h.b16 %v444
    %v3873 = vunpack.c.l.b16 %v445
    %v3874 = vunpack.c.h.b16 %v445
    %v3875 = vunpack.c.l.b16 %v446
    %v3876 = vunpack.c.h.b16 %v446
    %v3877 = vunpack.c.l.b16 %v447
    %v3878 = vunpack.c.h.b16 %v447
    %v3879 = vunpack.c.l.b16 %v448
    %v3880 = vunpack.c.h.b16 %v448
    %v3881 = vunpack.c.l.b16 %v449
    %v3882 = vunpack.c.h.b16 %v449
    %v3883 = vunpack.c.l.b16 %v450
    %v3884 = vunpack.c.h.b16 %v450
    %v3885 = vunpack.c.l.b16 %v451
    %v3886 = vunpack.c.h.b16 %v451
    %v3887 = vunpack.c.l.b16 %v452
    %v3888 = vunpack.c.h.b16 %v452
    %v3889 = vunpack.c.l.b16 %v453
    %v3890 = vunpack.c.h.b16 %v453
    %v3891 = vunpack.c.l.b16 %v454
    %v3892 = vunpack.c.h.b16 %v454
    %v3893 = vunpack.c.l.b16 %v455
    %v3894 = vunpack.c.h.b16 %v455
    %v3895 = vunpack.c.l.b16 %v456
    %v3896 = vunpack.c.h.b16 %v456
    %v3897 = vunpack.c.l.b16 %v457
    %v3898 = vunpack.c.h.b16 %v457
    %v3899 = vunpack.c.l.b16 %v458
    %v3900 = vunpack.c.h.b16 %v458
    %v3901 = vunpack.c.l.b16 %v459
    %v3902 = vunpack.c.h.b16 %v459
    %v3903 = vunpack.c.l.b16 %v460
    %v3904 = vunpack.c.h.b16 %v460
    %v3905 = vunpack.c.l.b16 %v461
    %v3906 = vunpack.c.h.b16 %v461
    %v3907 = vunpack.c.l.b16 %v462
    %v3908 = vunpack.c.h.b16 %v462
    %v3909 = vunpack.c.l.b16 %v463
    %v3910 = vunpack.c.h.b16 %v463
    %v3911 = vunpack.c.l.b16 %v464
    %v3912 = vunpack.c.h.b16 %v464
    %v3913 = vunpack.c.l.b16 %v465
    %v3914 = vunpack.c.h.b16 %v465
    %v3915 = vunpack.c.l.b16 %v466
    %v3916 = vunpack.c.h.b16 %v466
    %v3917 = vunpack.c.l.b16 %v467
    %v3918 = vunpack.c.h.b16 %v467
    %v3919 = vunpack.c.l.b16 %v468
    %v3920 = vunpack.c.h.b16 %v468
    %v3921 = vunpack.c.l.b16 %v469
    %v3922 = vunpack.c.h.b16 %v469
    %v3923 = vunpack.c.l.b16 %v470
    %v3924 = vunpack.c.h.b16 %v470
    %v3925 = vunpack.c.l.b16 %v471
    %v3926 = vunpack.c.h.b16 %v471
    %v3927 = vunpack.c.l.b16 %v472
    %v3928 = vunpack.c.h.b16 %v472
    %v3929 = vunpack.c.l.b16 %v473
    %v3930 = vunpack.c.h.b16 %v473
    %v3931 = vunpack.c.l.b16 %v474
    %v3932 = vunpack.c.h.b16 %v474
    %v3933 = vunpack.c.l.b16 %v475
    %v3934 = vunpack.c.h.b16 %v475
    %v3935 = vunpack.c.l.b16 %v476
    %v3936 = vunpack.c.h.b16 %v476
    %v3937 = vunpack.c.l.b16 %v477
    %v3938 = vunpack.c.h.b16 %v477
    %v3939 = vunpack.c.l.b16 %v478
    %v3940 = vunpack.c.h.b16 %v478
    %v3941 = vunpack.c.l.b16 %v479
    %v3942 = vunpack.c.h.b16 %v479
    %v3943 = vunpack.c.l.b16 %v480
    %v3944 = vunpack.c.h.b16 %v480
    %v3945 = vunpack.c.l.b16 %v481
    %v3946 = vunpack.c.h.b16 %v481
    %v3947 = vunpack.c.l.b16 %v482
    %v3948 = vunpack.c.h.b16 %v482
    %v3949 = vunpack.c.l.b16 %v483
    %v3950 = vunpack.c.h.b16 %v483
    %v3951 = vunpack.c.l.b16 %v484
    %v3952 = vunpack.c.h.b16 %v484
    %v3953 = vunpack.c.l.b16 %v485
    %v3954 = vunpack.c.h.b16 %v485
    %v3955 = vunpack.c.l.b16 %v486
    %v3956 = vunpack.c.h.b16 %v486
    %v3957 = vunpack.c.l.b16 %v487
    %v3958 = vunpack.c.h.b16 %v487
    %v3959 = vunpack.c.l.b16 %v488
    %v3960 = vunpack.c.h.b16 %v488
    %v3961 = vunpack.c.l.b16 %v489
    %v3962 = vunpack.c.h.b16 %v489
    %v3963 = vunpack.c.l.b16 %v490
    %v3964 = vunpack.c.h.b16 %v490
    %v3965 = vunpack.c.l.b16 %v491
    %v3966 = vunpack.c.h.b16 %v491
    %v3967 = vunpack.c.l.b16 %v492
    %v3968 = vunpack.c.h.b16 %v492
    %v3969 = vunpack.c.l.b16 %v493
    %v3970 = vunpack.c.h.b16 %v493
    %v3971 = vunpack.c.l.b16 %v494
    %v3972 = vunpack.c.h.b16 %v494
    %v3973 = vunpack.c.l.b16 %v495
    %v3974 = vunpack.c.h.b16 %v495
    %v3975 = vunpack.c.l.b16 %v496
    %v3976 = vunpack.c.h.b16 %v496
    %v3977 = vunpack.c.l.b16 %v497
    %v3978 = vunpack.c.h.b16 %v497
    %v3979 = vunpack.c.l.b16 %v498
    %v3980 = vunpack.c.h.b16 %v498
    %v3981 = vunpack.c.l.b16 %v499
    %v3982 = vunpack.c.h.b16 %v499
    %v3983 = vunpack.c.l.b16 %v500
    %v3984 = vunpack.c.h.b16 %v500
    %v3985 = vunpack.c.l.b16 %v501
    %v3986 = vunpack.c.h.b16 %v501
    %v3987 = vunpack.c.l.b16 %v502
    %v3988 = vunpack.c.h.b16 %v502
    %v3989 = vunpack.c.l.b16 %v503
    %v3990 = vunpack.c.h.b16 %v503
    %v3991 = vunpack.c.l.b16 %v504
    %v3992 = vunpack.c.h.b16 %v504
    %v3993 = vunpack.c.l.b16 %v505
    %v3994 = vunpack.c.h.b16 %v505
    %v3995 = vunpack.c.l.b16 %v506
    %v3996 = vunpack.c.h.b16 %v506
    %v3997 = vunpack.c.l.b16 %v507
    %v3998 = vunpack.c.h.b16 %v507
    %v3999 = vunpack.c.l.b16 %v508
    %v4000 = vunpack.c.h.b16 %v508
    %v4001 = vunpack.c.l.b16 %v509
    %v4002 = vunpack.c.h.b16 %v509
    %v4003 = vunpack.c.l.b16 %v510
    %v4004 = vunpack.c.h.b16 %v510
    %v4005 = vunpack.c.l.b16 %v511
    %v4006 = vunpack.c.h.b16 %v511
    %v4007 = vunpack.c.l.b16 %v512
    %v4008 = vunpack.c.h.b16 %v512
    %v4009 = vunpack.c.l.b16 %v513
    %v4010 = vunpack.c.h.b16 %v513
    %v4011 = vunpack.c.l.b16 %v514
    %v4012 = vunpack.c.h.b16 %v514
    %v4013 = vunpack.c.l.b16 %v515
    %v4014 = vunpack.c.h.b16 %v515
    %v4015 = vunpack.c.l.b16 %v516
    %v4016 = vunpack.c.h.b16 %v516
    %v4017 = vunpack.c.l.b16 %v517
    %v4018 = vunpack.c.h.b16 %v517
    %v4019 = vunpack.c.l.b16 %v518
    %v4020 = vunpack.c.h.b16 %v518
    %v4021 = vunpack.c.l.b16 %v519
    %v4022 = vunpack.c.h.b16 %v519
    %v4023 = vunpack.c.l.b16 %v520
    %v4024 = vunpack.c.h.b16 %v520
    %v4025 = vunpack.c.l.b16 %v521
    %v4026 = vunpack.c.h.b16 %v521
    %v4027 = vunpack.c.l.b16 %v522
    %v4028 = vunpack.c.h.b16 %v522
    %v4029 = vunpack.c.l.b16 %v523
    %v4030 = vunpack.c.h.b16 %v523
    %v4031 = vunpack.c.l.b16 %v524
    %v4032 = vunpack.c.h.b16 %v524
    %v4033 = vunpack.c.l.b16 %v525
    %v4034 = vunpack.c.h.b16 %v525
    %v4035 = vunpack.c.l.b16 %v526
    %v4036 = vunpack.c.h.b16 %v526
    %v4037 = vunpack.c.l.b16 %v527
    %v4038 = vunpack.c.h.b16 %v527
    %v4039 = vunpack.c.l.b16 %v528
    %v4040 = vunpack.c.h.b16 %v528
    %v4041 = vunpack.c.l.b16 %v529
    %v4042 = vunpack.c.h.b16 %v529
    %v4043 = vunpack.c.l.b16 %v530
    %v4044 = vunpack.c.h.b16 %v530
    %v4045 = vunpack.c.l.b16 %v531
    %v4046 = vunpack.c.h.b16 %v531
    %v4047 = vunpack.c.l.b16 %v532
    %v4048 = vunpack.c.h.b16 %v532
    %v4049 = vunpack.c.l.b16 %v533
    %v4050 = vunpack.c.h.b16 %v533
    %v4051 = vunpack.c.l.b16 %v534
    %v4052 = vunpack.c.h.b16 %v534
    %v4053 = vunpack.c.l.b16 %v535
    %v4054 = vunpack.c.h.b16 %v535
    %v4055 = vunpack.c.l.b16 %v536
    %v4056 = vunpack.c.h.b16 %v536
    %v4057 = vunpack.c.l.b16 %v537
    %v4058 = vunpack.c.h.b16 %v537
    %v4059 = vunpack.c.l.b16 %v538
    %v4060 = vunpack.c.h.b16 %v538
    %v4061 = vunpack.c.l.b16 %v539
    %v4062 = vunpack.c.h.b16 %v539
    %v4063 = vunpack.c.l.b16 %v540
    %v4064 = vunpack.c.h.b16 %v540
    %v4065 = vunpack.c.l.b16 %v541
    %v4066 = vunpack.c.h.b16 %v541
    %v4067 = vunpack.c.l.b16 %v542
    %v4068 = vunpack.c.h.b16 %v542
    %v4069 = vunpack.c.l.b16 %v543
    %v4070 = vunpack.c.h.b16 %v543
    %v4071 = vunpack.c.l.b16 %v544
    %v4072 = vunpack.c.h.b16 %v544
    %v4073 = vunpack.c.l.b16 %v545
    %v4074 = vunpack.c.h.b16 %v545
    %v4075 = vunpack.c.l.b16 %v546
    %v4076 = vunpack.c.h.b16 %v546
    %v4077 = vunpack.c.l.b16 %v547
    %v4078 = vunpack.c.h.b16 %v547
    %v4079 = vunpack.c.l.b16 %v548
    %v4080 = vunpack.c.h.b16 %v548
    %v4081 = vunpack.c.l.b16 %v549
    %v4082 = vunpack.c.h.b16 %v549
    %v4083 = vunpack.c.l.b16 %v550
    %v4084 = vunpack.c.h.b16 %v550
    %v4085 = vunpack.c.l.b16 %v551
    %v4086 = vunpack.c.h.b16 %v551
    %v4087 = vunpack.c.l.b16 %v552
    %v4088 = vunpack.c.h.b16 %v552
    %v4089 = vunpack.c.l.b16 %v553
    %v4090 = vunpack.c.h.b16 %v553
    %v4091 = vunpack.c.l.b16 %v554
    %v4092 = vunpack.c.h.b16 %v554
    %v4093 = vunpack.c.l.b16 %v555
    %v4094 = vunpack.c.h.b16 %v555
    %v4095 = vunpack.c.l.b16 %v556
    %v4096 = vunpack.c.h.b16 %v556
    %v4097 = vunpack.c.l.b16 %v557
    %v4098 = vunpack.c.h.b16 %v557
    %v4099 = vunpack.c.l.b16 %v558
    %v4100 = vunpack.c.h.b16 %v558
    %v4101 = vunpack.c.l.b16 %v559
    %v4102 = vunpack.c.h.b16 %v559
    %v4103 = vunpack.c.l.b16 %v560
    %v4104 = vunpack.c.h.b16 %v560
    %v4105 = vunpack.c.l.b16 %v561
    %v4106 = vunpack.c.h.b16 %v561
    %v4107 = vunpack.c.l.b16 %v562
    %v4108 = vunpack.c.h.b16 %v562
    %v4109 = vunpack.c.l.b16 %v563
    %v4110 = vunpack.c.h.b16 %v563
    %v4111 = vunpack.c.l.b16 %v564
    %v4112 = vunpack.c.h.b16 %v564
    %v4113 = vunpack.c.l.b16 %v565
    %v4114 = vunpack.c.h.b16 %v565
    %v4115 = vunpack.c.l.b16 %v566
    %v4116 = vunpack.c.h.b16 %v566
    %v4117 = vunpack.c.l.b16 %v567
    %v4118 = vunpack.c.h.b16 %v567
    %v4119 = vunpack.c.l.b16 %v568
    %v4120 = vunpack.c.h.b16 %v568
    %v4121 = vunpack.c.l.b16 %v569
    %v4122 = vunpack.c.h.b16 %v569
    %v4123 = vunpack.c.l.b16 %v570
    %v4124 = vunpack.c.h.b16 %v570
    %v4125 = vunpack.c.l.b16 %v571
    %v4126 = vunpack.c.h.b16 %v571
    %v4127 = vunpack.c.l.b16 %v572
    %v4128 = vunpack.c.h.b16 %v572
    %v4129 = vunpack.c.l.b16 %v573
    %v4130 = vunpack.c.h.b16 %v573
    %v4131 = vunpack.c.l.b16 %v574
    %v4132 = vunpack.c.h.b16 %v574
    %v4133 = vunpack.c.l.b16 %v575
    %v4134 = vunpack.c.h.b16 %v575
    %v4135 = vunpack.c.l.b16 %v576
    %v4136 = vunpack.c.h.b16 %v576
    %v4137 = vunpack.c.l.b16 %v577
    %v4138 = vunpack.c.h.b16 %v577
    %v4139 = vunpack.c.l.b16 %v578
    %v4140 = vunpack.c.h.b16 %v578
    %v4141 = vunpack.c.l.b16 %v579
    %v4142 = vunpack.c.h.b16 %v579
    %v4143 = vunpack.c.l.b16 %v580
    %v4144 = vunpack.c.h.b16 %v580
    %v4145 = vunpack.c.l.b16 %v581
    %v4146 = vunpack.c.h.b16 %v581
    %v4147 = vunpack.c.l.b16 %v582
    %v4148 = vunpack.c.h.b16 %v582
    %v4149 = vunpack.c.l.b16 %v583
    %v4150 = vunpack.c.h.b16 %v583
    %v4151 = vunpack.c.l.b16 %v584
    %v4152 = vunpack.c.h.b16 %v584
    %v4153 = vunpack.c.l.b16 %v585
    %v4154 = vunpack.c.h.b16 %v585
    %v4155 = vunpack.c.l.b16 %v586
    %v4156 = vunpack.c.h.b16 %v586
    %v4157 = vunpack.c.l.b16 %v587
    %v4158 = vunpack.c.h.b16 %v587
    %v4159 = vunpack.c.l.b16 %v588
    %v4160 = vunpack.c.h.b16 %v588
    %v4161 = vunpack.c.l.b16 %v589
    %v4162 = vunpack.c.h.b16 %v589
    %v4163 = vunpack.c.l.b16 %v590
    %v4164 = vunpack.c.h.b16 %v590
    %v4165 = vunpack.c.l.b16 %v591
    %v4166 = vunpack.c.h.b16 %v591
    %v4167 = vunpack.c.l.b16 %v592
    %v4168 = vunpack.c.h.b16 %v592
    %v4169 = vunpack.c.l.b16 %v593
    %v4170 = vunpack.c.h.b16 %v593
    %v4171 = vunpack.c.l.b16 %v594
    %v4172 = vunpack.c.h.b16 %v594
    %v4173 = vunpack.c.l.b16 %v595
    %v4174 = vunpack.c.h.b16 %v595
    %v4175 = vunpack.c.l.b16 %v596
    %v4176 = vunpack.c.h.b16 %v596
    %v4177 = vunpack.c.l.b16 %v597
    %v4178 = vunpack.c.h.b16 %v597
    %v4179 = vunpack.c.l.b16 %v598
    %v4180 = vunpack.c.h.b16 %v598
    %v4181 = vunpack.c.l.b16 %v599
    %v4182 = vunpack.c.h.b16 %v599
    %v4183 = vunpack.c.l.b16 %v600
    %v4184 = vunpack.c.h.b16 %v600
    %v4185 = vunpack.c.l.b16 %v601
    %v4186 = vunpack.c.h.b16 %v601
    %v4187 = vunpack.c.l.b16 %v602
    %v4188 = vunpack.c.h.b16 %v602
    %v4189 = vunpack.c.l.b16 %v603
    %v4190 = vunpack.c.h.b16 %v603
    %v4191 = vunpack.c.l.b16 %v604
    %v4192 = vunpack.c.h.b16 %v604
    %v4193 = vunpack.c.l.b16 %v605
    %v4194 = vunpack.c.h.b16 %v605
    %v4195 = vunpack.c.l.b16 %v606
    %v4196 = vunpack.c.h.b16 %v606
    %v4197 = vunpack.c.l.b16 %v607
    %v4198 = vunpack.c.h.b16 %v607
    %v4199 = vunpack.c.l.b16 %v608
    %v4200 = vunpack.c.h.b16 %v608
    %v4201 = vunpack.c.l.b16 %v609
    %v4202 = vunpack.c.h.b16 %v609
    %v4203 = vunpack.c.l.b16 %v610
    %v4204 = vunpack.c.h.b16 %v610
    %v4205 = vunpack.c.l.b16 %v611
    %v4206 = vunpack.c.h.b16 %v611
    %v4207 = vunpack.c.l.b16 %v612
    %v4208 = vunpack.c.h.b16 %v612
    %v4209 = vunpack.c.l.b16 %v613
    %v4210 = vunpack.c.h.b16 %v613
    %v4211 = vunpack.c.l.b16 %v614
    %v4212 = vunpack.c.h.b16 %v614
    %v4213 = vunpack.c.l.b16 %v615
    %v4214 = vunpack.c.h.b16 %v615
    %v4215 = vunpack.c.l.b16 %v616
    %v4216 = vunpack.c.h.b16 %v616
    %v4217 = vunpack.c.l.b16 %v617
    %v4218 = vunpack.c.h.b16 %v617
    %v4219 = vunpack.c.l.b16 %v618
    %v4220 = vunpack.c.h.b16 %v618
    %v4221 = vunpack.c.l.b16 %v619
    %v4222 = vunpack.c.h.b16 %v619
    %v4223 = vunpack.c.l.b16 %v620
    %v4224 = vunpack.c.h.b16 %v620
    %v4225 = vunpack.c.l.b16 %v621
    %v4226 = vunpack.c.h.b16 %v621
    %v4227 = vunpack.c.l.b16 %v622
    %v4228 = vunpack.c.h.b16 %v622
    %v4229 = vunpack.c.l.b16 %v623
    %v4230 = vunpack.c.h.b16 %v623
    %v4231 = vunpack.c.l.b16 %v624
    %v4232 = vunpack.c.h.b16 %v624
    %v4233 = vunpack.c.l.b16 %v625
    %v4234 = vunpack.c.h.b16 %v625
    %v4235 = vunpack.c.l.b16 %v626
    %v4236 = vunpack.c.h.b16 %v626
    %v4237 = vunpack.c.l.b16 %v627
    %v4238 = vunpack.c.h.b16 %v627
    %v4239 = vunpack.c.l.b16 %v628
    %v4240 = vunpack.c.h.b16 %v628
    %v4241 = vunpack.c.l.b16 %v629
    %v4242 = vunpack.c.h.b16 %v629
    %v4243 = vunpack.c.l.b16 %v630
    %v4244 = vunpack.c.h.b16 %v630
    %v4245 = vunpack.c.l.b16 %v631
    %v4246 = vunpack.c.h.b16 %v631
    %v4247 = vunpack.c.l.b16 %v632
    %v4248 = vunpack.c.h.b16 %v632
    %v4249 = vunpack.c.l.b16 %v633
    %v4250 = vunpack.c.h.b16 %v633
    %v4251 = vunpack.c.l.b16 %v634
    %v4252 = vunpack.c.h.b16 %v634
    %v4253 = vunpack.c.l.b16 %v635
    %v4254 = vunpack.c.h.b16 %v635
    %v4255 = vunpack.c.l.b16 %v636
    %v4256 = vunpack.c.h.b16 %v636
    %v4257 = vunpack.c.l.b16 %v637
    %v4258 = vunpack.c.h.b16 %v637
    %v4259 = vunpack.c.l.b16 %v638
    %v4260 = vunpack.c.h.b16 %v638
    %v4261 = vunpack.c.l.b16 %v639
    %v4262 = vunpack.c.h.b16 %v639
    %v4263 = vunpack.c.l.b16 %v640
    %v4264 = vunpack.c.h.b16 %v640
    %v4265 = vunpack.c.l.b16 %v641
    %v4266 = vunpack.c.h.b16 %v641
    %v4267 = vunpack.c.l.b16 %v642
    %v4268 = vunpack.c.h.b16 %v642
    %v4269 = vunpack.c.l.b16 %v643
    %v4270 = vunpack.c.h.b16 %v643
    %v4271 = vunpack.c.l.b16 %v644
    %v4272 = vunpack.c.h.b16 %v644
    %v4273 = vunpack.c.l.b16 %v645
    %v4274 = vunpack.c.h.b16 %v645
    %v4275 = vunpack.c.l.b16 %v646
    %v4276 = vunpack.c.h.b16 %v646
    %v4277 = vunpack.c.l.b16 %v647
    %v4278 = vunpack.c.h.b16 %v647
    %v4279 = vunpack.c.l.b16 %v648
    %v4280 = vunpack.c.h.b16 %v648
    %v4281 = vunpack.c.l.b16 %v649
    %v4282 = vunpack.c.h.b16 %v649
    %v4283 = vunpack.c.l.b16 %v650
    %v4284 = vunpack.c.h.b16 %v650
    %v4285 = vunpack.c.l.b16 %v651
    %v4286 = vunpack.c.h.b16 %v651
    %v4287 = vunpack.c.l.b16 %v652
    %v4288 = vunpack.c.h.b16 %v652
    %v4289 = vunpack.c.l.b16 %v653
    %v4290 = vunpack.c.h.b16 %v653
    %v4291 = vunpack.c.l.b16 %v654
    %v4292 = vunpack.c.h.b16 %v654
    %v4293 = vunpack.c.l.b16 %v655
    %v4294 = vunpack.c.h.b16 %v655
    %v4295 = vunpack.c.l.b16 %v656
    %v4296 = vunpack.c.h.b16 %v656
    %v4297 = vunpack.c.l.b16 %v657
    %v4298 = vunpack.c.h.b16 %v657
    %v4299 = vunpack.c.l.b16 %v658
    %v4300 = vunpack.c.h.b16 %v658
    %v4301 = vunpack.c.l.b16 %v659
    %v4302 = vunpack.c.h.b16 %v659
    %v4303 = vunpack.c.l.b16 %v660
    %v4304 = vunpack.c.h.b16 %v660
    %v4305 = vunpack.c.l.b16 %v661
    %v4306 = vunpack.c.h.b16 %v661
    %v4307 = vunpack.c.l.b16 %v662
    %v4308 = vunpack.c.h.b16 %v662
    %v4309 = vunpack.c.l.b16 %v663
    %v4310 = vunpack.c.h.b16 %v663
    %v4311 = vunpack.c.l.b16 %v664
    %v4312 = vunpack.c.h.b16 %v664
    %v4313 = vunpack.c.l.b16 %v665
    %v4314 = vunpack.c.h.b16 %v665
    %v4315 = vunpack.c.l.b16 %v666
    %v4316 = vunpack.c.h.b16 %v666
    %v4317 = vunpack.c.l.b16 %v667
    %v4318 = vunpack.c.h.b16 %v667
    %v4319 = vunpack.c.l.b16 %v668
    %v4320 = vunpack.c.h.b16 %v668
    %v4321 = vunpack.c.l.b16 %v669
    %v4322 = vunpack.c.h.b16 %v669
    %v4323 = vunpack.c.l.b16 %v670
    %v4324 = vunpack.c.h.b16 %v670
    %v4325 = vunpack.c.l.b16 %v671
    %v4326 = vunpack.c.h.b16 %v671
    %v4327 = vunpack.c.l.b16 %v672
    %v4328 = vunpack.c.h.b16 %v672
    %v4329 = vunpack.c.l.b16 %v673
    %v4330 = vunpack.c.h.b16 %v673
    %v4331 = vunpack.c.l.b16 %v674
    %v4332 = vunpack.c.h.b16 %v674
    %v4333 = vunpack.c.l.b16 %v675
    %v4334 = vunpack.c.h.b16 %v675
    %v4335 = vunpack.c.l.b16 %v676
    %v4336 = vunpack.c.h.b16 %v676
    %v4337 = vunpack.c.l.b16 %v677
    %v4338 = vunpack.c.h.b16 %v677
    %v4339 = vunpack.c.l.b16 %v678
    %v4340 = vunpack.c.h.b16 %v678
    %v4341 = vunpack.c.l.b16 %v679
    %v4342 = vunpack.c.h.b16 %v679
    %v4343 = vunpack.c.l.b16 %v680
    %v4344 = vunpack.c.h.b16 %v680
    %v4345 = vunpack.c.l.b16 %v681
    %v4346 = vunpack.c.h.b16 %v681
    %v4347 = vunpack.c.l.b16 %v682
    %v4348 = vunpack.c.h.b16 %v682
    %v4349 = vunpack.c.l.b16 %v683
    %v4350 = vunpack.c.h.b16 %v683
    %v4351 = vunpack.c.l.b16 %v684
    %v4352 = vunpack.c.h.b16 %v684
    %v4353 = vunpack.c.l.b16 %v685
    %v4354 = vunpack.c.h.b16 %v685
    %v4355 = vunpack.c.l.b16 %v686
    %v4356 = vunpack.c.h.b16 %v686
    %v4357 = vunpack.c.l.b16 %v687
    %v4358 = vunpack.c.h.b16 %v687
    %v4359 = vunpack.c.l.b16 %v688
    %v4360 = vunpack.c.h.b16 %v688
    %v4361 = vunpack.c.l.b16 %v689
    %v4362 = vunpack.c.h.b16 %v689
    %v4363 = vunpack.c.l.b16 %v690
    %v4364 = vunpack.c.h.b16 %v690
    %v4365 = vunpack.c.l.b16 %v691
    %v4366 = vunpack.c.h.b16 %v691
    %v4367 = vunpack.c.l.b16 %v692
    %v4368 = vunpack.c.h.b16 %v692
    %v4369 = vunpack.c.l.b16 %v693
    %v4370 = vunpack.c.h.b16 %v693
    %v4371 = vunpack.c.l.b16 %v694
    %v4372 = vunpack.c.h.b16 %v694
    %v4373 = vunpack.c.l.b16 %v695
    %v4374 = vunpack.c.h.b16 %v695
    %v4375 = vunpack.c.l.b16 %v696
    %v4376 = vunpack.c.h.b16 %v696
    %v4377 = vunpack.c.l.b16 %v697
    %v4378 = vunpack.c.h.b16 %v697
    %v4379 = vunpack.c.l.b16 %v698
    %v4380 = vunpack.c.h.b16 %v698
    %v4381 = vunpack.c.l.b16 %v699
    %v4382 = vunpack.c.h.b16 %v699
    %v4383 = vunpack.c.l.b16 %v700
    %v4384 = vunpack.c.h.b16 %v700
    %v4385 = vunpack.c.l.b16 %v701
    %v4386 = vunpack.c.h.b16 %v701
    %v4387 = vunpack.c.l.b16 %v702
    %v4388 = vunpack.c.h.b16 %v702
    %v4389 = vunpack.c.l.b16 %v703
    %v4390 = vunpack.c.h.b16 %v703
    %v4391 = vunpack.c.l.b16 %v704
    %v4392 = vunpack.c.h.b16 %v704
    %v4393 = vunpack.c.l.b16 %v705
    %v4394 = vunpack.c.h.b16 %v705
    %v4395 = vunpack.c.l.b16 %v706
    %v4396 = vunpack.c.h.b16 %v706
    %v4397 = vunpack.c.l.b16 %v707
    %v4398 = vunpack.c.h.b16 %v707
    %v4399 = vunpack.c.l.b16 %v708
    %v4400 = vunpack.c.h.b16 %v708
    %v4401 = vunpack.c.l.b16 %v709
    %v4402 = vunpack.c.h.b16 %v709
    %v4403 = vunpack.c.l.b16 %v710
    %v4404 = vunpack.c.h.b16 %v710
    %v4405 = vunpack.c.l.b16 %v711
    %v4406 = vunpack.c.h.b16 %v711
    %v4407 = vunpack.c.l.b16 %v712
    %v4408 = vunpack.c.h.b16 %v712
    %v4409 = vunpack.c.l.b16 %v713
    %v4410 = vunpack.c.h.b16 %v713
    %v4411 = vunpack.c.l.b16 %v714
    %v4412 = vunpack.c.h.b16 %v714
    %v4413 = vunpack.c.l.b16 %v715
    %v4414 = vunpack.c.h.b16 %v715
    %v4415 = vunpack.c.l.b16 %v716
    %v4416 = vunpack.c.h.b16 %v716
    %v4417 = vunpack.c.l.b16 %v717
    %v4418 = vunpack.c.h.b16 %v717
    %v4419 = vunpack.c.l.b16 %v718
    %v4420 = vunpack.c.h.b16 %v718
    %v4421 = vunpack.c.l.b16 %v719
    %v4422 = vunpack.c.h.b16 %v719
    %v4423 = vunpack.c.l.b16 %v720
    %v4424 = vunpack.c.h.b16 %v720
    %v4425 = vunpack.c.l.b16 %v721
    %v4426 = vunpack.c.h.b16 %v721
    %v4427 = vunpack.c.l.b16 %v722
    %v4428 = vunpack.c.h.b16 %v722
    %v4429 = vunpack.c.l.b16 %v723
    %v4430 = vunpack.c.h.b16 %v723
    %v4431 = vunpack.c.l.b16 %v724
    %v4432 = vunpack.c.h.b16 %v724
    %v4433 = vunpack.c.l.b16 %v725
    %v4434 = vunpack.c.h.b16 %v725
    %v4435 = vunpack.c.l.b16 %v726
    %v4436 = vunpack.c.h.b16 %v726
    %v4437 = vunpack.c.l.b16 %v727
    %v4438 = vunpack.c.h.b16 %v727
    %v4439 = vunpack.c.l.b16 %v728
    %v4440 = vunpack.c.h.b16 %v728
    %v4441 = vunpack.c.l.b16 %v729
    %v4442 = vunpack.c.h.b16 %v729
    %v4443 = vunpack.c.l.b16 %v730
    %v4444 = vunpack.c.h.b16 %v730
    %v4445 = vunpack.c.l.b16 %v731
    %v4446 = vunpack.c.h.b16 %v731
    %v4447 = vunpack.c.l.b16 %v732
    %v4448 = vunpack.c.h.b16 %v732
    %v4449 = vunpack.c.l.b16 %v733
    %v4450 = vunpack.c.h.b16 %v733
    %v4451 = vunpack.c.l.b16 %v734
    %v4452 = vunpack.c.h.b16 %v734
    %v4453 = vunpack.c.l.b16 %v735
    %v4454 = vunpack.c.h.b16 %v735
    %v4455 = vunpack.c.l.b16 %v736
    %v4456 = vunpack.c.h.b16 %v736
    %v4457 = vunpack.c.l.b16 %v737
    %v4458 = vunpack.c.h.b16 %v737
    %v4459 = vunpack.c.l.b16 %v738
    %v4460 = vunpack.c.h.b16 %v738
    %v4461 = vunpack.c.l.b16 %v739
    %v4462 = vunpack.c.h.b16 %v739
    %v4463 = vunpack.c.l.b16 %v740
    %v4464 = vunpack.c.h.b16 %v740
    %v4465 = vunpack.c.l.b16 %v741
    %v4466 = vunpack.c.h.b16 %v741
    %v4467 = vunpack.c.l.b16 %v742
    %v4468 = vunpack.c.h.b16 %v742
    %v4469 = vunpack.c.l.b16 %v743
    %v4470 = vunpack.c.h.b16 %v743
    %v4471 = vunpack.c.l.b16 %v744
    %v4472 = vunpack.c.h.b16 %v744
    %v4473 = vunpack.c.l.b16 %v745
    %v4474 = vunpack.c.h.b16 %v745
    %v4475 = vunpack.c.l.b16 %v746
    %v4476 = vunpack.c.h.b16 %v746
    %v4477 = vunpack.c.l.b16 %v747
    %v4478 = vunpack.c.h.b16 %v747
    %v4479 = vunpack.c.l.b16 %v748
    %v4480 = vunpack.c.h.b16 %v748
    %v4481 = vunpack.c.l.b16 %v749
    %v4482 = vunpack.c.h.b16 %v749
    %v4483 = vunpack.c.l.b16 %v750
    %v4484 = vunpack.c.h.b16 %v750
    %v4485 = vunpack.c.l.b16 %v751
    %v4486 = vunpack.c.h.b16 %v751
    %v4487 = vunpack.c.l.b16 %v752
    %v4488 = vunpack.c.h.b16 %v752
    %v4489 = vunpack.c.l.b16 %v753
    %v4490 = vunpack.c.h.b16 %v753
    %v4491 = vunpack.c.l.b16 %v754
    %v4492 = vunpack.c.h.b16 %v754
    %v4493 = vunpack.c.l.b16 %v755
    %v4494 = vunpack.c.h.b16 %v755
    %v4495 = vunpack.c.l.b16 %v756
    %v4496 = vunpack.c.h.b16 %v756
    %v4497 = vunpack.c.l.b16 %v757
    %v4498 = vunpack.c.h.b16 %v757
    %v4499 = vunpack.c.l.b16 %v758
    %v4500 = vunpack.c.h.b16 %v758
    %v4501 = vunpack.c.l.b16 %v759
    %v4502 = vunpack.c.h.b16 %v759
    %v4503 = vunpack.c.l.b16 %v760
    %v4504 = vunpack.c.h.b16 %v760
    %v4505 = vunpack.c.l.b16 %v761
    %v4506 = vunpack.c.h.b16 %v761
    %v4507 = vunpack.c.l.b16 %v762
    %v4508 = vunpack.c.h.b16 %v762
    %v4509 = vunpack.c.l.b16 %v763
    %v4510 = vunpack.c.h.b16 %v763
    %v4511 = vunpack.c.l.b16 %v764
    %v4512 = vunpack.c.h.b16 %v764
    %v4513 = vunpack.c.l.b16 %v765
    %v4514 = vunpack.c.h.b16 %v765
    %v4515 = vunpack.c.l.b16 %v766
    %v4516 = vunpack.c.h.b16 %v766
    %v4517 = vunpack.c.l.b16 %v767
    %v4518 = vunpack.c.h.b16 %v767
    %v4519 = vunpack.c.l.b16 %v768
    %v4520 = vunpack.c.h.b16 %v768
    %v4521 = vunpack.c.l.b16 %v769
    %v4522 = vunpack.c.h.b16 %v769
    %v4523 = vunpack.c.l.b16 %v770
    %v4524 = vunpack.c.h.b16 %v770
    %v4525 = vunpack.c.l.b16 %v771
    %v4526 = vunpack.c.h.b16 %v771
    %v4527 = vunpack.c.l.b16 %v772
    %v4528 = vunpack.c.h.b16 %v772
    %v4529 = vunpack.c.l.b16 %v773
    %v4530 = vunpack.c.h.b16 %v773
    %v4531 = vunpack.c.l.b16 %v774
    %v4532 = vunpack.c.h.b16 %v774
    %v4533 = vunpack.c.l.b16 %v775
    %v4534 = vunpack.c.h.b16 %v775
    %v4535 = vunpack.c.l.b16 %v776
    %v4536 = vunpack.c.h.b16 %v776
    %v4537 = vunpack.c.l.b16 %v777
    %v4538 = vunpack.c.h.b16 %v777
    %v4539 = vunpack.c.l.b16 %v778
    %v4540 = vunpack.c.h.b16 %v778
    %v4541 = vunpack.c.l.b16 %v779
    %v4542 = vunpack.c.h.b16 %v779
    %v4543 = vunpack.c.l.b16 %v780
    %v4544 = vunpack.c.h.b16 %v780
    %v4545 = vunpack.c.l.b16 %v781
    %v4546 = vunpack.c.h.b16 %v781
    %v4547 = vunpack.c.l.b16 %v782
    %v4548 = vunpack.c.h.b16 %v782
    %v4549 = vunpack.c.l.b16 %v783
    %v4550 = vunpack.c.h.b16 %v783
    %v4551 = vunpack.c.l.b16 %v784
    %v4552 = vunpack.c.h.b16 %v784
    %v4553 = vunpack.c.l.b16 %v785
    %v4554 = vunpack.c.h.b16 %v785
    %v4555 = vunpack.c.l.b16 %v786
    %v4556 = vunpack.c.h.b16 %v786
    %v4557 = vunpack.c.l.b16 %v787
    %v4558 = vunpack.c.h.b16 %v787
    %v4559 = vunpack.c.l.b16 %v788
    %v4560 = vunpack.c.h.b16 %v788
    %v4561 = vunpack.c.l.b16 %v789
    %v4562 = vunpack.c.h.b16 %v789
    %v4563 = vunpack.c.l.b16 %v790
    %v4564 = vunpack.c.h.b16 %v790
    %v4565 = vunpack.c.l.b16 %v791
    %v4566 = vunpack.c.h.b16 %v791
    %v4567 = vunpack.c.l.b16 %v792
    %v4568 = vunpack.c.h.b16 %v792
    %v4569 = vunpack.c.l.b16 %v793
    %v4570 = vunpack.c.h.b16 %v793
    %v4571 = vunpack.c.l.b16 %v794
    %v4572 = vunpack.c.h.b16 %v794
    %v4573 = vunpack.c.l.b16 %v795
    %v4574 = vunpack.c.h.b16 %v795
    %v4575 = vunpack.c.l.b16 %v796
    %v4576 = vunpack.c.h.b16 %v796
    %v4577 = vunpack.c.l.b16 %v797
    %v4578 = vunpack.c.h.b16 %v797
    %v4579 = vunpack.c.l.b16 %v798
    %v4580 = vunpack.c.h.b16 %v798
    %v4581 = vunpack.c.l.b16 %v799
    %v4582 = vunpack.c.h.b16 %v799
    %v4583 = vunpack.c.l.b16 %v800
    %v4584 = vunpack.c.h.b16 %v800
    %v4585 = vunpack.c.l.b16 %v801
    %v4586 = vunpack.c.h.b16 %v801
    %v4587 = vunpack.c.l.b16 %v802
    %v4588 = vunpack.c.h.b16 %v802
    %v4589 = vunpack.c.l.b16 %v803
    %v4590 = vunpack.c.h.b16 %v803
    %v4591 = vunpack.c.l.b16 %v804
    %v4592 = vunpack.c.h.b16 %v804
    %v4593 = vunpack.c.l.b16 %v805
    %v4594 = vunpack.c.h.b16 %v805
    %v4595 = vunpack.c.l.b16 %v806
    %v4596 = vunpack.c.h.b16 %v806
    %v4597 = vunpack.c.l.b16 %v807
    %v4598 = vunpack.c.h.b16 %v807
    %v4599 = vunpack.c.l.b16 %v808
    %v4600 = vunpack.c.h.b16 %v808
    %v4601 = vunpack.c.l.b16 %v809
    %v4602 = vunpack.c.h.b16 %v809
    %v4603 = vunpack.c.l.b16 %v810
    %v4604 = vunpack.c.h.b16 %v810
    %v4605 = vunpack.c.l.b16 %v811
    %v4606 = vunpack.c.h.b16 %v811
    %v4607 = vunpack.c.l.b16 %v812
    %v4608 = vunpack.c.h.b16 %v812
    %v4609 = vunpack.c.l.b16 %v813
    %v4610 = vunpack.c.h.b16 %v813
    %v4611 = vunpack.c.l.b16 %v814
    %v4612 = vunpack.c.h.b16 %v814
    %v4613 = vunpack.c.l.b16 %v815
    %v4614 = vunpack.c.h.b16 %v815
    %v4615 = vunpack.c.l.b16 %v816
    %v4616 = vunpack.c.h.b16 %v816
    %v4617 = vunpack.c.l.b16 %v817
    %v4618 = vunpack.c.h.b16 %v817
    %v4619 = vunpack.c.l.b16 %v818
    %v4620 = vunpack.c.h.b16 %v818
    %v4621 = vunpack.c.l.b16 %v819
    %v4622 = vunpack.c.h.b16 %v819
    %v4623 = vunpack.c.l.b16 %v820
    %v4624 = vunpack.c.h.b16 %v820
    %v4625 = vunpack.c.l.b16 %v821
    %v4626 = vunpack.c.h.b16 %v821
    %v4627 = vunpack.c.l.b16 %v822
    %v4628 = vunpack.c.h.b16 %v822
    %v4629 = vunpack.c.l.b16 %v823
    %v4630 = vunpack.c.h.b16 %v823
    %v4631 = vunpack.c.l.b16 %v824
    %v4632 = vunpack.c.h.b16 %v824
    %v4633 = vunpack.c.l.b16 %v825
    %v4634 = vunpack.c.h.b16 %v825
    %v4635 = vunpack.c.l.b16 %v826
    %v4636 = vunpack.c.h.b16 %v826
    %v4637 = vunpack.c.l.b16 %v827
    %v4638 = vunpack.c.h.b16 %v827
    %v4639 = vunpack.c.l.b16 %v828
    %v4640 = vunpack.c.h.b16 %v828
    %v4641 = vunpack.c.l.b16 %v829
    %v4642 = vunpack.c.h.b16 %v829
    %v4643 = vunpack.c.l.b16 %v830
    %v4644 = vunpack.c.h.b16 %v830
    %v4645 = vunpack.c.l.b16 %v831
    %v4646 = vunpack.c.h.b16 %v831
    %v4647 = vunpack.c.l.b16 %v832
    %v4648 = vunpack.c.h.b16 %v832
    %v4649 = vunpack.c.l.b16 %v833
    %v4650 = vunpack.c.h.b16 %v833
    %v4651 = vunpack.c.l.b16 %v834
    %v4652 = vunpack.c.h.b16 %v834
    %v4653 = vunpack.c.l.b16 %v835
    %v4654 = vunpack.c.h.b16 %v835
    %v4655 = vunpack.c.l.b16 %v836
    %v4656 = vunpack.c.h.b16 %v836
    %v4657 = vunpack.c.l.b16 %v837
    %v4658 = vunpack.c.h.b16 %v837
    %v4659 = vunpack.c.l.b16 %v838
    %v4660 = vunpack.c.h.b16 %v838
    %v4661 = vunpack.c.l.b16 %v839
    %v4662 = vunpack.c.h.b16 %v839
    %v4663 = vunpack.c.l.b16 %v840
    %v4664 = vunpack.c.h.b16 %v840
    %v4665 = vunpack.c.l.b16 %v841
    %v4666 = vunpack.c.h.b16 %v841
    %v4667 = vunpack.c.l.b16 %v842
    %v4668 = vunpack.c.h.b16 %v842
    %v4669 = vunpack.c.l.b16 %v843
    %v4670 = vunpack.c.h.b16 %v843
    %v4671 = vunpack.c.l.b16 %v844
    %v4672 = vunpack.c.h.b16 %v844
    %v4673 = vunpack.c.l.b16 %v845
    %v4674 = vunpack.c.h.b16 %v845
    %v4675 = vunpack.c.l.b16 %v846
    %v4676 = vunpack.c.h.b16 %v846
    %v4677 = vunpack.c.l.b16 %v847
    %v4678 = vunpack.c.h.b16 %v847
    %v4679 = vunpack.c.l.b16 %v848
    %v4680 = vunpack.c.h.b16 %v848
    %v4681 = vunpack.c.l.b16 %v849
    %v4682 = vunpack.c.h.b16 %v849
    %v4683 = vunpack.c.l.b16 %v850
    %v4684 = vunpack.c.h.b16 %v850
    %v4685 = vunpack.c.l.b16 %v851
    %v4686 = vunpack.c.h.b16 %v851
    %v4687 = vunpack.c.l.b16 %v852
    %v4688 = vunpack.c.h.b16 %v852
    %v4689 = vunpack.c.l.b16 %v853
    %v4690 = vunpack.c.h.b16 %v853
    %v4691 = vunpack.c.l.b16 %v854
    %v4692 = vunpack.c.h.b16 %v854
    %v4693 = vunpack.c.l.b16 %v855
    %v4694 = vunpack.c.h.b16 %v855
    %v4695 = vunpack.c.l.b16 %v856
    %v4696 = vunpack.c.h.b16 %v856
    %v4697 = vunpack.c.l.b16 %v857
    %v4698 = vunpack.c.h.b16 %v857
    %v4699 = vunpack.c.l.b16 %v858
    %v4700 = vunpack.c.h.b16 %v858
    %v4701 = vunpack.c.l.b16 %v859
    %v4702 = vunpack.c.h.b16 %v859
    %v4703 = vunpack.c.l.b16 %v860
    %v4704 = vunpack.c.h.b16 %v860
    %v4705 = vunpack.c.l.b16 %v861
    %v4706 = vunpack.c.h.b16 %v861
    %v4707 = vunpack.c.l.b16 %v862
    %v4708 = vunpack.c.h.b16 %v862
    %v4709 = vunpack.c.l.b16 %v863
    %v4710 = vunpack.c.h.b16 %v863
    %v4711 = vunpack.c.l.b16 %v864
    %v4712 = vunpack.c.h.b16 %v864
    %v4713 = vunpack.c.l.b16 %v865
    %v4714 = vunpack.c.h.b16 %v865
    %v4715 = vunpack.c.l.b16 %v866
    %v4716 = vunpack.c.h.b16 %v866
    %v4717 = vunpack.c.l.b16 %v867
    %v4718 = vunpack.c.h.b16 %v867
    %v4719 = vunpack.c.l.b16 %v868
    %v4720 = vunpack.c.h.b16 %v868
    %v4721 = vunpack.c.l.b16 %v869
    %v4722 = vunpack.c.h.b16 %v869
    %v4723 = vunpack.c.l.b16 %v870
    %v4724 = vunpack.c.h.b16 %v870
    %v4725 = vunpack.c.l.b16 %v871
    %v4726 = vunpack.c.h.b16 %v871
    %v4727 = vunpack.c.l.b16 %v872
    %v4728 = vunpack.c.h.b16 %v872
    %v4729 = vunpack.c.l.b16 %v873
    %v4730 = vunpack.c.h.b16 %v873
    %v4731 = vunpack.c.l.b16 %v874
    %v4732 = vunpack.c.h.b16 %v874
    %v4733 = vunpack.c.l.b16 %v875
    %v4734 = vunpack.c.h.b16 %v875
    %v4735 = vunpack.c.l.b16 %v876
    %v4736 = vunpack.c.h.b16 %v876
    %v4737 = vunpack.c.l.b16 %v877
    %v4738 = vunpack.c.h.b16 %v877
    %v4739 = vunpack.c.l.b16 %v878
    %v4740 = vunpack.c.h.b16 %v878
    %v4741 = vunpack.c.l.b16 %v879
    %v4742 = vunpack.c.h.b16 %v879
    %v4743 = vunpack.c.l.b16 %v880
    %v4744 = vunpack.c.h.b16 %v880
    %v4745 = vunpack.c.l.b16 %v881
    %v4746 = vunpack.c.h.b16 %v881
    %v4747 = vunpack.c.l.b16 %v882
    %v4748 = vunpack.c.h.b16 %v882
    %v4749 = vunpack.c.l.b16 %v883
    %v4750 = vunpack.c.h.b16 %v883
    %v4751 = vunpack.c.l.b16 %v884
    %v4752 = vunpack.c.h.b16 %v884
    %v4753 = vunpack.c.l.b16 %v885
    %v4754 = vunpack.c.h.b16 %v885
    %v4755 = vunpack.c.l.b16 %v886
    %v4756 = vunpack.c.h.b16 %v886
    %v4757 = vunpack.c.l.b16 %v887
    %v4758 = vunpack.c.h.b16 %v887
    %v4759 = vunpack.c.l.b16 %v888
    %v4760 = vunpack.c.h.b16 %v888
    %v4761 = vunpack.c.l.b16 %v889
    %v4762 = vunpack.c.h.b16 %v889
    %v4763 = vunpack.c.l.b16 %v890
    %v4764 = vunpack.c.h.b16 %v890
    %v4765 = vunpack.c.l.b16 %v891
    %v4766 = vunpack.c.h.b16 %v891
    %v4767 = vunpack.c.l.b16 %v892
    %v4768 = vunpack.c.h.b16 %v892
    %v4769 = vunpack.c.l.b16 %v893
    %v4770 = vunpack.c.h.b16 %v893
    %v4771 = vunpack.c.l.b16 %v894
    %v4772 = vunpack.c.h.b16 %v894
    %v4773 = vunpack.c.l.b16 %v895
    %v4774 = vunpack.c.h.b16 %v895
    %v4775 = vunpack.c.l.b16 %v896
    %v4776 = vunpack.c.h.b16 %v896
    %v4777 = vunpack.c.l.b16 %v897
    %v4778 = vunpack.c.h.b16 %v897
    %v4779 = vunpack.c.l.b16 %v898
    %v4780 = vunpack.c.h.b16 %v898
    %v4781 = vunpack.c.l.b16 %v899
    %v4782 = vunpack.c.h.b16 %v899
    %v4783 = vunpack.c.l.b16 %v900
    %v4784 = vunpack.c.h.b16 %v900
    %v4785 = vunpack.c.l.b16 %v901
    %v4786 = vunpack.c.h.b16 %v901
    %v4787 = vunpack.c.l.b16 %v902
    %v4788 = vunpack.c.h.b16 %v902
    %v4789 = vunpack.c.l.b16 %v903
    %v4790 = vunpack.c.h.b16 %v903
    %v4791 = vunpack.c.l.b16 %v904
    %v4792 = vunpack.c.h.b16 %v904
    %v4793 = vunpack.c.l.b16 %v905
    %v4794 = vunpack.c.h.b16 %v905
    %v4795 = vunpack.c.l.b16 %v906
    %v4796 = vunpack.c.h.b16 %v906
    %v4797 = vunpack.c.l.b16 %v907
    %v4798 = vunpack.c.h.b16 %v907
    %v4799 = vunpack.c.l.b16 %v908
    %v4800 = vunpack.c.h.b16 %v908
    %v4801 = vunpack.c.l.b16 %v909
    %v4802 = vunpack.c.h.b16 %v909
    %v4803 = vunpack.c.l.b16 %v910
    %v4804 = vunpack.c.h.b16 %v910
    %v4805 = vunpack.c.l.b16 %v911
    %v4806 = vunpack.c.h.b16 %v911
    %v4807 = vunpack.c.l.b16 %v912
    %v4808 = vunpack.c.h.b16 %v912
    %v4809 = vunpack.c.l.b16 %v913
    %v4810 = vunpack.c.h.b16 %v913
    %v4811 = vunpack.c.l.b16 %v914
    %v4812 = vunpack.c.h.b16 %v914
    %v4813 = vunpack.c.l.b16 %v915
    %v4814 = vunpack.c.h.b16 %v915
    %v4815 = vunpack.c.l.b16 %v916
    %v4816 = vunpack.c.h.b16 %v916
    %v4817 = vunpack.c.l.b16 %v917
    %v4818 = vunpack.c.h.b16 %v917
    %v4819 = vunpack.c.l.b16 %v918
    %v4820 = vunpack.c.h.b16 %v918
    %v4821 = vunpack.c.l.b16 %v919
    %v4822 = vunpack.c.h.b16 %v919
    %v4823 = vunpack.c.l.b16 %v920
    %v4824 = vunpack.c.h.b16 %v920
    %v4825 = vunpack.c.l.b16 %v921
    %v4826 = vunpack.c.h.b16 %v921
    %v4827 = vunpack.c.l.b16 %v922
    %v4828 = vunpack.c.h.b16 %v922
    %v4829 = vunpack.c.l.b16 %v923
    %v4830 = vunpack.c.h.b16 %v923
    %v4831 = vunpack.c.l.b16 %v924
    %v4832 = vunpack.c.h.b16 %v924
    %v4833 = vunpack.c.l.b16 %v925
    %v4834 = vunpack.c.h.b16 %v925
    %v4835 = vunpack.c.l.b16 %v926
    %v4836 = vunpack.c.h.b16 %v926
    %v4837 = vunpack.c.l.b16 %v927
    %v4838 = vunpack.c.h.b16 %v927
    %v4839 = vunpack.c.l.b16 %v928
    %v4840 = vunpack.c.h.b16 %v928
    %v4841 = vunpack.c.l.b16 %v929
    %v4842 = vunpack.c.h.b16 %v929
    %v4843 = vunpack.c.l.b16 %v930
    %v4844 = vunpack.c.h.b16 %v930
    %v4845 = vunpack.c.l.b16 %v931
    %v4846 = vunpack.c.h.b16 %v931
    %v4847 = vunpack.c.l.b16 %v932
    %v4848 = vunpack.c.h.b16 %v932
    %v4849 = vunpack.c.l.b16 %v933
    %v4850 = vunpack.c.h.b16 %v933
    %v4851 = vunpack.c.l.b16 %v934
    %v4852 = vunpack.c.h.b16 %v934
    %v4853 = vunpack.c.l.b16 %v935
    %v4854 = vunpack.c.h.b16 %v935
    %v4855 = vunpack.c.l.b16 %v936
    %v4856 = vunpack.c.h.b16 %v936
    %v4857 = vunpack.c.l.b16 %v937
    %v4858 = vunpack.c.h.b16 %v937
    %v4859 = vunpack.c.l.b16 %v938
    %v4860 = vunpack.c.h.b16 %v938
    %v4861 = vunpack.c.l.b16 %v939
    %v4862 = vunpack.c.h.b16 %v939
    %v4863 = vunpack.c.l.b16 %v940
    %v4864 = vunpack.c.h.b16 %v940
    %v4865 = vunpack.c.l.b16 %v941
    %v4866 = vunpack.c.h.b16 %v941
    %v4867 = vunpack.c.l.b16 %v942
    %v4868 = vunpack.c.h.b16 %v942
    %v4869 = vunpack.c.l.b16 %v943
    %v4870 = vunpack.c.h.b16 %v943
    %v4871 = vunpack.c.l.b16 %v944
    %v4872 = vunpack.c.h.b16 %v944
    %v4873 = vunpack.c.l.b16 %v945
    %v4874 = vunpack.c.h.b16 %v945
    %v4875 = vunpack.c.l.b16 %v946
    %v4876 = vunpack.c.h.b16 %v946
    %v4877 = vunpack.c.l.b16 %v947
    %v4878 = vunpack.c.h.b16 %v947
    %v4879 = vunpack.c.l.b16 %v948
    %v4880 = vunpack.c.h.b16 %v948
    %v4881 = vunpack.c.l.b16 %v949
    %v4882 = vunpack.c.h.b16 %v949
    %v4883 = vunpack.c.l.b16 %v950
    %v4884 = vunpack.c.h.b16 %v950
    %v4885 = vunpack.c.l.b16 %v951
    %v4886 = vunpack.c.h.b16 %v951
    %v4887 = vunpack.c.l.b16 %v952
    %v4888 = vunpack.c.h.b16 %v952
    %v4889 = vunpack.c.l.b16 %v953
    %v4890 = vunpack.c.h.b16 %v953
    %v4891 = vunpack.c.l.b16 %v954
    %v4892 = vunpack.c.h.b16 %v954
    %v4893 = vunpack.c.l.b16 %v955
    %v4894 = vunpack.c.h.b16 %v955
    %v4895 = vunpack.c.l.b16 %v956
    %v4896 = vunpack.c.h.b16 %v956
    %v4897 = vunpack.c.l.b16 %v957
    %v4898 = vunpack.c.h.b16 %v957
    %v4899 = vunpack.c.l.b16 %v958
    %v4900 = vunpack.c.h.b16 %v958
    %v4901 = vunpack.c.l.b16 %v959
    %v4902 = vunpack.c.h.b16 %v959
    %v4903 = vunpack.c.l.b16 %v960
    %v4904 = vunpack.c.h.b16 %v960
    %v4905 = vunpack.c.l.b16 %v961
    %v4906 = vunpack.c.h.b16 %v961
    %v4907 = vunpack.c.l.b16 %v962
    %v4908 = vunpack.c.h.b16 %v962
    %v4909 = vunpack.c.l.b16 %v963
    %v4910 = vunpack.c.h.b16 %v963
    %v4911 = vunpack.c.l.b16 %v964
    %v4912 = vunpack.c.h.b16 %v964
    %v4913 = vunpack.c.l.b16 %v965
    %v4914 = vunpack.c.h.b16 %v965
    %v4915 = vunpack.c.l.b16 %v966
    %v4916 = vunpack.c.h.b16 %v966
    %v4917 = vunpack.c.l.b16 %v967
    %v4918 = vunpack.c.h.b16 %v967
    %v4919 = vunpack.c.l.b16 %v968
    %v4920 = vunpack.c.h.b16 %v968
    %v4921 = vunpack.c.l.b16 %v969
    %v4922 = vunpack.c.h.b16 %v969
    %v4923 = vunpack.c.l.b16 %v970
    %v4924 = vunpack.c.h.b16 %v970
    %v4925 = vunpack.c.l.b16 %v971
    %v4926 = vunpack.c.h.b16 %v971
    %v4927 = vunpack.c.l.b16 %v972
    %v4928 = vunpack.c.h.b16 %v972
    %v4929 = vunpack.c.l.b16 %v973
    %v4930 = vunpack.c.h.b16 %v973
    %v4931 = vunpack.c.l.b16 %v974
    %v4932 = vunpack.c.h.b16 %v974
    %v4933 = vunpack.c.l.b16 %v975
    %v4934 = vunpack.c.h.b16 %v975
    %v4935 = vunpack.c.l.b16 %v976
    %v4936 = vunpack.c.h.b16 %v976
    %v4937 = vunpack.c.l.b16 %v977
    %v4938 = vunpack.c.h.b16 %v977
    %v4939 = vunpack.c.l.b16 %v978
    %v4940 = vunpack.c.h.b16 %v978
    %v4941 = vunpack.c.l.b16 %v979
    %v4942 = vunpack.c.h.b16 %v979
    %v4943 = vunpack.c.l.b16 %v980
    %v4944 = vunpack.c.h.b16 %v980
    %v4945 = vunpack.c.l.b16 %v981
    %v4946 = vunpack.c.h.b16 %v981
    %v4947 = vunpack.c.l.b16 %v982
    %v4948 = vunpack.c.h.b16 %v982
    %v4949 = vunpack.c.l.b16 %v983
    %v4950 = vunpack.c.h.b16 %v983
    %v4951 = vunpack.c.l.b16 %v984
    %v4952 = vunpack.c.h.b16 %v984
    %v4953 = vunpack.c.l.b16 %v985
    %v4954 = vunpack.c.h.b16 %v985
    %v4955 = vunpack.c.l.b16 %v986
    %v4956 = vunpack.c.h.b16 %v986
    %v4957 = vunpack.c.l.b16 %v987
    %v4958 = vunpack.c.h.b16 %v987
    %v4959 = vunpack.c.l.b16 %v988
    %v4960 = vunpack.c.h.b16 %v988
    %v4961 = vunpack.c.l.b16 %v989
    %v4962 = vunpack.c.h.b16 %v989
    %v4963 = vunpack.c.l.b16 %v990
    %v4964 = vunpack.c.h.b16 %v990
    %v4965 = vunpack.c.l.b16 %v991
    %v4966 = vunpack.c.h.b16 %v991
    %v4967 = vunpack.c.l.b16 %v992
    %v4968 = vunpack.c.h.b16 %v992
    %v4969 = vunpack.c.l.b16 %v993
    %v4970 = vunpack.c.h.b16 %v993
    %v4971 = vunpack.c.l.b16 %v994
    %v4972 = vunpack.c.h.b16 %v994
    %v4973 = vunpack.c.l.b16 %v995
    %v4974 = vunpack.c.h.b16 %v995
    %v4975 = vunpack.c.l.b16 %v996
    %v4976 = vunpack.c.h.b16 %v996
    %v4977 = vunpack.c.l.b16 %v997
    %v4978 = vunpack.c.h.b16 %v997
    %v4979 = vunpack.c.l.b16 %v998
    %v4980 = vunpack.c.h.b16 %v998
    %v4981 = vunpack.c.l.b16 %v999
    %v4982 = vunpack.c.h.b16 %v999
    %v4983 = vunpack.c.l.b16 %v1000
    %v4984 = vunpack.c.h.b16 %v1000
    %v4985 = vunpack.c.l.b16 %v1001
    %v4986 = vunpack.c.h.b16 %v1001
    %v4987 = vunpack.c.l.b16 %v1002
    %v4988 = vunpack.c.h.b16 %v1002
    %v4989 = vunpack.c.l.b16 %v1003
    %v4990 = vunpack.c.h.b16 %v1003
    %v4991 = vunpack.c.l.b16 %v1004
    %v4992 = vunpack.c.h.b16 %v1004
    %v4993 = vunpack.c.l.b16 %v1005
    %v4994 = vunpack.c.h.b16 %v1005
    %v4995 = vunpack.c.l.b16 %v1006
    %v4996 = vunpack.c.h.b16 %v1006
    %v4997 = vunpack.c.l.b16 %v1007
    %v4998 = vunpack.c.h.b16 %v1007
    %v4999 = vunpack.c.l.b16 %v1008
    %v5000 = vunpack.c.h.b16 %v1008
    %v5001 = vunpack.c.l.b16 %v1009
    %v5002 = vunpack.c.h.b16 %v1009
    %v5003 = vunpack.c.l.b16 %v1010
    %v5004 = vunpack.c.h.b16 %v1010
    %v5005 = vunpack.c.l.b16 %v1011
    %v5006 = vunpack.c.h.b16 %v1011
    %v5007 = vunpack.c.l.b16 %v1012
    %v5008 = vunpack.c.h.b16 %v1012
    %v5009 = vunpack.c.l.b16 %v1013
    %v5010 = vunpack.c.h.b16 %v1013
    %v5011 = vunpack.c.l.b16 %v1014
    %v5012 = vunpack.c.h.b16 %v1014
    %v5013 = vunpack.c.l.b16 %v1015
    %v5014 = vunpack.c.h.b16 %v1015
    %v5015 = vunpack.c.l.b16 %v1016
    %v5016 = vunpack.c.h.b16 %v1016
    %v5017 = vunpack.c.l.b16 %v1017
    %v5018 = vunpack.c.h.b16 %v1017
    %v5019 = vunpack.c.l.b16 %v1018
    %v5020 = vunpack.c.h.b16 %v1018
    %v5021 = vunpack.c.l.b16 %v1019
    %v5022 = vunpack.c.h.b16 %v1019
    %v5023 = vunpack.c.l.b16 %v1020
    %v5024 = vunpack.c.h.b16 %v1020
    %v5025 = vunpack.c.l.b16 %v1021
    %v5026 = vunpack.c.h.b16 %v1021
    %v5027 = vunpack.c.l.b16 %v1022
    %v5028 = vunpack.c.h.b16 %v1022
    %v5029 = vunpack.c.l.b16 %v1023
    %v5030 = vunpack.c.h.b16 %v1023
    %v5031 = vunpack.c.l.b16 %v1024
    %v5032 = vunpack.c.h.b16 %v1024
    %v5033 = vunpack.c.l.b16 %v1025
    %v5034 = vunpack.c.h.b16 %v1025
    %v5035 = vunpack.c.l.b16 %v1026
    %v5036 = vunpack.c.h.b16 %v1026
    %v5037 = vunpack.c.l.b16 %v1027
    %v5038 = vunpack.c.h.b16 %v1027
    %v5039 = vunpack.c.l.b16 %v1028
    %v5040 = vunpack.c.h.b16 %v1028
    %v5041 = vunpack.c.l.b16 %v1029
    %v5042 = vunpack.c.h.b16 %v1029
    %v5043 = vunpack.c.l.b16 %v1030
    %v5044 = vunpack.c.h.b16 %v1030
    %v5045 = vunpack.c.l.b16 %v1031
    %v5046 = vunpack.c.h.b16 %v1031
    %v5047 = vunpack.c.l.b16 %v1032
    %v5048 = vunpack.c.h.b16 %v1032
    %v5049 = vunpack.c.l.b16 %v1033
    %v5050 = vunpack.c.h.b16 %v1033
    %v5051 = vunpack.c.l.b16 %v1034
    %v5052 = vunpack.c.h.b16 %v1034
    %v5053 = vunpack.c.l.b16 %v1035
    %v5054 = vunpack.c.h.b16 %v1035
    %v5055 = vunpack.c.l.b16 %v1036
    %v5056 = vunpack.c.h.b16 %v1036
    %v5057 = vunpack.c.l.b16 %v1037
    %v5058 = vunpack.c.h.b16 %v1037
    %v5059 = vunpack.c.l.b16 %v1038
    %v5060 = vunpack.c.h.b16 %v1038
    %v5061 = vunpack.c.l.b16 %v1039
    %v5062 = vunpack.c.h.b16 %v1039
    %v5063 = vunpack.c.l.b16 %v1040
    %v5064 = vunpack.c.h.b16 %v1040
    %v5065 = vunpack.c.l.b16 %v1041
    %v5066 = vunpack.c.h.b16 %v1041
    %v5067 = vunpack.c.l.b16 %v1042
    %v5068 = vunpack.c.h.b16 %v1042
    %v5069 = vunpack.c.l.b16 %v1043
    %v5070 = vunpack.c.h.b16 %v1043
    %v5071 = vunpack.c.l.b16 %v1044
    %v5072 = vunpack.c.h.b16 %v1044
    %v5073 = vunpack.c.l.b16 %v1045
    %v5074 = vunpack.c.h.b16 %v1045
    %v5075 = vunpack.c.l.b16 %v1046
    %v5076 = vunpack.c.h.b16 %v1046
    %v5077 = vunpack.c.l.b16 %v1047
    %v5078 = vunpack.c.h.b16 %v1047
    %v5079 = vunpack.c.l.b16 %v1048
    %v5080 = vunpack.c.h.b16 %v1048
    %v5081 = vunpack.c.l.b16 %v1049
    %v5082 = vunpack.c.h.b16 %v1049
    %v5083 = vunpack.c.l.b16 %v1050
    %v5084 = vunpack.c.h.b16 %v1050
    %v5085 = vunpack.c.l.b16 %v1051
    %v5086 = vunpack.c.h.b16 %v1051
    %v5087 = vunpack.c.l.b16 %v1052
    %v5088 = vunpack.c.h.b16 %v1052
    %v5089 = vunpack.c.l.b16 %v1053
    %v5090 = vunpack.c.h.b16 %v1053
    %v5091 = vunpack.c.l.b16 %v1054
    %v5092 = vunpack.c.h.b16 %v1054
    %v5093 = vunpack.c.l.b16 %v1055
    %v5094 = vunpack.c.h.b16 %v1055
    %v5095 = vunpack.c.l.b16 %v1056
    %v5096 = vunpack.c.h.b16 %v1056
    %v5097 = vunpack.c.l.b16 %v1057
    %v5098 = vunpack.c.h.b16 %v1057
    %v5099 = vunpack.c.l.b16 %v1058
    %v5100 = vunpack.c.h.b16 %v1058
    %v5101 = vunpack.c.l.b16 %v1059
    %v5102 = vunpack.c.h.b16 %v1059
    %v5103 = vunpack.c.l.b16 %v1060
    %v5104 = vunpack.c.h.b16 %v1060
    %v5105 = vunpack.c.l.b16 %v1061
    %v5106 = vunpack.c.h.b16 %v1061
    %v5107 = vunpack.c.l.b16 %v1062
    %v5108 = vunpack.c.h.b16 %v1062
    %v5109 = vunpack.c.l.b16 %v1063
    %v5110 = vunpack.c.h.b16 %v1063
    %v5111 = vunpack.c.l.b16 %v1064
    %v5112 = vunpack.c.h.b16 %v1064
    %v5113 = vunpack.c.l.b16 %v1065
    %v5114 = vunpack.c.h.b16 %v1065
    %v5115 = vunpack.c.l.b16 %v1066
    %v5116 = vunpack.c.h.b16 %v1066
    %v5117 = vunpack.c.l.b16 %v1067
    %v5118 = vunpack.c.h.b16 %v1067
    %v5119 = vunpack.c.l.b16 %v1068
    %v5120 = vunpack.c.h.b16 %v1068
    %v5121 = vunpack.c.l.b16 %v1069
    %v5122 = vunpack.c.h.b16 %v1069
    %v5123 = vunpack.c.l.b16 %v1070
    %v5124 = vunpack.c.h.b16 %v1070
    %v5125 = vunpack.c.l.b16 %v1071
    %v5126 = vunpack.c.h.b16 %v1071
    %v5127 = vunpack.c.l.b16 %v1072
    %v5128 = vunpack.c.h.b16 %v1072
    %v5129 = vunpack.c.l.b16 %v1073
    %v5130 = vunpack.c.h.b16 %v1073
    %v5131 = vunpack.c.l.b16 %v1074
    %v5132 = vunpack.c.h.b16 %v1074
    %v5133 = vunpack.c.l.b16 %v1075
    %v5134 = vunpack.c.h.b16 %v1075
    %v5135 = vunpack.c.l.b16 %v1076
    %v5136 = vunpack.c.h.b16 %v1076
    %v5137 = vunpack.c.l.b16 %v1077
    %v5138 = vunpack.c.h.b16 %v1077
    %v5139 = vunpack.c.l.b16 %v1078
    %v5140 = vunpack.c.h.b16 %v1078
    %v5141 = vunpack.c.l.b16 %v1079
    %v5142 = vunpack.c.h.b16 %v1079
    %v5143 = vunpack.c.l.b16 %v1080
    %v5144 = vunpack.c.h.b16 %v1080
    %v5145 = vunpack.c.l.b16 %v1081
    %v5146 = vunpack.c.h.b16 %v1081
    %v5147 = vunpack.c.l.b16 %v1082
    %v5148 = vunpack.c.h.b16 %v1082
    %v5149 = vunpack.c.l.b16 %v1083
    %v5150 = vunpack.c.h.b16 %v1083
    %v5151 = vunpack.c.l.b16 %v1084
    %v5152 = vunpack.c.h.b16 %v1084
    %v5153 = vunpack.c.l.b16 %v1085
    %v5154 = vunpack.c.h.b16 %v1085
    %v5155 = vunpack.c.l.b16 %v1086
    %v5156 = vunpack.c.h.b16 %v1086
    %v5157 = vunpack.c.l.b16 %v1087
    %v5158 = vunpack.c.h.b16 %v1087
    %v5159 = vunpack.c.l.b16 %v1088
    %v5160 = vunpack.c.h.b16 %v1088
    %v5161 = vunpack.c.l.b16 %v1089
    %v5162 = vunpack.c.h.b16 %v1089
    %v5163 = vunpack.c.l.b16 %v1090
    %v5164 = vunpack.c.h.b16 %v1090
    %v5165 = vunpack.c.l.b16 %v1091
    %v5166 = vunpack.c.h.b16 %v1091
    %v5167 = vunpack.c.l.b16 %v1092
    %v5168 = vunpack.c.h.b16 %v1092
    %v5169 = vunpack.c.l.b16 %v1093
    %v5170 = vunpack.c.h.b16 %v1093
    %v5171 = vunpack.c.l.b16 %v1094
    %v5172 = vunpack.c.h.b16 %v1094
    %v5173 = vunpack.c.l.b16 %v1095
    %v5174 = vunpack.c.h.b16 %v1095
    %v5175 = vunpack.c.l.b16 %v1096
    %v5176 = vunpack.c.h.b16 %v1096
    %v5177 = vunpack.c.l.b16 %v1097
    %v5178 = vunpack.c.h.b16 %v1097
    %v5179 = vunpack.c.l.b16 %v1098
    %v5180 = vunpack.c.h.b16 %v1098
    %v5181 = vunpack.c.l.b16 %v1099
    %v5182 = vunpack.c.h.b16 %v1099
    %v5183 = vunpack.c.l.b16 %v1100
    %v5184 = vunpack.c.h.b16 %v1100
    %v5185 = vunpack.c.l.b16 %v1101
    %v5186 = vunpack.c.h.b16 %v1101
    %v5187 = vunpack.c.l.b16 %v1102
    %v5188 = vunpack.c.h.b16 %v1102
    %v5189 = vunpack.c.l.b16 %v1103
    %v5190 = vunpack.c.h.b16 %v1103
    %v5191 = vunpack.c.l.b16 %v1104
    %v5192 = vunpack.c.h.b16 %v1104
    %v5193 = vunpack.c.l.b16 %v1105
    %v5194 = vunpack.c.h.b16 %v1105
    %v5195 = vunpack.c.l.b16 %v1106
    %v5196 = vunpack.c.h.b16 %v1106
    %v5197 = vunpack.c.l.b16 %v1107
    %v5198 = vunpack.c.h.b16 %v1107
    %v5199 = vunpack.c.l.b16 %v1108
    %v5200 = vunpack.c.h.b16 %v1108
    %v5201 = vunpack.c.l.b16 %v1109
    %v5202 = vunpack.c.h.b16 %v1109
    %v5203 = vunpack.c.l.b16 %v1110
    %v5204 = vunpack.c.h.b16 %v1110
    %v5205 = vunpack.c.l.b16 %v1111
    %v5206 = vunpack.c.h.b16 %v1111
    %v5207 = vunpack.c.l.b16 %v1112
    %v5208 = vunpack.c.h.b16 %v1112
    %v5209 = vunpack.c.l.b16 %v1113
    %v5210 = vunpack.c.h.b16 %v1113
    %v5211 = vunpack.c.l.b16 %v1114
    %v5212 = vunpack.c.h.b16 %v1114
    %v5213 = vunpack.c.l.b16 %v1115
    %v5214 = vunpack.c.h.b16 %v1115
    %v5215 = vunpack.c.l.b16 %v1116
    %v5216 = vunpack.c.h.b16 %v1116
    %v5217 = vunpack.c.l.b16 %v1117
    %v5218 = vunpack.c.h.b16 %v1117
    %v5219 = vunpack.c.l.b16 %v1118
    %v5220 = vunpack.c.h.b16 %v1118
    %v5221 = vunpack.c.l.b16 %v1119
    %v5222 = vunpack.c.h.b16 %v1119
    %v5223 = vunpack.c.l.b16 %v1120
    %v5224 = vunpack.c.h.b16 %v1120
    %v5225 = vunpack.c.l.b16 %v1121
    %v5226 = vunpack.c.h.b16 %v1121
    %v5227 = vunpack.c.l.b16 %v1122
    %v5228 = vunpack.c.h.b16 %v1122
    %v5229 = vunpack.c.l.b16 %v1123
    %v5230 = vunpack.c.h.b16 %v1123
    %v5231 = vunpack.c.l.b16 %v1124
    %v5232 = vunpack.c.h.b16 %v1124
    %v5233 = vunpack.c.l.b16 %v1125
    %v5234 = vunpack.c.h.b16 %v1125
    %v5235 = vunpack.c.l.b16 %v1126
    %v5236 = vunpack.c.h.b16 %v1126
    %v5237 = vunpack.c.l.b16 %v1127
    %v5238 = vunpack.c.h.b16 %v1127
    %v5239 = vunpack.c.l.b16 %v1128
    %v5240 = vunpack.c.h.b16 %v1128
    %v5241 = vunpack.c.l.b16 %v1129
    %v5242 = vunpack.c.h.b16 %v1129
    %v5243 = vunpack.c.l.b16 %v1130
    %v5244 = vunpack.c.h.b16 %v1130
    %v5245 = vunpack.c.l.b16 %v1131
    %v5246 = vunpack.c.h.b16 %v1131
    %v5247 = vunpack.c.l.b16 %v1132
    %v5248 = vunpack.c.h.b16 %v1132
    %v5249 = vunpack.c.l.b16 %v1133
    %v5250 = vunpack.c.h.b16 %v1133
    %v5251 = vunpack.c.l.b16 %v1134
    %v5252 = vunpack.c.h.b16 %v1134
    %v5253 = vunpack.c.l.b16 %v1135
    %v5254 = vunpack.c.h.b16 %v1135
    %v5255 = vunpack.c.l.b16 %v1136
    %v5256 = vunpack.c.h.b16 %v1136
    %v5257 = vunpack.c.l.b16 %v1137
    %v5258 = vunpack.c.h.b16 %v1137
    %v5259 = vunpack.c.l.b16 %v1138
    %v5260 = vunpack.c.h.b16 %v1138
    %v5261 = vunpack.c.l.b16 %v1139
    %v5262 = vunpack.c.h.b16 %v1139
    %v5263 = vunpack.c.l.b16 %v1140
    %v5264 = vunpack.c.h.b16 %v1140
    %v5265 = vunpack.c.l.b16 %v1141
    %v5266 = vunpack.c.h.b16 %v1141
    %v5267 = vunpack.c.l.b16 %v1142
    %v5268 = vunpack.c.h.b16 %v1142
    %v5269 = vunpack.c.l.b16 %v1143
    %v5270 = vunpack.c.h.b16 %v1143
    %v5271 = vunpack.c.l.b16 %v1144
    %v5272 = vunpack.c.h.b16 %v1144
    %v5273 = vunpack.c.l.b16 %v1145
    %v5274 = vunpack.c.h.b16 %v1145
    %v5275 = vunpack.c.l.b16 %v1146
    %v5276 = vunpack.c.h.b16 %v1146
    %v5277 = vunpack.c.l.b16 %v1147
    %v5278 = vunpack.c.h.b16 %v1147
    %v5279 = vunpack.c.l.b16 %v1148
    %v5280 = vunpack.c.h.b16 %v1148
    %v5281 = vunpack.c.l.b16 %v1149
    %v5282 = vunpack.c.h.b16 %v1149
    %v5283 = vunpack.c.l.b16 %v1150
    %v5284 = vunpack.c.h.b16 %v1150
    %v5285 = vunpack.c.l.b16 %v1151
    %v5286 = vunpack.c.h.b16 %v1151
    %v5287 = vunpack.c.l.b16 %v1152
    %v5288 = vunpack.c.h.b16 %v1152
    %v5289 = vunpack.c.l.b16 %v1153
    %v5290 = vunpack.c.h.b16 %v1153
    %v5291 = vunpack.c.l.b16 %v1154
    %v5292 = vunpack.c.h.b16 %v1154
    %v5293 = vunpack.c.l.b16 %v1155
    %v5294 = vunpack.c.h.b16 %v1155
    %v5295 = vunpack.c.l.b16 %v1156
    %v5296 = vunpack.c.h.b16 %v1156
    %v5297 = vunpack.c.l.b16 %v1157
    %v5298 = vunpack.c.h.b16 %v1157
    %v5299 = vunpack.c.l.b16 %v1158
    %v5300 = vunpack.c.h.b16 %v1158
    %v5301 = vunpack.c.l.b16 %v1159
    %v5302 = vunpack.c.h.b16 %v1159
    %v5303 = vunpack.c.l.b16 %v1160
    %v5304 = vunpack.c.h.b16 %v1160
    %v5305 = vunpack.c.l.b16 %v1161
    %v5306 = vunpack.c.h.b16 %v1161
    %v5307 = vunpack.c.l.b16 %v1162
    %v5308 = vunpack.c.h.b16 %v1162
    %v5309 = vunpack.c.l.b16 %v1163
    %v5310 = vunpack.c.h.b16 %v1163
    %v5311 = vunpack.c.l.b16 %v1164
    %v5312 = vunpack.c.h.b16 %v1164
    %v5313 = vunpack.c.l.b16 %v1165
    %v5314 = vunpack.c.h.b16 %v1165
    %v5315 = vunpack.c.l.b16 %v1166
    %v5316 = vunpack.c.h.b16 %v1166
    %v5317 = vunpack.c.l.b16 %v1167
    %v5318 = vunpack.c.h.b16 %v1167
    %v5319 = vunpack.c.l.b16 %v1168
    %v5320 = vunpack.c.h.b16 %v1168
    %v5321 = vunpack.c.l.b16 %v1169
    %v5322 = vunpack.c.h.b16 %v1169
    %v5323 = vunpack.c.l.b16 %v1170
    %v5324 = vunpack.c.h.b16 %v1170
    %v5325 = vunpack.c.l.b16 %v1171
    %v5326 = vunpack.c.h.b16 %v1171
    %v5327 = vunpack.c.l.b16 %v1172
    %v5328 = vunpack.c.h.b16 %v1172
    %v5329 = vunpack.c.l.b16 %v1173
    %v5330 = vunpack.c.h.b16 %v1173
    %v5331 = vunpack.c.l.b16 %v1174
    %v5332 = vunpack.c.h.b16 %v1174
    %v5333 = vunpack.c.l.b16 %v1175
    %v5334 = vunpack.c.h.b16 %v1175
    %v5335 = vunpack.c.l.b16 %v1176
    %v5336 = vunpack.c.h.b16 %v1176
    %v5337 = vunpack.c.l.b16 %v1177
    %v5338 = vunpack.c.h.b16 %v1177
    %v5339 = vunpack.c.l.b16 %v1178
    %v5340 = vunpack.c.h.b16 %v1178
    %v5341 = vunpack.c.l.b16 %v1179
    %v5342 = vunpack.c.h.b16 %v1179
    %v5343 = vunpack.c.l.b16 %v1180
    %v5344 = vunpack.c.h.b16 %v1180
    %v5345 = vunpack.c.l.b16 %v1181
    %v5346 = vunpack.c.h.b16 %v1181
    %v5347 = vunpack.c.l.b16 %v1182
    %v5348 = vunpack.c.h.b16 %v1182
    %v5349 = vunpack.c.l.b16 %v1183
    %v5350 = vunpack.c.h.b16 %v1183
    %v5351 = vunpack.c.l.b16 %v1184
    %v5352 = vunpack.c.h.b16 %v1184
    %v5353 = vunpack.c.l.b16 %v1185
    %v5354 = vunpack.c.h.b16 %v1185
    %v5355 = vunpack.c.l.b16 %v1186
    %v5356 = vunpack.c.h.b16 %v1186
    %v5357 = vunpack.c.l.b16 %v1187
    %v5358 = vunpack.c.h.b16 %v1187
    %v5359 = vunpack.c.l.b16 %v1188
    %v5360 = vunpack.c.h.b16 %v1188
    %v5361 = vunpack.c.l.b16 %v1189
    %v5362 = vunpack.c.h.b16 %v1189
    %v5363 = vunpack.c.l.b16 %v1190
    %v5364 = vunpack.c.h.b16 %v1190
    %v5365 = vunpack.c.l.b16 %v1191
    %v5366 = vunpack.c.h.b16 %v1191
    %v5367 = vunpack.c.l.b16 %v1192
    %v5368 = vunpack.c.h.b16 %v1192
    %v5369 = vunpack.c.l.b16 %v1193
    %v5370 = vunpack.c.h.b16 %v1193
    %v5371 = vunpack.c.l.b16 %v1194
    %v5372 = vunpack.c.h.b16 %v1194
    %v5373 = vunpack.c.l.b16 %v1195
    %v5374 = vunpack.c.h.b16 %v1195
    %v5375 = vunpack.c.l.b16 %v1196
    %v5376 = vunpack.c.h.b16 %v1196
    %v5377 = vunpack.c.l.b16 %v1197
    %v5378 = vunpack.c.h.b16 %v1197
    %v5379 = vunpack.c.l.b16 %v1198
    %v5380 = vunpack.c.h.b16 %v1198
    %v5381 = vunpack.c.l.b16 %v1199
    %v5382 = vunpack.c.h.b16 %v1199
    %v5383 = vunpack.c.l.b16 %v1200
    %v5384 = vunpack.c.h.b16 %v1200
    %v5385 = vunpack.c.l.b16 %v1201
    %v5386 = vunpack.c.h.b16 %v1201
    %v5387 = vunpack.c.l.b16 %v1202
    %v5388 = vunpack.c.h.b16 %v1202
    %v5389 = vunpack.c.l.b16 %v1203
    %v5390 = vunpack.c.h.b16 %v1203
    %v5391 = vunpack.c.l.b16 %v1204
    %v5392 = vunpack.c.h.b16 %v1204
    %v5393 = vunpack.c.l.b16 %v1205
    %v5394 = vunpack.c.h.b16 %v1205
    %v5395 = vunpack.c.l.b16 %v1206
    %v5396 = vunpack.c.h.b16 %v1206
    %v5397 = vunpack.c.l.b16 %v1207
    %v5398 = vunpack.c.h.b16 %v1207
    %v5399 = vunpack.c.l.b16 %v1208
    %v5400 = vunpack.c.h.b16 %v1208
    %v5401 = vunpack.c.l.b16 %v1209
    %v5402 = vunpack.c.h.b16 %v1209
    %v5403 = vunpack.c.l.b16 %v1210
    %v5404 = vunpack.c.h.b16 %v1210
    %v5405 = vunpack.c.l.b16 %v1211
    %v5406 = vunpack.c.h.b16 %v1211
    %v5407 = vunpack.c.l.b16 %v1212
    %v5408 = vunpack.c.h.b16 %v1212
    %v5409 = vunpack.c.l.b16 %v1213
    %v5410 = vunpack.c.h.b16 %v1213
    %v5411 = vunpack.c.l.b16 %v1214
    %v5412 = vunpack.c.h.b16 %v1214
    %v5413 = vunpack.c.l.b16 %v1215
    %v5414 = vunpack.c.h.b16 %v1215
    %v5415 = vunpack.c.l.b16 %v1216
    %v5416 = vunpack.c.h.b16 %v1216
    %v5417 = vunpack.c.l.b16 %v1217
    %v5418 = vunpack.c.h.b16 %v1217
    %v5419 = vunpack.c.l.b16 %v1218
    %v5420 = vunpack.c.h.b16 %v1218
    %v5421 = vunpack.c.l.b16 %v1219
    %v5422 = vunpack.c.h.b16 %v1219
    %v5423 = vunpack.c.l.b16 %v1220
    %v5424 = vunpack.c.h.b16 %v1220
    %v5425 = vunpack.c.l.b16 %v1221
    %v5426 = vunpack.c.h.b16 %v1221
    %v5427 = vunpack.c.l.b16 %v1222
    %v5428 = vunpack.c.h.b16 %v1222
    %v5429 = vunpack.c.l.b16 %v1223
    %v5430 = vunpack.c.h.b16 %v1223
    %v5431 = vunpack.c.l.b16 %v1224
    %v5432 = vunpack.c.h.b16 %v1224
    %v5433 = vunpack.c.l.b16 %v1225
    %v5434 = vunpack.c.h.b16 %v1225
    %v5435 = vunpack.c.l.b16 %v1226
    %v5436 = vunpack.c.h.b16 %v1226
    %v5437 = vunpack.c.l.b16 %v1227
    %v5438 = vunpack.c.h.b16 %v1227
    %v5439 = vunpack.c.l.b16 %v1228
    %v5440 = vunpack.c.h.b16 %v1228
    %v5441 = vunpack.c.l.b16 %v1229
    %v5442 = vunpack.c.h.b16 %v1229
    %v5443 = vunpack.c.l.b16 %v1230
    %v5444 = vunpack.c.h.b16 %v1230
    %v5445 = vunpack.c.l.b16 %v1231
    %v5446 = vunpack.c.h.b16 %v1231
    %v5447 = vunpack.c.l.b16 %v1232
    %v5448 = vunpack.c.h.b16 %v1232
    %v5449 = vunpack.c.l.b16 %v1233
    %v5450 = vunpack.c.h.b16 %v1233
    %v5451 = vunpack.c.l.b16 %v1234
    %v5452 = vunpack.c.h.b16 %v1234
    %v5453 = vunpack.c.l.b16 %v1235
    %v5454 = vunpack.c.h.b16 %v1235
    %v5455 = vunpack.c.l.b16 %v1236
    %v5456 = vunpack.c.h.b16 %v1236
    %v5457 = vunpack.c.l.b16 %v1237
    %v5458 = vunpack.c.h.b16 %v1237
    %v5459 = vunpack.c.l.b16 %v1238
    %v5460 = vunpack.c.h.b16 %v1238
    %v5461 = vunpack.c.l.b16 %v1239
    %v5462 = vunpack.c.h.b16 %v1239
    %v5463 = vunpack.c.l.b16 %v1240
    %v5464 = vunpack.c.h.b16 %v1240
    %v5465 = vunpack.c.l.b16 %v1241
    %v5466 = vunpack.c.h.b16 %v1241
    %v5467 = vunpack.c.l.b16 %v1242
    %v5468 = vunpack.c.h.b16 %v1242
    %v5469 = vunpack.c.l.b16 %v1243
    %v5470 = vunpack.c.h.b16 %v1243
    %v5471 = vunpack.c.l.b16 %v1244
    %v5472 = vunpack.c.h.b16 %v1244
    %v5473 = vunpack.c.l.b16 %v1245
    %v5474 = vunpack.c.h.b16 %v1245
    %v5475 = vunpack.c.l.b16 %v1246
    %v5476 = vunpack.c.h.b16 %v1246
    %v5477 = vunpack.c.l.b16 %v1247
    %v5478 = vunpack.c.h.b16 %v1247
    %v5479 = vunpack.c.l.b16 %v1248
    %v5480 = vunpack.c.h.b16 %v1248
    %v5481 = vunpack.c.l.b16 %v1249
    %v5482 = vunpack.c.h.b16 %v1249
    %v5483 = vunpack.c.l.b16 %v1250
    %v5484 = vunpack.c.h.b16 %v1250
    %v5485 = vunpack.c.l.b16 %v1251
    %v5486 = vunpack.c.h.b16 %v1251
    %v5487 = vunpack.c.l.b16 %v1252
    %v5488 = vunpack.c.h.b16 %v1252
    %v5489 = vunpack.c.l.b16 %v1253
    %v5490 = vunpack.c.h.b16 %v1253
    %v5491 = vunpack.c.l.b16 %v1254
    %v5492 = vunpack.c.h.b16 %v1254
    %v5493 = vunpack.c.l.b16 %v1255
    %v5494 = vunpack.c.h.b16 %v1255
    %v5495 = vunpack.c.l.b16 %v1256
    %v5496 = vunpack.c.h.b16 %v1256
    %v5497 = vunpack.c.l.b16 %v1257
    %v5498 = vunpack.c.h.b16 %v1257
    %v5499 = vunpack.c.l.b16 %v1258
    %v5500 = vunpack.c.h.b16 %v1258
    %v5501 = vunpack.c.l.b16 %v1259
    %v5502 = vunpack.c.h.b16 %v1259
    %v5503 = vunpack.c.l.b16 %v1260
    %v5504 = vunpack.c.h.b16 %v1260
    %v5505 = vunpack.c.l.b16 %v1261
    %v5506 = vunpack.c.h.b16 %v1261
    %v5507 = vunpack.c.l.b16 %v1262
    %v5508 = vunpack.c.h.b16 %v1262
    %v5509 = vunpack.c.l.b16 %v1263
    %v5510 = vunpack.c.h.b16 %v1263
    %v5511 = vunpack.c.l.b16 %v1264
    %v5512 = vunpack.c.h.b16 %v1264
    %v5513 = vunpack.c.l.b16 %v1265
    %v5514 = vunpack.c.h.b16 %v1265
    %v5515 = vunpack.c.l.b16 %v1266
    %v5516 = vunpack.c.h.b16 %v1266
    %v5517 = vunpack.c.l.b16 %v1267
    %v5518 = vunpack.c.h.b16 %v1267
    %v5519 = vunpack.c.l.b16 %v1268
    %v5520 = vunpack.c.h.b16 %v1268
    %v5521 = vunpack.c.l.b16 %v1269
    %v5522 = vunpack.c.h.b16 %v1269
    %v5523 = vunpack.c.l.b16 %v1270
    %v5524 = vunpack.c.h.b16 %v1270
    %v5525 = vunpack.c.l.b16 %v1271
    %v5526 = vunpack.c.h.b16 %v1271
    %v5527 = vunpack.c.l.b16 %v1272
    %v5528 = vunpack.c.h.b16 %v1272
    %v5529 = vunpack.c.l.b16 %v1273
    %v5530 = vunpack.c.h.b16 %v1273
    %v5531 = vunpack.c.l.b16 %v1274
    %v5532 = vunpack.c.h.b16 %v1274
    %v5533 = vunpack.c.l.b16 %v1275
    %v5534 = vunpack.c.h.b16 %v1275
    %v5535 = vunpack.c.l.b16 %v1276
    %v5536 = vunpack.c.h.b16 %v1276
    %v5537 = vunpack.c.l.b16 %v1277
    %v5538 = vunpack.c.h.b16 %v1277
    %v5539 = vunpack.c.l.b16 %v1278
    %v5540 = vunpack.c.h.b16 %v1278
    %v5541 = vunpack.c.l.b16 %v1279
    %v5542 = vunpack.c.h.b16 %v1279
    %v5543 = vunpack.c.l.b16 %v1280
    %v5544 = vunpack.c.h.b16 %v1280
    %v5545 = vunpack.c.l.b16 %v1281
    %v5546 = vunpack.c.h.b16 %v1281
    %v5547 = vunpack.c.l.b16 %v1282
    %v5548 = vunpack.c.h.b16 %v1282
    %v5549 = vunpack.c.l.b16 %v1283
    %v5550 = vunpack.c.h.b16 %v1283
    %v5551 = vunpack.c.l.b16 %v1284
    %v5552 = vunpack.c.h.b16 %v1284
    %v5553 = vunpack.c.l.b16 %v1285
    %v5554 = vunpack.c.h.b16 %v1285
    %v5555 = vunpack.c.l.b16 %v1286
    %v5556 = vunpack.c.h.b16 %v1286
    %v5557 = vunpack.c.l.b16 %v1287
    %v5558 = vunpack.c.h.b16 %v1287
    %v5559 = vunpack.c.l.b16 %v1288
    %v5560 = vunpack.c.h.b16 %v1288
    %v5561 = vunpack.c.l.b16 %v1289
    %v5562 = vunpack.c.h.b16 %v1289
    %v5563 = vunpack.c.l.b16 %v1290
    %v5564 = vunpack.c.h.b16 %v1290
    %v5565 = vunpack.c.l.b16 %v1291
    %v5566 = vunpack.c.h.b16 %v1291
    %v5567 = vunpack.c.l.b16 %v1292
    %v5568 = vunpack.c.h.b16 %v1292
    %v5569 = vunpack.c.l.b16 %v1293
    %v5570 = vunpack.c.h.b16 %v1293
    %v5571 = vunpack.c.l.b16 %v1294
    %v5572 = vunpack.c.h.b16 %v1294
    %v5573 = vunpack.c.l.b16 %v1295
    %v5574 = vunpack.c.h.b16 %v1295
    %v5575 = vunpack.c.l.b16 %v1296
    %v5576 = vunpack.c.h.b16 %v1296
    %v5577 = vunpack.c.l.b16 %v1297
    %v5578 = vunpack.c.h.b16 %v1297
    %v5579 = vunpack.c.l.b16 %v1298
    %v5580 = vunpack.c.h.b16 %v1298
    %v5581 = vunpack.c.l.b16 %v1299
    %v5582 = vunpack.c.h.b16 %v1299
    %v5583 = vunpack.c.l.b16 %v1300
    %v5584 = vunpack.c.h.b16 %v1300
    %v5585 = vunpack.c.l.b16 %v1301
    %v5586 = vunpack.c.h.b16 %v1301
    %v5587 = vunpack.c.l.b16 %v1302
    %v5588 = vunpack.c.h.b16 %v1302
    %v5589 = vunpack.c.l.b16 %v1303
    %v5590 = vunpack.c.h.b16 %v1303
    %v5591 = vunpack.c.l.b16 %v1304
    %v5592 = vunpack.c.h.b16 %v1304
    %v5593 = vunpack.c.l.b16 %v1305
    %v5594 = vunpack.c.h.b16 %v1305
    %v5595 = vunpack.c.l.b16 %v1306
    %v5596 = vunpack.c.h.b16 %v1306
    %v5597 = vunpack.c.l.b16 %v1307
    %v5598 = vunpack.c.h.b16 %v1307
    %v5599 = vunpack.c.l.b16 %v1308
    %v5600 = vunpack.c.h.b16 %v1308
    %v5601 = vunpack.c.l.b16 %v1309
    %v5602 = vunpack.c.h.b16 %v1309
    %v5603 = vunpack.c.l.b16 %v1310
    %v5604 = vunpack.c.h.b16 %v1310
    %v5605 = vunpack.c.l.b16 %v1311
    %v5606 = vunpack.c.h.b16 %v1311
    %v5607 = vunpack.c.l.b16 %v1312
    %v5608 = vunpack.c.h.b16 %v1312
    %v5609 = vunpack.c.l.b16 %v1313
    %v5610 = vunpack.c.h.b16 %v1313
    %v5611 = vunpack.c.l.b16 %v1314
    %v5612 = vunpack.c.h.b16 %v1314
    %v5613 = vunpack.c.l.b16 %v1315
    %v5614 = vunpack.c.h.b16 %v1315
    %v5615 = vunpack.c.l.b16 %v1316
    %v5616 = vunpack.c.h.b16 %v1316
    %v5617 = vunpack.c.l.b16 %v1317
    %v5618 = vunpack.c.h.b16 %v1317
    %v5619 = vunpack.c.l.b16 %v1318
    %v5620 = vunpack.c.h.b16 %v1318
    %v5621 = vunpack.c.l.b16 %v1319
    %v5622 = vunpack.c.h.b16 %v1319
    %v5623 = vunpack.c.l.b16 %v1320
    %v5624 = vunpack.c.h.b16 %v1320
    %v5625 = vunpack.c.l.b16 %v1321
    %v5626 = vunpack.c.h.b16 %v1321
    %v5627 = vunpack.c.l.b16 %v1322
    %v5628 = vunpack.c.h.b16 %v1322
    %v5629 = vunpack.c.l.b16 %v1323
    %v5630 = vunpack.c.h.b16 %v1323
    %v5631 = vunpack.c.l.b16 %v1324
    %v5632 = vunpack.c.h.b16 %v1324
    %v5633 = vunpack.c.l.b16 %v1325
    %v5634 = vunpack.c.h.b16 %v1325
    %v5635 = vunpack.c.l.b16 %v1326
    %v5636 = vunpack.c.h.b16 %v1326
    %v5637 = vunpack.c.l.b16 %v1327
    %v5638 = vunpack.c.h.b16 %v1327
    %v5639 = vunpack.c.l.b16 %v1328
    %v5640 = vunpack.c.h.b16 %v1328
    %v5641 = vunpack.c.l.b16 %v1329
    %v5642 = vunpack.c.h.b16 %v1329
    %v5643 = vunpack.c.l.b16 %v1330
    %v5644 = vunpack.c.h.b16 %v1330
    %v5645 = vunpack.c.l.b16 %v1331
    %v5646 = vunpack.c.h.b16 %v1331
    %v5647 = vunpack.c.l.b16 %v1332
    %v5648 = vunpack.c.h.b16 %v1332
    %v5649 = vunpack.c.l.b16 %v1333
    %v5650 = vunpack.c.h.b16 %v1333
    %v5651 = vunpack.c.l.b16 %v1334
    %v5652 = vunpack.c.h.b16 %v1334
    %v5653 = vunpack.c.l.b16 %v1335
    %v5654 = vunpack.c.h.b16 %v1335
    %v5655 = vunpack.c.l.b16 %v1336
    %v5656 = vunpack.c.h.b16 %v1336
    %v5657 = vunpack.c.l.b16 %v1337
    %v5658 = vunpack.c.h.b16 %v1337
    %v5659 = vunpack.c.l.b16 %v1338
    %v5660 = vunpack.c.h.b16 %v1338
    %v5661 = vunpack.c.l.b16 %v1339
    %v5662 = vunpack.c.h.b16 %v1339
    %v5663 = vunpack.c.l.b16 %v1340
    %v5664 = vunpack.c.h.b16 %v1340
    %v5665 = vunpack.c.l.b16 %v1341
    %v5666 = vunpack.c.h.b16 %v1341
    %v5667 = vunpack.c.l.b16 %v1342
    %v5668 = vunpack.c.h.b16 %v1342
    %v5669 = vunpack.c.l.b16 %v1343
    %v5670 = vunpack.c.h.b16 %v1343
    %v5671 = vunpack.c.l.b16 %v1344
    %v5672 = vunpack.c.h.b16 %v1344
    %v5673 = vunpack.c.l.b16 %v1345
    %v5674 = vunpack.c.h.b16 %v1345
    %v5675 = vunpack.c.l.b16 %v1346
    %v5676 = vunpack.c.h.b16 %v1346
    %v5677 = vunpack.c.l.b16 %v1347
    %v5678 = vunpack.c.h.b16 %v1347
    %v5679 = vunpack.c.l.b16 %v1348
    %v5680 = vunpack.c.h.b16 %v1348
    %v5681 = vunpack.c.l.b16 %v1349
    %v5682 = vunpack.c.h.b16 %v1349
    %v5683 = vunpack.c.l.b16 %v1350
    %v5684 = vunpack.c.h.b16 %v1350
    %v5685 = vunpack.c.l.b16 %v1351
    %v5686 = vunpack.c.h.b16 %v1351
    %v5687 = vunpack.c.l.b16 %v1352
    %v5688 = vunpack.c.h.b16 %v1352
    %v5689 = vunpack.c.l.b16 %v1353
    %v5690 = vunpack.c.h.b16 %v1353
    %v5691 = vunpack.c.l.b16 %v1354
    %v5692 = vunpack.c.h.b16 %v1354
    %v5693 = vunpack.c.l.b16 %v1355
    %v5694 = vunpack.c.h.b16 %v1355
    %v5695 = vunpack.c.l.b16 %v1356
    %v5696 = vunpack.c.h.b16 %v1356
    %v5697 = vunpack.c.l.b16 %v1357
    %v5698 = vunpack.c.h.b16 %v1357
    %v5699 = vunpack.c.l.b16 %v1358
    %v5700 = vunpack.c.h.b16 %v1358
    %v5701 = vunpack.c.l.b16 %v1359
    %v5702 = vunpack.c.h.b16 %v1359
    %v5703 = vunpack.c.l.b16 %v1360
    %v5704 = vunpack.c.h.b16 %v1360
    %v5705 = vunpack.c.l.b16 %v1361
    %v5706 = vunpack.c.h.b16 %v1361
    %v5707 = vunpack.c.l.b16 %v1362
    %v5708 = vunpack.c.h.b16 %v1362
    %v5709 = vunpack.c.l.b16 %v1363
    %v5710 = vunpack.c.h.b16 %v1363
    %v5711 = vunpack.c.l.b16 %v1364
    %v5712 = vunpack.c.h.b16 %v1364
    %v5713 = vunpack.c.l.b16 %v1365
    %v5714 = vunpack.c.h.b16 %v1365
    %v5715 = vunpack.c.l.b16 %v1366
    %v5716 = vunpack.c.h.b16 %v1366
    %v5717 = vunpack.c.l.b16 %v1367
    %v5718 = vunpack.c.h.b16 %v1367
    %v5719 = vunpack.c.l.b16 %v1368
    %v5720 = vunpack.c.h.b16 %v1368
    %v5721 = vunpack.c.l.b16 %v1369
    %v5722 = vunpack.c.h.b16 %v1369
    %v5723 = vunpack.c.l.b16 %v1370
    %v5724 = vunpack.c.h.b16 %v1370
    %v5725 = vunpack.c.l.b16 %v1371
    %v5726 = vunpack.c.h.b16 %v1371
    %v5727 = vunpack.c.l.b16 %v1372
    %v5728 = vunpack.c.h.b16 %v1372
    %v5729 = vunpack.c.l.b16 %v1373
    %v5730 = vunpack.c.h.b16 %v1373
    %v5731 = vunpack.c.l.b16 %v1374
    %v5732 = vunpack.c.h.b16 %v1374
    %v5733 = vunpack.c.l.b16 %v1375
    %v5734 = vunpack.c.h.b16 %v1375
    %v5735 = vunpack.c.l.b16 %v1376
    %v5736 = vunpack.c.h.b16 %v1376
    %v5737 = vunpack.c.l.b16 %v1377
    %v5738 = vunpack.c.h.b16 %v1377
    %v5739 = vunpack.c.l.b16 %v1378
    %v5740 = vunpack.c.h.b16 %v1378
    %v5741 = vunpack.c.l.b16 %v1379
    %v5742 = vunpack.c.h.b16 %v1379
    %v5743 = vunpack.c.l.b16 %v1380
    %v5744 = vunpack.c.h.b16 %v1380
    %v5745 = vunpack.c.l.b16 %v1381
    %v5746 = vunpack.c.h.b16 %v1381
    %v5747 = vunpack.c.l.b16 %v1382
    %v5748 = vunpack.c.h.b16 %v1382
    %v5749 = vunpack.c.l.b16 %v1383
    %v5750 = vunpack.c.h.b16 %v1383
    %v5751 = vunpack.c.l.b16 %v1384
    %v5752 = vunpack.c.h.b16 %v1384
    %v5753 = vunpack.c.l.b16 %v1385
    %v5754 = vunpack.c.h.b16 %v1385
    %v5755 = vunpack.c.l.b16 %v1386
    %v5756 = vunpack.c.h.b16 %v1386
    %v5757 = vunpack.c.l.b16 %v1387
    %v5758 = vunpack.c.h.b16 %v1387
    %v5759 = vunpack.c.l.b16 %v1388
    %v5760 = vunpack.c.h.b16 %v1388
    %v5761 = vunpack.c.l.b16 %v1389
    %v5762 = vunpack.c.h.b16 %v1389
    %v5763 = vunpack.c.l.b16 %v1390
    %v5764 = vunpack.c.h.b16 %v1390
    %v5765 = vunpack.c.l.b16 %v1391
    %v5766 = vunpack.c.h.b16 %v1391
    %v5767 = vunpack.c.l.b16 %v1392
    %v5768 = vunpack.c.h.b16 %v1392
    %v5769 = vunpack.c.l.b16 %v1393
    %v5770 = vunpack.c.h.b16 %v1393
    %v5771 = vunpack.c.l.b16 %v1394
    %v5772 = vunpack.c.h.b16 %v1394
    %v5773 = vunpack.c.l.b16 %v1395
    %v5774 = vunpack.c.h.b16 %v1395
    %v5775 = vunpack.c.l.b16 %v1396
    %v5776 = vunpack.c.h.b16 %v1396
    %v5777 = vunpack.c.l.b16 %v1397
    %v5778 = vunpack.c.h.b16 %v1397
    %v5779 = vunpack.c.l.b16 %v1398
    %v5780 = vunpack.c.h.b16 %v1398
    %v5781 = vunpack.c.l.b16 %v1399
    %v5782 = vunpack.c.h.b16 %v1399
    %v5783 = vunpack.c.l.b16 %v1400
    %v5784 = vunpack.c.h.b16 %v1400
    %v5785 = vunpack.c.l.b16 %v1401
    %v5786 = vunpack.c.h.b16 %v1401
    %v5787 = vunpack.c.l.b16 %v1402
    %v5788 = vunpack.c.h.b16 %v1402
    %v5789 = vunpack.c.l.b16 %v1403
    %v5790 = vunpack.c.h.b16 %v1403
    %v5791 = vunpack.c.l.b16 %v1404
    %v5792 = vunpack.c.h.b16 %v1404
    %v5793 = vunpack.c.l.b16 %v1405
    %v5794 = vunpack.c.h.b16 %v1405
    %v5795 = vunpack.c.l.b16 %v1406
    %v5796 = vunpack.c.h.b16 %v1406
    %v5797 = vunpack.c.l.b16 %v1407
    %v5798 = vunpack.c.h.b16 %v1407
    %v5799 = vunpack.c.l.b16 %v1408
    %v5800 = vunpack.c.h.b16 %v1408
    %v5801 = vunpack.c.l.b16 %v1409
    %v5802 = vunpack.c.h.b16 %v1409
    %v5803 = vunpack.c.l.b16 %v1410
    %v5804 = vunpack.c.h.b16 %v1410
    %v5805 = vunpack.c.l.b16 %v1411
    %v5806 = vunpack.c.h.b16 %v1411
    %v5807 = vunpack.c.l.b16 %v1412
    %v5808 = vunpack.c.h.b16 %v1412
    %v5809 = vunpack.c.l.b16 %v1413
    %v5810 = vunpack.c.h.b16 %v1413
    %v5811 = vunpack.c.l.b16 %v1414
    %v5812 = vunpack.c.h.b16 %v1414
    %v5813 = vunpack.c.l.b16 %v1415
    %v5814 = vunpack.c.h.b16 %v1415
    %v5815 = vunpack.c.l.b16 %v1416
    %v5816 = vunpack.c.h.b16 %v1416
    %v5817 = vunpack.c.l.b16 %v1417
    %v5818 = vunpack.c.h.b16 %v1417
    %v5819 = vunpack.c.l.b16 %v1418
    %v5820 = vunpack.c.h.b16 %v1418
    %v5821 = vunpack.c.l.b16 %v1419
    %v5822 = vunpack.c.h.b16 %v1419
    %v5823 = vunpack.c.l.b16 %v1420
    %v5824 = vunpack.c.h.b16 %v1420
    %v5825 = vunpack.c.l.b16 %v1421
    %v5826 = vunpack.c.h.b16 %v1421
    %v5827 = vunpack.c.l.b16 %v1422
    %v5828 = vunpack.c.h.b16 %v1422
    %v5829 = vunpack.c.l.b16 %v1423
    %v5830 = vunpack.c.h.b16 %v1423
    %v5831 = vunpack.c.l.b16 %v1424
    %v5832 = vunpack.c.h.b16 %v1424
    %v5833 = vunpack.c.l.b16 %v1425
    %v5834 = vunpack.c.h.b16 %v1425
    %v5835 = vunpack.c.l.b16 %v1426
    %v5836 = vunpack.c.h.b16 %v1426
    %v5837 = vunpack.c.l.b16 %v1427
    %v5838 = vunpack.c.h.b16 %v1427
    %v5839 = vunpack.c.l.b16 %v1428
    %v5840 = vunpack.c.h.b16 %v1428
    %v5841 = vunpack.c.l.b16 %v1429
    %v5842 = vunpack.c.h.b16 %v1429
    %v5843 = vunpack.c.l.b16 %v1430
    %v5844 = vunpack.c.h.b16 %v1430
    %v5845 = vunpack.c.l.b16 %v1431
    %v5846 = vunpack.c.h.b16 %v1431
    %v5847 = vunpack.c.l.b16 %v1432
    %v5848 = vunpack.c.h.b16 %v1432
    %v5849 = vunpack.c.l.b16 %v1433
    %v5850 = vunpack.c.h.b16 %v1433
    %v5851 = vunpack.c.l.b16 %v1434
    %v5852 = vunpack.c.h.b16 %v1434
    %v5853 = vunpack.c.l.b16 %v1435
    %v5854 = vunpack.c.h.b16 %v1435
    %v5855 = vunpack.c.l.b16 %v1436
    %v5856 = vunpack.c.h.b16 %v1436
    %v5857 = vunpack.c.l.b16 %v1437
    %v5858 = vunpack.c.h.b16 %v1437
    %v5859 = vunpack.c.l.b16 %v1438
    %v5860 = vunpack.c.h.b16 %v1438
    %v5861 = vunpack.c.l.b16 %v1439
    %v5862 = vunpack.c.h.b16 %v1439
    %v5863 = vunpack.c.l.b16 %v1440
    %v5864 = vunpack.c.h.b16 %v1440
    %v5865 = vunpack.c.l.b16 %v1441
    %v5866 = vunpack.c.h.b16 %v1441
    %v5867 = vunpack.c.l.b16 %v1442
    %v5868 = vunpack.c.h.b16 %v1442
    %v5869 = vunpack.c.l.b16 %v1443
    %v5870 = vunpack.c.h.b16 %v1443
    %v5871 = vunpack.c.l.b16 %v1444
    %v5872 = vunpack.c.h.b16 %v1444
    %v5873 = vunpack.c.l.b16 %v1445
    %v5874 = vunpack.c.h.b16 %v1445
    %v5875 = vunpack.c.l.b16 %v1446
    %v5876 = vunpack.c.h.b16 %v1446
    %v5877 = vunpack.c.l.b16 %v1447
    %v5878 = vunpack.c.h.b16 %v1447
    %v5879 = vunpack.c.l.b16 %v1448
    %v5880 = vunpack.c.h.b16 %v1448
    %v5881 = vunpack.c.l.b16 %v1449
    %v5882 = vunpack.c.h.b16 %v1449
    %v5883 = vunpack.c.l.b16 %v1450
    %v5884 = vunpack.c.h.b16 %v1450
    %v5885 = vunpack.c.l.b16 %v1451
    %v5886 = vunpack.c.h.b16 %v1451
    %v5887 = vunpack.c.l.b16 %v1452
    %v5888 = vunpack.c.h.b16 %v1452
    %v5889 = vunpack.c.l.b16 %v1453
    %v5890 = vunpack.c.h.b16 %v1453
    %v5891 = vunpack.c.l.b16 %v1454
    %v5892 = vunpack.c.h.b16 %v1454
    %v5893 = vunpack.c.l.b16 %v1455
    %v5894 = vunpack.c.h.b16 %v1455
    %v5895 = vunpack.c.l.b16 %v1456
    %v5896 = vunpack.c.h.b16 %v1456
    %v5897 = vunpack.c.l.b16 %v1457
    %v5898 = vunpack.c.h.b16 %v1457
    %v5899 = vunpack.c.l.b16 %v1458
    %v5900 = vunpack.c.h.b16 %v1458
    %v5901 = vunpack.c.l.b16 %v1459
    %v5902 = vunpack.c.h.b16 %v1459
    %v5903 = vunpack.c.l.b16 %v1460
    %v5904 = vunpack.c.h.b16 %v1460
    %v5905 = vunpack.c.l.b16 %v1461
    %v5906 = vunpack.c.h.b16 %v1461
    %v5907 = vunpack.c.l.b16 %v1462
    %v5908 = vunpack.c.h.b16 %v1462
    %v5909 = vunpack.c.l.b16 %v1463
    %v5910 = vunpack.c.h.b16 %v1463
    %v5911 = vunpack.c.l.b16 %v1464
    %v5912 = vunpack.c.h.b16 %v1464
    %v5913 = vunpack.c.l.b16 %v1465
    %v5914 = vunpack.c.h.b16 %v1465
    %v5915 = vunpack.c.l.b16 %v1466
    %v5916 = vunpack.c.h.b16 %v1466
    %v5917 = vunpack.c.l.b16 %v1467
    %v5918 = vunpack.c.h.b16 %v1467
    %v5919 = vunpack.c.l.b16 %v1468
    %v5920 = vunpack.c.h.b16 %v1468
    %v5921 = vunpack.c.l.b16 %v1469
    %v5922 = vunpack.c.h.b16 %v1469
    %v5923 = vunpack.c.l.b16 %v1470
    %v5924 = vunpack.c.h.b16 %v1470
    %v5925 = vunpack.c.l.b16 %v1471
    %v5926 = vunpack.c.h.b16 %v1471
    %v5927 = vunpack.c.l.b16 %v1472
    %v5928 = vunpack.c.h.b16 %v1472
    %v5929 = vunpack.c.l.b16 %v1473
    %v5930 = vunpack.c.h.b16 %v1473
    %v5931 = vunpack.c.l.b16 %v1474
    %v5932 = vunpack.c.h.b16 %v1474
    %v5933 = vunpack.c.l.b16 %v1475
    %v5934 = vunpack.c.h.b16 %v1475
    %v5935 = vunpack.c.l.b16 %v1476
    %v5936 = vunpack.c.h.b16 %v1476
    %v5937 = vunpack.c.l.b16 %v1477
    %v5938 = vunpack.c.h.b16 %v1477
    %v5939 = vunpack.c.l.b16 %v1478
    %v5940 = vunpack.c.h.b16 %v1478
    %v5941 = vunpack.c.l.b16 %v1479
    %v5942 = vunpack.c.h.b16 %v1479
    %v5943 = vunpack.c.l.b16 %v1480
    %v5944 = vunpack.c.h.b16 %v1480
    %v5945 = vunpack.c.l.b16 %v1481
    %v5946 = vunpack.c.h.b16 %v1481
    %v5947 = vunpack.c.l.b16 %v1482
    %v5948 = vunpack.c.h.b16 %v1482
    %v5949 = vunpack.c.l.b16 %v1483
    %v5950 = vunpack.c.h.b16 %v1483
    %v5951 = vunpack.c.l.b16 %v1484
    %v5952 = vunpack.c.h.b16 %v1484
    %v5953 = vunpack.c.l.b16 %v1485
    %v5954 = vunpack.c.h.b16 %v1485
    %v5955 = vunpack.c.l.b16 %v1486
    %v5956 = vunpack.c.h.b16 %v1486
    %v5957 = vunpack.c.l.b16 %v1487
    %v5958 = vunpack.c.h.b16 %v1487
    %v5959 = vunpack.c.l.b16 %v1488
    %v5960 = vunpack.c.h.b16 %v1488
    %v5961 = vunpack.c.l.b16 %v1489
    %v5962 = vunpack.c.h.b16 %v1489
    %v5963 = vunpack.c.l.b16 %v1490
    %v5964 = vunpack.c.h.b16 %v1490
    %v5965 = vunpack.c.l.b16 %v1491
    %v5966 = vunpack.c.h.b16 %v1491
    %v5967 = vunpack.c.l.b16 %v1492
    %v5968 = vunpack.c.h.b16 %v1492
    %v5969 = vunpack.c.l.b16 %v1493
    %v5970 = vunpack.c.h.b16 %v1493
    %v5971 = vunpack.c.l.b16 %v1494
    %v5972 = vunpack.c.h.b16 %v1494
    %v5973 = vunpack.c.l.b16 %v1495
    %v5974 = vunpack.c.h.b16 %v1495
    %v5975 = vunpack.c.l.b16 %v1496
    %v5976 = vunpack.c.h.b16 %v1496
    %v5977 = vunpack.c.l.b16 %v1497
    %v5978 = vunpack.c.h.b16 %v1497
    %v5979 = vunpack.c.l.b16 %v1498
    %v5980 = vunpack.c.h.b16 %v1498
    %v5981 = vunpack.c.l.b16 %v1499
    %v5982 = vunpack.c.h.b16 %v1499
    %v5983 = vunpack.c.l.b16 %v1500
    %v5984 = vunpack.c.h.b16 %v1500
    %v5985 = vunpack.c.l.b16 %v1501
    %v5986 = vunpack.c.h.b16 %v1501
    %v5987 = vunpack.c.l.b16 %v1502
    %v5988 = vunpack.c.h.b16 %v1502
    %v5989 = vunpack.c.l.b16 %v1503
    %v5990 = vunpack.c.h.b16 %v1503
    %v5991 = vunpack.c.l.b16 %v1504
    %v5992 = vunpack.c.h.b16 %v1504
    %v5993 = vunpack.c.l.b16 %v1505
    %v5994 = vunpack.c.h.b16 %v1505
    %v5995 = vunpack.c.l.b16 %v1506
    %v5996 = vunpack.c.h.b16 %v1506
    %v5997 = vunpack.c.l.b16 %v1507
    %v5998 = vunpack.c.h.b16 %v1507
    %v5999 = vunpack.c.l.b16 %v1508
    %v6000 = vunpack.c.h.b16 %v1508
    %v6001 = vunpack.c.l.b16 %v1509
    %v6002 = vunpack.c.h.b16 %v1509
    %v6003 = vunpack.c.l.b16 %v1510
    %v6004 = vunpack.c.h.b16 %v1510
    %v6005 = vunpack.c.l.b16 %v1511
    %v6006 = vunpack.c.h.b16 %v1511
    %v6007 = vunpack.c.l.b16 %v1512
    %v6008 = vunpack.c.h.b16 %v1512
    %v6009 = vunpack.c.l.b16 %v1513
    %v6010 = vunpack.c.h.b16 %v1513
    %v6011 = vunpack.c.l.b16 %v1514
    %v6012 = vunpack.c.h.b16 %v1514
    %v6013 = vunpack.c.l.b16 %v1515
    %v6014 = vunpack.c.h.b16 %v1515
    %v6015 = vunpack.c.l.b16 %v1516
    %v6016 = vunpack.c.h.b16 %v1516
    %v6017 = vunpack.c.l.b16 %v1517
    %v6018 = vunpack.c.h.b16 %v1517
    %v6019 = vunpack.c.l.b16 %v1518
    %v6020 = vunpack.c.h.b16 %v1518
    %v6021 = vunpack.c.l.b16 %v1519
    %v6022 = vunpack.c.h.b16 %v1519
    %v6023 = vunpack.c.l.b16 %v1520
    %v6024 = vunpack.c.h.b16 %v1520
    %v6025 = vunpack.c.l.b16 %v1521
    %v6026 = vunpack.c.h.b16 %v1521
    %v6027 = vunpack.c.l.b16 %v1522
    %v6028 = vunpack.c.h.b16 %v1522
    %v6029 = vunpack.c.l.b16 %v1523
    %v6030 = vunpack.c.h.b16 %v1523
    %v6031 = vunpack.c.l.b16 %v1524
    %v6032 = vunpack.c.h.b16 %v1524
    %v6033 = vunpack.c.l.b16 %v1525
    %v6034 = vunpack.c.h.b16 %v1525
    %v6035 = vunpack.c.l.b16 %v1526
    %v6036 = vunpack.c.h.b16 %v1526
    %v6037 = vunpack.c.l.b16 %v1527
    %v6038 = vunpack.c.h.b16 %v1527
    %v6039 = vunpack.c.l.b16 %v1528
    %v6040 = vunpack.c.h.b16 %v1528
    %v6041 = vunpack.c.l.b16 %v1529
    %v6042 = vunpack.c.h.b16 %v1529
    %v6043 = vunpack.c.l.b16 %v1530
    %v6044 = vunpack.c.h.b16 %v1530
    %v6045 = vunpack.c.l.b16 %v1531
    %v6046 = vunpack.c.h.b16 %v1531
    %v6047 = vunpack.c.l.b16 %v1532
    %v6048 = vunpack.c.h.b16 %v1532
    %v6049 = vunpack.c.l.b16 %v1533
    %v6050 = vunpack.c.h.b16 %v1533
    %v6051 = vunpack.c.l.b16 %v1534
    %v6052 = vunpack.c.h.b16 %v1534
    %v6053 = vunpack.c.l.b16 %v1535
    %v6054 = vunpack.c.h.b16 %v1535
    %v6055 = vunpack.c.l.b16 %v1536
    %v6056 = vunpack.c.h.b16 %v1536
    %v6057 = vunpack.c.l.b16 %v1537
    %v6058 = vunpack.c.h.b16 %v1537
    %v6059 = vunpack.c.l.b16 %v1538
    %v6060 = vunpack.c.h.b16 %v1538
    %v6061 = vunpack.c.l.b16 %v1539
    %v6062 = vunpack.c.h.b16 %v1539
    %v6063 = vunpack.c.l.b16 %v1540
    %v6064 = vunpack.c.h.b16 %v1540
    %v6065 = vunpack.c.l.b16 %v1541
    %v6066 = vunpack.c.h.b16 %v1541
    %v6067 = vunpack.c.l.b16 %v1542
    %v6068 = vunpack.c.h.b16 %v1542
    %v6069 = vunpack.c.l.b16 %v1543
    %v6070 = vunpack.c.h.b16 %v1543
    %v6071 = vunpack.c.l.b16 %v1544
    %v6072 = vunpack.c.h.b16 %v1544
    %v6073 = vunpack.c.l.b16 %v1545
    %v6074 = vunpack.c.h.b16 %v1545
    %v6075 = vunpack.c.l.b16 %v1546
    %v6076 = vunpack.c.h.b16 %v1546
    %v6077 = vunpack.c.l.b16 %v1547
    %v6078 = vunpack.c.h.b16 %v1547
    %v6079 = vunpack.c.l.b16 %v1548
    %v6080 = vunpack.c.h.b16 %v1548
    %v6081 = vunpack.c.l.b16 %v1549
    %v6082 = vunpack.c.h.b16 %v1549
    %v6083 = vunpack.c.l.b16 %v1550
    %v6084 = vunpack.c.h.b16 %v1550
    %v6085 = vunpack.c.l.b16 %v1551
    %v6086 = vunpack.c.h.b16 %v1551
    %v6087 = vunpack.c.l.b16 %v1552
    %v6088 = vunpack.c.h.b16 %v1552
    %v6089 = vunpack.c.l.b16 %v1553
    %v6090 = vunpack.c.h.b16 %v1553
    %v6091 = vunpack.c.l.b16 %v1554
    %v6092 = vunpack.c.h.b16 %v1554
    %v6093 = vunpack.c.l.b16 %v1555
    %v6094 = vunpack.c.h.b16 %v1555
    %v6095 = vunpack.c.l.b16 %v1556
    %v6096 = vunpack.c.h.b16 %v1556
    %v6097 = vunpack.c.l.b16 %v1557
    %v6098 = vunpack.c.h.b16 %v1557
    %v6099 = vunpack.c.l.b16 %v1558
    %v6100 = vunpack.c.h.b16 %v1558
    %v6101 = vunpack.c.l.b16 %v1559
    %v6102 = vunpack.c.h.b16 %v1559
    %v6103 = vunpack.c.l.b16 %v1560
    %v6104 = vunpack.c.h.b16 %v1560
    %v6105 = vunpack.c.l.b16 %v1561
    %v6106 = vunpack.c.h.b16 %v1561
    %v6107 = vunpack.c.l.b16 %v1562
    %v6108 = vunpack.c.h.b16 %v1562
    %v6109 = vunpack.c.l.b16 %v1563
    %v6110 = vunpack.c.h.b16 %v1563
    %v6111 = vunpack.c.l.b16 %v1564
    %v6112 = vunpack.c.h.b16 %v1564
    %v6113 = vunpack.c.l.b16 %v1565
    %v6114 = vunpack.c.h.b16 %v1565
    %v6115 = vunpack.c.l.b16 %v1566
    %v6116 = vunpack.c.h.b16 %v1566
    %v6117 = vunpack.c.l.b16 %v1567
    %v6118 = vunpack.c.h.b16 %v1567
    %v6119 = vunpack.c.l.b16 %v1568
    %v6120 = vunpack.c.h.b16 %v1568
    %v6121 = vunpack.c.l.b16 %v1569
    %v6122 = vunpack.c.h.b16 %v1569
    %v6123 = vunpack.c.l.b16 %v1570
    %v6124 = vunpack.c.h.b16 %v1570
    %v6125 = vunpack.c.l.b16 %v1571
    %v6126 = vunpack.c.h.b16 %v1571
    %v6127 = vunpack.c.l.b16 %v1572
    %v6128 = vunpack.c.h.b16 %v1572
    %v6129 = vunpack.c.l.b16 %v1573
    %v6130 = vunpack.c.h.b16 %v1573
    %v6131 = vunpack.c.l.b16 %v1574
    %v6132 = vunpack.c.h.b16 %v1574
    %v6133 = vunpack.c.l.b16 %v1575
    %v6134 = vunpack.c.h.b16 %v1575
    %v6135 = vunpack.c.l.b16 %v1576
    %v6136 = vunpack.c.h.b16 %v1576
    %v6137 = vunpack.c.l.b16 %v1577
    %v6138 = vunpack.c.h.b16 %v1577
    %v6139 = vunpack.c.l.b16 %v1578
    %v6140 = vunpack.c.h.b16 %v1578
    %v6141 = vunpack.c.l.b16 %v1579
    %v6142 = vunpack.c.h.b16 %v1579
    %v6143 = vunpack.c.l.b16 %v1580
    %v6144 = vunpack.c.h.b16 %v1580
    %v6145 = vunpack.c.l.b16 %v1581
    %v6146 = vunpack.c.h.b16 %v1581
    %v6147 = vunpack.c.l.b16 %v1582
    %v6148 = vunpack.c.h.b16 %v1582
    %v6149 = vunpack.c.l.b16 %v1583
    %v6150 = vunpack.c.h.b16 %v1583
    %v6151 = vunpack.c.l.b16 %v1584
    %v6152 = vunpack.c.h.b16 %v1584
    %v6153 = vunpack.c.l.b16 %v1585
    %v6154 = vunpack.c.h.b16 %v1585
    %v6155 = vunpack.c.l.b16 %v1586
    %v6156 = vunpack.c.h.b16 %v1586
    %v6157 = vunpack.c.l.b16 %v1587
    %v6158 = vunpack.c.h.b16 %v1587
    %v6159 = vunpack.c.l.b16 %v1588
    %v6160 = vunpack.c.h.b16 %v1588
    %v6161 = vunpack.c.l.b16 %v1589
    %v6162 = vunpack.c.h.b16 %v1589
    %v6163 = vunpack.c.l.b16 %v1590
    %v6164 = vunpack.c.h.b16 %v1590
    %v6165 = vunpack.c.l.b16 %v1591
    %v6166 = vunpack.c.h.b16 %v1591
    %v6167 = vunpack.c.l.b16 %v1592
    %v6168 = vunpack.c.h.b16 %v1592
    %v6169 = vunpack.c.l.b16 %v1593
    %v6170 = vunpack.c.h.b16 %v1593
    %v6171 = vunpack.c.l.b16 %v1594
    %v6172 = vunpack.c.h.b16 %v1594
    %v6173 = vunpack.c.l.b16 %v1595
    %v6174 = vunpack.c.h.b16 %v1595
    %v6175 = vunpack.c.l.b16 %v1596
    %v6176 = vunpack.c.h.b16 %v1596
    %v6177 = vunpack.c.l.b16 %v1597
    %v6178 = vunpack.c.h.b16 %v1597
    %v6179 = vunpack.c.l.b16 %v1598
    %v6180 = vunpack.c.h.b16 %v1598
    %v6181 = vunpack.c.l.b16 %v1599
    %v6182 = vunpack.c.h.b16 %v1599
    %v6183 = vunpack.c.l.b16 %v1600
    %v6184 = vunpack.c.h.b16 %v1600
    %v6185 = vunpack.c.l.b16 %v1601
    %v6186 = vunpack.c.h.b16 %v1601
    %v6187 = vunpack.c.l.b16 %v1602
    %v6188 = vunpack.c.h.b16 %v1602
    %v6189 = vunpack.c.l.b16 %v1603
    %v6190 = vunpack.c.h.b16 %v1603
    %v6191 = vunpack.c.l.b16 %v1604
    %v6192 = vunpack.c.h.b16 %v1604
    %v6193 = vunpack.c.l.b16 %v1605
    %v6194 = vunpack.c.h.b16 %v1605
    %v6195 = vunpack.c.l.b16 %v1606
    %v6196 = vunpack.c.h.b16 %v1606
    %v6197 = vunpack.c.l.b16 %v1607
    %v6198 = vunpack.c.h.b16 %v1607
    %v6199 = vunpack.c.l.b16 %v1608
    %v6200 = vunpack.c.h.b16 %v1608
    %v6201 = vunpack.c.l.b16 %v1609
    %v6202 = vunpack.c.h.b16 %v1609
    %v6203 = vunpack.c.l.b16 %v1610
    %v6204 = vunpack.c.h.b16 %v1610
    %v6205 = vunpack.c.l.b16 %v1611
    %v6206 = vunpack.c.h.b16 %v1611
    %v6207 = vunpack.c.l.b16 %v1612
    %v6208 = vunpack.c.h.b16 %v1612
    %v6209 = vunpack.c.l.b16 %v1613
    %v6210 = vunpack.c.h.b16 %v1613
    %v6211 = vunpack.c.l.b16 %v1614
    %v6212 = vunpack.c.h.b16 %v1614
    %v6213 = vunpack.c.l.b16 %v1615
    %v6214 = vunpack.c.h.b16 %v1615
    %v6215 = vunpack.c.l.b16 %v1616
    %v6216 = vunpack.c.h.b16 %v1616
    %v6217 = vunpack.c.l.b16 %v1617
    %v6218 = vunpack.c.h.b16 %v1617
    %v6219 = vunpack.c.l.b16 %v1618
    %v6220 = vunpack.c.h.b16 %v1618
    %v6221 = vunpack.c.l.b16 %v1619
    %v6222 = vunpack.c.h.b16 %v1619
    %v6223 = vunpack.c.l.b16 %v1620
    %v6224 = vunpack.c.h.b16 %v1620
    %v6225 = vunpack.c.l.b16 %v1621
    %v6226 = vunpack.c.h.b16 %v1621
    %v6227 = vunpack.c.l.b16 %v1622
    %v6228 = vunpack.c.h.b16 %v1622
    %v6229 = vunpack.c.l.b16 %v1623
    %v6230 = vunpack.c.h.b16 %v1623
    %v6231 = vunpack.c.l.b16 %v1624
    %v6232 = vunpack.c.h.b16 %v1624
    %v6233 = vunpack.c.l.b16 %v1625
    %v6234 = vunpack.c.h.b16 %v1625
    %v6235 = vunpack.c.l.b16 %v1626
    %v6236 = vunpack.c.h.b16 %v1626
    %v6237 = vunpack.c.l.b16 %v1627
    %v6238 = vunpack.c.h.b16 %v1627
    %v6239 = vunpack.c.l.b16 %v1628
    %v6240 = vunpack.c.h.b16 %v1628
    %v6241 = vunpack.c.l.b16 %v1629
    %v6242 = vunpack.c.h.b16 %v1629
    %v6243 = vunpack.c.l.b16 %v1630
    %v6244 = vunpack.c.h.b16 %v1630
    %v6245 = vunpack.c.l.b16 %v1631
    %v6246 = vunpack.c.h.b16 %v1631
    %v6247 = vunpack.c.l.b16 %v1632
    %v6248 = vunpack.c.h.b16 %v1632
    %v6249 = vunpack.c.l.b16 %v1633
    %v6250 = vunpack.c.h.b16 %v1633
    %v6251 = vunpack.c.l.b16 %v1634
    %v6252 = vunpack.c.h.b16 %v1634
    %v6253 = vunpack.c.l.b16 %v1635
    %v6254 = vunpack.c.h.b16 %v1635
    %v6255 = vunpack.c.l.b16 %v1636
    %v6256 = vunpack.c.h.b16 %v1636
    %v6257 = vunpack.c.l.b16 %v1637
    %v6258 = vunpack.c.h.b16 %v1637
    %v6259 = vunpack.c.l.b16 %v1638
    %v6260 = vunpack.c.h.b16 %v1638
    %v6261 = vunpack.c.l.b16 %v1639
    %v6262 = vunpack.c.h.b16 %v1639
    %v6263 = vunpack.c.l.b16 %v1640
    %v6264 = vunpack.c.h.b16 %v1640
    %v6265 = vunpack.c.l.b16 %v1641
    %v6266 = vunpack.c.h.b16 %v1641
    %v6267 = vunpack.c.l.b16 %v1642
    %v6268 = vunpack.c.h.b16 %v1642
    %v6269 = vunpack.c.l.b16 %v1643
    %v6270 = vunpack.c.h.b16 %v1643
    %v6271 = vunpack.c.l.b16 %v1644
    %v6272 = vunpack.c.h.b16 %v1644
    %v6273 = vunpack.c.l.b16 %v1645
    %v6274 = vunpack.c.h.b16 %v1645
    %v6275 = vunpack.c.l.b16 %v1646
    %v6276 = vunpack.c.h.b16 %v1646
    %v6277 = vunpack.c.l.b16 %v1647
    %v6278 = vunpack.c.h.b16 %v1647
    %v6279 = vunpack.c.l.b16 %v1648
    %v6280 = vunpack.c.h.b16 %v1648
    %v6281 = vunpack.c.l.b16 %v1649
    %v6282 = vunpack.c.h.b16 %v1649
    %v6283 = vunpack.c.l.b16 %v1650
    %v6284 = vunpack.c.h.b16 %v1650
    %v6285 = vunpack.c.l.b16 %v1651
    %v6286 = vunpack.c.h.b16 %v1651
    %v6287 = vunpack.c.l.b16 %v1652
    %v6288 = vunpack.c.h.b16 %v1652
    %v6289 = vunpack.c.l.b16 %v1653
    %v6290 = vunpack.c.h.b16 %v1653
    %v6291 = vunpack.c.l.b16 %v1654
    %v6292 = vunpack.c.h.b16 %v1654
    %v6293 = vunpack.c.l.b16 %v1655
    %v6294 = vunpack.c.h.b16 %v1655
    %v6295 = vunpack.c.l.b16 %v1656
    %v6296 = vunpack.c.h.b16 %v1656
    %v6297 = vunpack.c.l.b16 %v1657
    %v6298 = vunpack.c.h.b16 %v1657
    %v6299 = vunpack.c.l.b16 %v1658
    %v6300 = vunpack.c.h.b16 %v1658
    %v6301 = vunpack.c.l.b16 %v1659
    %v6302 = vunpack.c.h.b16 %v1659
    %v6303 = vunpack.c.l.b16 %v1660
    %v6304 = vunpack.c.h.b16 %v1660
    %v6305 = vunpack.c.l.b16 %v1661
    %v6306 = vunpack.c.h.b16 %v1661
    %v6307 = vunpack.c.l.b16 %v1662
    %v6308 = vunpack.c.h.b16 %v1662
    %v6309 = vunpack.c.l.b16 %v1663
    %v6310 = vunpack.c.h.b16 %v1663
    %v6311 = vunpack.c.l.b16 %v1664
    %v6312 = vunpack.c.h.b16 %v1664
    %v6313 = vunpack.c.l.b16 %v1665
    %v6314 = vunpack.c.h.b16 %v1665
    %v6315 = vunpack.c.l.b16 %v1666
    %v6316 = vunpack.c.h.b16 %v1666
    %v6317 = vunpack.c.l.b16 %v1667
    %v6318 = vunpack.c.h.b16 %v1667
    %v6319 = vunpack.c.l.b16 %v1668
    %v6320 = vunpack.c.h.b16 %v1668
    %v6321 = vunpack.c.l.b16 %v1669
    %v6322 = vunpack.c.h.b16 %v1669
    %v6323 = vunpack.c.l.b16 %v1670
    %v6324 = vunpack.c.h.b16 %v1670
    %v6325 = vunpack.c.l.b16 %v1671
    %v6326 = vunpack.c.h.b16 %v1671
    %v6327 = vunpack.c.l.b16 %v1672
    %v6328 = vunpack.c.h.b16 %v1672
    %v6329 = vunpack.c.l.b16 %v1673
    %v6330 = vunpack.c.h.b16 %v1673
    %v6331 = vunpack.c.l.b16 %v1674
    %v6332 = vunpack.c.h.b16 %v1674
    %v6333 = vunpack.c.l.b16 %v1675
    %v6334 = vunpack.c.h.b16 %v1675
    %v6335 = vunpack.c.l.b16 %v1676
    %v6336 = vunpack.c.h.b16 %v1676
    %v6337 = vunpack.c.l.b16 %v1677
    %v6338 = vunpack.c.h.b16 %v1677
    %v6339 = vunpack.c.l.b16 %v1678
    %v6340 = vunpack.c.h.b16 %v1678
    %v6341 = vunpack.c.l.b16 %v1679
    %v6342 = vunpack.c.h.b16 %v1679
    %v6343 = vunpack.c.l.b16 %v1680
    %v6344 = vunpack.c.h.b16 %v1680
    %v6345 = vunpack.c.l.b16 %v1681
    %v6346 = vunpack.c.h.b16 %v1681
    %v6347 = vunpack.c.l.b16 %v1682
    %v6348 = vunpack.c.h.b16 %v1682
    %v6349 = vunpack.c.l.b16 %v1683
    %v6350 = vunpack.c.h.b16 %v1683
    %v6351 = vunpack.c.l.b16 %v1684
    %v6352 = vunpack.c.h.b16 %v1684
    %v6353 = vunpack.c.l.b16 %v1685
    %v6354 = vunpack.c.h.b16 %v1685
    %v6355 = vunpack.c.l.b16 %v1686
    %v6356 = vunpack.c.h.b16 %v1686
    %v6357 = vunpack.c.l.b16 %v1687
    %v6358 = vunpack.c.h.b16 %v1687
    %v6359 = vunpack.c.l.b16 %v1688
    %v6360 = vunpack.c.h.b16 %v1688
    %v6361 = vunpack.c.l.b16 %v1689
    %v6362 = vunpack.c.h.b16 %v1689
    %v6363 = vunpack.c.l.b16 %v1690
    %v6364 = vunpack.c.h.b16 %v1690
    %v6365 = vunpack.c.l.b16 %v1691
    %v6366 = vunpack.c.h.b16 %v1691
    %v6367 = vunpack.c.l.b16 %v1692
    %v6368 = vunpack.c.h.b16 %v1692
    %v6369 = vunpack.c.l.b16 %v1693
    %v6370 = vunpack.c.h.b16 %v1693
    %v6371 = vunpack.c.l.b16 %v1694
    %v6372 = vunpack.c.h.b16 %v1694
    %v6373 = vunpack.c.l.b16 %v1695
    %v6374 = vunpack.c.h.b16 %v1695
    %v6375 = vunpack.c.l.b16 %v1696
    %v6376 = vunpack.c.h.b16 %v1696
    %v6377 = vunpack.c.l.b16 %v1697
    %v6378 = vunpack.c.h.b16 %v1697
    %v6379 = vunpack.c.l.b16 %v1698
    %v6380 = vunpack.c.h.b16 %v1698
    %v6381 = vunpack.c.l.b16 %v1699
    %v6382 = vunpack.c.h.b16 %v1699
    %v6383 = vunpack.c.l.b16 %v1700
    %v6384 = vunpack.c.h.b16 %v1700
    %v6385 = vunpack.c.l.b16 %v1701
    %v6386 = vunpack.c.h.b16 %v1701
    %v6387 = vunpack.c.l.b16 %v1702
    %v6388 = vunpack.c.h.b16 %v1702
    %v6389 = vunpack.c.l.b16 %v1703
    %v6390 = vunpack.c.h.b16 %v1703
    %v6391 = vunpack.c.l.b16 %v1704
    %v6392 = vunpack.c.h.b16 %v1704
    %v6393 = vunpack.c.l.b16 %v1705
    %v6394 = vunpack.c.h.b16 %v1705
    %v6395 = vunpack.c.l.b16 %v1706
    %v6396 = vunpack.c.h.b16 %v1706
    %v6397 = vunpack.c.l.b16 %v1707
    %v6398 = vunpack.c.h.b16 %v1707
    %v6399 = vunpack.c.l.b16 %v1708
    %v6400 = vunpack.c.h.b16 %v1708
    %v6401 = vunpack.c.l.b16 %v1709
    %v6402 = vunpack.c.h.b16 %v1709
    %v6403 = vunpack.c.l.b16 %v1710
    %v6404 = vunpack.c.h.b16 %v1710
    %v6405 = vunpack.c.l.b16 %v1711
    %v6406 = vunpack.c.h.b16 %v1711
    %v6407 = vunpack.c.l.b16 %v1712
    %v6408 = vunpack.c.h.b16 %v1712
    %v6409 = vunpack.c.l.b16 %v1713
    %v6410 = vunpack.c.h.b16 %v1713
    %v6411 = vunpack.c.l.b16 %v1714
    %v6412 = vunpack.c.h.b16 %v1714
    %v6413 = vunpack.c.l.b16 %v1715
    %v6414 = vunpack.c.h.b16 %v1715
    %v6415 = vunpack.c.l.b16 %v1716
    %v6416 = vunpack.c.h.b16 %v1716
    %v6417 = vunpack.c.l.b16 %v1717
    %v6418 = vunpack.c.h.b16 %v1717
    %v6419 = vunpack.c.l.b16 %v1718
    %v6420 = vunpack.c.h.b16 %v1718
    %v6421 = vunpack.c.l.b16 %v1719
    %v6422 = vunpack.c.h.b16 %v1719
    %v6423 = vunpack.c.l.b16 %v1720
    %v6424 = vunpack.c.h.b16 %v1720
    %v6425 = vunpack.c.l.b16 %v1721
    %v6426 = vunpack.c.h.b16 %v1721
    %v6427 = vunpack.c.l.b16 %v1722
    %v6428 = vunpack.c.h.b16 %v1722
    %v6429 = vunpack.c.l.b16 %v1723
    %v6430 = vunpack.c.h.b16 %v1723
    %v6431 = vunpack.c.l.b16 %v1724
    %v6432 = vunpack.c.h.b16 %v1724
    %v6433 = vunpack.c.l.b16 %v1725
    %v6434 = vunpack.c.h.b16 %v1725
    %v6435 = vunpack.c.l.b16 %v1726
    %v6436 = vunpack.c.h.b16 %v1726
    %v6437 = vunpack.c.l.b16 %v1727
    %v6438 = vunpack.c.h.b16 %v1727
    %v6439 = vunpack.c.l.b16 %v1728
    %v6440 = vunpack.c.h.b16 %v1728
    %v6441 = vunpack.c.l.b16 %v1729
    %v6442 = vunpack.c.h.b16 %v1729
    %v6443 = vunpack.c.l.b16 %v1730
    %v6444 = vunpack.c.h.b16 %v1730
    %v6445 = vunpack.c.l.b16 %v1731
    %v6446 = vunpack.c.h.b16 %v1731
    %v6447 = vunpack.c.l.b16 %v1732
    %v6448 = vunpack.c.h.b16 %v1732
    %v6449 = vunpack.c.l.b16 %v1733
    %v6450 = vunpack.c.h.b16 %v1733
    %v6451 = vunpack.c.l.b16 %v1734
    %v6452 = vunpack.c.h.b16 %v1734
    %v6453 = vunpack.c.l.b16 %v1735
    %v6454 = vunpack.c.h.b16 %v1735
    %v6455 = vunpack.c.l.b16 %v1736
    %v6456 = vunpack.c.h.b16 %v1736
    %v6457 = vunpack.c.l.b16 %v1737
    %v6458 = vunpack.c.h.b16 %v1737
    %v6459 = vunpack.c.l.b16 %v1738
    %v6460 = vunpack.c.h.b16 %v1738
    %v6461 = vunpack.c.l.b16 %v1739
    %v6462 = vunpack.c.h.b16 %v1739
    %v6463 = vunpack.c.l.b16 %v1740
    %v6464 = vunpack.c.h.b16 %v1740
    %v6465 = vunpack.c.l.b16 %v1741
    %v6466 = vunpack.c.h.b16 %v1741
    %v6467 = vunpack.c.l.b16 %v1742
    %v6468 = vunpack.c.h.b16 %v1742
    %v6469 = vunpack.c.l.b16 %v1743
    %v6470 = vunpack.c.h.b16 %v1743
    %v6471 = vunpack.c.l.b16 %v1744
    %v6472 = vunpack.c.h.b16 %v1744
    %v6473 = vunpack.c.l.b16 %v1745
    %v6474 = vunpack.c.h.b16 %v1745
    %v6475 = vunpack.c.l.b16 %v1746
    %v6476 = vunpack.c.h.b16 %v1746
    %v6477 = vunpack.c.l.b16 %v1747
    %v6478 = vunpack.c.h.b16 %v1747
    %v6479 = vunpack.c.l.b16 %v1748
    %v6480 = vunpack.c.h.b16 %v1748
    %v6481 = vunpack.c.l.b16 %v1749
    %v6482 = vunpack.c.h.b16 %v1749
    %v6483 = vunpack.c.l.b16 %v1750
    %v6484 = vunpack.c.h.b16 %v1750
    %v6485 = vunpack.c.l.b16 %v1751
    %v6486 = vunpack.c.h.b16 %v1751
    %v6487 = vunpack.c.l.b16 %v1752
    %v6488 = vunpack.c.h.b16 %v1752
    %v6489 = vunpack.c.l.b16 %v1753
    %v6490 = vunpack.c.h.b16 %v1753
    %v6491 = vunpack.c.l.b16 %v1754
    %v6492 = vunpack.c.h.b16 %v1754
    %v6493 = vunpack.c.l.b16 %v1755
    %v6494 = vunpack.c.h.b16 %v1755
    %v6495 = vunpack.c.l.b16 %v1756
    %v6496 = vunpack.c.h.b16 %v1756
    %v6497 = vunpack.c.l.b16 %v1757
    %v6498 = vunpack.c.h.b16 %v1757
    %v6499 = vunpack.c.l.b16 %v1758
    %v6500 = vunpack.c.h.b16 %v1758
    %v6501 = vunpack.c.l.b16 %v1759
    %v6502 = vunpack.c.h.b16 %v1759
    %v6503 = vunpack.c.l.b16 %v1760
    %v6504 = vunpack.c.h.b16 %v1760
    %v6505 = vunpack.c.l.b16 %v1761
    %v6506 = vunpack.c.h.b16 %v1761
    %v6507 = vunpack.c.l.b16 %v1762
    %v6508 = vunpack.c.h.b16 %v1762
    %v6509 = vpack.c.b16 %v3381, %v3373
    %v6510 = vpack.c.b16 %v3382, %v3374
    %v6511 = vpack.c.b16 %v3383, %v3375
    %v6512 = vpack.c.b16 %v3384, %v3376
    %v6513 = vpack.c.b16 %v3385, %v3377
    %v6514 = vpack.c.b16 %v3386, %v3378
    %v6515 = vpack.c.b16 %v3387, %v3379
    %v6516 = vpack.c.b16 %v3388, %v3380
    %v6517 = vpack.c.b16 %v3397, %v3389
    %v6518 = vpack.c.b16 %v3398, %v3390
    %v6519 = vpack.c.b16 %v3399, %v3391
    %v6520 = vpack.c.b16 %v3400, %v3392
    %v6521 = vpack.c.b16 %v3401, %v3393
    %v6522 = vpack.c.b16 %v3402, %v3394
    %v6523 = vpack.c.b16 %v3403, %v3395
    %v6524 = vpack.c.b16 %v3404, %v3396
    %v6525 = vpack.c.b16 %v3413, %v3405
    %v6526 = vpack.c.b16 %v3414, %v3406
    %v6527 = vpack.c.b16 %v3415, %v3407
    %v6528 = vpack.c.b16 %v3416, %v3408
    %v6529 = vpack.c.b16 %v3417, %v3409
    %v6530 = vpack.c.b16 %v3418, %v3410
    %v6531 = vpack.c.b16 %v3419, %v3411
    %v6532 = vpack.c.b16 %v3420, %v3412
    %v6533 = vpack.c.b16 %v3429, %v3421
    %v6534 = vpack.c.b16 %v3430, %v3422
    %v6535 = vpack.c.b16 %v3431, %v3423
    %v6536 = vpack.c.b16 %v3432, %v3424
    %v6537 = vpack.c.b16 %v3433, %v3425
    %v6538 = vpack.c.b16 %v3434, %v3426
    %v6539 = vpack.c.b16 %v3435, %v3427
    %v6540 = vpack.c.b16 %v3436, %v3428
    %v6541 = vpack.c.b16 %v3445, %v3437
    %v6542 = vpack.c.b16 %v3446, %v3438
    %v6543 = vpack.c.b16 %v3447, %v3439
    %v6544 = vpack.c.b16 %v3448, %v3440
    %v6545 = vpack.c.b16 %v3449, %v3441
    %v6546 = vpack.c.b16 %v3450, %v3442
    %v6547 = vpack.c.b16 %v3451, %v3443
    %v6548 = vpack.c.b16 %v3452, %v3444
    %v6549 = vpack.c.b16 %v3461, %v3453
    %v6550 = vpack.c.b16 %v3462, %v3454
    %v6551 = vpack.c.b16 %v3463, %v3455
    %v6552 = vpack.c.b16 %v3464, %v3456
    %v6553 = vpack.c.b16 %v3465, %v3457
    %v6554 = vpack.c.b16 %v3466, %v3458
    %v6555 = vpack.c.b16 %v3467, %v3459
    %v6556 = vpack.c.b16 %v3468, %v3460
    %v6557 = vpack.c.b16 %v3477, %v3469
    %v6558 = vpack.c.b16 %v3478, %v3470
    %v6559 = vpack.c.b16 %v3479, %v3471
    %v6560 = vpack.c.b16 %v3480, %v3472
    %v6561 = vpack.c.b16 %v3481, %v3473
    %v6562 = vpack.c.b16 %v3482, %v3474
    %v6563 = vpack.c.b16 %v3483, %v3475
    %v6564 = vpack.c.b16 %v3484, %v3476
    %v6565 = vpack.c.b16 %v3493, %v3485
    %v6566 = vpack.c.b16 %v3494, %v3486
    %v6567 = vpack.c.b16 %v3495, %v3487
    %v6568 = vpack.c.b16 %v3496, %v3488
    %v6569 = vpack.c.b16 %v3497, %v3489
    %v6570 = vpack.c.b16 %v3498, %v3490
    %v6571 = vpack.c.b16 %v3499, %v3491
    %v6572 = vpack.c.b16 %v3500, %v3492
    %v6573 = vpack.c.b16 %v3509, %v3501
    %v6574 = vpack.c.b16 %v3510, %v3502
    %v6575 = vpack.c.b16 %v3511, %v3503
    %v6576 = vpack.c.b16 %v3512, %v3504
    %v6577 = vpack.c.b16 %v3513, %v3505
    %v6578 = vpack.c.b16 %v3514, %v3506
    %v6579 = vpack.c.b16 %v3515, %v3507
    %v6580 = vpack.c.b16 %v3516, %v3508
    %v6581 = vpack.c.b16 %v3525, %v3517
    %v6582 = vpack.c.b16 %v3526, %v3518
    %v6583 = vpack.c.b16 %v3527, %v3519
    %v6584 = vpack.c.b16 %v3528, %v3520
    %v6585 = vpack.c.b16 %v3529, %v3521
    %v6586 = vpack.c.b16 %v3530, %v3522
    %v6587 = vpack.c.b16 %v3531, %v3523
    %v6588 = vpack.c.b16 %v3532, %v3524
    %v6589 = vpack.c.b16 %v3541, %v3533
    %v6590 = vpack.c.b16 %v3542, %v3534
    %v6591 = vpack.c.b16 %v3543, %v3535
    %v6592 = vpack.c.b16 %v3544, %v3536
    %v6593 = vpack.c.b16 %v3545, %v3537
    %v6594 = vpack.c.b16 %v3546, %v3538
    %v6595 = vpack.c.b16 %v3547, %v3539
    %v6596 = vpack.c.b16 %v3548, %v3540
    %v6597 = vpack.c.b16 %v3557, %v3549
    %v6598 = vpack.c.b16 %v3558, %v3550
    %v6599 = vpack.c.b16 %v3559, %v3551
    %v6600 = vpack.c.b16 %v3560, %v3552
    %v6601 = vpack.c.b16 %v3561, %v3553
    %v6602 = vpack.c.b16 %v3562, %v3554
    %v6603 = vpack.c.b16 %v3563, %v3555
    %v6604 = vpack.c.b16 %v3564, %v3556
    %v6605 = vpack.c.b16 %v3573, %v3565
    %v6606 = vpack.c.b16 %v3574, %v3566
    %v6607 = vpack.c.b16 %v3575, %v3567
    %v6608 = vpack.c.b16 %v3576, %v3568
    %v6609 = vpack.c.b16 %v3577, %v3569
    %v6610 = vpack.c.b16 %v3578, %v3570
    %v6611 = vpack.c.b16 %v3579, %v3571
    %v6612 = vpack.c.b16 %v3580, %v3572
    %v6613 = vpack.c.b16 %v3589, %v3581
    %v6614 = vpack.c.b16 %v3590, %v3582
    %v6615 = vpack.c.b16 %v3591, %v3583
    %v6616 = vpack.c.b16 %v3592, %v3584
    %v6617 = vpack.c.b16 %v3593, %v3585
    %v6618 = vpack.c.b16 %v3594, %v3586
    %v6619 = vpack.c.b16 %v3595, %v3587
    %v6620 = vpack.c.b16 %v3596, %v3588
    %v6621 = vpack.c.b16 %v3605, %v3597
    %v6622 = vpack.c.b16 %v3606, %v3598
    %v6623 = vpack.c.b16 %v3607, %v3599
    %v6624 = vpack.c.b16 %v3608, %v3600
    %v6625 = vpack.c.b16 %v3609, %v3601
    %v6626 = vpack.c.b16 %v3610, %v3602
    %v6627 = vpack.c.b16 %v3611, %v3603
    %v6628 = vpack.c.b16 %v3612, %v3604
    %v6629 = vpack.c.b16 %v3621, %v3613
    %v6630 = vpack.c.b16 %v3622, %v3614
    %v6631 = vpack.c.b16 %v3623, %v3615
    %v6632 = vpack.c.b16 %v3624, %v3616
    %v6633 = vpack.c.b16 %v3625, %v3617
    %v6634 = vpack.c.b16 %v3626, %v3618
    %v6635 = vpack.c.b16 %v3627, %v3619
    %v6636 = vpack.c.b16 %v3628, %v3620
    %v6637 = vpack.c.b16 %v3637, %v3629
    %v6638 = vpack.c.b16 %v3638, %v3630
    %v6639 = vpack.c.b16 %v3639, %v3631
    %v6640 = vpack.c.b16 %v3640, %v3632
    %v6641 = vpack.c.b16 %v3641, %v3633
    %v6642 = vpack.c.b16 %v3642, %v3634
    %v6643 = vpack.c.b16 %v3643, %v3635
    %v6644 = vpack.c.b16 %v3644, %v3636
    %v6645 = vpack.c.b16 %v3653, %v3645
    %v6646 = vpack.c.b16 %v3654, %v3646
    %v6647 = vpack.c.b16 %v3655, %v3647
    %v6648 = vpack.c.b16 %v3656, %v3648
    %v6649 = vpack.c.b16 %v3657, %v3649
    %v6650 = vpack.c.b16 %v3658, %v3650
    %v6651 = vpack.c.b16 %v3659, %v3651
    %v6652 = vpack.c.b16 %v3660, %v3652
    %v6653 = vpack.c.b16 %v3669, %v3661
    %v6654 = vpack.c.b16 %v3670, %v3662
    %v6655 = vpack.c.b16 %v3671, %v3663
    %v6656 = vpack.c.b16 %v3672, %v3664
    %v6657 = vpack.c.b16 %v3673, %v3665
    %v6658 = vpack.c.b16 %v3674, %v3666
    %v6659 = vpack.c.b16 %v3675, %v3667
    %v6660 = vpack.c.b16 %v3676, %v3668
    %v6661 = vpack.c.b16 %v3685, %v3677
    %v6662 = vpack.c.b16 %v3686, %v3678
    %v6663 = vpack.c.b16 %v3687, %v3679
    %v6664 = vpack.c.b16 %v3688, %v3680
    %v6665 = vpack.c.b16 %v3689, %v3681
    %v6666 = vpack.c.b16 %v3690, %v3682
    %v6667 = vpack.c.b16 %v3691, %v3683
    %v6668 = vpack.c.b16 %v3692, %v3684
    %v6669 = vpack.c.b16 %v3701, %v3693
    %v6670 = vpack.c.b16 %v3702, %v3694
    %v6671 = vpack.c.b16 %v3703, %v3695
    %v6672 = vpack.c.b16 %v3704, %v3696
    %v6673 = vpack.c.b16 %v3705, %v3697
    %v6674 = vpack.c.b16 %v3706, %v3698
    %v6675 = vpack.c.b16 %v3707, %v3699
    %v6676 = vpack.c.b16 %v3708, %v3700
    %v6677 = vpack.c.b16 %v3717, %v3709
    %v6678 = vpack.c.b16 %v3718, %v3710
    %v6679 = vpack.c.b16 %v3719, %v3711
    %v6680 = vpack.c.b16 %v3720, %v3712
    %v6681 = vpack.c.b16 %v3721, %v3713
    %v6682 = vpack.c.b16 %v3722, %v3714
    %v6683 = vpack.c.b16 %v3723, %v3715
    %v6684 = vpack.c.b16 %v3724, %v3716
    %v6685 = vpack.c.b16 %v3733, %v3725
    %v6686 = vpack.c.b16 %v3734, %v3726
    %v6687 = vpack.c.b16 %v3735, %v3727
    %v6688 = vpack.c.b16 %v3736, %v3728
    %v6689 = vpack.c.b16 %v3737, %v3729
    %v6690 = vpack.c.b16 %v3738, %v3730
    %v6691 = vpack.c.b16 %v3739, %v3731
    %v6692 = vpack.c.b16 %v3740, %v3732
    %v6693 = vpack.c.b16 %v3749, %v3741
    %v6694 = vpack.c.b16 %v3750, %v3742
    %v6695 = vpack.c.b16 %v3751, %v3743
    %v6696 = vpack.c.b16 %v3752, %v3744
    %v6697 = vpack.c.b16 %v3753, %v3745
    %v6698 = vpack.c.b16 %v3754, %v3746
    %v6699 = vpack.c.b16 %v3755, %v3747
    %v6700 = vpack.c.b16 %v3756, %v3748
    %v6701 = vpack.c.b16 %v3765, %v3757
    %v6702 = vpack.c.b16 %v3766, %v3758
    %v6703 = vpack.c.b16 %v3767, %v3759
    %v6704 = vpack.c.b16 %v3768, %v3760
    %v6705 = vpack.c.b16 %v3769, %v3761
    %v6706 = vpack.c.b16 %v3770, %v3762
    %v6707 = vpack.c.b16 %v3771, %v3763
    %v6708 = vpack.c.b16 %v3772, %v3764
    %v6709 = vpack.c.b16 %v3781, %v3773
    %v6710 = vpack.c.b16 %v3782, %v3774
    %v6711 = vpack.c.b16 %v3783, %v3775
    %v6712 = vpack.c.b16 %v3784, %v3776
    %v6713 = vpack.c.b16 %v3785, %v3777
    %v6714 = vpack.c.b16 %v3786, %v3778
    %v6715 = vpack.c.b16 %v3787, %v3779
    %v6716 = vpack.c.b16 %v3788, %v3780
    %v6717 = vpack.c.b16 %v3797, %v3789
    %v6718 = vpack.c.b16 %v3798, %v3790
    %v6719 = vpack.c.b16 %v3799, %v3791
    %v6720 = vpack.c.b16 %v3800, %v3792
    %v6721 = vpack.c.b16 %v3801, %v3793
    %v6722 = vpack.c.b16 %v3802, %v3794
    %v6723 = vpack.c.b16 %v3803, %v3795
    %v6724 = vpack.c.b16 %v3804, %v3796
    %v6725 = vpack.c.b16 %v3813, %v3805
    %v6726 = vpack.c.b16 %v3814, %v3806
    %v6727 = vpack.c.b16 %v3815, %v3807
    %v6728 = vpack.c.b16 %v3816, %v3808
    %v6729 = vpack.c.b16 %v3817, %v3809
    %v6730 = vpack.c.b16 %v3818, %v3810
    %v6731 = vpack.c.b16 %v3819, %v3811
    %v6732 = vpack.c.b16 %v3820, %v3812
    %v6733 = vpack.c.b16 %v3829, %v3821
    %v6734 = vpack.c.b16 %v3830, %v3822
    %v6735 = vpack.c.b16 %v3831, %v3823
    %v6736 = vpack.c.b16 %v3832, %v3824
    %v6737 = vpack.c.b16 %v3833, %v3825
    %v6738 = vpack.c.b16 %v3834, %v3826
    %v6739 = vpack.c.b16 %v3835, %v3827
    %v6740 = vpack.c.b16 %v3836, %v3828
    %v6741 = vpack.c.b16 %v3845, %v3837
    %v6742 = vpack.c.b16 %v3846, %v3838
    %v6743 = vpack.c.b16 %v3847, %v3839
    %v6744 = vpack.c.b16 %v3848, %v3840
    %v6745 = vpack.c.b16 %v3849, %v3841
    %v6746 = vpack.c.b16 %v3850, %v3842
    %v6747 = vpack.c.b16 %v3851, %v3843
    %v6748 = vpack.c.b16 %v3852, %v3844
    %v6749 = vpack.c.b16 %v3861, %v3853
    %v6750 = vpack.c.b16 %v3862, %v3854
    %v6751 = vpack.c.b16 %v3863, %v3855
    %v6752 = vpack.c.b16 %v3864, %v3856
    %v6753 = vpack.c.b16 %v3865, %v3857
    %v6754 = vpack.c.b16 %v3866, %v3858
    %v6755 = vpack.c.b16 %v3867, %v3859
    %v6756 = vpack.c.b16 %v3868, %v3860
    %v6757 = vpack.c.b16 %v3877, %v3869
    %v6758 = vpack.c.b16 %v3878, %v3870
    %v6759 = vpack.c.b16 %v3879, %v3871
    %v6760 = vpack.c.b16 %v3880, %v3872
    %v6761 = vpack.c.b16 %v3881, %v3873
    %v6762 = vpack.c.b16 %v3882, %v3874
    %v6763 = vpack.c.b16 %v3883, %v3875
    %v6764 = vpack.c.b16 %v3884, %v3876
    %v6765 = vpack.c.b16 %v3893, %v3885
    %v6766 = vpack.c.b16 %v3894, %v3886
    %v6767 = vpack.c.b16 %v3895, %v3887
    %v6768 = vpack.c.b16 %v3896, %v3888
    %v6769 = vpack.c.b16 %v3897, %v3889
    %v6770 = vpack.c.b16 %v3898, %v3890
    %v6771 = vpack.c.b16 %v3899, %v3891
    %v6772 = vpack.c.b16 %v3900, %v3892
    %v6773 = vpack.c.b16 %v3909, %v3901
    %v6774 = vpack.c.b16 %v3910, %v3902
    %v6775 = vpack.c.b16 %v3911, %v3903
    %v6776 = vpack.c.b16 %v3912, %v3904
    %v6777 = vpack.c.b16 %v3913, %v3905
    %v6778 = vpack.c.b16 %v3914, %v3906
    %v6779 = vpack.c.b16 %v3915, %v3907
    %v6780 = vpack.c.b16 %v3916, %v3908
    %v6781 = vpack.c.b16 %v3925, %v3917
    %v6782 = vpack.c.b16 %v3926, %v3918
    %v6783 = vpack.c.b16 %v3927, %v3919
    %v6784 = vpack.c.b16 %v3928, %v3920
    %v6785 = vpack.c.b16 %v3929, %v3921
    %v6786 = vpack.c.b16 %v3930, %v3922
    %v6787 = vpack.c.b16 %v3931, %v3923
    %v6788 = vpack.c.b16 %v3932, %v3924
    %v6789 = vpack.c.b16 %v3941, %v3933
    %v6790 = vpack.c.b16 %v3942, %v3934
    %v6791 = vpack.c.b16 %v3943, %v3935
    %v6792 = vpack.c.b16 %v3944, %v3936
    %v6793 = vpack.c.b16 %v3945, %v3937
    %v6794 = vpack.c.b16 %v3946, %v3938
    %v6795 = vpack.c.b16 %v3947, %v3939
    %v6796 = vpack.c.b16 %v3948, %v3940
    %v6797 = vpack.c.b16 %v3957, %v3949
    %v6798 = vpack.c.b16 %v3958, %v3950
    %v6799 = vpack.c.b16 %v3959, %v3951
    %v6800 = vpack.c.b16 %v3960, %v3952
    %v6801 = vpack.c.b16 %v3961, %v3953
    %v6802 = vpack.c.b16 %v3962, %v3954
    %v6803 = vpack.c.b16 %v3963, %v3955
    %v6804 = vpack.c.b16 %v3964, %v3956
    %v6805 = vpack.c.b16 %v3973, %v3965
    %v6806 = vpack.c.b16 %v3974, %v3966
    %v6807 = vpack.c.b16 %v3975, %v3967
    %v6808 = vpack.c.b16 %v3976, %v3968
    %v6809 = vpack.c.b16 %v3977, %v3969
    %v6810 = vpack.c.b16 %v3978, %v3970
    %v6811 = vpack.c.b16 %v3979, %v3971
    %v6812 = vpack.c.b16 %v3980, %v3972
    %v6813 = vpack.c.b16 %v3989, %v3981
    %v6814 = vpack.c.b16 %v3990, %v3982
    %v6815 = vpack.c.b16 %v3991, %v3983
    %v6816 = vpack.c.b16 %v3992, %v3984
    %v6817 = vpack.c.b16 %v3993, %v3985
    %v6818 = vpack.c.b16 %v3994, %v3986
    %v6819 = vpack.c.b16 %v3995, %v3987
    %v6820 = vpack.c.b16 %v3996, %v3988
    %v6821 = vpack.c.b16 %v4005, %v3997
    %v6822 = vpack.c.b16 %v4006, %v3998
    %v6823 = vpack.c.b16 %v4007, %v3999
    %v6824 = vpack.c.b16 %v4008, %v4000
    %v6825 = vpack.c.b16 %v4009, %v4001
    %v6826 = vpack.c.b16 %v4010, %v4002
    %v6827 = vpack.c.b16 %v4011, %v4003
    %v6828 = vpack.c.b16 %v4012, %v4004
    %v6829 = vpack.c.b16 %v4021, %v4013
    %v6830 = vpack.c.b16 %v4022, %v4014
    %v6831 = vpack.c.b16 %v4023, %v4015
    %v6832 = vpack.c.b16 %v4024, %v4016
    %v6833 = vpack.c.b16 %v4025, %v4017
    %v6834 = vpack.c.b16 %v4026, %v4018
    %v6835 = vpack.c.b16 %v4027, %v4019
    %v6836 = vpack.c.b16 %v4028, %v4020
    %v6837 = vpack.c.b16 %v4037, %v4029
    %v6838 = vpack.c.b16 %v4038, %v4030
    %v6839 = vpack.c.b16 %v4039, %v4031
    %v6840 = vpack.c.b16 %v4040, %v4032
    %v6841 = vpack.c.b16 %v4041, %v4033
    %v6842 = vpack.c.b16 %v4042, %v4034
    %v6843 = vpack.c.b16 %v4043, %v4035
    %v6844 = vpack.c.b16 %v4044, %v4036
    %v6845 = vpack.c.b16 %v4053, %v4045
    %v6846 = vpack.c.b16 %v4054, %v4046
    %v6847 = vpack.c.b16 %v4055, %v4047
    %v6848 = vpack.c.b16 %v4056, %v4048
    %v6849 = vpack.c.b16 %v4057, %v4049
    %v6850 = vpack.c.b16 %v4058, %v4050
    %v6851 = vpack.c.b16 %v4059, %v4051
    %v6852 = vpack.c.b16 %v4060, %v4052
    %v6853 = vpack.c.b16 %v4069, %v4061
    %v6854 = vpack.c.b16 %v4070, %v4062
    %v6855 = vpack.c.b16 %v4071, %v4063
    %v6856 = vpack.c.b16 %v4072, %v4064
    %v6857 = vpack.c.b16 %v4073, %v4065
    %v6858 = vpack.c.b16 %v4074, %v4066
    %v6859 = vpack.c.b16 %v4075, %v4067
    %v6860 = vpack.c.b16 %v4076, %v4068
    %v6861 = vpack.c.b16 %v4085, %v4077
    %v6862 = vpack.c.b16 %v4086, %v4078
    %v6863 = vpack.c.b16 %v4087, %v4079
    %v6864 = vpack.c.b16 %v4088, %v4080
    %v6865 = vpack.c.b16 %v4089, %v4081
    %v6866 = vpack.c.b16 %v4090, %v4082
    %v6867 = vpack.c.b16 %v4091, %v4083
    %v6868 = vpack.c.b16 %v4092, %v4084
    %v6869 = vpack.c.b16 %v4101, %v4093
    %v6870 = vpack.c.b16 %v4102, %v4094
    %v6871 = vpack.c.b16 %v4103, %v4095
    %v6872 = vpack.c.b16 %v4104, %v4096
    %v6873 = vpack.c.b16 %v4105, %v4097
    %v6874 = vpack.c.b16 %v4106, %v4098
    %v6875 = vpack.c.b16 %v4107, %v4099
    %v6876 = vpack.c.b16 %v4108, %v4100
    %v6877 = vpack.c.b16 %v4117, %v4109
    %v6878 = vpack.c.b16 %v4118, %v4110
    %v6879 = vpack.c.b16 %v4119, %v4111
    %v6880 = vpack.c.b16 %v4120, %v4112
    %v6881 = vpack.c.b16 %v4121, %v4113
    %v6882 = vpack.c.b16 %v4122, %v4114
    %v6883 = vpack.c.b16 %v4123, %v4115
    %v6884 = vpack.c.b16 %v4124, %v4116
    %v6885 = vpack.c.b16 %v4133, %v4125
    %v6886 = vpack.c.b16 %v4134, %v4126
    %v6887 = vpack.c.b16 %v4135, %v4127
    %v6888 = vpack.c.b16 %v4136, %v4128
    %v6889 = vpack.c.b16 %v4137, %v4129
    %v6890 = vpack.c.b16 %v4138, %v4130
    %v6891 = vpack.c.b16 %v4139, %v4131
    %v6892 = vpack.c.b16 %v4140, %v4132
    %v6893 = vpack.c.b16 %v4149, %v4141
    %v6894 = vpack.c.b16 %v4150, %v4142
    %v6895 = vpack.c.b16 %v4151, %v4143
    %v6896 = vpack.c.b16 %v4152, %v4144
    %v6897 = vpack.c.b16 %v4153, %v4145
    %v6898 = vpack.c.b16 %v4154, %v4146
    %v6899 = vpack.c.b16 %v4155, %v4147
    %v6900 = vpack.c.b16 %v4156, %v4148
    %v6901 = vpack.c.b16 %v4165, %v4157
    %v6902 = vpack.c.b16 %v4166, %v4158
    %v6903 = vpack.c.b16 %v4167, %v4159
    %v6904 = vpack.c.b16 %v4168, %v4160
    %v6905 = vpack.c.b16 %v4169, %v4161
    %v6906 = vpack.c.b16 %v4170, %v4162
    %v6907 = vpack.c.b16 %v4171, %v4163
    %v6908 = vpack.c.b16 %v4172, %v4164
    %v6909 = vpack.c.b16 %v4181, %v4173
    %v6910 = vpack.c.b16 %v4182, %v4174
    %v6911 = vpack.c.b16 %v4183, %v4175
    %v6912 = vpack.c.b16 %v4184, %v4176
    %v6913 = vpack.c.b16 %v4185, %v4177
    %v6914 = vpack.c.b16 %v4186, %v4178
    %v6915 = vpack.c.b16 %v4187, %v4179
    %v6916 = vpack.c.b16 %v4188, %v4180
    %v6917 = vpack.c.b16 %v4197, %v4189
    %v6918 = vpack.c.b16 %v4198, %v4190
    %v6919 = vpack.c.b16 %v4199, %v4191
    %v6920 = vpack.c.b16 %v4200, %v4192
    %v6921 = vpack.c.b16 %v4201, %v4193
    %v6922 = vpack.c.b16 %v4202, %v4194
    %v6923 = vpack.c.b16 %v4203, %v4195
    %v6924 = vpack.c.b16 %v4204, %v4196
    %v6925 = vpack.c.b16 %v4213, %v4205
    %v6926 = vpack.c.b16 %v4214, %v4206
    %v6927 = vpack.c.b16 %v4215, %v4207
    %v6928 = vpack.c.b16 %v4216, %v4208
    %v6929 = vpack.c.b16 %v4217, %v4209
    %v6930 = vpack.c.b16 %v4218, %v4210
    %v6931 = vpack.c.b16 %v4219, %v4211
    %v6932 = vpack.c.b16 %v4220, %v4212
    %v6933 = vpack.c.b16 %v4229, %v4221
    %v6934 = vpack.c.b16 %v4230, %v4222
    %v6935 = vpack.c.b16 %v4231, %v4223
    %v6936 = vpack.c.b16 %v4232, %v4224
    %v6937 = vpack.c.b16 %v4233, %v4225
    %v6938 = vpack.c.b16 %v4234, %v4226
    %v6939 = vpack.c.b16 %v4235, %v4227
    %v6940 = vpack.c.b16 %v4236, %v4228
    %v6941 = vpack.c.b16 %v4245, %v4237
    %v6942 = vpack.c.b16 %v4246, %v4238
    %v6943 = vpack.c.b16 %v4247, %v4239
    %v6944 = vpack.c.b16 %v4248, %v4240
    %v6945 = vpack.c.b16 %v4249, %v4241
    %v6946 = vpack.c.b16 %v4250, %v4242
    %v6947 = vpack.c.b16 %v4251, %v4243
    %v6948 = vpack.c.b16 %v4252, %v4244
    %v6949 = vpack.c.b16 %v4261, %v4253
    %v6950 = vpack.c.b16 %v4262, %v4254
    %v6951 = vpack.c.b16 %v4263, %v4255
    %v6952 = vpack.c.b16 %v4264, %v4256
    %v6953 = vpack.c.b16 %v4265, %v4257
    %v6954 = vpack.c.b16 %v4266, %v4258
    %v6955 = vpack.c.b16 %v4267, %v4259
    %v6956 = vpack.c.b16 %v4268, %v4260
    %v6957 = vpack.c.b16 %v4277, %v4269
    %v6958 = vpack.c.b16 %v4278, %v4270
    %v6959 = vpack.c.b16 %v4279, %v4271
    %v6960 = vpack.c.b16 %v4280, %v4272
    %v6961 = vpack.c.b16 %v4281, %v4273
    %v6962 = vpack.c.b16 %v4282, %v4274
    %v6963 = vpack.c.b16 %v4283, %v4275
    %v6964 = vpack.c.b16 %v4284, %v4276
    %v6965 = vpack.c.b16 %v4293, %v4285
    %v6966 = vpack.c.b16 %v4294, %v4286
    %v6967 = vpack.c.b16 %v4295, %v4287
    %v6968 = vpack.c.b16 %v4296, %v4288
    %v6969 = vpack.c.b16 %v4297, %v4289
    %v6970 = vpack.c.b16 %v4298, %v4290
    %v6971 = vpack.c.b16 %v4299, %v4291
    %v6972 = vpack.c.b16 %v4300, %v4292
    %v6973 = vpack.c.b16 %v4309, %v4301
    %v6974 = vpack.c.b16 %v4310, %v4302
    %v6975 = vpack.c.b16 %v4311, %v4303
    %v6976 = vpack.c.b16 %v4312, %v4304
    %v6977 = vpack.c.b16 %v4313, %v4305
    %v6978 = vpack.c.b16 %v4314, %v4306
    %v6979 = vpack.c.b16 %v4315, %v4307
    %v6980 = vpack.c.b16 %v4316, %v4308
    %v6981 = vpack.c.b16 %v4325, %v4317
    %v6982 = vpack.c.b16 %v4326, %v4318
    %v6983 = vpack.c.b16 %v4327, %v4319
    %v6984 = vpack.c.b16 %v4328, %v4320
    %v6985 = vpack.c.b16 %v4329, %v4321
    %v6986 = vpack.c.b16 %v4330, %v4322
    %v6987 = vpack.c.b16 %v4331, %v4323
    %v6988 = vpack.c.b16 %v4332, %v4324
    %v6989 = vpack.c.b16 %v4341, %v4333
    %v6990 = vpack.c.b16 %v4342, %v4334
    %v6991 = vpack.c.b16 %v4343, %v4335
    %v6992 = vpack.c.b16 %v4344, %v4336
    %v6993 = vpack.c.b16 %v4345, %v4337
    %v6994 = vpack.c.b16 %v4346, %v4338
    %v6995 = vpack.c.b16 %v4347, %v4339
    %v6996 = vpack.c.b16 %v4348, %v4340
    %v6997 = vpack.c.b16 %v4357, %v4349
    %v6998 = vpack.c.b16 %v4358, %v4350
    %v6999 = vpack.c.b16 %v4359, %v4351
    %v7000 = vpack.c.b16 %v4360, %v4352
    %v7001 = vpack.c.b16 %v4361, %v4353
    %v7002 = vpack.c.b16 %v4362, %v4354
    %v7003 = vpack.c.b16 %v4363, %v4355
    %v7004 = vpack.c.b16 %v4364, %v4356
    %v7005 = vpack.c.b16 %v4373, %v4365
    %v7006 = vpack.c.b16 %v4374, %v4366
    %v7007 = vpack.c.b16 %v4375, %v4367
    %v7008 = vpack.c.b16 %v4376, %v4368
    %v7009 = vpack.c.b16 %v4377, %v4369
    %v7010 = vpack.c.b16 %v4378, %v4370
    %v7011 = vpack.c.b16 %v4379, %v4371
    %v7012 = vpack.c.b16 %v4380, %v4372
    %v7013 = vpack.c.b16 %v4389, %v4381
    %v7014 = vpack.c.b16 %v4390, %v4382
    %v7015 = vpack.c.b16 %v4391, %v4383
    %v7016 = vpack.c.b16 %v4392, %v4384
    %v7017 = vpack.c.b16 %v4393, %v4385
    %v7018 = vpack.c.b16 %v4394, %v4386
    %v7019 = vpack.c.b16 %v4395, %v4387
    %v7020 = vpack.c.b16 %v4396, %v4388
    %v7021 = vpack.c.b16 %v4405, %v4397
    %v7022 = vpack.c.b16 %v4406, %v4398
    %v7023 = vpack.c.b16 %v4407, %v4399
    %v7024 = vpack.c.b16 %v4408, %v4400
    %v7025 = vpack.c.b16 %v4409, %v4401
    %v7026 = vpack.c.b16 %v4410, %v4402
    %v7027 = vpack.c.b16 %v4411, %v4403
    %v7028 = vpack.c.b16 %v4412, %v4404
    %v7029 = vpack.c.b16 %v4421, %v4413
    %v7030 = vpack.c.b16 %v4422, %v4414
    %v7031 = vpack.c.b16 %v4423, %v4415
    %v7032 = vpack.c.b16 %v4424, %v4416
    %v7033 = vpack.c.b16 %v4425, %v4417
    %v7034 = vpack.c.b16 %v4426, %v4418
    %v7035 = vpack.c.b16 %v4427, %v4419
    %v7036 = vpack.c.b16 %v4428, %v4420
    %v7037 = vpack.c.b16 %v4437, %v4429
    %v7038 = vpack.c.b16 %v4438, %v4430
    %v7039 = vpack.c.b16 %v4439, %v4431
    %v7040 = vpack.c.b16 %v4440, %v4432
    %v7041 = vpack.c.b16 %v4441, %v4433
    %v7042 = vpack.c.b16 %v4442, %v4434
    %v7043 = vpack.c.b16 %v4443, %v4435
    %v7044 = vpack.c.b16 %v4444, %v4436
    %v7045 = vpack.c.b16 %v4453, %v4445
    %v7046 = vpack.c.b16 %v4454, %v4446
    %v7047 = vpack.c.b16 %v4455, %v4447
    %v7048 = vpack.c.b16 %v4456, %v4448
    %v7049 = vpack.c.b16 %v4457, %v4449
    %v7050 = vpack.c.b16 %v4458, %v4450
    %v7051 = vpack.c.b16 %v4459, %v4451
    %v7052 = vpack.c.b16 %v4460, %v4452
    %v7053 = vpack.c.b16 %v4469, %v4461
    %v7054 = vpack.c.b16 %v4470, %v4462
    %v7055 = vpack.c.b16 %v4471, %v4463
    %v7056 = vpack.c.b16 %v4472, %v4464
    %v7057 = vpack.c.b16 %v4473, %v4465
    %v7058 = vpack.c.b16 %v4474, %v4466
    %v7059 = vpack.c.b16 %v4475, %v4467
    %v7060 = vpack.c.b16 %v4476, %v4468
    %v7061 = vpack.c.b16 %v4485, %v4477
    %v7062 = vpack.c.b16 %v4486, %v4478
    %v7063 = vpack.c.b16 %v4487, %v4479
    %v7064 = vpack.c.b16 %v4488, %v4480
    %v7065 = vpack.c.b16 %v4489, %v4481
    %v7066 = vpack.c.b16 %v4490, %v4482
    %v7067 = vpack.c.b16 %v4491, %v4483
    %v7068 = vpack.c.b16 %v4492, %v4484
    %v7069 = vpack.c.b16 %v4501, %v4493
    %v7070 = vpack.c.b16 %v4502, %v4494
    %v7071 = vpack.c.b16 %v4503, %v4495
    %v7072 = vpack.c.b16 %v4504, %v4496
    %v7073 = vpack.c.b16 %v4505, %v4497
    %v7074 = vpack.c.b16 %v4506, %v4498
    %v7075 = vpack.c.b16 %v4507, %v4499
    %v7076 = vpack.c.b16 %v4508, %v4500
    %v7077 = vpack.c.b16 %v4517, %v4509
    %v7078 = vpack.c.b16 %v4518, %v4510
    %v7079 = vpack.c.b16 %v4519, %v4511
    %v7080 = vpack.c.b16 %v4520, %v4512
    %v7081 = vpack.c.b16 %v4521, %v4513
    %v7082 = vpack.c.b16 %v4522, %v4514
    %v7083 = vpack.c.b16 %v4523, %v4515
    %v7084 = vpack.c.b16 %v4524, %v4516
    %v7085 = vpack.c.b16 %v4533, %v4525
    %v7086 = vpack.c.b16 %v4534, %v4526
    %v7087 = vpack.c.b16 %v4535, %v4527
    %v7088 = vpack.c.b16 %v4536, %v4528
    %v7089 = vpack.c.b16 %v4537, %v4529
    %v7090 = vpack.c.b16 %v4538, %v4530
    %v7091 = vpack.c.b16 %v4539, %v4531
    %v7092 = vpack.c.b16 %v4540, %v4532
    %v7093 = vpack.c.b16 %v4549, %v4541
    %v7094 = vpack.c.b16 %v4550, %v4542
    %v7095 = vpack.c.b16 %v4551, %v4543
    %v7096 = vpack.c.b16 %v4552, %v4544
    %v7097 = vpack.c.b16 %v4553, %v4545
    %v7098 = vpack.c.b16 %v4554, %v4546
    %v7099 = vpack.c.b16 %v4555, %v4547
    %v7100 = vpack.c.b16 %v4556, %v4548
    %v7101 = vpack.c.b16 %v4565, %v4557
    %v7102 = vpack.c.b16 %v4566, %v4558
    %v7103 = vpack.c.b16 %v4567, %v4559
    %v7104 = vpack.c.b16 %v4568, %v4560
    %v7105 = vpack.c.b16 %v4569, %v4561
    %v7106 = vpack.c.b16 %v4570, %v4562
    %v7107 = vpack.c.b16 %v4571, %v4563
    %v7108 = vpack.c.b16 %v4572, %v4564
    %v7109 = vpack.c.b16 %v4581, %v4573
    %v7110 = vpack.c.b16 %v4582, %v4574
    %v7111 = vpack.c.b16 %v4583, %v4575
    %v7112 = vpack.c.b16 %v4584, %v4576
    %v7113 = vpack.c.b16 %v4585, %v4577
    %v7114 = vpack.c.b16 %v4586, %v4578
    %v7115 = vpack.c.b16 %v4587, %v4579
    %v7116 = vpack.c.b16 %v4588, %v4580
    %v7117 = vpack.c.b16 %v4597, %v4589
    %v7118 = vpack.c.b16 %v4598, %v4590
    %v7119 = vpack.c.b16 %v4599, %v4591
    %v7120 = vpack.c.b16 %v4600, %v4592
    %v7121 = vpack.c.b16 %v4601, %v4593
    %v7122 = vpack.c.b16 %v4602, %v4594
    %v7123 = vpack.c.b16 %v4603, %v4595
    %v7124 = vpack.c.b16 %v4604, %v4596
    %v7125 = vpack.c.b16 %v4613, %v4605
    %v7126 = vpack.c.b16 %v4614, %v4606
    %v7127 = vpack.c.b16 %v4615, %v4607
    %v7128 = vpack.c.b16 %v4616, %v4608
    %v7129 = vpack.c.b16 %v4617, %v4609
    %v7130 = vpack.c.b16 %v4618, %v4610
    %v7131 = vpack.c.b16 %v4619, %v4611
    %v7132 = vpack.c.b16 %v4620, %v4612
    %v7133 = vpack.c.b16 %v4629, %v4621
    %v7134 = vpack.c.b16 %v4630, %v4622
    %v7135 = vpack.c.b16 %v4631, %v4623
    %v7136 = vpack.c.b16 %v4632, %v4624
    %v7137 = vpack.c.b16 %v4633, %v4625
    %v7138 = vpack.c.b16 %v4634, %v4626
    %v7139 = vpack.c.b16 %v4635, %v4627
    %v7140 = vpack.c.b16 %v4636, %v4628
    %v7141 = vpack.c.b16 %v4645, %v4637
    %v7142 = vpack.c.b16 %v4646, %v4638
    %v7143 = vpack.c.b16 %v4647, %v4639
    %v7144 = vpack.c.b16 %v4648, %v4640
    %v7145 = vpack.c.b16 %v4649, %v4641
    %v7146 = vpack.c.b16 %v4650, %v4642
    %v7147 = vpack.c.b16 %v4651, %v4643
    %v7148 = vpack.c.b16 %v4652, %v4644
    %v7149 = vpack.c.b16 %v4661, %v4653
    %v7150 = vpack.c.b16 %v4662, %v4654
    %v7151 = vpack.c.b16 %v4663, %v4655
    %v7152 = vpack.c.b16 %v4664, %v4656
    %v7153 = vpack.c.b16 %v4665, %v4657
    %v7154 = vpack.c.b16 %v4666, %v4658
    %v7155 = vpack.c.b16 %v4667, %v4659
    %v7156 = vpack.c.b16 %v4668, %v4660
    %v7157 = vpack.c.b16 %v4677, %v4669
    %v7158 = vpack.c.b16 %v4678, %v4670
    %v7159 = vpack.c.b16 %v4679, %v4671
    %v7160 = vpack.c.b16 %v4680, %v4672
    %v7161 = vpack.c.b16 %v4681, %v4673
    %v7162 = vpack.c.b16 %v4682, %v4674
    %v7163 = vpack.c.b16 %v4683, %v4675
    %v7164 = vpack.c.b16 %v4684, %v4676
    %v7165 = vpack.c.b16 %v4693, %v4685
    %v7166 = vpack.c.b16 %v4694, %v4686
    %v7167 = vpack.c.b16 %v4695, %v4687
    %v7168 = vpack.c.b16 %v4696, %v4688
    %v7169 = vpack.c.b16 %v4697, %v4689
    %v7170 = vpack.c.b16 %v4698, %v4690
    %v7171 = vpack.c.b16 %v4699, %v4691
    %v7172 = vpack.c.b16 %v4700, %v4692
    %v7173 = vpack.c.b16 %v4709, %v4701
    %v7174 = vpack.c.b16 %v4710, %v4702
    %v7175 = vpack.c.b16 %v4711, %v4703
    %v7176 = vpack.c.b16 %v4712, %v4704
    %v7177 = vpack.c.b16 %v4713, %v4705
    %v7178 = vpack.c.b16 %v4714, %v4706
    %v7179 = vpack.c.b16 %v4715, %v4707
    %v7180 = vpack.c.b16 %v4716, %v4708
    %v7181 = vpack.c.b16 %v4725, %v4717
    %v7182 = vpack.c.b16 %v4726, %v4718
    %v7183 = vpack.c.b16 %v4727, %v4719
    %v7184 = vpack.c.b16 %v4728, %v4720
    %v7185 = vpack.c.b16 %v4729, %v4721
    %v7186 = vpack.c.b16 %v4730, %v4722
    %v7187 = vpack.c.b16 %v4731, %v4723
    %v7188 = vpack.c.b16 %v4732, %v4724
    %v7189 = vpack.c.b16 %v4741, %v4733
    %v7190 = vpack.c.b16 %v4742, %v4734
    %v7191 = vpack.c.b16 %v4743, %v4735
    %v7192 = vpack.c.b16 %v4744, %v4736
    %v7193 = vpack.c.b16 %v4745, %v4737
    %v7194 = vpack.c.b16 %v4746, %v4738
    %v7195 = vpack.c.b16 %v4747, %v4739
    %v7196 = vpack.c.b16 %v4748, %v4740
    %v7197 = vpack.c.b16 %v4757, %v4749
    %v7198 = vpack.c.b16 %v4758, %v4750
    %v7199 = vpack.c.b16 %v4759, %v4751
    %v7200 = vpack.c.b16 %v4760, %v4752
    %v7201 = vpack.c.b16 %v4761, %v4753
    %v7202 = vpack.c.b16 %v4762, %v4754
    %v7203 = vpack.c.b16 %v4763, %v4755
    %v7204 = vpack.c.b16 %v4764, %v4756
    %v7205 = vpack.c.b16 %v4773, %v4765
    %v7206 = vpack.c.b16 %v4774, %v4766
    %v7207 = vpack.c.b16 %v4775, %v4767
    %v7208 = vpack.c.b16 %v4776, %v4768
    %v7209 = vpack.c.b16 %v4777, %v4769
    %v7210 = vpack.c.b16 %v4778, %v4770
    %v7211 = vpack.c.b16 %v4779, %v4771
    %v7212 = vpack.c.b16 %v4780, %v4772
    %v7213 = vpack.c.b16 %v4789, %v4781
    %v7214 = vpack.c.b16 %v4790, %v4782
    %v7215 = vpack.c.b16 %v4791, %v4783
    %v7216 = vpack.c.b16 %v4792, %v4784
    %v7217 = vpack.c.b16 %v4793, %v4785
    %v7218 = vpack.c.b16 %v4794, %v4786
    %v7219 = vpack.c.b16 %v4795, %v4787
    %v7220 = vpack.c.b16 %v4796, %v4788
    %v7221 = vpack.c.b16 %v4805, %v4797
    %v7222 = vpack.c.b16 %v4806, %v4798
    %v7223 = vpack.c.b16 %v4807, %v4799
    %v7224 = vpack.c.b16 %v4808, %v4800
    %v7225 = vpack.c.b16 %v4809, %v4801
    %v7226 = vpack.c.b16 %v4810, %v4802
    %v7227 = vpack.c.b16 %v4811, %v4803
    %v7228 = vpack.c.b16 %v4812, %v4804
    %v7229 = vpack.c.b16 %v4821, %v4813
    %v7230 = vpack.c.b16 %v4822, %v4814
    %v7231 = vpack.c.b16 %v4823, %v4815
    %v7232 = vpack.c.b16 %v4824, %v4816
    %v7233 = vpack.c.b16 %v4825, %v4817
    %v7234 = vpack.c.b16 %v4826, %v4818
    %v7235 = vpack.c.b16 %v4827, %v4819
    %v7236 = vpack.c.b16 %v4828, %v4820
    %v7237 = vpack.c.b16 %v4837, %v4829
    %v7238 = vpack.c.b16 %v4838, %v4830
    %v7239 = vpack.c.b16 %v4839, %v4831
    %v7240 = vpack.c.b16 %v4840, %v4832
    %v7241 = vpack.c.b16 %v4841, %v4833
    %v7242 = vpack.c.b16 %v4842, %v4834
    %v7243 = vpack.c.b16 %v4843, %v4835
    %v7244 = vpack.c.b16 %v4844, %v4836
    %v7245 = vpack.c.b16 %v4853, %v4845
    %v7246 = vpack.c.b16 %v4854, %v4846
    %v7247 = vpack.c.b16 %v4855, %v4847
    %v7248 = vpack.c.b16 %v4856, %v4848
    %v7249 = vpack.c.b16 %v4857, %v4849
    %v7250 = vpack.c.b16 %v4858, %v4850
    %v7251 = vpack.c.b16 %v4859, %v4851
    %v7252 = vpack.c.b16 %v4860, %v4852
    %v7253 = vpack.c.b16 %v4869, %v4861
    %v7254 = vpack.c.b16 %v4870, %v4862
    %v7255 = vpack.c.b16 %v4871, %v4863
    %v7256 = vpack.c.b16 %v4872, %v4864
    %v7257 = vpack.c.b16 %v4873, %v4865
    %v7258 = vpack.c.b16 %v4874, %v4866
    %v7259 = vpack.c.b16 %v4875, %v4867
    %v7260 = vpack.c.b16 %v4876, %v4868
    %v7261 = vpack.c.b16 %v4885, %v4877
    %v7262 = vpack.c.b16 %v4886, %v4878
    %v7263 = vpack.c.b16 %v4887, %v4879
    %v7264 = vpack.c.b16 %v4888, %v4880
    %v7265 = vpack.c.b16 %v4889, %v4881
    %v7266 = vpack.c.b16 %v4890, %v4882
    %v7267 = vpack.c.b16 %v4891, %v4883
    %v7268 = vpack.c.b16 %v4892, %v4884
    %v7269 = vpack.c.b16 %v4901, %v4893
    %v7270 = vpack.c.b16 %v4902, %v4894
    %v7271 = vpack.c.b16 %v4903, %v4895
    %v7272 = vpack.c.b16 %v4904, %v4896
    %v7273 = vpack.c.b16 %v4905, %v4897
    %v7274 = vpack.c.b16 %v4906, %v4898
    %v7275 = vpack.c.b16 %v4907, %v4899
    %v7276 = vpack.c.b16 %v4908, %v4900
    %v7277 = vpack.c.b16 %v4917, %v4909
    %v7278 = vpack.c.b16 %v4918, %v4910
    %v7279 = vpack.c.b16 %v4919, %v4911
    %v7280 = vpack.c.b16 %v4920, %v4912
    %v7281 = vpack.c.b16 %v4921, %v4913
    %v7282 = vpack.c.b16 %v4922, %v4914
    %v7283 = vpack.c.b16 %v4923, %v4915
    %v7284 = vpack.c.b16 %v4924, %v4916
    %v7285 = vpack.c.b16 %v4933, %v4925
    %v7286 = vpack.c.b16 %v4934, %v4926
    %v7287 = vpack.c.b16 %v4935, %v4927
    %v7288 = vpack.c.b16 %v4936, %v4928
    %v7289 = vpack.c.b16 %v4937, %v4929
    %v7290 = vpack.c.b16 %v4938, %v4930
    %v7291 = vpack.c.b16 %v4939, %v4931
    %v7292 = vpack.c.b16 %v4940, %v4932
    %v7293 = vpack.c.b16 %v4949, %v4941
    %v7294 = vpack.c.b16 %v4950, %v4942
    %v7295 = vpack.c.b16 %v4951, %v4943
    %v7296 = vpack.c.b16 %v4952, %v4944
    %v7297 = vpack.c.b16 %v4953, %v4945
    %v7298 = vpack.c.b16 %v4954, %v4946
    %v7299 = vpack.c.b16 %v4955, %v4947
    %v7300 = vpack.c.b16 %v4956, %v4948
    %v7301 = vpack.c.b16 %v4965, %v4957
    %v7302 = vpack.c.b16 %v4966, %v4958
    %v7303 = vpack.c.b16 %v4967, %v4959
    %v7304 = vpack.c.b16 %v4968, %v4960
    %v7305 = vpack.c.b16 %v4969, %v4961
    %v7306 = vpack.c.b16 %v4970, %v4962
    %v7307 = vpack.c.b16 %v4971, %v4963
    %v7308 = vpack.c.b16 %v4972, %v4964
    %v7309 = vpack.c.b16 %v4981, %v4973
    %v7310 = vpack.c.b16 %v4982, %v4974
    %v7311 = vpack.c.b16 %v4983, %v4975
    %v7312 = vpack.c.b16 %v4984, %v4976
    %v7313 = vpack.c.b16 %v4985, %v4977
    %v7314 = vpack.c.b16 %v4986, %v4978
    %v7315 = vpack.c.b16 %v4987, %v4979
    %v7316 = vpack.c.b16 %v4988, %v4980
    %v7317 = vpack.c.b16 %v4997, %v4989
    %v7318 = vpack.c.b16 %v4998, %v4990
    %v7319 = vpack.c.b16 %v4999, %v4991
    %v7320 = vpack.c.b16 %v5000, %v4992
    %v7321 = vpack.c.b16 %v5001, %v4993
    %v7322 = vpack.c.b16 %v5002, %v4994
    %v7323 = vpack.c.b16 %v5003, %v4995
    %v7324 = vpack.c.b16 %v5004, %v4996
    %v7325 = vpack.c.b16 %v5013, %v5005
    %v7326 = vpack.c.b16 %v5014, %v5006
    %v7327 = vpack.c.b16 %v5015, %v5007
    %v7328 = vpack.c.b16 %v5016, %v5008
    %v7329 = vpack.c.b16 %v5017, %v5009
    %v7330 = vpack.c.b16 %v5018, %v5010
    %v7331 = vpack.c.b16 %v5019, %v5011
    %v7332 = vpack.c.b16 %v5020, %v5012
    %v7333 = vpack.c.b16 %v5029, %v5021
    %v7334 = vpack.c.b16 %v5030, %v5022
    %v7335 = vpack.c.b16 %v5031, %v5023
    %v7336 = vpack.c.b16 %v5032, %v5024
    %v7337 = vpack.c.b16 %v5033, %v5025
    %v7338 = vpack.c.b16 %v5034, %v5026
    %v7339 = vpack.c.b16 %v5035, %v5027
    %v7340 = vpack.c.b16 %v5036, %v5028
    %v7341 = vpack.c.b16 %v5045, %v5037
    %v7342 = vpack.c.b16 %v5046, %v5038
    %v7343 = vpack.c.b16 %v5047, %v5039
    %v7344 = vpack.c.b16 %v5048, %v5040
    %v7345 = vpack.c.b16 %v5049, %v5041
    %v7346 = vpack.c.b16 %v5050, %v5042
    %v7347 = vpack.c.b16 %v5051, %v5043
    %v7348 = vpack.c.b16 %v5052, %v5044
    %v7349 = vpack.c.b16 %v5061, %v5053
    %v7350 = vpack.c.b16 %v5062, %v5054
    %v7351 = vpack.c.b16 %v5063, %v5055
    %v7352 = vpack.c.b16 %v5064, %v5056
    %v7353 = vpack.c.b16 %v5065, %v5057
    %v7354 = vpack.c.b16 %v5066, %v5058
    %v7355 = vpack.c.b16 %v5067, %v5059
    %v7356 = vpack.c.b16 %v5068, %v5060
    %v7357 = vpack.c.b16 %v5077, %v5069
    %v7358 = vpack.c.b16 %v5078, %v5070
    %v7359 = vpack.c.b16 %v5079, %v5071
    %v7360 = vpack.c.b16 %v5080, %v5072
    %v7361 = vpack.c.b16 %v5081, %v5073
    %v7362 = vpack.c.b16 %v5082, %v5074
    %v7363 = vpack.c.b16 %v5083, %v5075
    %v7364 = vpack.c.b16 %v5084, %v5076
    %v7365 = vpack.c.b16 %v5093, %v5085
    %v7366 = vpack.c.b16 %v5094, %v5086
    %v7367 = vpack.c.b16 %v5095, %v5087
    %v7368 = vpack.c.b16 %v5096, %v5088
    %v7369 = vpack.c.b16 %v5097, %v5089
    %v7370 = vpack.c.b16 %v5098, %v5090
    %v7371 = vpack.c.b16 %v5099, %v5091
    %v7372 = vpack.c.b16 %v5100, %v5092
    %v7373 = vpack.c.b16 %v5109, %v5101
    %v7374 = vpack.c.b16 %v5110, %v5102
    %v7375 = vpack.c.b16 %v5111, %v5103
    %v7376 = vpack.c.b16 %v5112, %v5104
    %v7377 = vpack.c.b16 %v5113, %v5105
    %v7378 = vpack.c.b16 %v5114, %v5106
    %v7379 = vpack.c.b16 %v5115, %v5107
    %v7380 = vpack.c.b16 %v5116, %v5108
    %v7381 = vpack.c.b16 %v5125, %v5117
    %v7382 = vpack.c.b16 %v5126, %v5118
    %v7383 = vpack.c.b16 %v5127, %v5119
    %v7384 = vpack.c.b16 %v5128, %v5120
    %v7385 = vpack.c.b16 %v5129, %v5121
    %v7386 = vpack.c.b16 %v5130, %v5122
    %v7387 = vpack.c.b16 %v5131, %v5123
    %v7388 = vpack.c.b16 %v5132, %v5124
    %v7389 = vpack.c.b16 %v5141, %v5133
    %v7390 = vpack.c.b16 %v5142, %v5134
    %v7391 = vpack.c.b16 %v5143, %v5135
    %v7392 = vpack.c.b16 %v5144, %v5136
    %v7393 = vpack.c.b16 %v5145, %v5137
    %v7394 = vpack.c.b16 %v5146, %v5138
    %v7395 = vpack.c.b16 %v5147, %v5139
    %v7396 = vpack.c.b16 %v5148, %v5140
    %v7397 = vpack.c.b16 %v5157, %v5149
    %v7398 = vpack.c.b16 %v5158, %v5150
    %v7399 = vpack.c.b16 %v5159, %v5151
    %v7400 = vpack.c.b16 %v5160, %v5152
    %v7401 = vpack.c.b16 %v5161, %v5153
    %v7402 = vpack.c.b16 %v5162, %v5154
    %v7403 = vpack.c.b16 %v5163, %v5155
    %v7404 = vpack.c.b16 %v5164, %v5156
    %v7405 = vpack.c.b16 %v5173, %v5165
    %v7406 = vpack.c.b16 %v5174, %v5166
    %v7407 = vpack.c.b16 %v5175, %v5167
    %v7408 = vpack.c.b16 %v5176, %v5168
    %v7409 = vpack.c.b16 %v5177, %v5169
    %v7410 = vpack.c.b16 %v5178, %v5170
    %v7411 = vpack.c.b16 %v5179, %v5171
    %v7412 = vpack.c.b16 %v5180, %v5172
    %v7413 = vpack.c.b16 %v5189, %v5181
    %v7414 = vpack.c.b16 %v5190, %v5182
    %v7415 = vpack.c.b16 %v5191, %v5183
    %v7416 = vpack.c.b16 %v5192, %v5184
    %v7417 = vpack.c.b16 %v5193, %v5185
    %v7418 = vpack.c.b16 %v5194, %v5186
    %v7419 = vpack.c.b16 %v5195, %v5187
    %v7420 = vpack.c.b16 %v5196, %v5188
    %v7421 = vpack.c.b16 %v5205, %v5197
    %v7422 = vpack.c.b16 %v5206, %v5198
    %v7423 = vpack.c.b16 %v5207, %v5199
    %v7424 = vpack.c.b16 %v5208, %v5200
    %v7425 = vpack.c.b16 %v5209, %v5201
    %v7426 = vpack.c.b16 %v5210, %v5202
    %v7427 = vpack.c.b16 %v5211, %v5203
    %v7428 = vpack.c.b16 %v5212, %v5204
    %v7429 = vpack.c.b16 %v5221, %v5213
    %v7430 = vpack.c.b16 %v5222, %v5214
    %v7431 = vpack.c.b16 %v5223, %v5215
    %v7432 = vpack.c.b16 %v5224, %v5216
    %v7433 = vpack.c.b16 %v5225, %v5217
    %v7434 = vpack.c.b16 %v5226, %v5218
    %v7435 = vpack.c.b16 %v5227, %v5219
    %v7436 = vpack.c.b16 %v5228, %v5220
    %v7437 = vpack.c.b16 %v5237, %v5229
    %v7438 = vpack.c.b16 %v5238, %v5230
    %v7439 = vpack.c.b16 %v5239, %v5231
    %v7440 = vpack.c.b16 %v5240, %v5232
    %v7441 = vpack.c.b16 %v5241, %v5233
    %v7442 = vpack.c.b16 %v5242, %v5234
    %v7443 = vpack.c.b16 %v5243, %v5235
    %v7444 = vpack.c.b16 %v5244, %v5236
    %v7445 = vpack.c.b16 %v5253, %v5245
    %v7446 = vpack.c.b16 %v5254, %v5246
    %v7447 = vpack.c.b16 %v5255, %v5247
    %v7448 = vpack.c.b16 %v5256, %v5248
    %v7449 = vpack.c.b16 %v5257, %v5249
    %v7450 = vpack.c.b16 %v5258, %v5250
    %v7451 = vpack.c.b16 %v5259, %v5251
    %v7452 = vpack.c.b16 %v5260, %v5252
    %v7453 = vpack.c.b16 %v5269, %v5261
    %v7454 = vpack.c.b16 %v5270, %v5262
    %v7455 = vpack.c.b16 %v5271, %v5263
    %v7456 = vpack.c.b16 %v5272, %v5264
    %v7457 = vpack.c.b16 %v5273, %v5265
    %v7458 = vpack.c.b16 %v5274, %v5266
    %v7459 = vpack.c.b16 %v5275, %v5267
    %v7460 = vpack.c.b16 %v5276, %v5268
    %v7461 = vpack.c.b16 %v5285, %v5277
    %v7462 = vpack.c.b16 %v5286, %v5278
    %v7463 = vpack.c.b16 %v5287, %v5279
    %v7464 = vpack.c.b16 %v5288, %v5280
    %v7465 = vpack.c.b16 %v5289, %v5281
    %v7466 = vpack.c.b16 %v5290, %v5282
    %v7467 = vpack.c.b16 %v5291, %v5283
    %v7468 = vpack.c.b16 %v5292, %v5284
    %v7469 = vpack.c.b16 %v5301, %v5293
    %v7470 = vpack.c.b16 %v5302, %v5294
    %v7471 = vpack.c.b16 %v5303, %v5295
    %v7472 = vpack.c.b16 %v5304, %v5296
    %v7473 = vpack.c.b16 %v5305, %v5297
    %v7474 = vpack.c.b16 %v5306, %v5298
    %v7475 = vpack.c.b16 %v5307, %v5299
    %v7476 = vpack.c.b16 %v5308, %v5300
    %v7477 = vpack.c.b16 %v5317, %v5309
    %v7478 = vpack.c.b16 %v5318, %v5310
    %v7479 = vpack.c.b16 %v5319, %v5311
    %v7480 = vpack.c.b16 %v5320, %v5312
    %v7481 = vpack.c.b16 %v5321, %v5313
    %v7482 = vpack.c.b16 %v5322, %v5314
    %v7483 = vpack.c.b16 %v5323, %v5315
    %v7484 = vpack.c.b16 %v5324, %v5316
    %v7485 = vpack.c.b16 %v5333, %v5325
    %v7486 = vpack.c.b16 %v5334, %v5326
    %v7487 = vpack.c.b16 %v5335, %v5327
    %v7488 = vpack.c.b16 %v5336, %v5328
    %v7489 = vpack.c.b16 %v5337, %v5329
    %v7490 = vpack.c.b16 %v5338, %v5330
    %v7491 = vpack.c.b16 %v5339, %v5331
    %v7492 = vpack.c.b16 %v5340, %v5332
    %v7493 = vpack.c.b16 %v5349, %v5341
    %v7494 = vpack.c.b16 %v5350, %v5342
    %v7495 = vpack.c.b16 %v5351, %v5343
    %v7496 = vpack.c.b16 %v5352, %v5344
    %v7497 = vpack.c.b16 %v5353, %v5345
    %v7498 = vpack.c.b16 %v5354, %v5346
    %v7499 = vpack.c.b16 %v5355, %v5347
    %v7500 = vpack.c.b16 %v5356, %v5348
    %v7501 = vpack.c.b16 %v5365, %v5357
    %v7502 = vpack.c.b16 %v5366, %v5358
    %v7503 = vpack.c.b16 %v5367, %v5359
    %v7504 = vpack.c.b16 %v5368, %v5360
    %v7505 = vpack.c.b16 %v5369, %v5361
    %v7506 = vpack.c.b16 %v5370, %v5362
    %v7507 = vpack.c.b16 %v5371, %v5363
    %v7508 = vpack.c.b16 %v5372, %v5364
    %v7509 = vpack.c.b16 %v5381, %v5373
    %v7510 = vpack.c.b16 %v5382, %v5374
    %v7511 = vpack.c.b16 %v5383, %v5375
    %v7512 = vpack.c.b16 %v5384, %v5376
    %v7513 = vpack.c.b16 %v5385, %v5377
    %v7514 = vpack.c.b16 %v5386, %v5378
    %v7515 = vpack.c.b16 %v5387, %v5379
    %v7516 = vpack.c.b16 %v5388, %v5380
    %v7517 = vpack.c.b16 %v5397, %v5389
    %v7518 = vpack.c.b16 %v5398, %v5390
    %v7519 = vpack.c.b16 %v5399, %v5391
    %v7520 = vpack.c.b16 %v5400, %v5392
    %v7521 = vpack.c.b16 %v5401, %v5393
    %v7522 = vpack.c.b16 %v5402, %v5394
    %v7523 = vpack.c.b16 %v5403, %v5395
    %v7524 = vpack.c.b16 %v5404, %v5396
    %v7525 = vpack.c.b16 %v5413, %v5405
    %v7526 = vpack.c.b16 %v5414, %v5406
    %v7527 = vpack.c.b16 %v5415, %v5407
    %v7528 = vpack.c.b16 %v5416, %v5408
    %v7529 = vpack.c.b16 %v5417, %v5409
    %v7530 = vpack.c.b16 %v5418, %v5410
    %v7531 = vpack.c.b16 %v5419, %v5411
    %v7532 = vpack.c.b16 %v5420, %v5412
    %v7533 = vpack.c.b16 %v5429, %v5421
    %v7534 = vpack.c.b16 %v5430, %v5422
    %v7535 = vpack.c.b16 %v5431, %v5423
    %v7536 = vpack.c.b16 %v5432, %v5424
    %v7537 = vpack.c.b16 %v5433, %v5425
    %v7538 = vpack.c.b16 %v5434, %v5426
    %v7539 = vpack.c.b16 %v5435, %v5427
    %v7540 = vpack.c.b16 %v5436, %v5428
    %v7541 = vpack.c.b16 %v5445, %v5437
    %v7542 = vpack.c.b16 %v5446, %v5438
    %v7543 = vpack.c.b16 %v5447, %v5439
    %v7544 = vpack.c.b16 %v5448, %v5440
    %v7545 = vpack.c.b16 %v5449, %v5441
    %v7546 = vpack.c.b16 %v5450, %v5442
    %v7547 = vpack.c.b16 %v5451, %v5443
    %v7548 = vpack.c.b16 %v5452, %v5444
    %v7549 = vpack.c.b16 %v5461, %v5453
    %v7550 = vpack.c.b16 %v5462, %v5454
    %v7551 = vpack.c.b16 %v5463, %v5455
    %v7552 = vpack.c.b16 %v5464, %v5456
    %v7553 = vpack.c.b16 %v5465, %v5457
    %v7554 = vpack.c.b16 %v5466, %v5458
    %v7555 = vpack.c.b16 %v5467, %v5459
    %v7556 = vpack.c.b16 %v5468, %v5460
    %v7557 = vpack.c.b16 %v5477, %v5469
    %v7558 = vpack.c.b16 %v5478, %v5470
    %v7559 = vpack.c.b16 %v5479, %v5471
    %v7560 = vpack.c.b16 %v5480, %v5472
    %v7561 = vpack.c.b16 %v5481, %v5473
    %v7562 = vpack.c.b16 %v5482, %v5474
    %v7563 = vpack.c.b16 %v5483, %v5475
    %v7564 = vpack.c.b16 %v5484, %v5476
    %v7565 = vpack.c.b16 %v5493, %v5485
    %v7566 = vpack.c.b16 %v5494, %v5486
    %v7567 = vpack.c.b16 %v5495, %v5487
    %v7568 = vpack.c.b16 %v5496, %v5488
    %v7569 = vpack.c.b16 %v5497, %v5489
    %v7570 = vpack.c.b16 %v5498, %v5490
    %v7571 = vpack.c.b16 %v5499, %v5491
    %v7572 = vpack.c.b16 %v5500, %v5492
    %v7573 = vpack.c.b16 %v5509, %v5501
    %v7574 = vpack.c.b16 %v5510, %v5502
    %v7575 = vpack.c.b16 %v5511, %v5503
    %v7576 = vpack.c.b16 %v5512, %v5504
    %v7577 = vpack.c.b16 %v5513, %v5505
    %v7578 = vpack.c.b16 %v5514, %v5506
    %v7579 = vpack.c.b16 %v5515, %v5507
    %v7580 = vpack.c.b16 %v5516, %v5508
    %v7581 = vpack.c.b16 %v5525, %v5517
    %v7582 = vpack.c.b16 %v5526, %v5518
    %v7583 = vpack.c.b16 %v5527, %v5519
    %v7584 = vpack.c.b16 %v5528, %v5520
    %v7585 = vpack.c.b16 %v5529, %v5521
    %v7586 = vpack.c.b16 %v5530, %v5522
    %v7587 = vpack.c.b16 %v5531, %v5523
    %v7588 = vpack.c.b16 %v5532, %v5524
    %v7589 = vpack.c.b16 %v5541, %v5533
    %v7590 = vpack.c.b16 %v5542, %v5534
    %v7591 = vpack.c.b16 %v5543, %v5535
    %v7592 = vpack.c.b16 %v5544, %v5536
    %v7593 = vpack.c.b16 %v5545, %v5537
    %v7594 = vpack.c.b16 %v5546, %v5538
    %v7595 = vpack.c.b16 %v5547, %v5539
    %v7596 = vpack.c.b16 %v5548, %v5540
    %v7597 = vpack.c.b16 %v5557, %v5549
    %v7598 = vpack.c.b16 %v5558, %v5550
    %v7599 = vpack.c.b16 %v5559, %v5551
    %v7600 = vpack.c.b16 %v5560, %v5552
    %v7601 = vpack.c.b16 %v5561, %v5553
    %v7602 = vpack.c.b16 %v5562, %v5554
    %v7603 = vpack.c.b16 %v5563, %v5555
    %v7604 = vpack.c.b16 %v5564, %v5556
    %v7605 = vpack.c.b16 %v5573, %v5565
    %v7606 = vpack.c.b16 %v5574, %v5566
    %v7607 = vpack.c.b16 %v5575, %v5567
    %v7608 = vpack.c.b16 %v5576, %v5568
    %v7609 = vpack.c.b16 %v5577, %v5569
    %v7610 = vpack.c.b16 %v5578, %v5570
    %v7611 = vpack.c.b16 %v5579, %v5571
    %v7612 = vpack.c.b16 %v5580, %v5572
    %v7613 = vpack.c.b16 %v5589, %v5581
    %v7614 = vpack.c.b16 %v5590, %v5582
    %v7615 = vpack.c.b16 %v5591, %v5583
    %v7616 = vpack.c.b16 %v5592, %v5584
    %v7617 = vpack.c.b16 %v5593, %v5585
    %v7618 = vpack.c.b16 %v5594, %v5586
    %v7619 = vpack.c.b16 %v5595, %v5587
    %v7620 = vpack.c.b16 %v5596, %v5588
    %v7621 = vpack.c.b16 %v5605, %v5597
    %v7622 = vpack.c.b16 %v5606, %v5598
    %v7623 = vpack.c.b16 %v5607, %v5599
    %v7624 = vpack.c.b16 %v5608, %v5600
    %v7625 = vpack.c.b16 %v5609, %v5601
    %v7626 = vpack.c.b16 %v5610, %v5602
    %v7627 = vpack.c.b16 %v5611, %v5603
    %v7628 = vpack.c.b16 %v5612, %v5604
    %v7629 = vpack.c.b16 %v5621, %v5613
    %v7630 = vpack.c.b16 %v5622, %v5614
    %v7631 = vpack.c.b16 %v5623, %v5615
    %v7632 = vpack.c.b16 %v5624, %v5616
    %v7633 = vpack.c.b16 %v5625, %v5617
    %v7634 = vpack.c.b16 %v5626, %v5618
    %v7635 = vpack.c.b16 %v5627, %v5619
    %v7636 = vpack.c.b16 %v5628, %v5620
    %v7637 = vpack.c.b16 %v5637, %v5629
    %v7638 = vpack.c.b16 %v5638, %v5630
    %v7639 = vpack.c.b16 %v5639, %v5631
    %v7640 = vpack.c.b16 %v5640, %v5632
    %v7641 = vpack.c.b16 %v5641, %v5633
    %v7642 = vpack.c.b16 %v5642, %v5634
    %v7643 = vpack.c.b16 %v5643, %v5635
    %v7644 = vpack.c.b16 %v5644, %v5636
    %v7645 = vpack.c.b16 %v5653, %v5645
    %v7646 = vpack.c.b16 %v5654, %v5646
    %v7647 = vpack.c.b16 %v5655, %v5647
    %v7648 = vpack.c.b16 %v5656, %v5648
    %v7649 = vpack.c.b16 %v5657, %v5649
    %v7650 = vpack.c.b16 %v5658, %v5650
    %v7651 = vpack.c.b16 %v5659, %v5651
    %v7652 = vpack.c.b16 %v5660, %v5652
    %v7653 = vpack.c.b16 %v5669, %v5661
    %v7654 = vpack.c.b16 %v5670, %v5662
    %v7655 = vpack.c.b16 %v5671, %v5663
    %v7656 = vpack.c.b16 %v5672, %v5664
    %v7657 = vpack.c.b16 %v5673, %v5665
    %v7658 = vpack.c.b16 %v5674, %v5666
    %v7659 = vpack.c.b16 %v5675, %v5667
    %v7660 = vpack.c.b16 %v5676, %v5668
    %v7661 = vpack.c.b16 %v5685, %v5677
    %v7662 = vpack.c.b16 %v5686, %v5678
    %v7663 = vpack.c.b16 %v5687, %v5679
    %v7664 = vpack.c.b16 %v5688, %v5680
    %v7665 = vpack.c.b16 %v5689, %v5681
    %v7666 = vpack.c.b16 %v5690, %v5682
    %v7667 = vpack.c.b16 %v5691, %v5683
    %v7668 = vpack.c.b16 %v5692, %v5684
    %v7669 = vpack.c.b16 %v5701, %v5693
    %v7670 = vpack.c.b16 %v5702, %v5694
    %v7671 = vpack.c.b16 %v5703, %v5695
    %v7672 = vpack.c.b16 %v5704, %v5696
    %v7673 = vpack.c.b16 %v5705, %v5697
    %v7674 = vpack.c.b16 %v5706, %v5698
    %v7675 = vpack.c.b16 %v5707, %v5699
    %v7676 = vpack.c.b16 %v5708, %v5700
    %v7677 = vpack.c.b16 %v5717, %v5709
    %v7678 = vpack.c.b16 %v5718, %v5710
    %v7679 = vpack.c.b16 %v5719, %v5711
    %v7680 = vpack.c.b16 %v5720, %v5712
    %v7681 = vpack.c.b16 %v5721, %v5713
    %v7682 = vpack.c.b16 %v5722, %v5714
    %v7683 = vpack.c.b16 %v5723, %v5715
    %v7684 = vpack.c.b16 %v5724, %v5716
    %v7685 = vpack.c.b16 %v5733, %v5725
    %v7686 = vpack.c.b16 %v5734, %v5726
    %v7687 = vpack.c.b16 %v5735, %v5727
    %v7688 = vpack.c.b16 %v5736, %v5728
    %v7689 = vpack.c.b16 %v5737, %v5729
    %v7690 = vpack.c.b16 %v5738, %v5730
    %v7691 = vpack.c.b16 %v5739, %v5731
    %v7692 = vpack.c.b16 %v5740, %v5732
    %v7693 = vpack.c.b16 %v5749, %v5741
    %v7694 = vpack.c.b16 %v5750, %v5742
    %v7695 = vpack.c.b16 %v5751, %v5743
    %v7696 = vpack.c.b16 %v5752, %v5744
    %v7697 = vpack.c.b16 %v5753, %v5745
    %v7698 = vpack.c.b16 %v5754, %v5746
    %v7699 = vpack.c.b16 %v5755, %v5747
    %v7700 = vpack.c.b16 %v5756, %v5748
    %v7701 = vpack.c.b16 %v5765, %v5757
    %v7702 = vpack.c.b16 %v5766, %v5758
    %v7703 = vpack.c.b16 %v5767, %v5759
    %v7704 = vpack.c.b16 %v5768, %v5760
    %v7705 = vpack.c.b16 %v5769, %v5761
    %v7706 = vpack.c.b16 %v5770, %v5762
    %v7707 = vpack.c.b16 %v5771, %v5763
    %v7708 = vpack.c.b16 %v5772, %v5764
    %v7709 = vpack.c.b16 %v5781, %v5773
    %v7710 = vpack.c.b16 %v5782, %v5774
    %v7711 = vpack.c.b16 %v5783, %v5775
    %v7712 = vpack.c.b16 %v5784, %v5776
    %v7713 = vpack.c.b16 %v5785, %v5777
    %v7714 = vpack.c.b16 %v5786, %v5778
    %v7715 = vpack.c.b16 %v5787, %v5779
    %v7716 = vpack.c.b16 %v5788, %v5780
    %v7717 = vpack.c.b16 %v5797, %v5789
    %v7718 = vpack.c.b16 %v5798, %v5790
    %v7719 = vpack.c.b16 %v5799, %v5791
    %v7720 = vpack.c.b16 %v5800, %v5792
    %v7721 = vpack.c.b16 %v5801, %v5793
    %v7722 = vpack.c.b16 %v5802, %v5794
    %v7723 = vpack.c.b16 %v5803, %v5795
    %v7724 = vpack.c.b16 %v5804, %v5796
    %v7725 = vpack.c.b16 %v5813, %v5805
    %v7726 = vpack.c.b16 %v5814, %v5806
    %v7727 = vpack.c.b16 %v5815, %v5807
    %v7728 = vpack.c.b16 %v5816, %v5808
    %v7729 = vpack.c.b16 %v5817, %v5809
    %v7730 = vpack.c.b16 %v5818, %v5810
    %v7731 = vpack.c.b16 %v5819, %v5811
    %v7732 = vpack.c.b16 %v5820, %v5812
    %v7733 = vpack.c.b16 %v5829, %v5821
    %v7734 = vpack.c.b16 %v5830, %v5822
    %v7735 = vpack.c.b16 %v5831, %v5823
    %v7736 = vpack.c.b16 %v5832, %v5824
    %v7737 = vpack.c.b16 %v5833, %v5825
    %v7738 = vpack.c.b16 %v5834, %v5826
    %v7739 = vpack.c.b16 %v5835, %v5827
    %v7740 = vpack.c.b16 %v5836, %v5828
    %v7741 = vpack.c.b16 %v5845, %v5837
    %v7742 = vpack.c.b16 %v5846, %v5838
    %v7743 = vpack.c.b16 %v5847, %v5839
    %v7744 = vpack.c.b16 %v5848, %v5840
    %v7745 = vpack.c.b16 %v5849, %v5841
    %v7746 = vpack.c.b16 %v5850, %v5842
    %v7747 = vpack.c.b16 %v5851, %v5843
    %v7748 = vpack.c.b16 %v5852, %v5844
    %v7749 = vpack.c.b16 %v5861, %v5853
    %v7750 = vpack.c.b16 %v5862, %v5854
    %v7751 = vpack.c.b16 %v5863, %v5855
    %v7752 = vpack.c.b16 %v5864, %v5856
    %v7753 = vpack.c.b16 %v5865, %v5857
    %v7754 = vpack.c.b16 %v5866, %v5858
    %v7755 = vpack.c.b16 %v5867, %v5859
    %v7756 = vpack.c.b16 %v5868, %v5860
    %v7757 = vpack.c.b16 %v5877, %v5869
    %v7758 = vpack.c.b16 %v5878, %v5870
    %v7759 = vpack.c.b16 %v5879, %v5871
    %v7760 = vpack.c.b16 %v5880, %v5872
    %v7761 = vpack.c.b16 %v5881, %v5873
    %v7762 = vpack.c.b16 %v5882, %v5874
    %v7763 = vpack.c.b16 %v5883, %v5875
    %v7764 = vpack.c.b16 %v5884, %v5876
    %v7765 = vpack.c.b16 %v5893, %v5885
    %v7766 = vpack.c.b16 %v5894, %v5886
    %v7767 = vpack.c.b16 %v5895, %v5887
    %v7768 = vpack.c.b16 %v5896, %v5888
    %v7769 = vpack.c.b16 %v5897, %v5889
    %v7770 = vpack.c.b16 %v5898, %v5890
    %v7771 = vpack.c.b16 %v5899, %v5891
    %v7772 = vpack.c.b16 %v5900, %v5892
    %v7773 = vpack.c.b16 %v5909, %v5901
    %v7774 = vpack.c.b16 %v5910, %v5902
    %v7775 = vpack.c.b16 %v5911, %v5903
    %v7776 = vpack.c.b16 %v5912, %v5904
    %v7777 = vpack.c.b16 %v5913, %v5905
    %v7778 = vpack.c.b16 %v5914, %v5906
    %v7779 = vpack.c.b16 %v5915, %v5907
    %v7780 = vpack.c.b16 %v5916, %v5908
    %v7781 = vpack.c.b16 %v5925, %v5917
    %v7782 = vpack.c.b16 %v5926, %v5918
    %v7783 = vpack.c.b16 %v5927, %v5919
    %v7784 = vpack.c.b16 %v5928, %v5920
    %v7785 = vpack.c.b16 %v5929, %v5921
    %v7786 = vpack.c.b16 %v5930, %v5922
    %v7787 = vpack.c.b16 %v5931, %v5923
    %v7788 = vpack.c.b16 %v5932, %v5924
    %v7789 = vpack.c.b16 %v5941, %v5933
    %v7790 = vpack.c.b16 %v5942, %v5934
    %v7791 = vpack.c.b16 %v5943, %v5935
    %v7792 = vpack.c.b16 %v5944, %v5936
    %v7793 = vpack.c.b16 %v5945, %v5937
    %v7794 = vpack.c.b16 %v5946, %v5938
    %v7795 = vpack.c.b16 %v5947, %v5939
    %v7796 = vpack.c.b16 %v5948, %v5940
    %v7797 = vpack.c.b16 %v5957, %v5949
    %v7798 = vpack.c.b16 %v5958, %v5950
    %v7799 = vpack.c.b16 %v5959, %v5951
    %v7800 = vpack.c.b16 %v5960, %v5952
    %v7801 = vpack.c.b16 %v5961, %v5953
    %v7802 = vpack.c.b16 %v5962, %v5954
    %v7803 = vpack.c.b16 %v5963, %v5955
    %v7804 = vpack.c.b16 %v5964, %v5956
    %v7805 = vpack.c.b16 %v5973, %v5965
    %v7806 = vpack.c.b16 %v5974, %v5966
    %v7807 = vpack.c.b16 %v5975, %v5967
    %v7808 = vpack.c.b16 %v5976, %v5968
    %v7809 = vpack.c.b16 %v5977, %v5969
    %v7810 = vpack.c.b16 %v5978, %v5970
    %v7811 = vpack.c.b16 %v5979, %v5971
    %v7812 = vpack.c.b16 %v5980, %v5972
    %v7813 = vpack.c.b16 %v5989, %v5981
    %v7814 = vpack.c.b16 %v5990, %v5982
    %v7815 = vpack.c.b16 %v5991, %v5983
    %v7816 = vpack.c.b16 %v5992, %v5984
    %v7817 = vpack.c.b16 %v5993, %v5985
    %v7818 = vpack.c.b16 %v5994, %v5986
    %v7819 = vpack.c.b16 %v5995, %v5987
    %v7820 = vpack.c.b16 %v5996, %v5988
    %v7821 = vpack.c.b16 %v6005, %v5997
    %v7822 = vpack.c.b16 %v6006, %v5998
    %v7823 = vpack.c.b16 %v6007, %v5999
    %v7824 = vpack.c.b16 %v6008, %v6000
    %v7825 = vpack.c.b16 %v6009, %v6001
    %v7826 = vpack.c.b16 %v6010, %v6002
    %v7827 = vpack.c.b16 %v6011, %v6003
    %v7828 = vpack.c.b16 %v6012, %v6004
    %v7829 = vpack.c.b16 %v6021, %v6013
    %v7830 = vpack.c.b16 %v6022, %v6014
    %v7831 = vpack.c.b16 %v6023, %v6015
    %v7832 = vpack.c.b16 %v6024, %v6016
    %v7833 = vpack.c.b16 %v6025, %v6017
    %v7834 = vpack.c.b16 %v6026, %v6018
    %v7835 = vpack.c.b16 %v6027, %v6019
    %v7836 = vpack.c.b16 %v6028, %v6020
    %v7837 = vpack.c.b16 %v6037, %v6029
    %v7838 = vpack.c.b16 %v6038, %v6030
    %v7839 = vpack.c.b16 %v6039, %v6031
    %v7840 = vpack.c.b16 %v6040, %v6032
    %v7841 = vpack.c.b16 %v6041, %v6033
    %v7842 = vpack.c.b16 %v6042, %v6034
    %v7843 = vpack.c.b16 %v6043, %v6035
    %v7844 = vpack.c.b16 %v6044, %v6036
    %v7845 = vpack.c.b16 %v6053, %v6045
    %v7846 = vpack.c.b16 %v6054, %v6046
    %v7847 = vpack.c.b16 %v6055, %v6047
    %v7848 = vpack.c.b16 %v6056, %v6048
    %v7849 = vpack.c.b16 %v6057, %v6049
    %v7850 = vpack.c.b16 %v6058, %v6050
    %v7851 = vpack.c.b16 %v6059, %v6051
    %v7852 = vpack.c.b16 %v6060, %v6052
    %v7853 = vpack.c.b16 %v6069, %v6061
    %v7854 = vpack.c.b16 %v6070, %v6062
    %v7855 = vpack.c.b16 %v6071, %v6063
    %v7856 = vpack.c.b16 %v6072, %v6064
    %v7857 = vpack.c.b16 %v6073, %v6065
    %v7858 = vpack.c.b16 %v6074, %v6066
    %v7859 = vpack.c.b16 %v6075, %v6067
    %v7860 = vpack.c.b16 %v6076, %v6068
    %v7861 = vpack.c.b16 %v6085, %v6077
    %v7862 = vpack.c.b16 %v6086, %v6078
    %v7863 = vpack.c.b16 %v6087, %v6079
    %v7864 = vpack.c.b16 %v6088, %v6080
    %v7865 = vpack.c.b16 %v6089, %v6081
    %v7866 = vpack.c.b16 %v6090, %v6082
    %v7867 = vpack.c.b16 %v6091, %v6083
    %v7868 = vpack.c.b16 %v6092, %v6084
    %v7869 = vpack.c.b16 %v6101, %v6093
    %v7870 = vpack.c.b16 %v6102, %v6094
    %v7871 = vpack.c.b16 %v6103, %v6095
    %v7872 = vpack.c.b16 %v6104, %v6096
    %v7873 = vpack.c.b16 %v6105, %v6097
    %v7874 = vpack.c.b16 %v6106, %v6098
    %v7875 = vpack.c.b16 %v6107, %v6099
    %v7876 = vpack.c.b16 %v6108, %v6100
    %v7877 = vpack.c.b16 %v6117, %v6109
    %v7878 = vpack.c.b16 %v6118, %v6110
    %v7879 = vpack.c.b16 %v6119, %v6111
    %v7880 = vpack.c.b16 %v6120, %v6112
    %v7881 = vpack.c.b16 %v6121, %v6113
    %v7882 = vpack.c.b16 %v6122, %v6114
    %v7883 = vpack.c.b16 %v6123, %v6115
    %v7884 = vpack.c.b16 %v6124, %v6116
    %v7885 = vpack.c.b16 %v6133, %v6125
    %v7886 = vpack.c.b16 %v6134, %v6126
    %v7887 = vpack.c.b16 %v6135, %v6127
    %v7888 = vpack.c.b16 %v6136, %v6128
    %v7889 = vpack.c.b16 %v6137, %v6129
    %v7890 = vpack.c.b16 %v6138, %v6130
    %v7891 = vpack.c.b16 %v6139, %v6131
    %v7892 = vpack.c.b16 %v6140, %v6132
    %v7893 = vpack.c.b16 %v6149, %v6141
    %v7894 = vpack.c.b16 %v6150, %v6142
    %v7895 = vpack.c.b16 %v6151, %v6143
    %v7896 = vpack.c.b16 %v6152, %v6144
    %v7897 = vpack.c.b16 %v6153, %v6145
    %v7898 = vpack.c.b16 %v6154, %v6146
    %v7899 = vpack.c.b16 %v6155, %v6147
    %v7900 = vpack.c.b16 %v6156, %v6148
    %v7901 = vpack.c.b16 %v6165, %v6157
    %v7902 = vpack.c.b16 %v6166, %v6158
    %v7903 = vpack.c.b16 %v6167, %v6159
    %v7904 = vpack.c.b16 %v6168, %v6160
    %v7905 = vpack.c.b16 %v6169, %v6161
    %v7906 = vpack.c.b16 %v6170, %v6162
    %v7907 = vpack.c.b16 %v6171, %v6163
    %v7908 = vpack.c.b16 %v6172, %v6164
    %v7909 = vpack.c.b16 %v6181, %v6173
    %v7910 = vpack.c.b16 %v6182, %v6174
    %v7911 = vpack.c.b16 %v6183, %v6175
    %v7912 = vpack.c.b16 %v6184, %v6176
    %v7913 = vpack.c.b16 %v6185, %v6177
    %v7914 = vpack.c.b16 %v6186, %v6178
    %v7915 = vpack.c.b16 %v6187, %v6179
    %v7916 = vpack.c.b16 %v6188, %v6180
    %v7917 = vpack.c.b16 %v6197, %v6189
    %v7918 = vpack.c.b16 %v6198, %v6190
    %v7919 = vpack.c.b16 %v6199, %v6191
    %v7920 = vpack.c.b16 %v6200, %v6192
    %v7921 = vpack.c.b16 %v6201, %v6193
    %v7922 = vpack.c.b16 %v6202, %v6194
    %v7923 = vpack.c.b16 %v6203, %v6195
    %v7924 = vpack.c.b16 %v6204, %v6196
    %v7925 = vpack.c.b16 %v6213, %v6205
    %v7926 = vpack.c.b16 %v6214, %v6206
    %v7927 = vpack.c.b16 %v6215, %v6207
    %v7928 = vpack.c.b16 %v6216, %v6208
    %v7929 = vpack.c.b16 %v6217, %v6209
    %v7930 = vpack.c.b16 %v6218, %v6210
    %v7931 = vpack.c.b16 %v6219, %v6211
    %v7932 = vpack.c.b16 %v6220, %v6212
    %v7933 = vpack.c.b16 %v6229, %v6221
    %v7934 = vpack.c.b16 %v6230, %v6222
    %v7935 = vpack.c.b16 %v6231, %v6223
    %v7936 = vpack.c.b16 %v6232, %v6224
    %v7937 = vpack.c.b16 %v6233, %v6225
    %v7938 = vpack.c.b16 %v6234, %v6226
    %v7939 = vpack.c.b16 %v6235, %v6227
    %v7940 = vpack.c.b16 %v6236, %v6228
    %v7941 = vpack.c.b16 %v6245, %v6237
    %v7942 = vpack.c.b16 %v6246, %v6238
    %v7943 = vpack.c.b16 %v6247, %v6239
    %v7944 = vpack.c.b16 %v6248, %v6240
    %v7945 = vpack.c.b16 %v6249, %v6241
    %v7946 = vpack.c.b16 %v6250, %v6242
    %v7947 = vpack.c.b16 %v6251, %v6243
    %v7948 = vpack.c.b16 %v6252, %v6244
    %v7949 = vpack.c.b16 %v6261, %v6253
    %v7950 = vpack.c.b16 %v6262, %v6254
    %v7951 = vpack.c.b16 %v6263, %v6255
    %v7952 = vpack.c.b16 %v6264, %v6256
    %v7953 = vpack.c.b16 %v6265, %v6257
    %v7954 = vpack.c.b16 %v6266, %v6258
    %v7955 = vpack.c.b16 %v6267, %v6259
    %v7956 = vpack.c.b16 %v6268, %v6260
    %v7957 = vpack.c.b16 %v6277, %v6269
    %v7958 = vpack.c.b16 %v6278, %v6270
    %v7959 = vpack.c.b16 %v6279, %v6271
    %v7960 = vpack.c.b16 %v6280, %v6272
    %v7961 = vpack.c.b16 %v6281, %v6273
    %v7962 = vpack.c.b16 %v6282, %v6274
    %v7963 = vpack.c.b16 %v6283, %v6275
    %v7964 = vpack.c.b16 %v6284, %v6276
    %v7965 = vpack.c.b16 %v6293, %v6285
    %v7966 = vpack.c.b16 %v6294, %v6286
    %v7967 = vpack.c.b16 %v6295, %v6287
    %v7968 = vpack.c.b16 %v6296, %v6288
    %v7969 = vpack.c.b16 %v6297, %v6289
    %v7970 = vpack.c.b16 %v6298, %v6290
    %v7971 = vpack.c.b16 %v6299, %v6291
    %v7972 = vpack.c.b16 %v6300, %v6292
    %v7973 = vpack.c.b16 %v6309, %v6301
    %v7974 = vpack.c.b16 %v6310, %v6302
    %v7975 = vpack.c.b16 %v6311, %v6303
    %v7976 = vpack.c.b16 %v6312, %v6304
    %v7977 = vpack.c.b16 %v6313, %v6305
    %v7978 = vpack.c.b16 %v6314, %v6306
    %v7979 = vpack.c.b16 %v6315, %v6307
    %v7980 = vpack.c.b16 %v6316, %v6308
    %v7981 = vpack.c.b16 %v6325, %v6317
    %v7982 = vpack.c.b16 %v6326, %v6318
    %v7983 = vpack.c.b16 %v6327, %v6319
    %v7984 = vpack.c.b16 %v6328, %v6320
    %v7985 = vpack.c.b16 %v6329, %v6321
    %v7986 = vpack.c.b16 %v6330, %v6322
    %v7987 = vpack.c.b16 %v6331, %v6323
    %v7988 = vpack.c.b16 %v6332, %v6324
    %v7989 = vpack.c.b16 %v6341, %v6333
    %v7990 = vpack.c.b16 %v6342, %v6334
    %v7991 = vpack.c.b16 %v6343, %v6335
    %v7992 = vpack.c.b16 %v6344, %v6336
    %v7993 = vpack.c.b16 %v6345, %v6337
    %v7994 = vpack.c.b16 %v6346, %v6338
    %v7995 = vpack.c.b16 %v6347, %v6339
    %v7996 = vpack.c.b16 %v6348, %v6340
    %v7997 = vpack.c.b16 %v6357, %v6349
    %v7998 = vpack.c.b16 %v6358, %v6350
    %v7999 = vpack.c.b16 %v6359, %v6351
    %v8000 = vpack.c.b16 %v6360, %v6352
    %v8001 = vpack.c.b16 %v6361, %v6353
    %v8002 = vpack.c.b16 %v6362, %v6354
    %v8003 = vpack.c.b16 %v6363, %v6355
    %v8004 = vpack.c.b16 %v6364, %v6356
    %v8005 = vpack.c.b16 %v6373, %v6365
    %v8006 = vpack.c.b16 %v6374, %v6366
    %v8007 = vpack.c.b16 %v6375, %v6367
    %v8008 = vpack.c.b16 %v6376, %v6368
    %v8009 = vpack.c.b16 %v6377, %v6369
    %v8010 = vpack.c.b16 %v6378, %v6370
    %v8011 = vpack.c.b16 %v6379, %v6371
    %v8012 = vpack.c.b16 %v6380, %v6372
    %v8013 = vpack.c.b16 %v6389, %v6381
    %v8014 = vpack.c.b16 %v6390, %v6382
    %v8015 = vpack.c.b16 %v6391, %v6383
    %v8016 = vpack.c.b16 %v6392, %v6384
    %v8017 = vpack.c.b16 %v6393, %v6385
    %v8018 = vpack.c.b16 %v6394, %v6386
    %v8019 = vpack.c.b16 %v6395, %v6387
    %v8020 = vpack.c.b16 %v6396, %v6388
    %v8021 = vpack.c.b16 %v6405, %v6397
    %v8022 = vpack.c.b16 %v6406, %v6398
    %v8023 = vpack.c.b16 %v6407, %v6399
    %v8024 = vpack.c.b16 %v6408, %v6400
    %v8025 = vpack.c.b16 %v6409, %v6401
    %v8026 = vpack.c.b16 %v6410, %v6402
    %v8027 = vpack.c.b16 %v6411, %v6403
    %v8028 = vpack.c.b16 %v6412, %v6404
    %v8029 = vpack.c.b16 %v6421, %v6413
    %v8030 = vpack.c.b16 %v6422, %v6414
    %v8031 = vpack.c.b16 %v6423, %v6415
    %v8032 = vpack.c.b16 %v6424, %v6416
    %v8033 = vpack.c.b16 %v6425, %v6417
    %v8034 = vpack.c.b16 %v6426, %v6418
    %v8035 = vpack.c.b16 %v6427, %v6419
    %v8036 = vpack.c.b16 %v6428, %v6420
    %v8037 = vpack.c.b16 %v6437, %v6429
    %v8038 = vpack.c.b16 %v6438, %v6430
    %v8039 = vpack.c.b16 %v6439, %v6431
    %v8040 = vpack.c.b16 %v6440, %v6432
    %v8041 = vpack.c.b16 %v6441, %v6433
    %v8042 = vpack.c.b16 %v6442, %v6434
    %v8043 = vpack.c.b16 %v6443, %v6435
    %v8044 = vpack.c.b16 %v6444, %v6436
    %v8045 = vpack.c.b16 %v6453, %v6445
    %v8046 = vpack.c.b16 %v6454, %v6446
    %v8047 = vpack.c.b16 %v6455, %v6447
    %v8048 = vpack.c.b16 %v6456, %v6448
    %v8049 = vpack.c.b16 %v6457, %v6449
    %v8050 = vpack.c.b16 %v6458, %v6450
    %v8051 = vpack.c.b16 %v6459, %v6451
    %v8052 = vpack.c.b16 %v6460, %v6452
    %v8053 = vpack.c.b16 %v6469, %v6461
    %v8054 = vpack.c.b16 %v6470, %v6462
    %v8055 = vpack.c.b16 %v6471, %v6463
    %v8056 = vpack.c.b16 %v6472, %v6464
    %v8057 = vpack.c.b16 %v6473, %v6465
    %v8058 = vpack.c.b16 %v6474, %v6466
    %v8059 = vpack.c.b16 %v6475, %v6467
    %v8060 = vpack.c.b16 %v6476, %v6468
    %v8061 = vpack.c.b16 %v6485, %v6477
    %v8062 = vpack.c.b16 %v6486, %v6478
    %v8063 = vpack.c.b16 %v6487, %v6479
    %v8064 = vpack.c.b16 %v6488, %v6480
    %v8065 = vpack.c.b16 %v6489, %v6481
    %v8066 = vpack.c.b16 %v6490, %v6482
    %v8067 = vpack.c.b16 %v6491, %v6483
    %v8068 = vpack.c.b16 %v6492, %v6484
    %v8069 = vpack.c.b16 %v6501, %v6493
    %v8070 = vpack.c.b16 %v6502, %v6494
    %v8071 = vpack.c.b16 %v6503, %v6495
    %v8072 = vpack.c.b16 %v6504, %v6496
    %v8073 = vpack.c.b16 %v6505, %v6497
    %v8074 = vpack.c.b16 %v6506, %v6498
    %v8075 = vpack.c.b16 %v6507, %v6499
    %v8076 = vpack.c.b16 %v6508, %v6500
    %vm9645 = vcmask 523264
    %v9647 = vsel %vm9645, %v194, 0
    %9649 = vmatprep.subr.bf16.mxu0 %v6510
    %9650 = vmatpush1.bf16.msra.mxu0 %v6509
    %9651 = vmatprep.subr.bf16.mxu0 %v6518
    %9652 = vmatpush1.bf16.msra.mxu0 %v6517
    %9653 = vmatprep.subr.bf16.mxu0 %v6526
    %9654 = vmatpush1.bf16.msra.mxu0 %v6525
    %9655 = vmatprep.subr.bf16.mxu0 %v6534
    %9656 = vmatpush1.bf16.msra.mxu0 %v6533
    %9657 = vmatprep.subr.bf16.mxu0 %v6542
    %9658 = vmatpush1.bf16.msra.mxu0 %v6541
    %9659 = vmatprep.subr.bf16.mxu0 %v6550
    %9660 = vmatpush1.bf16.msra.mxu0 %v6549
    %9661 = vmatprep.subr.bf16.mxu0 %v6558
    %9662 = vmatpush1.bf16.msra.mxu0 %v6557
    %9663 = vmatprep.subr.bf16.mxu0 %v6566
    %9664 = vmatpush1.bf16.msra.mxu0 %v6565
    %9665 = vmatprep.subr.bf16.mxu0 %v6574
    %9666 = vmatpush1.bf16.msra.mxu0 %v6573
    %9667 = vmatprep.subr.bf16.mxu0 %v6582
    %9668 = vmatpush1.bf16.msra.mxu0 %v6581
    %9669 = vmatprep.subr.bf16.mxu0 %v6590
    %9670 = vmatpush1.bf16.msra.mxu0 %v6589
    %9671 = vmatprep.subr.bf16.mxu0 %v6598
    %9672 = vmatpush1.bf16.msra.mxu0 %v6597
    %9673 = vmatprep.subr.bf16.mxu0 %v6606
    %9674 = vmatpush1.bf16.msra.mxu0 %v6605
    %9675 = vmatprep.subr.bf16.mxu0 %v6614
    %9676 = vmatpush1.bf16.msra.mxu0 %v6613
    %9677 = vmatprep.subr.bf16.mxu0 %v6622
    %9678 = vmatpush1.bf16.msra.mxu0 %v6621
    %9679 = vmatprep.subr.bf16.mxu0 %v6630
    %9680 = vmatpush1.bf16.msra.mxu0 %v6629
    %9681 = vmatprep.mubr.bf16.mxu0 %v171
    %9682 = vmatmul.mubr.bf16.gmra.mrb[0].mxu0 %v170
    %v9683 = vpop.f32.mrb[0].mxu0
    %v9684 = vadd.f32 %v1768, %v9683
    %v9685 = vpop.f32.mrb[0].mxu0
    %v9686 = vadd.f32 %v1772, %v9685
    %v9687 = vpop.f32.mrb[0].mxu0
    %v9688 = vpop.f32.mrb[0].mxu0
    %9689 = vdwg.mxu0
    %9690 = vmatprep.subr.bf16.mxu0 %v6638
    %9691 = vmatpush1.bf16.msra.mxu0 %v6637
    %9692 = vmatprep.subr.bf16.mxu0 %v6646
    %9693 = vmatpush1.bf16.msra.mxu0 %v6645
    %9694 = vmatprep.subr.bf16.mxu0 %v6654
    %9695 = vmatpush1.bf16.msra.mxu0 %v6653
    %9696 = vmatprep.subr.bf16.mxu0 %v6662
    %9697 = vmatpush1.bf16.msra.mxu0 %v6661
    %9698 = vmatprep.subr.bf16.mxu0 %v6670
    %9699 = vmatpush1.bf16.msra.mxu0 %v6669
    %9700 = vmatprep.subr.bf16.mxu0 %v6678
    %9701 = vmatpush1.bf16.msra.mxu0 %v6677
    %9702 = vmatprep.subr.bf16.mxu0 %v6686
    %9703 = vmatpush1.bf16.msra.mxu0 %v6685
    %9704 = vmatprep.subr.bf16.mxu0 %v6694
    %9705 = vmatpush1.bf16.msra.mxu0 %v6693
    %9706 = vmatprep.subr.bf16.mxu0 %v6702
    %9707 = vmatpush1.bf16.msra.mxu0 %v6701
    %9708 = vmatprep.subr.bf16.mxu0 %v6710
    %9709 = vmatpush1.bf16.msra.mxu0 %v6709
    %9710 = vmatprep.subr.bf16.mxu0 %v6718
    %9711 = vmatpush1.bf16.msra.mxu0 %v6717
    %9712 = vmatprep.subr.bf16.mxu0 %v6726
    %9713 = vmatpush1.bf16.msra.mxu0 %v6725
    %9714 = vmatprep.subr.bf16.mxu0 %v6734
    %9715 = vmatpush1.bf16.msra.mxu0 %v6733
    %9716 = vmatprep.subr.bf16.mxu0 %v6742
    %9717 = vmatpush1.bf16.msra.mxu0 %v6741
    %9718 = vmatprep.subr.bf16.mxu0 %v6750
    %9719 = vmatpush1.bf16.msra.mxu0 %v6749
    %9720 = vmatprep.subr.bf16.mxu0 %v6758
    %9721 = vmatpush1.bf16.msra.mxu0 %v6757
    %9722 = vmatprep.mubr.bf16.mxu0 %v173
    %9723 = vmatmul.mubr.bf16.gmra.mrb[0].mxu0 %v172
    %v9724 = vpop.f32.mrb[0].mxu0
    %v9725 = vadd.f32 %v9684, %v9724
    %v9726 = vpop.f32.mrb[0].mxu0
    %v9727 = vadd.f32 %v9686, %v9726
    %v9728 = vpop.f32.mrb[0].mxu0
    %v9729 = vpop.f32.mrb[0].mxu0
    %9730 = vdwg.mxu0
    %9731 = vmatprep.subr.bf16.mxu0 %v6766
    %9732 = vmatpush1.bf16.msra.mxu0 %v6765
    %9733 = vmatprep.subr.bf16.mxu0 %v6774
    %9734 = vmatpush1.bf16.msra.mxu0 %v6773
    %9735 = vmatprep.subr.bf16.mxu0 %v6782
    %9736 = vmatpush1.bf16.msra.mxu0 %v6781
    %9737 = vmatprep.subr.bf16.mxu0 %v6790
    %9738 = vmatpush1.bf16.msra.mxu0 %v6789
    %9739 = vmatprep.subr.bf16.mxu0 %v6798
    %9740 = vmatpush1.bf16.msra.mxu0 %v6797
    %9741 = vmatprep.subr.bf16.mxu0 %v6806
    %9742 = vmatpush1.bf16.msra.mxu0 %v6805
    %9743 = vmatprep.subr.bf16.mxu0 %v6814
    %9744 = vmatpush1.bf16.msra.mxu0 %v6813
    %9745 = vmatprep.subr.bf16.mxu0 %v6822
    %9746 = vmatpush1.bf16.msra.mxu0 %v6821
    %9747 = vmatprep.subr.bf16.mxu0 %v6830
    %9748 = vmatpush1.bf16.msra.mxu0 %v6829
    %9749 = vmatprep.subr.bf16.mxu0 %v6838
    %9750 = vmatpush1.bf16.msra.mxu0 %v6837
    %9751 = vmatprep.subr.bf16.mxu0 %v6846
    %9752 = vmatpush1.bf16.msra.mxu0 %v6845
    %9753 = vmatprep.subr.bf16.mxu0 %v6854
    %9754 = vmatpush1.bf16.msra.mxu0 %v6853
    %9755 = vmatprep.subr.bf16.mxu0 %v6862
    %9756 = vmatpush1.bf16.msra.mxu0 %v6861
    %9757 = vmatprep.subr.bf16.mxu0 %v6870
    %9758 = vmatpush1.bf16.msra.mxu0 %v6869
    %9759 = vmatprep.subr.bf16.mxu0 %v6878
    %9760 = vmatpush1.bf16.msra.mxu0 %v6877
    %9761 = vmatprep.subr.bf16.mxu0 %v6886
    %9762 = vmatpush1.bf16.msra.mxu0 %v6885
    %9763 = vmatprep.mubr.bf16.mxu0 %v175
    %9764 = vmatmul.mubr.bf16.gmra.mrb[0].mxu0 %v174
    %v9765 = vpop.f32.mrb[0].mxu0
    %v9766 = vadd.f32 %v9725, %v9765
    %v9767 = vpop.f32.mrb[0].mxu0
    %v9768 = vadd.f32 %v9727, %v9767
    %v9769 = vpop.f32.mrb[0].mxu0
    %v9770 = vpop.f32.mrb[0].mxu0
    %9771 = vdwg.mxu0
    %9772 = vmatprep.subr.bf16.mxu0 %v6894
    %9773 = vmatpush1.bf16.msra.mxu0 %v6893
    %9774 = vmatprep.subr.bf16.mxu0 %v6902
    %9775 = vmatpush1.bf16.msra.mxu0 %v6901
    %9776 = vmatprep.subr.bf16.mxu0 %v6910
    %9777 = vmatpush1.bf16.msra.mxu0 %v6909
    %9778 = vmatprep.subr.bf16.mxu0 %v6918
    %9779 = vmatpush1.bf16.msra.mxu0 %v6917
    %9780 = vmatprep.subr.bf16.mxu0 %v6926
    %9781 = vmatpush1.bf16.msra.mxu0 %v6925
    %9782 = vmatprep.subr.bf16.mxu0 %v6934
    %9783 = vmatpush1.bf16.msra.mxu0 %v6933
    %9784 = vmatprep.subr.bf16.mxu0 %v6942
    %9785 = vmatpush1.bf16.msra.mxu0 %v6941
    %9786 = vmatprep.subr.bf16.mxu0 %v6950
    %9787 = vmatpush1.bf16.msra.mxu0 %v6949
    %9788 = vmatprep.subr.bf16.mxu0 %v6958
    %9789 = vmatpush1.bf16.msra.mxu0 %v6957
    %9790 = vmatprep.subr.bf16.mxu0 %v6966
    %9791 = vmatpush1.bf16.msra.mxu0 %v6965
    %9792 = vmatprep.subr.bf16.mxu0 %v6974
    %9793 = vmatpush1.bf16.msra.mxu0 %v6973
    %9794 = vmatprep.subr.bf16.mxu0 %v6982
    %9795 = vmatpush1.bf16.msra.mxu0 %v6981
    %9796 = vmatprep.subr.bf16.mxu0 %v6990
    %9797 = vmatpush1.bf16.msra.mxu0 %v6989
    %9798 = vmatprep.subr.bf16.mxu0 %v6998
    %9799 = vmatpush1.bf16.msra.mxu0 %v6997
    %9800 = vmatprep.subr.bf16.mxu0 %v7006
    %9801 = vmatpush1.bf16.msra.mxu0 %v7005
    %9802 = vmatprep.subr.bf16.mxu0 %v7014
    %9803 = vmatpush1.bf16.msra.mxu0 %v7013
    %9804 = vmatprep.mubr.bf16.mxu0 %v177
    %9805 = vmatmul.mubr.bf16.gmra.mrb[0].mxu0 %v176
    %v9806 = vpop.f32.mrb[0].mxu0
    %v9807 = vadd.f32 %v9766, %v9806
    %v9808 = vpop.f32.mrb[0].mxu0
    %v9809 = vadd.f32 %v9768, %v9808
    %v9810 = vpop.f32.mrb[0].mxu0
    %v9811 = vpop.f32.mrb[0].mxu0
    %9812 = vdwg.mxu0
    %9813 = vmatprep.subr.bf16.mxu0 %v7022
    %9814 = vmatpush1.bf16.msra.mxu0 %v7021
    %9815 = vmatprep.subr.bf16.mxu0 %v7030
    %9816 = vmatpush1.bf16.msra.mxu0 %v7029
    %9817 = vmatprep.subr.bf16.mxu0 %v7038
    %9818 = vmatpush1.bf16.msra.mxu0 %v7037
    %9819 = vmatprep.subr.bf16.mxu0 %v7046
    %9820 = vmatpush1.bf16.msra.mxu0 %v7045
    %9821 = vmatprep.subr.bf16.mxu0 %v7054
    %9822 = vmatpush1.bf16.msra.mxu0 %v7053
    %9823 = vmatprep.subr.bf16.mxu0 %v7062
    %9824 = vmatpush1.bf16.msra.mxu0 %v7061
    %9825 = vmatprep.subr.bf16.mxu0 %v7070
    %9826 = vmatpush1.bf16.msra.mxu0 %v7069
    %9827 = vmatprep.subr.bf16.mxu0 %v7078
    %9828 = vmatpush1.bf16.msra.mxu0 %v7077
    %9829 = vmatprep.subr.bf16.mxu0 %v7086
    %9830 = vmatpush1.bf16.msra.mxu0 %v7085
    %9831 = vmatprep.subr.bf16.mxu0 %v7094
    %9832 = vmatpush1.bf16.msra.mxu0 %v7093
    %9833 = vmatprep.subr.bf16.mxu0 %v7102
    %9834 = vmatpush1.bf16.msra.mxu0 %v7101
    %9835 = vmatprep.subr.bf16.mxu0 %v7110
    %9836 = vmatpush1.bf16.msra.mxu0 %v7109
    %9837 = vmatprep.subr.bf16.mxu0 %v7118
    %9838 = vmatpush1.bf16.msra.mxu0 %v7117
    %9839 = vmatprep.subr.bf16.mxu0 %v7126
    %9840 = vmatpush1.bf16.msra.mxu0 %v7125
    %9841 = vmatprep.subr.bf16.mxu0 %v7134
    %9842 = vmatpush1.bf16.msra.mxu0 %v7133
    %9843 = vmatprep.subr.bf16.mxu0 %v7142
    %9844 = vmatpush1.bf16.msra.mxu0 %v7141
    %9845 = vmatprep.mubr.bf16.mxu0 %v179
    %9846 = vmatmul.mubr.bf16.gmra.mrb[0].mxu0 %v178
    %v9847 = vpop.f32.mrb[0].mxu0
    %v9848 = vadd.f32 %v9807, %v9847
    %v9849 = vpop.f32.mrb[0].mxu0
    %v9850 = vadd.f32 %v9809, %v9849
    %v9851 = vpop.f32.mrb[0].mxu0
    %v9852 = vpop.f32.mrb[0].mxu0
    %9853 = vdwg.mxu0
    %9854 = vmatprep.subr.bf16.mxu0 %v7150
    %9855 = vmatpush1.bf16.msra.mxu0 %v7149
    %9856 = vmatprep.subr.bf16.mxu0 %v7158
    %9857 = vmatpush1.bf16.msra.mxu0 %v7157
    %9858 = vmatprep.subr.bf16.mxu0 %v7166
    %9859 = vmatpush1.bf16.msra.mxu0 %v7165
    %9860 = vmatprep.subr.bf16.mxu0 %v7174
    %9861 = vmatpush1.bf16.msra.mxu0 %v7173
    %9862 = vmatprep.subr.bf16.mxu0 %v7182
    %9863 = vmatpush1.bf16.msra.mxu0 %v7181
    %9864 = vmatprep.subr.bf16.mxu0 %v7190
    %9865 = vmatpush1.bf16.msra.mxu0 %v7189
    %9866 = vmatprep.subr.bf16.mxu0 %v7198
    %9867 = vmatpush1.bf16.msra.mxu0 %v7197
    %9868 = vmatprep.subr.bf16.mxu0 %v7206
    %9869 = vmatpush1.bf16.msra.mxu0 %v7205
    %9870 = vmatprep.subr.bf16.mxu0 %v7214
    %9871 = vmatpush1.bf16.msra.mxu0 %v7213
    %9872 = vmatprep.subr.bf16.mxu0 %v7222
    %9873 = vmatpush1.bf16.msra.mxu0 %v7221
    %9874 = vmatprep.subr.bf16.mxu0 %v7230
    %9875 = vmatpush1.bf16.msra.mxu0 %v7229
    %9876 = vmatprep.subr.bf16.mxu0 %v7238
    %9877 = vmatpush1.bf16.msra.mxu0 %v7237
    %9878 = vmatprep.subr.bf16.mxu0 %v7246
    %9879 = vmatpush1.bf16.msra.mxu0 %v7245
    %9880 = vmatprep.subr.bf16.mxu0 %v7254
    %9881 = vmatpush1.bf16.msra.mxu0 %v7253
    %9882 = vmatprep.subr.bf16.mxu0 %v7262
    %9883 = vmatpush1.bf16.msra.mxu0 %v7261
    %9884 = vmatprep.subr.bf16.mxu0 %v7270
    %9885 = vmatpush1.bf16.msra.mxu0 %v7269
    %9886 = vmatprep.mubr.bf16.mxu0 %v181
    %9887 = vmatmul.mubr.bf16.gmra.mrb[0].mxu0 %v180
    %v9888 = vpop.f32.mrb[0].mxu0
    %v9889 = vadd.f32 %v9848, %v9888
    %v9890 = vpop.f32.mrb[0].mxu0
    %v9891 = vadd.f32 %v9850, %v9890
    %v9892 = vpop.f32.mrb[0].mxu0
    %v9893 = vpop.f32.mrb[0].mxu0
    %9894 = vdwg.mxu0
    %9895 = vmatprep.subr.bf16.mxu0 %v7278
    %9896 = vmatpush1.bf16.msra.mxu0 %v7277
    %9897 = vmatprep.subr.bf16.mxu0 %v7286
    %9898 = vmatpush1.bf16.msra.mxu0 %v7285
    %9899 = vmatprep.subr.bf16.mxu0 %v7294
    %9900 = vmatpush1.bf16.msra.mxu0 %v7293
    %9901 = vmatprep.subr.bf16.mxu0 %v7302
    %9902 = vmatpush1.bf16.msra.mxu0 %v7301
    %9903 = vmatprep.subr.bf16.mxu0 %v7310
    %9904 = vmatpush1.bf16.msra.mxu0 %v7309
    %9905 = vmatprep.subr.bf16.mxu0 %v7318
    %9906 = vmatpush1.bf16.msra.mxu0 %v7317
    %9907 = vmatprep.subr.bf16.mxu0 %v7326
    %9908 = vmatpush1.bf16.msra.mxu0 %v7325
    %9909 = vmatprep.subr.bf16.mxu0 %v7334
    %9910 = vmatpush1.bf16.msra.mxu0 %v7333
    %9911 = vmatprep.subr.bf16.mxu0 %v7342
    %9912 = vmatpush1.bf16.msra.mxu0 %v7341
    %9913 = vmatprep.subr.bf16.mxu0 %v7350
    %9914 = vmatpush1.bf16.msra.mxu0 %v7349
    %9915 = vmatprep.subr.bf16.mxu0 %v7358
    %9916 = vmatpush1.bf16.msra.mxu0 %v7357
    %9917 = vmatprep.subr.bf16.mxu0 %v7366
    %9918 = vmatpush1.bf16.msra.mxu0 %v7365
    %9919 = vmatprep.subr.bf16.mxu0 %v7374
    %9920 = vmatpush1.bf16.msra.mxu0 %v7373
    %9921 = vmatprep.subr.bf16.mxu0 %v7382
    %9922 = vmatpush1.bf16.msra.mxu0 %v7381
    %9923 = vmatprep.subr.bf16.mxu0 %v7390
    %9924 = vmatpush1.bf16.msra.mxu0 %v7389
    %9925 = vmatprep.subr.bf16.mxu0 %v7398
    %9926 = vmatpush1.bf16.msra.mxu0 %v7397
    %9927 = vmatprep.mubr.bf16.mxu0 %v183
    %9928 = vmatmul.mubr.bf16.gmra.mrb[0].mxu0 %v182
    %v9929 = vpop.f32.mrb[0].mxu0
    %v9930 = vadd.f32 %v9889, %v9929
    %v9931 = vpop.f32.mrb[0].mxu0
    %v9932 = vadd.f32 %v9891, %v9931
    %v9933 = vpop.f32.mrb[0].mxu0
    %v9934 = vpop.f32.mrb[0].mxu0
    %9935 = vdwg.mxu0
    %9936 = vmatprep.subr.bf16.mxu0 %v7406
    %9937 = vmatpush1.bf16.msra.mxu0 %v7405
    %9938 = vmatprep.subr.bf16.mxu0 %v7414
    %9939 = vmatpush1.bf16.msra.mxu0 %v7413
    %9940 = vmatprep.subr.bf16.mxu0 %v7422
    %9941 = vmatpush1.bf16.msra.mxu0 %v7421
    %9942 = vmatprep.subr.bf16.mxu0 %v7430
    %9943 = vmatpush1.bf16.msra.mxu0 %v7429
    %9944 = vmatprep.subr.bf16.mxu0 %v7438
    %9945 = vmatpush1.bf16.msra.mxu0 %v7437
    %9946 = vmatprep.subr.bf16.mxu0 %v7446
    %9947 = vmatpush1.bf16.msra.mxu0 %v7445
    %9948 = vmatprep.subr.bf16.mxu0 %v7454
    %9949 = vmatpush1.bf16.msra.mxu0 %v7453
    %9950 = vmatprep.subr.bf16.mxu0 %v7462
    %9951 = vmatpush1.bf16.msra.mxu0 %v7461
    %9952 = vmatprep.subr.bf16.mxu0 %v7470
    %9953 = vmatpush1.bf16.msra.mxu0 %v7469
    %9954 = vmatprep.subr.bf16.mxu0 %v7478
    %9955 = vmatpush1.bf16.msra.mxu0 %v7477
    %9956 = vmatprep.subr.bf16.mxu0 %v7486
    %9957 = vmatpush1.bf16.msra.mxu0 %v7485
    %9958 = vmatprep.subr.bf16.mxu0 %v7494
    %9959 = vmatpush1.bf16.msra.mxu0 %v7493
    %9960 = vmatprep.subr.bf16.mxu0 %v7502
    %9961 = vmatpush1.bf16.msra.mxu0 %v7501
    %9962 = vmatprep.subr.bf16.mxu0 %v7510
    %9963 = vmatpush1.bf16.msra.mxu0 %v7509
    %9964 = vmatprep.subr.bf16.mxu0 %v7518
    %9965 = vmatpush1.bf16.msra.mxu0 %v7517
    %9966 = vmatprep.subr.bf16.mxu0 %v7526
    %9967 = vmatpush1.bf16.msra.mxu0 %v7525
    %9968 = vmatprep.mubr.bf16.mxu0 %v185
    %9969 = vmatmul.mubr.bf16.gmra.mrb[0].mxu0 %v184
    %v9970 = vpop.f32.mrb[0].mxu0
    %v9971 = vadd.f32 %v9930, %v9970
    %v9972 = vpop.f32.mrb[0].mxu0
    %v9973 = vadd.f32 %v9932, %v9972
    %v9974 = vpop.f32.mrb[0].mxu0
    %v9975 = vpop.f32.mrb[0].mxu0
    %9976 = vdwg.mxu0
    %9977 = vmatprep.subr.bf16.mxu0 %v7534
    %9978 = vmatpush1.bf16.msra.mxu0 %v7533
    %9979 = vmatprep.subr.bf16.mxu0 %v7542
    %9980 = vmatpush1.bf16.msra.mxu0 %v7541
    %9981 = vmatprep.subr.bf16.mxu0 %v7550
    %9982 = vmatpush1.bf16.msra.mxu0 %v7549
    %9983 = vmatprep.subr.bf16.mxu0 %v7558
    %9984 = vmatpush1.bf16.msra.mxu0 %v7557
    %9985 = vmatprep.subr.bf16.mxu0 %v7566
    %9986 = vmatpush1.bf16.msra.mxu0 %v7565
    %9987 = vmatprep.subr.bf16.mxu0 %v7574
    %9988 = vmatpush1.bf16.msra.mxu0 %v7573
    %9989 = vmatprep.subr.bf16.mxu0 %v7582
    %9990 = vmatpush1.bf16.msra.mxu0 %v7581
    %9991 = vmatprep.subr.bf16.mxu0 %v7590
    %9992 = vmatpush1.bf16.msra.mxu0 %v7589
    %9993 = vmatprep.subr.bf16.mxu0 %v7598
    %9994 = vmatpush1.bf16.msra.mxu0 %v7597
    %9995 = vmatprep.subr.bf16.mxu0 %v7606
    %9996 = vmatpush1.bf16.msra.mxu0 %v7605
    %9997 = vmatprep.subr.bf16.mxu0 %v7614
    %9998 = vmatpush1.bf16.msra.mxu0 %v7613
    %9999 = vmatprep.subr.bf16.mxu0 %v7622
    %10000 = vmatpush1.bf16.msra.mxu0 %v7621
    %10001 = vmatprep.subr.bf16.mxu0 %v7630
    %10002 = vmatpush1.bf16.msra.mxu0 %v7629
    %10003 = vmatprep.subr.bf16.mxu0 %v7638
    %10004 = vmatpush1.bf16.msra.mxu0 %v7637
    %10005 = vmatprep.subr.bf16.mxu0 %v7646
    %10006 = vmatpush1.bf16.msra.mxu0 %v7645
    %10007 = vmatprep.subr.bf16.mxu0 %v7654
    %10008 = vmatpush1.bf16.msra.mxu0 %v7653
    %10009 = vmatprep.mubr.bf16.mxu0 %v187
    %10010 = vmatmul.mubr.bf16.gmra.mrb[0].mxu0 %v186
    %v10011 = vpop.f32.mrb[0].mxu0
    %v10012 = vadd.f32 %v9971, %v10011
    %v10013 = vpop.f32.mrb[0].mxu0
    %v10014 = vadd.f32 %v9973, %v10013
    %v10015 = vpop.f32.mrb[0].mxu0
    %v10016 = vpop.f32.mrb[0].mxu0
    %10017 = vdwg.mxu0
    %10018 = vmatprep.subr.bf16.mxu0 %v7662
    %10019 = vmatpush1.bf16.msra.mxu0 %v7661
    %10020 = vmatprep.subr.bf16.mxu0 %v7670
    %10021 = vmatpush1.bf16.msra.mxu0 %v7669
    %10022 = vmatprep.subr.bf16.mxu0 %v7678
    %10023 = vmatpush1.bf16.msra.mxu0 %v7677
    %10024 = vmatprep.subr.bf16.mxu0 %v7686
    %10025 = vmatpush1.bf16.msra.mxu0 %v7685
    %10026 = vmatprep.subr.bf16.mxu0 %v7694
    %10027 = vmatpush1.bf16.msra.mxu0 %v7693
    %10028 = vmatprep.subr.bf16.mxu0 %v7702
    %10029 = vmatpush1.bf16.msra.mxu0 %v7701
    %10030 = vmatprep.subr.bf16.mxu0 %v7710
    %10031 = vmatpush1.bf16.msra.mxu0 %v7709
    %10032 = vmatprep.subr.bf16.mxu0 %v7718
    %10033 = vmatpush1.bf16.msra.mxu0 %v7717
    %10034 = vmatprep.subr.bf16.mxu0 %v7726
    %10035 = vmatpush1.bf16.msra.mxu0 %v7725
    %10036 = vmatprep.subr.bf16.mxu0 %v7734
    %10037 = vmatpush1.bf16.msra.mxu0 %v7733
    %10038 = vmatprep.subr.bf16.mxu0 %v7742
    %10039 = vmatpush1.bf16.msra.mxu0 %v7741
    %10040 = vmatprep.subr.bf16.mxu0 %v7750
    %10041 = vmatpush1.bf16.msra.mxu0 %v7749
    %10042 = vmatprep.subr.bf16.mxu0 %v7758
    %10043 = vmatpush1.bf16.msra.mxu0 %v7757
    %10044 = vmatprep.subr.bf16.mxu0 %v7766
    %10045 = vmatpush1.bf16.msra.mxu0 %v7765
    %10046 = vmatprep.subr.bf16.mxu0 %v7774
    %10047 = vmatpush1.bf16.msra.mxu0 %v7773
    %10048 = vmatprep.subr.bf16.mxu0 %v7782
    %10049 = vmatpush1.bf16.msra.mxu0 %v7781
    %10050 = vmatprep.mubr.bf16.mxu0 %v189
    %10051 = vmatmul.mubr.bf16.gmra.mrb[0].mxu0 %v188
    %v10052 = vpop.f32.mrb[0].mxu0
    %v10053 = vadd.f32 %v10012, %v10052
    %v10054 = vpop.f32.mrb[0].mxu0
    %v10055 = vadd.f32 %v10014, %v10054
    %v10056 = vpop.f32.mrb[0].mxu0
    %v10057 = vpop.f32.mrb[0].mxu0
    %10058 = vdwg.mxu0
    %10059 = vmatprep.subr.bf16.mxu0 %v7790
    %10060 = vmatpush1.bf16.msra.mxu0 %v7789
    %10061 = vmatprep.subr.bf16.mxu0 %v7798
    %10062 = vmatpush1.bf16.msra.mxu0 %v7797
    %10063 = vmatprep.subr.bf16.mxu0 %v7806
    %10064 = vmatpush1.bf16.msra.mxu0 %v7805
    %10065 = vmatprep.subr.bf16.mxu0 %v7814
    %10066 = vmatpush1.bf16.msra.mxu0 %v7813
    %10067 = vmatprep.subr.bf16.mxu0 %v7822
    %10068 = vmatpush1.bf16.msra.mxu0 %v7821
    %10069 = vmatprep.subr.bf16.mxu0 %v7830
    %10070 = vmatpush1.bf16.msra.mxu0 %v7829
    %10071 = vmatprep.subr.bf16.mxu0 %v7838
    %10072 = vmatpush1.bf16.msra.mxu0 %v7837
    %10073 = vmatprep.subr.bf16.mxu0 %v7846
    %10074 = vmatpush1.bf16.msra.mxu0 %v7845
    %10075 = vmatprep.subr.bf16.mxu0 %v7854
    %10076 = vmatpush1.bf16.msra.mxu0 %v7853
    %10077 = vmatprep.subr.bf16.mxu0 %v7862
    %10078 = vmatpush1.bf16.msra.mxu0 %v7861
    %10079 = vmatprep.subr.bf16.mxu0 %v7870
    %10080 = vmatpush1.bf16.msra.mxu0 %v7869
    %10081 = vmatprep.subr.bf16.mxu0 %v7878
    %10082 = vmatpush1.bf16.msra.mxu0 %v7877
    %10083 = vmatprep.subr.bf16.mxu0 %v7886
    %10084 = vmatpush1.bf16.msra.mxu0 %v7885
    %10085 = vmatprep.subr.bf16.mxu0 %v7894
    %10086 = vmatpush1.bf16.msra.mxu0 %v7893
    %10087 = vmatprep.subr.bf16.mxu0 %v7902
    %10088 = vmatpush1.bf16.msra.mxu0 %v7901
    %10089 = vmatprep.subr.bf16.mxu0 %v7910
    %10090 = vmatpush1.bf16.msra.mxu0 %v7909
    %10091 = vmatprep.mubr.bf16.mxu0 %v191
    %10092 = vmatmul.mubr.bf16.gmra.mrb[0].mxu0 %v190
    %v10093 = vpop.f32.mrb[0].mxu0
    %v10094 = vadd.f32 %v10053, %v10093
    %v10095 = vpop.f32.mrb[0].mxu0
    %v10096 = vadd.f32 %v10055, %v10095
    %v10097 = vpop.f32.mrb[0].mxu0
    %v10098 = vpop.f32.mrb[0].mxu0
    %10099 = vdwg.mxu0
    %10100 = vmatprep.subr.bf16.mxu0 %v7918
    %10101 = vmatpush1.bf16.msra.mxu0 %v7917
    %10102 = vmatprep.subr.bf16.mxu0 %v7926
    %10103 = vmatpush1.bf16.msra.mxu0 %v7925
    %10104 = vmatprep.subr.bf16.mxu0 %v7934
    %10105 = vmatpush1.bf16.msra.mxu0 %v7933
    %10106 = vmatprep.subr.bf16.mxu0 %v7942
    %10107 = vmatpush1.bf16.msra.mxu0 %v7941
    %10108 = vmatprep.subr.bf16.mxu0 %v7950
    %10109 = vmatpush1.bf16.msra.mxu0 %v7949
    %10110 = vmatprep.subr.bf16.mxu0 %v7958
    %10111 = vmatpush1.bf16.msra.mxu0 %v7957
    %10112 = vmatprep.subr.bf16.mxu0 %v7966
    %10113 = vmatpush1.bf16.msra.mxu0 %v7965
    %10114 = vmatprep.subr.bf16.mxu0 %v7974
    %10115 = vmatpush1.bf16.msra.mxu0 %v7973
    %10116 = vmatprep.subr.bf16.mxu0 %v7982
    %10117 = vmatpush1.bf16.msra.mxu0 %v7981
    %10118 = vmatprep.subr.bf16.mxu0 %v7990
    %10119 = vmatpush1.bf16.msra.mxu0 %v7989
    %10120 = vmatprep.subr.bf16.mxu0 %v7998
    %10121 = vmatpush1.bf16.msra.mxu0 %v7997
    %10122 = vmatprep.subr.bf16.mxu0 %v8006
    %10123 = vmatpush1.bf16.msra.mxu0 %v8005
    %10124 = vmatprep.subr.bf16.mxu0 %v8014
    %10125 = vmatpush1.bf16.msra.mxu0 %v8013
    %10126 = vmatprep.subr.bf16.mxu0 %v8022
    %10127 = vmatpush1.bf16.msra.mxu0 %v8021
    %10128 = vmatprep.subr.bf16.mxu0 %v8030
    %10129 = vmatpush1.bf16.msra.mxu0 %v8029
    %10130 = vmatprep.subr.bf16.mxu0 %v8038
    %10131 = vmatpush1.bf16.msra.mxu0 %v8037
    %10132 = vmatprep.mubr.bf16.mxu0 %v193
    %10133 = vmatmul.mubr.bf16.gmra.mrb[0].mxu0 %v192
    %v10134 = vpop.f32.mrb[0].mxu0
    %v10135 = vadd.f32 %v10094, %v10134
    %v10136 = vpop.f32.mrb[0].mxu0
    %v10137 = vadd.f32 %v10096, %v10136
    %v10138 = vpop.f32.mrb[0].mxu0
    %v10139 = vpop.f32.mrb[0].mxu0
    %10140 = vdwg.mxu0
    %10141 = vmatprep.subr.bf16.mxu0 %v8046
    %10142 = vmatpush1.bf16.msra.mxu0 %v8045
    %10143 = vmatprep.subr.bf16.mxu0 %v8054
    %10144 = vmatpush1.bf16.msra.mxu0 %v8053
    %10145 = vmatprep.subr.bf16.mxu0 %v8062
    %10146 = vmatpush1.bf16.msra.mxu0 %v8061
    %10147 = vmatprep.subr.bf16.mxu0 %v8070
    %10148 = vmatpush1.bf16.msra.mxu0 %v8069
    %10149 = vmatprep.subr.bf16.mxu0 0
    %10150 = vmatpush1.bf16.msra.mxu0 0
    %10151 = vmatprep.subr.bf16.mxu0 0
    %10152 = vmatpush1.bf16.msra.mxu0 0
    %10153 = vmatprep.subr.bf16.mxu0 0
    %10154 = vmatpush1.bf16.msra.mxu0 0
    %10155 = vmatprep.subr.bf16.mxu0 0
    %10156 = vmatpush1.bf16.msra.mxu0 0
    %10157 = vmatprep.subr.bf16.mxu0 0
    %10158 = vmatpush1.bf16.msra.mxu0 0
    %10159 = vmatprep.subr.bf16.mxu0 0
    %10160 = vmatpush1.bf16.msra.mxu0 0
    %10161 = vmatprep.subr.bf16.mxu0 0
    %10162 = vmatpush1.bf16.msra.mxu0 0
    %10163 = vmatprep.subr.bf16.mxu0 0
    %10164 = vmatpush1.bf16.msra.mxu0 0
    %10165 = vmatprep.subr.bf16.mxu0 0
    %10166 = vmatpush1.bf16.msra.mxu0 0
    %10167 = vmatprep.subr.bf16.mxu0 0
    %10168 = vmatpush1.bf16.msra.mxu0 0
    %10169 = vmatprep.subr.bf16.mxu0 0
    %10170 = vmatpush1.bf16.msra.mxu0 0
    %10171 = vmatprep.subr.bf16.mxu0 0
    %10172 = vmatpush1.bf16.msra.mxu0 0
    %10173 = vmatprep.mubr.bf16.mxu0 0
    %10174 = vmatmul.mubr.bf16.gmra.mrb[0].mxu0 %v9647
    %v10175 = vpop.f32.mrb[0].mxu0
    %v10176 = vadd.f32 %v10135, %v10175
    %v10177 = vpop.f32.mrb[0].mxu0
    %v10178 = vadd.f32 %v10137, %v10177
    %v10179 = vpop.f32.mrb[0].mxu0
    %v10180 = vpop.f32.mrb[0].mxu0
    %10181 = vdwg.mxu0
    %10182 = vmatprep.subr.bf16.mxu0 %v6512
    %10183 = vmatpush1.bf16.msra.mxu0 %v6511
    %10184 = vmatprep.subr.bf16.mxu0 %v6520
    %10185 = vmatpush1.bf16.msra.mxu0 %v6519
    %10186 = vmatprep.subr.bf16.mxu0 %v6528
    %10187 = vmatpush1.bf16.msra.mxu0 %v6527
    %10188 = vmatprep.subr.bf16.mxu0 %v6536
    %10189 = vmatpush1.bf16.msra.mxu0 %v6535
    %10190 = vmatprep.subr.bf16.mxu0 %v6544
    %10191 = vmatpush1.bf16.msra.mxu0 %v6543
    %10192 = vmatprep.subr.bf16.mxu0 %v6552
    %10193 = vmatpush1.bf16.msra.mxu0 %v6551
    %10194 = vmatprep.subr.bf16.mxu0 %v6560
    %10195 = vmatpush1.bf16.msra.mxu0 %v6559
    %10196 = vmatprep.subr.bf16.mxu0 %v6568
    %10197 = vmatpush1.bf16.msra.mxu0 %v6567
    %10198 = vmatprep.subr.bf16.mxu0 %v6576
    %10199 = vmatpush1.bf16.msra.mxu0 %v6575
    %10200 = vmatprep.subr.bf16.mxu0 %v6584
    %10201 = vmatpush1.bf16.msra.mxu0 %v6583
    %10202 = vmatprep.subr.bf16.mxu0 %v6592
    %10203 = vmatpush1.bf16.msra.mxu0 %v6591
    %10204 = vmatprep.subr.bf16.mxu0 %v6600
    %10205 = vmatpush1.bf16.msra.mxu0 %v6599
    %10206 = vmatprep.subr.bf16.mxu0 %v6608
    %10207 = vmatpush1.bf16.msra.mxu0 %v6607
    %10208 = vmatprep.subr.bf16.mxu0 %v6616
    %10209 = vmatpush1.bf16.msra.mxu0 %v6615
    %10210 = vmatprep.subr.bf16.mxu0 %v6624
    %10211 = vmatpush1.bf16.msra.mxu0 %v6623
    %10212 = vmatprep.subr.bf16.mxu0 %v6632
    %10213 = vmatpush1.bf16.msra.mxu0 %v6631
    %10214 = vmatprep.mubr.bf16.mxu0 %v171
    %10215 = vmatmul.mubr.bf16.gmra.mrb[0].mxu0 %v170
    %v10216 = vpop.f32.mrb[0].mxu0
    %v10217 = vadd.f32 %v1776, %v10216
    %v10218 = vpop.f32.mrb[0].mxu0
    %v10219 = vadd.f32 %v1780, %v10218
    %v10220 = vpop.f32.mrb[0].mxu0
    %v10221 = vpop.f32.mrb[0].mxu0
    %10222 = vdwg.mxu0
    %10223 = vmatprep.subr.bf16.mxu0 %v6640
    %10224 = vmatpush1.bf16.msra.mxu0 %v6639
    %10225 = vmatprep.subr.bf16.mxu0 %v6648
    %10226 = vmatpush1.bf16.msra.mxu0 %v6647
    %10227 = vmatprep.subr.bf16.mxu0 %v6656
    %10228 = vmatpush1.bf16.msra.mxu0 %v6655
    %10229 = vmatprep.subr.bf16.mxu0 %v6664
    %10230 = vmatpush1.bf16.msra.mxu0 %v6663
    %10231 = vmatprep.subr.bf16.mxu0 %v6672
    %10232 = vmatpush1.bf16.msra.mxu0 %v6671
    %10233 = vmatprep.subr.bf16.mxu0 %v6680
    %10234 = vmatpush1.bf16.msra.mxu0 %v6679
    %10235 = vmatprep.subr.bf16.mxu0 %v6688
    %10236 = vmatpush1.bf16.msra.mxu0 %v6687
    %10237 = vmatprep.subr.bf16.mxu0 %v6696
    %10238 = vmatpush1.bf16.msra.mxu0 %v6695
    %10239 = vmatprep.subr.bf16.mxu0 %v6704
    %10240 = vmatpush1.bf16.msra.mxu0 %v6703
    %10241 = vmatprep.subr.bf16.mxu0 %v6712
    %10242 = vmatpush1.bf16.msra.mxu0 %v6711
    %10243 = vmatprep.subr.bf16.mxu0 %v6720
    %10244 = vmatpush1.bf16.msra.mxu0 %v6719
    %10245 = vmatprep.subr.bf16.mxu0 %v6728
    %10246 = vmatpush1.bf16.msra.mxu0 %v6727
    %10247 = vmatprep.subr.bf16.mxu0 %v6736
    %10248 = vmatpush1.bf16.msra.mxu0 %v6735
    %10249 = vmatprep.subr.bf16.mxu0 %v6744
    %10250 = vmatpush1.bf16.msra.mxu0 %v6743
    %10251 = vmatprep.subr.bf16.mxu0 %v6752
    %10252 = vmatpush1.bf16.msra.mxu0 %v6751
    %10253 = vmatprep.subr.bf16.mxu0 %v6760
    %10254 = vmatpush1.bf16.msra.mxu0 %v6759
    %10255 = vmatprep.mubr.bf16.mxu0 %v173
    %10256 = vmatmul.mubr.bf16.gmra.mrb[0].mxu0 %v172
    %v10257 = vpop.f32.mrb[0].mxu0
    %v10258 = vadd.f32 %v10217, %v10257
    %v10259 = vpop.f32.mrb[0].mxu0
    %v10260 = vadd.f32 %v10219, %v10259
    %v10261 = vpop.f32.mrb[0].mxu0
    %v10262 = vpop.f32.mrb[0].mxu0
    %10263 = vdwg.mxu0
    %10264 = vmatprep.subr.bf16.mxu0 %v6768
    %10265 = vmatpush1.bf16.msra.mxu0 %v6767
    %10266 = vmatprep.subr.bf16.mxu0 %v6776
    %10267 = vmatpush1.bf16.msra.mxu0 %v6775
    %10268 = vmatprep.subr.bf16.mxu0 %v6784
    %10269 = vmatpush1.bf16.msra.mxu0 %v6783
    %10270 = vmatprep.subr.bf16.mxu0 %v6792
    %10271 = vmatpush1.bf16.msra.mxu0 %v6791
    %10272 = vmatprep.subr.bf16.mxu0 %v6800
    %10273 = vmatpush1.bf16.msra.mxu0 %v6799
    %10274 = vmatprep.subr.bf16.mxu0 %v6808
    %10275 = vmatpush1.bf16.msra.mxu0 %v6807
    %10276 = vmatprep.subr.bf16.mxu0 %v6816
    %10277 = vmatpush1.bf16.msra.mxu0 %v6815
    %10278 = vmatprep.subr.bf16.mxu0 %v6824
    %10279 = vmatpush1.bf16.msra.mxu0 %v6823
    %10280 = vmatprep.subr.bf16.mxu0 %v6832
    %10281 = vmatpush1.bf16.msra.mxu0 %v6831
    %10282 = vmatprep.subr.bf16.mxu0 %v6840
    %10283 = vmatpush1.bf16.msra.mxu0 %v6839
    %10284 = vmatprep.subr.bf16.mxu0 %v6848
    %10285 = vmatpush1.bf16.msra.mxu0 %v6847
    %10286 = vmatprep.subr.bf16.mxu0 %v6856
    %10287 = vmatpush1.bf16.msra.mxu0 %v6855
    %10288 = vmatprep.subr.bf16.mxu0 %v6864
    %10289 = vmatpush1.bf16.msra.mxu0 %v6863
    %10290 = vmatprep.subr.bf16.mxu0 %v6872
    %10291 = vmatpush1.bf16.msra.mxu0 %v6871
    %10292 = vmatprep.subr.bf16.mxu0 %v6880
    %10293 = vmatpush1.bf16.msra.mxu0 %v6879
    %10294 = vmatprep.subr.bf16.mxu0 %v6888
    %10295 = vmatpush1.bf16.msra.mxu0 %v6887
    %10296 = vmatprep.mubr.bf16.mxu0 %v175
    %10297 = vmatmul.mubr.bf16.gmra.mrb[0].mxu0 %v174
    %v10298 = vpop.f32.mrb[0].mxu0
    %v10299 = vadd.f32 %v10258, %v10298
    %v10300 = vpop.f32.mrb[0].mxu0
    %v10301 = vadd.f32 %v10260, %v10300
    %v10302 = vpop.f32.mrb[0].mxu0
    %v10303 = vpop.f32.mrb[0].mxu0
    %10304 = vdwg.mxu0
    %10305 = vmatprep.subr.bf16.mxu0 %v6896
    %10306 = vmatpush1.bf16.msra.mxu0 %v6895
    %10307 = vmatprep.subr.bf16.mxu0 %v6904
    %10308 = vmatpush1.bf16.msra.mxu0 %v6903
    %10309 = vmatprep.subr.bf16.mxu0 %v6912
    %10310 = vmatpush1.bf16.msra.mxu0 %v6911
    %10311 = vmatprep.subr.bf16.mxu0 %v6920
    %10312 = vmatpush1.bf16.msra.mxu0 %v6919
    %10313 = vmatprep.subr.bf16.mxu0 %v6928
    %10314 = vmatpush1.bf16.msra.mxu0 %v6927
    %10315 = vmatprep.subr.bf16.mxu0 %v6936
    %10316 = vmatpush1.bf16.msra.mxu0 %v6935
    %10317 = vmatprep.subr.bf16.mxu0 %v6944
    %10318 = vmatpush1.bf16.msra.mxu0 %v6943
    %10319 = vmatprep.subr.bf16.mxu0 %v6952
    %10320 = vmatpush1.bf16.msra.mxu0 %v6951
    %10321 = vmatprep.subr.bf16.mxu0 %v6960
    %10322 = vmatpush1.bf16.msra.mxu0 %v6959
    %10323 = vmatprep.subr.bf16.mxu0 %v6968
    %10324 = vmatpush1.bf16.msra.mxu0 %v6967
    %10325 = vmatprep.subr.bf16.mxu0 %v6976
    %10326 = vmatpush1.bf16.msra.mxu0 %v6975
    %10327 = vmatprep.subr.bf16.mxu0 %v6984
    %10328 = vmatpush1.bf16.msra.mxu0 %v6983
    %10329 = vmatprep.subr.bf16.mxu0 %v6992
    %10330 = vmatpush1.bf16.msra.mxu0 %v6991
    %10331 = vmatprep.subr.bf16.mxu0 %v7000
    %10332 = vmatpush1.bf16.msra.mxu0 %v6999
    %10333 = vmatprep.subr.bf16.mxu0 %v7008
    %10334 = vmatpush1.bf16.msra.mxu0 %v7007
    %10335 = vmatprep.subr.bf16.mxu0 %v7016
    %10336 = vmatpush1.bf16.msra.mxu0 %v7015
    %10337 = vmatprep.mubr.bf16.mxu0 %v177
    %10338 = vmatmul.mubr.bf16.gmra.mrb[0].mxu0 %v176
    %v10339 = vpop.f32.mrb[0].mxu0
    %v10340 = vadd.f32 %v10299, %v10339
    %v10341 = vpop.f32.mrb[0].mxu0
    %v10342 = vadd.f32 %v10301, %v10341
    %v10343 = vpop.f32.mrb[0].mxu0
    %v10344 = vpop.f32.mrb[0].mxu0
    %10345 = vdwg.mxu0
    %10346 = vmatprep.subr.bf16.mxu0 %v7024
    %10347 = vmatpush1.bf16.msra.mxu0 %v7023
    %10348 = vmatprep.subr.bf16.mxu0 %v7032
    %10349 = vmatpush1.bf16.msra.mxu0 %v7031
    %10350 = vmatprep.subr.bf16.mxu0 %v7040
    %10351 = vmatpush1.bf16.msra.mxu0 %v7039
    %10352 = vmatprep.subr.bf16.mxu0 %v7048
    %10353 = vmatpush1.bf16.msra.mxu0 %v7047
    %10354 = vmatprep.subr.bf16.mxu0 %v7056
    %10355 = vmatpush1.bf16.msra.mxu0 %v7055
    %10356 = vmatprep.subr.bf16.mxu0 %v7064
    %10357 = vmatpush1.bf16.msra.mxu0 %v7063
    %10358 = vmatprep.subr.bf16.mxu0 %v7072
    %10359 = vmatpush1.bf16.msra.mxu0 %v7071
    %10360 = vmatprep.subr.bf16.mxu0 %v7080
    %10361 = vmatpush1.bf16.msra.mxu0 %v7079
    %10362 = vmatprep.subr.bf16.mxu0 %v7088
    %10363 = vmatpush1.bf16.msra.mxu0 %v7087
    %10364 = vmatprep.subr.bf16.mxu0 %v7096
    %10365 = vmatpush1.bf16.msra.mxu0 %v7095
    %10366 = vmatprep.subr.bf16.mxu0 %v7104
    %10367 = vmatpush1.bf16.msra.mxu0 %v7103
    %10368 = vmatprep.subr.bf16.mxu0 %v7112
    %10369 = vmatpush1.bf16.msra.mxu0 %v7111
    %10370 = vmatprep.subr.bf16.mxu0 %v7120
    %10371 = vmatpush1.bf16.msra.mxu0 %v7119
    %10372 = vmatprep.subr.bf16.mxu0 %v7128
    %10373 = vmatpush1.bf16.msra.mxu0 %v7127
    %10374 = vmatprep.subr.bf16.mxu0 %v7136
    %10375 = vmatpush1.bf16.msra.mxu0 %v7135
    %10376 = vmatprep.subr.bf16.mxu0 %v7144
    %10377 = vmatpush1.bf16.msra.mxu0 %v7143
    %10378 = vmatprep.mubr.bf16.mxu0 %v179
    %10379 = vmatmul.mubr.bf16.gmra.mrb[0].mxu0 %v178
    %v10380 = vpop.f32.mrb[0].mxu0
    %v10381 = vadd.f32 %v10340, %v10380
    %v10382 = vpop.f32.mrb[0].mxu0
    %v10383 = vadd.f32 %v10342, %v10382
    %v10384 = vpop.f32.mrb[0].mxu0
    %v10385 = vpop.f32.mrb[0].mxu0
    %10386 = vdwg.mxu0
    %10387 = vmatprep.subr.bf16.mxu0 %v7152
    %10388 = vmatpush1.bf16.msra.mxu0 %v7151
    %10389 = vmatprep.subr.bf16.mxu0 %v7160
    %10390 = vmatpush1.bf16.msra.mxu0 %v7159
    %10391 = vmatprep.subr.bf16.mxu0 %v7168
    %10392 = vmatpush1.bf16.msra.mxu0 %v7167
    %10393 = vmatprep.subr.bf16.mxu0 %v7176
    %10394 = vmatpush1.bf16.msra.mxu0 %v7175
    %10395 = vmatprep.subr.bf16.mxu0 %v7184
    %10396 = vmatpush1.bf16.msra.mxu0 %v7183
    %10397 = vmatprep.subr.bf16.mxu0 %v7192
    %10398 = vmatpush1.bf16.msra.mxu0 %v7191
    %10399 = vmatprep.subr.bf16.mxu0 %v7200
    %10400 = vmatpush1.bf16.msra.mxu0 %v7199
    %10401 = vmatprep.subr.bf16.mxu0 %v7208
    %10402 = vmatpush1.bf16.msra.mxu0 %v7207
    %10403 = vmatprep.subr.bf16.mxu0 %v7216
    %10404 = vmatpush1.bf16.msra.mxu0 %v7215
    %10405 = vmatprep.subr.bf16.mxu0 %v7224
    %10406 = vmatpush1.bf16.msra.mxu0 %v7223
    %10407 = vmatprep.subr.bf16.mxu0 %v7232
    %10408 = vmatpush1.bf16.msra.mxu0 %v7231
    %10409 = vmatprep.subr.bf16.mxu0 %v7240
    %10410 = vmatpush1.bf16.msra.mxu0 %v7239
    %10411 = vmatprep.subr.bf16.mxu0 %v7248
    %10412 = vmatpush1.bf16.msra.mxu0 %v7247
    %10413 = vmatprep.subr.bf16.mxu0 %v7256
    %10414 = vmatpush1.bf16.msra.mxu0 %v7255
    %10415 = vmatprep.subr.bf16.mxu0 %v7264
    %10416 = vmatpush1.bf16.msra.mxu0 %v7263
    %10417 = vmatprep.subr.bf16.mxu0 %v7272
    %10418 = vmatpush1.bf16.msra.mxu0 %v7271
    %10419 = vmatprep.mubr.bf16.mxu0 %v181
    %10420 = vmatmul.mubr.bf16.gmra.mrb[0].mxu0 %v180
    %v10421 = vpop.f32.mrb[0].mxu0
    %v10422 = vadd.f32 %v10381, %v10421
    %v10423 = vpop.f32.mrb[0].mxu0
    %v10424 = vadd.f32 %v10383, %v10423
    %v10425 = vpop.f32.mrb[0].mxu0
    %v10426 = vpop.f32.mrb[0].mxu0
    %10427 = vdwg.mxu0
    %10428 = vmatprep.subr.bf16.mxu0 %v7280
    %10429 = vmatpush1.bf16.msra.mxu0 %v7279
    %10430 = vmatprep.subr.bf16.mxu0 %v7288
    %10431 = vmatpush1.bf16.msra.mxu0 %v7287
    %10432 = vmatprep.subr.bf16.mxu0 %v7296
    %10433 = vmatpush1.bf16.msra.mxu0 %v7295
    %10434 = vmatprep.subr.bf16.mxu0 %v7304
    %10435 = vmatpush1.bf16.msra.mxu0 %v7303
    %10436 = vmatprep.subr.bf16.mxu0 %v7312
    %10437 = vmatpush1.bf16.msra.mxu0 %v7311
    %10438 = vmatprep.subr.bf16.mxu0 %v7320
    %10439 = vmatpush1.bf16.msra.mxu0 %v7319
    %10440 = vmatprep.subr.bf16.mxu0 %v7328
    %10441 = vmatpush1.bf16.msra.mxu0 %v7327
    %10442 = vmatprep.subr.bf16.mxu0 %v7336
    %10443 = vmatpush1.bf16.msra.mxu0 %v7335
    %10444 = vmatprep.subr.bf16.mxu0 %v7344
    %10445 = vmatpush1.bf16.msra.mxu0 %v7343
    %10446 = vmatprep.subr.bf16.mxu0 %v7352
    %10447 = vmatpush1.bf16.msra.mxu0 %v7351
    %10448 = vmatprep.subr.bf16.mxu0 %v7360
    %10449 = vmatpush1.bf16.msra.mxu0 %v7359
    %10450 = vmatprep.subr.bf16.mxu0 %v7368
    %10451 = vmatpush1.bf16.msra.mxu0 %v7367
    %10452 = vmatprep.subr.bf16.mxu0 %v7376
    %10453 = vmatpush1.bf16.msra.mxu0 %v7375
    %10454 = vmatprep.subr.bf16.mxu0 %v7384
    %10455 = vmatpush1.bf16.msra.mxu0 %v7383
    %10456 = vmatprep.subr.bf16.mxu0 %v7392
    %10457 = vmatpush1.bf16.msra.mxu0 %v7391
    %10458 = vmatprep.subr.bf16.mxu0 %v7400
    %10459 = vmatpush1.bf16.msra.mxu0 %v7399
    %10460 = vmatprep.mubr.bf16.mxu0 %v183
    %10461 = vmatmul.mubr.bf16.gmra.mrb[0].mxu0 %v182
    %v10462 = vpop.f32.mrb[0].mxu0
    %v10463 = vadd.f32 %v10422, %v10462
    %v10464 = vpop.f32.mrb[0].mxu0
    %v10465 = vadd.f32 %v10424, %v10464
    %v10466 = vpop.f32.mrb[0].mxu0
    %v10467 = vpop.f32.mrb[0].mxu0
    %10468 = vdwg.mxu0
    %10469 = vmatprep.subr.bf16.mxu0 %v7408
    %10470 = vmatpush1.bf16.msra.mxu0 %v7407
    %10471 = vmatprep.subr.bf16.mxu0 %v7416
    %10472 = vmatpush1.bf16.msra.mxu0 %v7415
    %10473 = vmatprep.subr.bf16.mxu0 %v7424
    %10474 = vmatpush1.bf16.msra.mxu0 %v7423
    %10475 = vmatprep.subr.bf16.mxu0 %v7432
    %10476 = vmatpush1.bf16.msra.mxu0 %v7431
    %10477 = vmatprep.subr.bf16.mxu0 %v7440
    %10478 = vmatpush1.bf16.msra.mxu0 %v7439
    %10479 = vmatprep.subr.bf16.mxu0 %v7448
    %10480 = vmatpush1.bf16.msra.mxu0 %v7447
    %10481 = vmatprep.subr.bf16.mxu0 %v7456
    %10482 = vmatpush1.bf16.msra.mxu0 %v7455
    %10483 = vmatprep.subr.bf16.mxu0 %v7464
    %10484 = vmatpush1.bf16.msra.mxu0 %v7463
    %10485 = vmatprep.subr.bf16.mxu0 %v7472
    %10486 = vmatpush1.bf16.msra.mxu0 %v7471
    %10487 = vmatprep.subr.bf16.mxu0 %v7480
    %10488 = vmatpush1.bf16.msra.mxu0 %v7479
    %10489 = vmatprep.subr.bf16.mxu0 %v7488
    %10490 = vmatpush1.bf16.msra.mxu0 %v7487
    %10491 = vmatprep.subr.bf16.mxu0 %v7496
    %10492 = vmatpush1.bf16.msra.mxu0 %v7495
    %10493 = vmatprep.subr.bf16.mxu0 %v7504
    %10494 = vmatpush1.bf16.msra.mxu0 %v7503
    %10495 = vmatprep.subr.bf16.mxu0 %v7512
    %10496 = vmatpush1.bf16.msra.mxu0 %v7511
    %10497 = vmatprep.subr.bf16.mxu0 %v7520
    %10498 = vmatpush1.bf16.msra.mxu0 %v7519
    %10499 = vmatprep.subr.bf16.mxu0 %v7528
    %10500 = vmatpush1.bf16.msra.mxu0 %v7527
    %10501 = vmatprep.mubr.bf16.mxu0 %v185
    %10502 = vmatmul.mubr.bf16.gmra.mrb[0].mxu0 %v184
    %v10503 = vpop.f32.mrb[0].mxu0
    %v10504 = vadd.f32 %v10463, %v10503
    %v10505 = vpop.f32.mrb[0].mxu0
    %v10506 = vadd.f32 %v10465, %v10505
    %v10507 = vpop.f32.mrb[0].mxu0
    %v10508 = vpop.f32.mrb[0].mxu0
    %10509 = vdwg.mxu0
    %10510 = vmatprep.subr.bf16.mxu0 %v7536
    %10511 = vmatpush1.bf16.msra.mxu0 %v7535
    %10512 = vmatprep.subr.bf16.mxu0 %v7544
    %10513 = vmatpush1.bf16.msra.mxu0 %v7543
    %10514 = vmatprep.subr.bf16.mxu0 %v7552
    %10515 = vmatpush1.bf16.msra.mxu0 %v7551
    %10516 = vmatprep.subr.bf16.mxu0 %v7560
    %10517 = vmatpush1.bf16.msra.mxu0 %v7559
    %10518 = vmatprep.subr.bf16.mxu0 %v7568
    %10519 = vmatpush1.bf16.msra.mxu0 %v7567
    %10520 = vmatprep.subr.bf16.mxu0 %v7576
    %10521 = vmatpush1.bf16.msra.mxu0 %v7575
    %10522 = vmatprep.subr.bf16.mxu0 %v7584
    %10523 = vmatpush1.bf16.msra.mxu0 %v7583
    %10524 = vmatprep.subr.bf16.mxu0 %v7592
    %10525 = vmatpush1.bf16.msra.mxu0 %v7591
    %10526 = vmatprep.subr.bf16.mxu0 %v7600
    %10527 = vmatpush1.bf16.msra.mxu0 %v7599
    %10528 = vmatprep.subr.bf16.mxu0 %v7608
    %10529 = vmatpush1.bf16.msra.mxu0 %v7607
    %10530 = vmatprep.subr.bf16.mxu0 %v7616
    %10531 = vmatpush1.bf16.msra.mxu0 %v7615
    %10532 = vmatprep.subr.bf16.mxu0 %v7624
    %10533 = vmatpush1.bf16.msra.mxu0 %v7623
    %10534 = vmatprep.subr.bf16.mxu0 %v7632
    %10535 = vmatpush1.bf16.msra.mxu0 %v7631
    %10536 = vmatprep.subr.bf16.mxu0 %v7640
    %10537 = vmatpush1.bf16.msra.mxu0 %v7639
    %10538 = vmatprep.subr.bf16.mxu0 %v7648
    %10539 = vmatpush1.bf16.msra.mxu0 %v7647
    %10540 = vmatprep.subr.bf16.mxu0 %v7656
    %10541 = vmatpush1.bf16.msra.mxu0 %v7655
    %10542 = vmatprep.mubr.bf16.mxu0 %v187
    %10543 = vmatmul.mubr.bf16.gmra.mrb[0].mxu0 %v186
    %v10544 = vpop.f32.mrb[0].mxu0
    %v10545 = vadd.f32 %v10504, %v10544
    %v10546 = vpop.f32.mrb[0].mxu0
    %v10547 = vadd.f32 %v10506, %v10546
    %v10548 = vpop.f32.mrb[0].mxu0
    %v10549 = vpop.f32.mrb[0].mxu0
    %10550 = vdwg.mxu0
    %10551 = vmatprep.subr.bf16.mxu0 %v7664
    %10552 = vmatpush1.bf16.msra.mxu0 %v7663
    %10553 = vmatprep.subr.bf16.mxu0 %v7672
    %10554 = vmatpush1.bf16.msra.mxu0 %v7671
    %10555 = vmatprep.subr.bf16.mxu0 %v7680
    %10556 = vmatpush1.bf16.msra.mxu0 %v7679
    %10557 = vmatprep.subr.bf16.mxu0 %v7688
    %10558 = vmatpush1.bf16.msra.mxu0 %v7687
    %10559 = vmatprep.subr.bf16.mxu0 %v7696
    %10560 = vmatpush1.bf16.msra.mxu0 %v7695
    %10561 = vmatprep.subr.bf16.mxu0 %v7704
    %10562 = vmatpush1.bf16.msra.mxu0 %v7703
    %10563 = vmatprep.subr.bf16.mxu0 %v7712
    %10564 = vmatpush1.bf16.msra.mxu0 %v7711
    %10565 = vmatprep.subr.bf16.mxu0 %v7720
    %10566 = vmatpush1.bf16.msra.mxu0 %v7719
    %10567 = vmatprep.subr.bf16.mxu0 %v7728
    %10568 = vmatpush1.bf16.msra.mxu0 %v7727
    %10569 = vmatprep.subr.bf16.mxu0 %v7736
    %10570 = vmatpush1.bf16.msra.mxu0 %v7735
    %10571 = vmatprep.subr.bf16.mxu0 %v7744
    %10572 = vmatpush1.bf16.msra.mxu0 %v7743
    %10573 = vmatprep.subr.bf16.mxu0 %v7752
    %10574 = vmatpush1.bf16.msra.mxu0 %v7751
    %10575 = vmatprep.subr.bf16.mxu0 %v7760
    %10576 = vmatpush1.bf16.msra.mxu0 %v7759
    %10577 = vmatprep.subr.bf16.mxu0 %v7768
    %10578 = vmatpush1.bf16.msra.mxu0 %v7767
    %10579 = vmatprep.subr.bf16.mxu0 %v7776
    %10580 = vmatpush1.bf16.msra.mxu0 %v7775
    %10581 = vmatprep.subr.bf16.mxu0 %v7784
    %10582 = vmatpush1.bf16.msra.mxu0 %v7783
    %10583 = vmatprep.mubr.bf16.mxu0 %v189
    %10584 = vmatmul.mubr.bf16.gmra.mrb[0].mxu0 %v188
    %v10585 = vpop.f32.mrb[0].mxu0
    %v10586 = vadd.f32 %v10545, %v10585
    %v10587 = vpop.f32.mrb[0].mxu0
    %v10588 = vadd.f32 %v10547, %v10587
    %v10589 = vpop.f32.mrb[0].mxu0
    %v10590 = vpop.f32.mrb[0].mxu0
    %10591 = vdwg.mxu0
    %10592 = vmatprep.subr.bf16.mxu0 %v7792
    %10593 = vmatpush1.bf16.msra.mxu0 %v7791
    %10594 = vmatprep.subr.bf16.mxu0 %v7800
    %10595 = vmatpush1.bf16.msra.mxu0 %v7799
    %10596 = vmatprep.subr.bf16.mxu0 %v7808
    %10597 = vmatpush1.bf16.msra.mxu0 %v7807
    %10598 = vmatprep.subr.bf16.mxu0 %v7816
    %10599 = vmatpush1.bf16.msra.mxu0 %v7815
    %10600 = vmatprep.subr.bf16.mxu0 %v7824
    %10601 = vmatpush1.bf16.msra.mxu0 %v7823
    %10602 = vmatprep.subr.bf16.mxu0 %v7832
    %10603 = vmatpush1.bf16.msra.mxu0 %v7831
    %10604 = vmatprep.subr.bf16.mxu0 %v7840
    %10605 = vmatpush1.bf16.msra.mxu0 %v7839
    %10606 = vmatprep.subr.bf16.mxu0 %v7848
    %10607 = vmatpush1.bf16.msra.mxu0 %v7847
    %10608 = vmatprep.subr.bf16.mxu0 %v7856
    %10609 = vmatpush1.bf16.msra.mxu0 %v7855
    %10610 = vmatprep.subr.bf16.mxu0 %v7864
    %10611 = vmatpush1.bf16.msra.mxu0 %v7863
    %10612 = vmatprep.subr.bf16.mxu0 %v7872
    %10613 = vmatpush1.bf16.msra.mxu0 %v7871
    %10614 = vmatprep.subr.bf16.mxu0 %v7880
    %10615 = vmatpush1.bf16.msra.mxu0 %v7879
    %10616 = vmatprep.subr.bf16.mxu0 %v7888
    %10617 = vmatpush1.bf16.msra.mxu0 %v7887
    %10618 = vmatprep.subr.bf16.mxu0 %v7896
    %10619 = vmatpush1.bf16.msra.mxu0 %v7895
    %10620 = vmatprep.subr.bf16.mxu0 %v7904
    %10621 = vmatpush1.bf16.msra.mxu0 %v7903
    %10622 = vmatprep.subr.bf16.mxu0 %v7912
    %10623 = vmatpush1.bf16.msra.mxu0 %v7911
    %10624 = vmatprep.mubr.bf16.mxu0 %v191
    %10625 = vmatmul.mubr.bf16.gmra.mrb[0].mxu0 %v190
    %v10626 = vpop.f32.mrb[0].mxu0
    %v10627 = vadd.f32 %v10586, %v10626
    %v10628 = vpop.f32.mrb[0].mxu0
    %v10629 = vadd.f32 %v10588, %v10628
    %v10630 = vpop.f32.mrb[0].mxu0
    %v10631 = vpop.f32.mrb[0].mxu0
    %10632 = vdwg.mxu0
    %10633 = vmatprep.subr.bf16.mxu0 %v7920
    %10634 = vmatpush1.bf16.msra.mxu0 %v7919
    %10635 = vmatprep.subr.bf16.mxu0 %v7928
    %10636 = vmatpush1.bf16.msra.mxu0 %v7927
    %10637 = vmatprep.subr.bf16.mxu0 %v7936
    %10638 = vmatpush1.bf16.msra.mxu0 %v7935
    %10639 = vmatprep.subr.bf16.mxu0 %v7944
    %10640 = vmatpush1.bf16.msra.mxu0 %v7943
    %10641 = vmatprep.subr.bf16.mxu0 %v7952
    %10642 = vmatpush1.bf16.msra.mxu0 %v7951
    %10643 = vmatprep.subr.bf16.mxu0 %v7960
    %10644 = vmatpush1.bf16.msra.mxu0 %v7959
    %10645 = vmatprep.subr.bf16.mxu0 %v7968
    %10646 = vmatpush1.bf16.msra.mxu0 %v7967
    %10647 = vmatprep.subr.bf16.mxu0 %v7976
    %10648 = vmatpush1.bf16.msra.mxu0 %v7975
    %10649 = vmatprep.subr.bf16.mxu0 %v7984
    %10650 = vmatpush1.bf16.msra.mxu0 %v7983
    %10651 = vmatprep.subr.bf16.mxu0 %v7992
    %10652 = vmatpush1.bf16.msra.mxu0 %v7991
    %10653 = vmatprep.subr.bf16.mxu0 %v8000
    %10654 = vmatpush1.bf16.msra.mxu0 %v7999
    %10655 = vmatprep.subr.bf16.mxu0 %v8008
    %10656 = vmatpush1.bf16.msra.mxu0 %v8007
    %10657 = vmatprep.subr.bf16.mxu0 %v8016
    %10658 = vmatpush1.bf16.msra.mxu0 %v8015
    %10659 = vmatprep.subr.bf16.mxu0 %v8024
    %10660 = vmatpush1.bf16.msra.mxu0 %v8023
    %10661 = vmatprep.subr.bf16.mxu0 %v8032
    %10662 = vmatpush1.bf16.msra.mxu0 %v8031
    %10663 = vmatprep.subr.bf16.mxu0 %v8040
    %10664 = vmatpush1.bf16.msra.mxu0 %v8039
    %10665 = vmatprep.mubr.bf16.mxu0 %v193
    %10666 = vmatmul.mubr.bf16.gmra.mrb[0].mxu0 %v192
    %v10667 = vpop.f32.mrb[0].mxu0
    %v10668 = vadd.f32 %v10627, %v10667
    %v10669 = vpop.f32.mrb[0].mxu0
    %v10670 = vadd.f32 %v10629, %v10669
    %v10671 = vpop.f32.mrb[0].mxu0
    %v10672 = vpop.f32.mrb[0].mxu0
    %10673 = vdwg.mxu0
    %10674 = vmatprep.subr.bf16.mxu0 %v8048
    %10675 = vmatpush1.bf16.msra.mxu0 %v8047
    %10676 = vmatprep.subr.bf16.mxu0 %v8056
    %10677 = vmatpush1.bf16.msra.mxu0 %v8055
    %10678 = vmatprep.subr.bf16.mxu0 %v8064
    %10679 = vmatpush1.bf16.msra.mxu0 %v8063
    %10680 = vmatprep.subr.bf16.mxu0 %v8072
    %10681 = vmatpush1.bf16.msra.mxu0 %v8071
    %10682 = vmatprep.subr.bf16.mxu0 0
    %10683 = vmatpush1.bf16.msra.mxu0 0
    %10684 = vmatprep.subr.bf16.mxu0 0
    %10685 = vmatpush1.bf16.msra.mxu0 0
    %10686 = vmatprep.subr.bf16.mxu0 0
    %10687 = vmatpush1.bf16.msra.mxu0 0
    %10688 = vmatprep.subr.bf16.mxu0 0
    %10689 = vmatpush1.bf16.msra.mxu0 0
    %10690 = vmatprep.subr.bf16.mxu0 0
    %10691 = vmatpush1.bf16.msra.mxu0 0
    %10692 = vmatprep.subr.bf16.mxu0 0
    %10693 = vmatpush1.bf16.msra.mxu0 0
    %10694 = vmatprep.subr.bf16.mxu0 0
    %10695 = vmatpush1.bf16.msra.mxu0 0
    %10696 = vmatprep.subr.bf16.mxu0 0
    %10697 = vmatpush1.bf16.msra.mxu0 0
    %10698 = vmatprep.subr.bf16.mxu0 0
    %10699 = vmatpush1.bf16.msra.mxu0 0
    %10700 = vmatprep.subr.bf16.mxu0 0
    %10701 = vmatpush1.bf16.msra.mxu0 0
    %10702 = vmatprep.subr.bf16.mxu0 0
    %10703 = vmatpush1.bf16.msra.mxu0 0
    %10704 = vmatprep.subr.bf16.mxu0 0
    %10705 = vmatpush1.bf16.msra.mxu0 0
    %10706 = vmatprep.mubr.bf16.mxu0 0
    %10707 = vmatmul.mubr.bf16.gmra.mrb[0].mxu0 %v9647
    %v10708 = vpop.f32.mrb[0].mxu0
    %v10709 = vadd.f32 %v10668, %v10708
    %v10710 = vpop.f32.mrb[0].mxu0
    %v10711 = vadd.f32 %v10670, %v10710
    %v10712 = vpop.f32.mrb[0].mxu0
    %v10713 = vpop.f32.mrb[0].mxu0
    %10714 = vdwg.mxu0
    %10715 = vmatprep.subr.bf16.mxu0 %v6514
    %10716 = vmatpush1.bf16.msra.mxu0 %v6513
    %10717 = vmatprep.subr.bf16.mxu0 %v6522
    %10718 = vmatpush1.bf16.msra.mxu0 %v6521
    %10719 = vmatprep.subr.bf16.mxu0 %v6530
    %10720 = vmatpush1.bf16.msra.mxu0 %v6529
    %10721 = vmatprep.subr.bf16.mxu0 %v6538
    %10722 = vmatpush1.bf16.msra.mxu0 %v6537
    %10723 = vmatprep.subr.bf16.mxu0 %v6546
    %10724 = vmatpush1.bf16.msra.mxu0 %v6545
    %10725 = vmatprep.subr.bf16.mxu0 %v6554
    %10726 = vmatpush1.bf16.msra.mxu0 %v6553
    %10727 = vmatprep.subr.bf16.mxu0 %v6562
    %10728 = vmatpush1.bf16.msra.mxu0 %v6561
    %10729 = vmatprep.subr.bf16.mxu0 %v6570
    %10730 = vmatpush1.bf16.msra.mxu0 %v6569
    %10731 = vmatprep.subr.bf16.mxu0 %v6578
    %10732 = vmatpush1.bf16.msra.mxu0 %v6577
    %10733 = vmatprep.subr.bf16.mxu0 %v6586
    %10734 = vmatpush1.bf16.msra.mxu0 %v6585
    %10735 = vmatprep.subr.bf16.mxu0 %v6594
    %10736 = vmatpush1.bf16.msra.mxu0 %v6593
    %10737 = vmatprep.subr.bf16.mxu0 %v6602
    %10738 = vmatpush1.bf16.msra.mxu0 %v6601
    %10739 = vmatprep.subr.bf16.mxu0 %v6610
    %10740 = vmatpush1.bf16.msra.mxu0 %v6609
    %10741 = vmatprep.subr.bf16.mxu0 %v6618
    %10742 = vmatpush1.bf16.msra.mxu0 %v6617
    %10743 = vmatprep.subr.bf16.mxu0 %v6626
    %10744 = vmatpush1.bf16.msra.mxu0 %v6625
    %10745 = vmatprep.subr.bf16.mxu0 %v6634
    %10746 = vmatpush1.bf16.msra.mxu0 %v6633
    %10747 = vmatprep.mubr.bf16.mxu0 %v171
    %10748 = vmatmul.mubr.bf16.gmra.mrb[0].mxu0 %v170
    %v10749 = vpop.f32.mrb[0].mxu0
    %v10750 = vadd.f32 %v1784, %v10749
    %v10751 = vpop.f32.mrb[0].mxu0
    %v10752 = vadd.f32 %v1788, %v10751
    %v10753 = vpop.f32.mrb[0].mxu0
    %v10754 = vpop.f32.mrb[0].mxu0
    %10755 = vdwg.mxu0
    %10756 = vmatprep.subr.bf16.mxu0 %v6642
    %10757 = vmatpush1.bf16.msra.mxu0 %v6641
    %10758 = vmatprep.subr.bf16.mxu0 %v6650
    %10759 = vmatpush1.bf16.msra.mxu0 %v6649
    %10760 = vmatprep.subr.bf16.mxu0 %v6658
    %10761 = vmatpush1.bf16.msra.mxu0 %v6657
    %10762 = vmatprep.subr.bf16.mxu0 %v6666
    %10763 = vmatpush1.bf16.msra.mxu0 %v6665
    %10764 = vmatprep.subr.bf16.mxu0 %v6674
    %10765 = vmatpush1.bf16.msra.mxu0 %v6673
    %10766 = vmatprep.subr.bf16.mxu0 %v6682
    %10767 = vmatpush1.bf16.msra.mxu0 %v6681
    %10768 = vmatprep.subr.bf16.mxu0 %v6690
    %10769 = vmatpush1.bf16.msra.mxu0 %v6689
    %10770 = vmatprep.subr.bf16.mxu0 %v6698
    %10771 = vmatpush1.bf16.msra.mxu0 %v6697
    %10772 = vmatprep.subr.bf16.mxu0 %v6706
    %10773 = vmatpush1.bf16.msra.mxu0 %v6705
    %10774 = vmatprep.subr.bf16.mxu0 %v6714
    %10775 = vmatpush1.bf16.msra.mxu0 %v6713
    %10776 = vmatprep.subr.bf16.mxu0 %v6722
    %10777 = vmatpush1.bf16.msra.mxu0 %v6721
    %10778 = vmatprep.subr.bf16.mxu0 %v6730
    %10779 = vmatpush1.bf16.msra.mxu0 %v6729
    %10780 = vmatprep.subr.bf16.mxu0 %v6738
    %10781 = vmatpush1.bf16.msra.mxu0 %v6737
    %10782 = vmatprep.subr.bf16.mxu0 %v6746
    %10783 = vmatpush1.bf16.msra.mxu0 %v6745
    %10784 = vmatprep.subr.bf16.mxu0 %v6754
    %10785 = vmatpush1.bf16.msra.mxu0 %v6753
    %10786 = vmatprep.subr.bf16.mxu0 %v6762
    %10787 = vmatpush1.bf16.msra.mxu0 %v6761
    %10788 = vmatprep.mubr.bf16.mxu0 %v173
    %10789 = vmatmul.mubr.bf16.gmra.mrb[0].mxu0 %v172
    %v10790 = vpop.f32.mrb[0].mxu0
    %v10791 = vadd.f32 %v10750, %v10790
    %v10792 = vpop.f32.mrb[0].mxu0
    %v10793 = vadd.f32 %v10752, %v10792
    %v10794 = vpop.f32.mrb[0].mxu0
    %v10795 = vpop.f32.mrb[0].mxu0
    %10796 = vdwg.mxu0
    %10797 = vmatprep.subr.bf16.mxu0 %v6770
    %10798 = vmatpush1.bf16.msra.mxu0 %v6769
    %10799 = vmatprep.subr.bf16.mxu0 %v6778
    %10800 = vmatpush1.bf16.msra.mxu0 %v6777
    %10801 = vmatprep.subr.bf16.mxu0 %v6786
    %10802 = vmatpush1.bf16.msra.mxu0 %v6785
    %10803 = vmatprep.subr.bf16.mxu0 %v6794
    %10804 = vmatpush1.bf16.msra.mxu0 %v6793
    %10805 = vmatprep.subr.bf16.mxu0 %v6802
    %10806 = vmatpush1.bf16.msra.mxu0 %v6801
    %10807 = vmatprep.subr.bf16.mxu0 %v6810
    %10808 = vmatpush1.bf16.msra.mxu0 %v6809
    %10809 = vmatprep.subr.bf16.mxu0 %v6818
    %10810 = vmatpush1.bf16.msra.mxu0 %v6817
    %10811 = vmatprep.subr.bf16.mxu0 %v6826
    %10812 = vmatpush1.bf16.msra.mxu0 %v6825
    %10813 = vmatprep.subr.bf16.mxu0 %v6834
    %10814 = vmatpush1.bf16.msra.mxu0 %v6833
    %10815 = vmatprep.subr.bf16.mxu0 %v6842
    %10816 = vmatpush1.bf16.msra.mxu0 %v6841
    %10817 = vmatprep.subr.bf16.mxu0 %v6850
    %10818 = vmatpush1.bf16.msra.mxu0 %v6849
    %10819 = vmatprep.subr.bf16.mxu0 %v6858
    %10820 = vmatpush1.bf16.msra.mxu0 %v6857
    %10821 = vmatprep.subr.bf16.mxu0 %v6866
    %10822 = vmatpush1.bf16.msra.mxu0 %v6865
    %10823 = vmatprep.subr.bf16.mxu0 %v6874
    %10824 = vmatpush1.bf16.msra.mxu0 %v6873
    %10825 = vmatprep.subr.bf16.mxu0 %v6882
    %10826 = vmatpush1.bf16.msra.mxu0 %v6881
    %10827 = vmatprep.subr.bf16.mxu0 %v6890
    %10828 = vmatpush1.bf16.msra.mxu0 %v6889
    %10829 = vmatprep.mubr.bf16.mxu0 %v175
    %10830 = vmatmul.mubr.bf16.gmra.mrb[0].mxu0 %v174
    %v10831 = vpop.f32.mrb[0].mxu0
    %v10832 = vadd.f32 %v10791, %v10831
    %v10833 = vpop.f32.mrb[0].mxu0
    %v10834 = vadd.f32 %v10793, %v10833
    %v10835 = vpop.f32.mrb[0].mxu0
    %v10836 = vpop.f32.mrb[0].mxu0
    %10837 = vdwg.mxu0
    %10838 = vmatprep.subr.bf16.mxu0 %v6898
    %10839 = vmatpush1.bf16.msra.mxu0 %v6897
    %10840 = vmatprep.subr.bf16.mxu0 %v6906
    %10841 = vmatpush1.bf16.msra.mxu0 %v6905
    %10842 = vmatprep.subr.bf16.mxu0 %v6914
    %10843 = vmatpush1.bf16.msra.mxu0 %v6913
    %10844 = vmatprep.subr.bf16.mxu0 %v6922
    %10845 = vmatpush1.bf16.msra.mxu0 %v6921
    %10846 = vmatprep.subr.bf16.mxu0 %v6930
    %10847 = vmatpush1.bf16.msra.mxu0 %v6929
    %10848 = vmatprep.subr.bf16.mxu0 %v6938
    %10849 = vmatpush1.bf16.msra.mxu0 %v6937
    %10850 = vmatprep.subr.bf16.mxu0 %v6946
    %10851 = vmatpush1.bf16.msra.mxu0 %v6945
    %10852 = vmatprep.subr.bf16.mxu0 %v6954
    %10853 = vmatpush1.bf16.msra.mxu0 %v6953
    %10854 = vmatprep.subr.bf16.mxu0 %v6962
    %10855 = vmatpush1.bf16.msra.mxu0 %v6961
    %10856 = vmatprep.subr.bf16.mxu0 %v6970
    %10857 = vmatpush1.bf16.msra.mxu0 %v6969
    %10858 = vmatprep.subr.bf16.mxu0 %v6978
    %10859 = vmatpush1.bf16.msra.mxu0 %v6977
    %10860 = vmatprep.subr.bf16.mxu0 %v6986
    %10861 = vmatpush1.bf16.msra.mxu0 %v6985
    %10862 = vmatprep.subr.bf16.mxu0 %v6994
    %10863 = vmatpush1.bf16.msra.mxu0 %v6993
    %10864 = vmatprep.subr.bf16.mxu0 %v7002
    %10865 = vmatpush1.bf16.msra.mxu0 %v7001
    %10866 = vmatprep.subr.bf16.mxu0 %v7010
    %10867 = vmatpush1.bf16.msra.mxu0 %v7009
    %10868 = vmatprep.subr.bf16.mxu0 %v7018
    %10869 = vmatpush1.bf16.msra.mxu0 %v7017
    %10870 = vmatprep.mubr.bf16.mxu0 %v177
    %10871 = vmatmul.mubr.bf16.gmra.mrb[0].mxu0 %v176
    %v10872 = vpop.f32.mrb[0].mxu0
    %v10873 = vadd.f32 %v10832, %v10872
    %v10874 = vpop.f32.mrb[0].mxu0
    %v10875 = vadd.f32 %v10834, %v10874
    %v10876 = vpop.f32.mrb[0].mxu0
    %v10877 = vpop.f32.mrb[0].mxu0
    %10878 = vdwg.mxu0
    %10879 = vmatprep.subr.bf16.mxu0 %v7026
    %10880 = vmatpush1.bf16.msra.mxu0 %v7025
    %10881 = vmatprep.subr.bf16.mxu0 %v7034
    %10882 = vmatpush1.bf16.msra.mxu0 %v7033
    %10883 = vmatprep.subr.bf16.mxu0 %v7042
    %10884 = vmatpush1.bf16.msra.mxu0 %v7041
    %10885 = vmatprep.subr.bf16.mxu0 %v7050
    %10886 = vmatpush1.bf16.msra.mxu0 %v7049
    %10887 = vmatprep.subr.bf16.mxu0 %v7058
    %10888 = vmatpush1.bf16.msra.mxu0 %v7057
    %10889 = vmatprep.subr.bf16.mxu0 %v7066
    %10890 = vmatpush1.bf16.msra.mxu0 %v7065
    %10891 = vmatprep.subr.bf16.mxu0 %v7074
    %10892 = vmatpush1.bf16.msra.mxu0 %v7073
    %10893 = vmatprep.subr.bf16.mxu0 %v7082
    %10894 = vmatpush1.bf16.msra.mxu0 %v7081
    %10895 = vmatprep.subr.bf16.mxu0 %v7090
    %10896 = vmatpush1.bf16.msra.mxu0 %v7089
    %10897 = vmatprep.subr.bf16.mxu0 %v7098
    %10898 = vmatpush1.bf16.msra.mxu0 %v7097
    %10899 = vmatprep.subr.bf16.mxu0 %v7106
    %10900 = vmatpush1.bf16.msra.mxu0 %v7105
    %10901 = vmatprep.subr.bf16.mxu0 %v7114
    %10902 = vmatpush1.bf16.msra.mxu0 %v7113
    %10903 = vmatprep.subr.bf16.mxu0 %v7122
    %10904 = vmatpush1.bf16.msra.mxu0 %v7121
    %10905 = vmatprep.subr.bf16.mxu0 %v7130
    %10906 = vmatpush1.bf16.msra.mxu0 %v7129
    %10907 = vmatprep.subr.bf16.mxu0 %v7138
    %10908 = vmatpush1.bf16.msra.mxu0 %v7137
    %10909 = vmatprep.subr.bf16.mxu0 %v7146
    %10910 = vmatpush1.bf16.msra.mxu0 %v7145
    %10911 = vmatprep.mubr.bf16.mxu0 %v179
    %10912 = vmatmul.mubr.bf16.gmra.mrb[0].mxu0 %v178
    %v10913 = vpop.f32.mrb[0].mxu0
    %v10914 = vadd.f32 %v10873, %v10913
    %v10915 = vpop.f32.mrb[0].mxu0
    %v10916 = vadd.f32 %v10875, %v10915
    %v10917 = vpop.f32.mrb[0].mxu0
    %v10918 = vpop.f32.mrb[0].mxu0
    %10919 = vdwg.mxu0
    %10920 = vmatprep.subr.bf16.mxu0 %v7154
    %10921 = vmatpush1.bf16.msra.mxu0 %v7153
    %10922 = vmatprep.subr.bf16.mxu0 %v7162
    %10923 = vmatpush1.bf16.msra.mxu0 %v7161
    %10924 = vmatprep.subr.bf16.mxu0 %v7170
    %10925 = vmatpush1.bf16.msra.mxu0 %v7169
    %10926 = vmatprep.subr.bf16.mxu0 %v7178
    %10927 = vmatpush1.bf16.msra.mxu0 %v7177
    %10928 = vmatprep.subr.bf16.mxu0 %v7186
    %10929 = vmatpush1.bf16.msra.mxu0 %v7185
    %10930 = vmatprep.subr.bf16.mxu0 %v7194
    %10931 = vmatpush1.bf16.msra.mxu0 %v7193
    %10932 = vmatprep.subr.bf16.mxu0 %v7202
    %10933 = vmatpush1.bf16.msra.mxu0 %v7201
    %10934 = vmatprep.subr.bf16.mxu0 %v7210
    %10935 = vmatpush1.bf16.msra.mxu0 %v7209
    %10936 = vmatprep.subr.bf16.mxu0 %v7218
    %10937 = vmatpush1.bf16.msra.mxu0 %v7217
    %10938 = vmatprep.subr.bf16.mxu0 %v7226
    %10939 = vmatpush1.bf16.msra.mxu0 %v7225
    %10940 = vmatprep.subr.bf16.mxu0 %v7234
    %10941 = vmatpush1.bf16.msra.mxu0 %v7233
    %10942 = vmatprep.subr.bf16.mxu0 %v7242
    %10943 = vmatpush1.bf16.msra.mxu0 %v7241
    %10944 = vmatprep.subr.bf16.mxu0 %v7250
    %10945 = vmatpush1.bf16.msra.mxu0 %v7249
    %10946 = vmatprep.subr.bf16.mxu0 %v7258
    %10947 = vmatpush1.bf16.msra.mxu0 %v7257
    %10948 = vmatprep.subr.bf16.mxu0 %v7266
    %10949 = vmatpush1.bf16.msra.mxu0 %v7265
    %10950 = vmatprep.subr.bf16.mxu0 %v7274
    %10951 = vmatpush1.bf16.msra.mxu0 %v7273
    %10952 = vmatprep.mubr.bf16.mxu0 %v181
    %10953 = vmatmul.mubr.bf16.gmra.mrb[0].mxu0 %v180
    %v10954 = vpop.f32.mrb[0].mxu0
    %v10955 = vadd.f32 %v10914, %v10954
    %v10956 = vpop.f32.mrb[0].mxu0
    %v10957 = vadd.f32 %v10916, %v10956
    %v10958 = vpop.f32.mrb[0].mxu0
    %v10959 = vpop.f32.mrb[0].mxu0
    %10960 = vdwg.mxu0
    %10961 = vmatprep.subr.bf16.mxu0 %v7282
    %10962 = vmatpush1.bf16.msra.mxu0 %v7281
    %10963 = vmatprep.subr.bf16.mxu0 %v7290
    %10964 = vmatpush1.bf16.msra.mxu0 %v7289
    %10965 = vmatprep.subr.bf16.mxu0 %v7298
    %10966 = vmatpush1.bf16.msra.mxu0 %v7297
    %10967 = vmatprep.subr.bf16.mxu0 %v7306
    %10968 = vmatpush1.bf16.msra.mxu0 %v7305
    %10969 = vmatprep.subr.bf16.mxu0 %v7314
    %10970 = vmatpush1.bf16.msra.mxu0 %v7313
    %10971 = vmatprep.subr.bf16.mxu0 %v7322
    %10972 = vmatpush1.bf16.msra.mxu0 %v7321
    %10973 = vmatprep.subr.bf16.mxu0 %v7330
    %10974 = vmatpush1.bf16.msra.mxu0 %v7329
    %10975 = vmatprep.subr.bf16.mxu0 %v7338
    %10976 = vmatpush1.bf16.msra.mxu0 %v7337
    %10977 = vmatprep.subr.bf16.mxu0 %v7346
    %10978 = vmatpush1.bf16.msra.mxu0 %v7345
    %10979 = vmatprep.subr.bf16.mxu0 %v7354
    %10980 = vmatpush1.bf16.msra.mxu0 %v7353
    %10981 = vmatprep.subr.bf16.mxu0 %v7362
    %10982 = vmatpush1.bf16.msra.mxu0 %v7361
    %10983 = vmatprep.subr.bf16.mxu0 %v7370
    %10984 = vmatpush1.bf16.msra.mxu0 %v7369
    %10985 = vmatprep.subr.bf16.mxu0 %v7378
    %10986 = vmatpush1.bf16.msra.mxu0 %v7377
    %10987 = vmatprep.subr.bf16.mxu0 %v7386
    %10988 = vmatpush1.bf16.msra.mxu0 %v7385
    %10989 = vmatprep.subr.bf16.mxu0 %v7394
    %10990 = vmatpush1.bf16.msra.mxu0 %v7393
    %10991 = vmatprep.subr.bf16.mxu0 %v7402
    %10992 = vmatpush1.bf16.msra.mxu0 %v7401
    %10993 = vmatprep.mubr.bf16.mxu0 %v183
    %10994 = vmatmul.mubr.bf16.gmra.mrb[0].mxu0 %v182
    %v10995 = vpop.f32.mrb[0].mxu0
    %v10996 = vadd.f32 %v10955, %v10995
    %v10997 = vpop.f32.mrb[0].mxu0
    %v10998 = vadd.f32 %v10957, %v10997
    %v10999 = vpop.f32.mrb[0].mxu0
    %v11000 = vpop.f32.mrb[0].mxu0
    %11001 = vdwg.mxu0
    %11002 = vmatprep.subr.bf16.mxu0 %v7410
    %11003 = vmatpush1.bf16.msra.mxu0 %v7409
    %11004 = vmatprep.subr.bf16.mxu0 %v7418
    %11005 = vmatpush1.bf16.msra.mxu0 %v7417
    %11006 = vmatprep.subr.bf16.mxu0 %v7426
    %11007 = vmatpush1.bf16.msra.mxu0 %v7425
    %11008 = vmatprep.subr.bf16.mxu0 %v7434
    %11009 = vmatpush1.bf16.msra.mxu0 %v7433
    %11010 = vmatprep.subr.bf16.mxu0 %v7442
    %11011 = vmatpush1.bf16.msra.mxu0 %v7441
    %11012 = vmatprep.subr.bf16.mxu0 %v7450
    %11013 = vmatpush1.bf16.msra.mxu0 %v7449
    %11014 = vmatprep.subr.bf16.mxu0 %v7458
    %11015 = vmatpush1.bf16.msra.mxu0 %v7457
    %11016 = vmatprep.subr.bf16.mxu0 %v7466
    %11017 = vmatpush1.bf16.msra.mxu0 %v7465
    %11018 = vmatprep.subr.bf16.mxu0 %v7474
    %11019 = vmatpush1.bf16.msra.mxu0 %v7473
    %11020 = vmatprep.subr.bf16.mxu0 %v7482
    %11021 = vmatpush1.bf16.msra.mxu0 %v7481
    %11022 = vmatprep.subr.bf16.mxu0 %v7490
    %11023 = vmatpush1.bf16.msra.mxu0 %v7489
    %11024 = vmatprep.subr.bf16.mxu0 %v7498
    %11025 = vmatpush1.bf16.msra.mxu0 %v7497
    %11026 = vmatprep.subr.bf16.mxu0 %v7506
    %11027 = vmatpush1.bf16.msra.mxu0 %v7505
    %11028 = vmatprep.subr.bf16.mxu0 %v7514
    %11029 = vmatpush1.bf16.msra.mxu0 %v7513
    %11030 = vmatprep.subr.bf16.mxu0 %v7522
    %11031 = vmatpush1.bf16.msra.mxu0 %v7521
    %11032 = vmatprep.subr.bf16.mxu0 %v7530
    %11033 = vmatpush1.bf16.msra.mxu0 %v7529
    %11034 = vmatprep.mubr.bf16.mxu0 %v185
    %11035 = vmatmul.mubr.bf16.gmra.mrb[0].mxu0 %v184
    %v11036 = vpop.f32.mrb[0].mxu0
    %v11037 = vadd.f32 %v10996, %v11036
    %v11038 = vpop.f32.mrb[0].mxu0
    %v11039 = vadd.f32 %v10998, %v11038
    %v11040 = vpop.f32.mrb[0].mxu0
    %v11041 = vpop.f32.mrb[0].mxu0
    %11042 = vdwg.mxu0
    %11043 = vmatprep.subr.bf16.mxu0 %v7538
    %11044 = vmatpush1.bf16.msra.mxu0 %v7537
    %11045 = vmatprep.subr.bf16.mxu0 %v7546
    %11046 = vmatpush1.bf16.msra.mxu0 %v7545
    %11047 = vmatprep.subr.bf16.mxu0 %v7554
    %11048 = vmatpush1.bf16.msra.mxu0 %v7553
    %11049 = vmatprep.subr.bf16.mxu0 %v7562
    %11050 = vmatpush1.bf16.msra.mxu0 %v7561
    %11051 = vmatprep.subr.bf16.mxu0 %v7570
    %11052 = vmatpush1.bf16.msra.mxu0 %v7569
    %11053 = vmatprep.subr.bf16.mxu0 %v7578
    %11054 = vmatpush1.bf16.msra.mxu0 %v7577
    %11055 = vmatprep.subr.bf16.mxu0 %v7586
    %11056 = vmatpush1.bf16.msra.mxu0 %v7585
    %11057 = vmatprep.subr.bf16.mxu0 %v7594
    %11058 = vmatpush1.bf16.msra.mxu0 %v7593
    %11059 = vmatprep.subr.bf16.mxu0 %v7602
    %11060 = vmatpush1.bf16.msra.mxu0 %v7601
    %11061 = vmatprep.subr.bf16.mxu0 %v7610
    %11062 = vmatpush1.bf16.msra.mxu0 %v7609
    %11063 = vmatprep.subr.bf16.mxu0 %v7618
    %11064 = vmatpush1.bf16.msra.mxu0 %v7617
    %11065 = vmatprep.subr.bf16.mxu0 %v7626
    %11066 = vmatpush1.bf16.msra.mxu0 %v7625
    %11067 = vmatprep.subr.bf16.mxu0 %v7634
    %11068 = vmatpush1.bf16.msra.mxu0 %v7633
    %11069 = vmatprep.subr.bf16.mxu0 %v7642
    %11070 = vmatpush1.bf16.msra.mxu0 %v7641
    %11071 = vmatprep.subr.bf16.mxu0 %v7650
    %11072 = vmatpush1.bf16.msra.mxu0 %v7649
    %11073 = vmatprep.subr.bf16.mxu0 %v7658
    %11074 = vmatpush1.bf16.msra.mxu0 %v7657
    %11075 = vmatprep.mubr.bf16.mxu0 %v187
    %11076 = vmatmul.mubr.bf16.gmra.mrb[0].mxu0 %v186
    %v11077 = vpop.f32.mrb[0].mxu0
    %v11078 = vadd.f32 %v11037, %v11077
    %v11079 = vpop.f32.mrb[0].mxu0
    %v11080 = vadd.f32 %v11039, %v11079
    %v11081 = vpop.f32.mrb[0].mxu0
    %v11082 = vpop.f32.mrb[0].mxu0
    %11083 = vdwg.mxu0
    %11084 = vmatprep.subr.bf16.mxu0 %v7666
    %11085 = vmatpush1.bf16.msra.mxu0 %v7665
    %11086 = vmatprep.subr.bf16.mxu0 %v7674
    %11087 = vmatpush1.bf16.msra.mxu0 %v7673
    %11088 = vmatprep.subr.bf16.mxu0 %v7682
    %11089 = vmatpush1.bf16.msra.mxu0 %v7681
    %11090 = vmatprep.subr.bf16.mxu0 %v7690
    %11091 = vmatpush1.bf16.msra.mxu0 %v7689
    %11092 = vmatprep.subr.bf16.mxu0 %v7698
    %11093 = vmatpush1.bf16.msra.mxu0 %v7697
    %11094 = vmatprep.subr.bf16.mxu0 %v7706
    %11095 = vmatpush1.bf16.msra.mxu0 %v7705
    %11096 = vmatprep.subr.bf16.mxu0 %v7714
    %11097 = vmatpush1.bf16.msra.mxu0 %v7713
    %11098 = vmatprep.subr.bf16.mxu0 %v7722
    %11099 = vmatpush1.bf16.msra.mxu0 %v7721
    %11100 = vmatprep.subr.bf16.mxu0 %v7730
    %11101 = vmatpush1.bf16.msra.mxu0 %v7729
    %11102 = vmatprep.subr.bf16.mxu0 %v7738
    %11103 = vmatpush1.bf16.msra.mxu0 %v7737
    %11104 = vmatprep.subr.bf16.mxu0 %v7746
    %11105 = vmatpush1.bf16.msra.mxu0 %v7745
    %11106 = vmatprep.subr.bf16.mxu0 %v7754
    %11107 = vmatpush1.bf16.msra.mxu0 %v7753
    %11108 = vmatprep.subr.bf16.mxu0 %v7762
    %11109 = vmatpush1.bf16.msra.mxu0 %v7761
    %11110 = vmatprep.subr.bf16.mxu0 %v7770
    %11111 = vmatpush1.bf16.msra.mxu0 %v7769
    %11112 = vmatprep.subr.bf16.mxu0 %v7778
    %11113 = vmatpush1.bf16.msra.mxu0 %v7777
    %11114 = vmatprep.subr.bf16.mxu0 %v7786
    %11115 = vmatpush1.bf16.msra.mxu0 %v7785
    %11116 = vmatprep.mubr.bf16.mxu0 %v189
    %11117 = vmatmul.mubr.bf16.gmra.mrb[0].mxu0 %v188
    %v11118 = vpop.f32.mrb[0].mxu0
    %v11119 = vadd.f32 %v11078, %v11118
    %v11120 = vpop.f32.mrb[0].mxu0
    %v11121 = vadd.f32 %v11080, %v11120
    %v11122 = vpop.f32.mrb[0].mxu0
    %v11123 = vpop.f32.mrb[0].mxu0
    %11124 = vdwg.mxu0
    %11125 = vmatprep.subr.bf16.mxu0 %v7794
    %11126 = vmatpush1.bf16.msra.mxu0 %v7793
    %11127 = vmatprep.subr.bf16.mxu0 %v7802
    %11128 = vmatpush1.bf16.msra.mxu0 %v7801
    %11129 = vmatprep.subr.bf16.mxu0 %v7810
    %11130 = vmatpush1.bf16.msra.mxu0 %v7809
    %11131 = vmatprep.subr.bf16.mxu0 %v7818
    %11132 = vmatpush1.bf16.msra.mxu0 %v7817
    %11133 = vmatprep.subr.bf16.mxu0 %v7826
    %11134 = vmatpush1.bf16.msra.mxu0 %v7825
    %11135 = vmatprep.subr.bf16.mxu0 %v7834
    %11136 = vmatpush1.bf16.msra.mxu0 %v7833
    %11137 = vmatprep.subr.bf16.mxu0 %v7842
    %11138 = vmatpush1.bf16.msra.mxu0 %v7841
    %11139 = vmatprep.subr.bf16.mxu0 %v7850
    %11140 = vmatpush1.bf16.msra.mxu0 %v7849
    %11141 = vmatprep.subr.bf16.mxu0 %v7858
    %11142 = vmatpush1.bf16.msra.mxu0 %v7857
    %11143 = vmatprep.subr.bf16.mxu0 %v7866
    %11144 = vmatpush1.bf16.msra.mxu0 %v7865
    %11145 = vmatprep.subr.bf16.mxu0 %v7874
    %11146 = vmatpush1.bf16.msra.mxu0 %v7873
    %11147 = vmatprep.subr.bf16.mxu0 %v7882
    %11148 = vmatpush1.bf16.msra.mxu0 %v7881
    %11149 = vmatprep.subr.bf16.mxu0 %v7890
    %11150 = vmatpush1.bf16.msra.mxu0 %v7889
    %11151 = vmatprep.subr.bf16.mxu0 %v7898
    %11152 = vmatpush1.bf16.msra.mxu0 %v7897
    %11153 = vmatprep.subr.bf16.mxu0 %v7906
    %11154 = vmatpush1.bf16.msra.mxu0 %v7905
    %11155 = vmatprep.subr.bf16.mxu0 %v7914
    %11156 = vmatpush1.bf16.msra.mxu0 %v7913
    %11157 = vmatprep.mubr.bf16.mxu0 %v191
    %11158 = vmatmul.mubr.bf16.gmra.mrb[0].mxu0 %v190
    %v11159 = vpop.f32.mrb[0].mxu0
    %v11160 = vadd.f32 %v11119, %v11159
    %v11161 = vpop.f32.mrb[0].mxu0
    %v11162 = vadd.f32 %v11121, %v11161
    %v11163 = vpop.f32.mrb[0].mxu0
    %v11164 = vpop.f32.mrb[0].mxu0
    %11165 = vdwg.mxu0
    %11166 = vmatprep.subr.bf16.mxu0 %v7922
    %11167 = vmatpush1.bf16.msra.mxu0 %v7921
    %11168 = vmatprep.subr.bf16.mxu0 %v7930
    %11169 = vmatpush1.bf16.msra.mxu0 %v7929
    %11170 = vmatprep.subr.bf16.mxu0 %v7938
    %11171 = vmatpush1.bf16.msra.mxu0 %v7937
    %11172 = vmatprep.subr.bf16.mxu0 %v7946
    %11173 = vmatpush1.bf16.msra.mxu0 %v7945
    %11174 = vmatprep.subr.bf16.mxu0 %v7954
    %11175 = vmatpush1.bf16.msra.mxu0 %v7953
    %11176 = vmatprep.subr.bf16.mxu0 %v7962
    %11177 = vmatpush1.bf16.msra.mxu0 %v7961
    %11178 = vmatprep.subr.bf16.mxu0 %v7970
    %11179 = vmatpush1.bf16.msra.mxu0 %v7969
    %11180 = vmatprep.subr.bf16.mxu0 %v7978
    %11181 = vmatpush1.bf16.msra.mxu0 %v7977
    %11182 = vmatprep.subr.bf16.mxu0 %v7986
    %11183 = vmatpush1.bf16.msra.mxu0 %v7985
    %11184 = vmatprep.subr.bf16.mxu0 %v7994
    %11185 = vmatpush1.bf16.msra.mxu0 %v7993
    %11186 = vmatprep.subr.bf16.mxu0 %v8002
    %11187 = vmatpush1.bf16.msra.mxu0 %v8001
    %11188 = vmatprep.subr.bf16.mxu0 %v8010
    %11189 = vmatpush1.bf16.msra.mxu0 %v8009
    %11190 = vmatprep.subr.bf16.mxu0 %v8018
    %11191 = vmatpush1.bf16.msra.mxu0 %v8017
    %11192 = vmatprep.subr.bf16.mxu0 %v8026
    %11193 = vmatpush1.bf16.msra.mxu0 %v8025
    %11194 = vmatprep.subr.bf16.mxu0 %v8034
    %11195 = vmatpush1.bf16.msra.mxu0 %v8033
    %11196 = vmatprep.subr.bf16.mxu0 %v8042
    %11197 = vmatpush1.bf16.msra.mxu0 %v8041
    %11198 = vmatprep.mubr.bf16.mxu0 %v193
    %11199 = vmatmul.mubr.bf16.gmra.mrb[0].mxu0 %v192
    %v11200 = vpop.f32.mrb[0].mxu0
    %v11201 = vadd.f32 %v11160, %v11200
    %v11202 = vpop.f32.mrb[0].mxu0
    %v11203 = vadd.f32 %v11162, %v11202
    %v11204 = vpop.f32.mrb[0].mxu0
    %v11205 = vpop.f32.mrb[0].mxu0
    %11206 = vdwg.mxu0
    %11207 = vmatprep.subr.bf16.mxu0 %v8050
    %11208 = vmatpush1.bf16.msra.mxu0 %v8049
    %11209 = vmatprep.subr.bf16.mxu0 %v8058
    %11210 = vmatpush1.bf16.msra.mxu0 %v8057
    %11211 = vmatprep.subr.bf16.mxu0 %v8066
    %11212 = vmatpush1.bf16.msra.mxu0 %v8065
    %11213 = vmatprep.subr.bf16.mxu0 %v8074
    %11214 = vmatpush1.bf16.msra.mxu0 %v8073
    %11215 = vmatprep.subr.bf16.mxu0 0
    %11216 = vmatpush1.bf16.msra.mxu0 0
    %11217 = vmatprep.subr.bf16.mxu0 0
    %11218 = vmatpush1.bf16.msra.mxu0 0
    %11219 = vmatprep.subr.bf16.mxu0 0
    %11220 = vmatpush1.bf16.msra.mxu0 0
    %11221 = vmatprep.subr.bf16.mxu0 0
    %11222 = vmatpush1.bf16.msra.mxu0 0
    %11223 = vmatprep.subr.bf16.mxu0 0
    %11224 = vmatpush1.bf16.msra.mxu0 0
    %11225 = vmatprep.subr.bf16.mxu0 0
    %11226 = vmatpush1.bf16.msra.mxu0 0
    %11227 = vmatprep.subr.bf16.mxu0 0
    %11228 = vmatpush1.bf16.msra.mxu0 0
    %11229 = vmatprep.subr.bf16.mxu0 0
    %11230 = vmatpush1.bf16.msra.mxu0 0
    %11231 = vmatprep.subr.bf16.mxu0 0
    %11232 = vmatpush1.bf16.msra.mxu0 0
    %11233 = vmatprep.subr.bf16.mxu0 0
    %11234 = vmatpush1.bf16.msra.mxu0 0
    %11235 = vmatprep.subr.bf16.mxu0 0
    %11236 = vmatpush1.bf16.msra.mxu0 0
    %11237 = vmatprep.subr.bf16.mxu0 0
    %11238 = vmatpush1.bf16.msra.mxu0 0
    %11239 = vmatprep.mubr.bf16.mxu0 0
    %11240 = vmatmul.mubr.bf16.gmra.mrb[0].mxu0 %v9647
    %v11241 = vpop.f32.mrb[0].mxu0
    %v11242 = vadd.f32 %v11201, %v11241
    %v11243 = vpop.f32.mrb[0].mxu0
    %v11244 = vadd.f32 %v11203, %v11243
    %v11245 = vpop.f32.mrb[0].mxu0
    %v11246 = vpop.f32.mrb[0].mxu0
    %11247 = vdwg.mxu0
    %11248 = vmatprep.subr.bf16.mxu0 %v6516
    %11249 = vmatpush1.bf16.msra.mxu0 %v6515
    %11250 = vmatprep.subr.bf16.mxu0 %v6524
    %11251 = vmatpush1.bf16.msra.mxu0 %v6523
    %11252 = vmatprep.subr.bf16.mxu0 %v6532
    %11253 = vmatpush1.bf16.msra.mxu0 %v6531
    %11254 = vmatprep.subr.bf16.mxu0 %v6540
    %11255 = vmatpush1.bf16.msra.mxu0 %v6539
    %11256 = vmatprep.subr.bf16.mxu0 %v6548
    %11257 = vmatpush1.bf16.msra.mxu0 %v6547
    %11258 = vmatprep.subr.bf16.mxu0 %v6556
    %11259 = vmatpush1.bf16.msra.mxu0 %v6555
    %11260 = vmatprep.subr.bf16.mxu0 %v6564
    %11261 = vmatpush1.bf16.msra.mxu0 %v6563
    %11262 = vmatprep.subr.bf16.mxu0 %v6572
    %11263 = vmatpush1.bf16.msra.mxu0 %v6571
    %11264 = vmatprep.subr.bf16.mxu0 %v6580
    %11265 = vmatpush1.bf16.msra.mxu0 %v6579
    %11266 = vmatprep.subr.bf16.mxu0 %v6588
    %11267 = vmatpush1.bf16.msra.mxu0 %v6587
    %11268 = vmatprep.subr.bf16.mxu0 %v6596
    %11269 = vmatpush1.bf16.msra.mxu0 %v6595
    %11270 = vmatprep.subr.bf16.mxu0 %v6604
    %11271 = vmatpush1.bf16.msra.mxu0 %v6603
    %11272 = vmatprep.subr.bf16.mxu0 %v6612
    %11273 = vmatpush1.bf16.msra.mxu0 %v6611
    %11274 = vmatprep.subr.bf16.mxu0 %v6620
    %11275 = vmatpush1.bf16.msra.mxu0 %v6619
    %11276 = vmatprep.subr.bf16.mxu0 %v6628
    %11277 = vmatpush1.bf16.msra.mxu0 %v6627
    %11278 = vmatprep.subr.bf16.mxu0 %v6636
    %11279 = vmatpush1.bf16.msra.mxu0 %v6635
    %11280 = vmatprep.mubr.bf16.mxu0 %v171
    %11281 = vmatmul.mubr.bf16.gmra.mrb[0].mxu0 %v170
    %v11282 = vpop.f32.mrb[0].mxu0
    %v11283 = vadd.f32 %v1792, %v11282
    %v11284 = vpop.f32.mrb[0].mxu0
    %v11285 = vadd.f32 %v1796, %v11284
    %v11286 = vpop.f32.mrb[0].mxu0
    %v11287 = vpop.f32.mrb[0].mxu0
    %11288 = vdwg.mxu0
    %11289 = vmatprep.subr.bf16.mxu0 %v6644
    %11290 = vmatpush1.bf16.msra.mxu0 %v6643
    %11291 = vmatprep.subr.bf16.mxu0 %v6652
    %11292 = vmatpush1.bf16.msra.mxu0 %v6651
    %11293 = vmatprep.subr.bf16.mxu0 %v6660
    %11294 = vmatpush1.bf16.msra.mxu0 %v6659
    %11295 = vmatprep.subr.bf16.mxu0 %v6668
    %11296 = vmatpush1.bf16.msra.mxu0 %v6667
    %11297 = vmatprep.subr.bf16.mxu0 %v6676
    %11298 = vmatpush1.bf16.msra.mxu0 %v6675
    %11299 = vmatprep.subr.bf16.mxu0 %v6684
    %11300 = vmatpush1.bf16.msra.mxu0 %v6683
    %11301 = vmatprep.subr.bf16.mxu0 %v6692
    %11302 = vmatpush1.bf16.msra.mxu0 %v6691
    %11303 = vmatprep.subr.bf16.mxu0 %v6700
    %11304 = vmatpush1.bf16.msra.mxu0 %v6699
    %11305 = vmatprep.subr.bf16.mxu0 %v6708
    %11306 = vmatpush1.bf16.msra.mxu0 %v6707
    %11307 = vmatprep.subr.bf16.mxu0 %v6716
    %11308 = vmatpush1.bf16.msra.mxu0 %v6715
    %11309 = vmatprep.subr.bf16.mxu0 %v6724
    %11310 = vmatpush1.bf16.msra.mxu0 %v6723
    %11311 = vmatprep.subr.bf16.mxu0 %v6732
    %11312 = vmatpush1.bf16.msra.mxu0 %v6731
    %11313 = vmatprep.subr.bf16.mxu0 %v6740
    %11314 = vmatpush1.bf16.msra.mxu0 %v6739
    %11315 = vmatprep.subr.bf16.mxu0 %v6748
    %11316 = vmatpush1.bf16.msra.mxu0 %v6747
    %11317 = vmatprep.subr.bf16.mxu0 %v6756
    %11318 = vmatpush1.bf16.msra.mxu0 %v6755
    %11319 = vmatprep.subr.bf16.mxu0 %v6764
    %11320 = vmatpush1.bf16.msra.mxu0 %v6763
    %11321 = vmatprep.mubr.bf16.mxu0 %v173
    %11322 = vmatmul.mubr.bf16.gmra.mrb[0].mxu0 %v172
    %v11323 = vpop.f32.mrb[0].mxu0
    %v11324 = vadd.f32 %v11283, %v11323
    %v11325 = vpop.f32.mrb[0].mxu0
    %v11326 = vadd.f32 %v11285, %v11325
    %v11327 = vpop.f32.mrb[0].mxu0
    %v11328 = vpop.f32.mrb[0].mxu0
    %11329 = vdwg.mxu0
    %11330 = vmatprep.subr.bf16.mxu0 %v6772
    %11331 = vmatpush1.bf16.msra.mxu0 %v6771
    %11332 = vmatprep.subr.bf16.mxu0 %v6780
    %11333 = vmatpush1.bf16.msra.mxu0 %v6779
    %11334 = vmatprep.subr.bf16.mxu0 %v6788
    %11335 = vmatpush1.bf16.msra.mxu0 %v6787
    %11336 = vmatprep.subr.bf16.mxu0 %v6796
    %11337 = vmatpush1.bf16.msra.mxu0 %v6795
    %11338 = vmatprep.subr.bf16.mxu0 %v6804
    %11339 = vmatpush1.bf16.msra.mxu0 %v6803
    %11340 = vmatprep.subr.bf16.mxu0 %v6812
    %11341 = vmatpush1.bf16.msra.mxu0 %v6811
    %11342 = vmatprep.subr.bf16.mxu0 %v6820
    %11343 = vmatpush1.bf16.msra.mxu0 %v6819
    %11344 = vmatprep.subr.bf16.mxu0 %v6828
    %11345 = vmatpush1.bf16.msra.mxu0 %v6827
    %11346 = vmatprep.subr.bf16.mxu0 %v6836
    %11347 = vmatpush1.bf16.msra.mxu0 %v6835
    %11348 = vmatprep.subr.bf16.mxu0 %v6844
    %11349 = vmatpush1.bf16.msra.mxu0 %v6843
    %11350 = vmatprep.subr.bf16.mxu0 %v6852
    %11351 = vmatpush1.bf16.msra.mxu0 %v6851
    %11352 = vmatprep.subr.bf16.mxu0 %v6860
    %11353 = vmatpush1.bf16.msra.mxu0 %v6859
    %11354 = vmatprep.subr.bf16.mxu0 %v6868
    %11355 = vmatpush1.bf16.msra.mxu0 %v6867
    %11356 = vmatprep.subr.bf16.mxu0 %v6876
    %11357 = vmatpush1.bf16.msra.mxu0 %v6875
    %11358 = vmatprep.subr.bf16.mxu0 %v6884
    %11359 = vmatpush1.bf16.msra.mxu0 %v6883
    %11360 = vmatprep.subr.bf16.mxu0 %v6892
    %11361 = vmatpush1.bf16.msra.mxu0 %v6891
    %11362 = vmatprep.mubr.bf16.mxu0 %v175
    %11363 = vmatmul.mubr.bf16.gmra.mrb[0].mxu0 %v174
    %v11364 = vpop.f32.mrb[0].mxu0
    %v11365 = vadd.f32 %v11324, %v11364
    %v11366 = vpop.f32.mrb[0].mxu0
    %v11367 = vadd.f32 %v11326, %v11366
    %v11368 = vpop.f32.mrb[0].mxu0
    %v11369 = vpop.f32.mrb[0].mxu0
    %11370 = vdwg.mxu0
    %11371 = vmatprep.subr.bf16.mxu0 %v6900
    %11372 = vmatpush1.bf16.msra.mxu0 %v6899
    %11373 = vmatprep.subr.bf16.mxu0 %v6908
    %11374 = vmatpush1.bf16.msra.mxu0 %v6907
    %11375 = vmatprep.subr.bf16.mxu0 %v6916
    %11376 = vmatpush1.bf16.msra.mxu0 %v6915
    %11377 = vmatprep.subr.bf16.mxu0 %v6924
    %11378 = vmatpush1.bf16.msra.mxu0 %v6923
    %11379 = vmatprep.subr.bf16.mxu0 %v6932
    %11380 = vmatpush1.bf16.msra.mxu0 %v6931
    %11381 = vmatprep.subr.bf16.mxu0 %v6940
    %11382 = vmatpush1.bf16.msra.mxu0 %v6939
    %11383 = vmatprep.subr.bf16.mxu0 %v6948
    %11384 = vmatpush1.bf16.msra.mxu0 %v6947
    %11385 = vmatprep.subr.bf16.mxu0 %v6956
    %11386 = vmatpush1.bf16.msra.mxu0 %v6955
    %11387 = vmatprep.subr.bf16.mxu0 %v6964
    %11388 = vmatpush1.bf16.msra.mxu0 %v6963
    %11389 = vmatprep.subr.bf16.mxu0 %v6972
    %11390 = vmatpush1.bf16.msra.mxu0 %v6971
    %11391 = vmatprep.subr.bf16.mxu0 %v6980
    %11392 = vmatpush1.bf16.msra.mxu0 %v6979
    %11393 = vmatprep.subr.bf16.mxu0 %v6988
    %11394 = vmatpush1.bf16.msra.mxu0 %v6987
    %11395 = vmatprep.subr.bf16.mxu0 %v6996
    %11396 = vmatpush1.bf16.msra.mxu0 %v6995
    %11397 = vmatprep.subr.bf16.mxu0 %v7004
    %11398 = vmatpush1.bf16.msra.mxu0 %v7003
    %11399 = vmatprep.subr.bf16.mxu0 %v7012
    %11400 = vmatpush1.bf16.msra.mxu0 %v7011
    %11401 = vmatprep.subr.bf16.mxu0 %v7020
    %11402 = vmatpush1.bf16.msra.mxu0 %v7019
    %11403 = vmatprep.mubr.bf16.mxu0 %v177
    %11404 = vmatmul.mubr.bf16.gmra.mrb[0].mxu0 %v176
    %v11405 = vpop.f32.mrb[0].mxu0
    %v11406 = vadd.f32 %v11365, %v11405
    %v11407 = vpop.f32.mrb[0].mxu0
    %v11408 = vadd.f32 %v11367, %v11407
    %v11409 = vpop.f32.mrb[0].mxu0
    %v11410 = vpop.f32.mrb[0].mxu0
    %11411 = vdwg.mxu0
    %11412 = vmatprep.subr.bf16.mxu0 %v7028
    %11413 = vmatpush1.bf16.msra.mxu0 %v7027
    %11414 = vmatprep.subr.bf16.mxu0 %v7036
    %11415 = vmatpush1.bf16.msra.mxu0 %v7035
    %11416 = vmatprep.subr.bf16.mxu0 %v7044
    %11417 = vmatpush1.bf16.msra.mxu0 %v7043
    %11418 = vmatprep.subr.bf16.mxu0 %v7052
    %11419 = vmatpush1.bf16.msra.mxu0 %v7051
    %11420 = vmatprep.subr.bf16.mxu0 %v7060
    %11421 = vmatpush1.bf16.msra.mxu0 %v7059
    %11422 = vmatprep.subr.bf16.mxu0 %v7068
    %11423 = vmatpush1.bf16.msra.mxu0 %v7067
    %11424 = vmatprep.subr.bf16.mxu0 %v7076
    %11425 = vmatpush1.bf16.msra.mxu0 %v7075
    %11426 = vmatprep.subr.bf16.mxu0 %v7084
    %11427 = vmatpush1.bf16.msra.mxu0 %v7083
    %11428 = vmatprep.subr.bf16.mxu0 %v7092
    %11429 = vmatpush1.bf16.msra.mxu0 %v7091
    %11430 = vmatprep.subr.bf16.mxu0 %v7100
    %11431 = vmatpush1.bf16.msra.mxu0 %v7099
    %11432 = vmatprep.subr.bf16.mxu0 %v7108
    %11433 = vmatpush1.bf16.msra.mxu0 %v7107
    %11434 = vmatprep.subr.bf16.mxu0 %v7116
    %11435 = vmatpush1.bf16.msra.mxu0 %v7115
    %11436 = vmatprep.subr.bf16.mxu0 %v7124
    %11437 = vmatpush1.bf16.msra.mxu0 %v7123
    %11438 = vmatprep.subr.bf16.mxu0 %v7132
    %11439 = vmatpush1.bf16.msra.mxu0 %v7131
    %11440 = vmatprep.subr.bf16.mxu0 %v7140
    %11441 = vmatpush1.bf16.msra.mxu0 %v7139
    %11442 = vmatprep.subr.bf16.mxu0 %v7148
    %11443 = vmatpush1.bf16.msra.mxu0 %v7147
    %11444 = vmatprep.mubr.bf16.mxu0 %v179
    %11445 = vmatmul.mubr.bf16.gmra.mrb[0].mxu0 %v178
    %v11446 = vpop.f32.mrb[0].mxu0
    %v11447 = vadd.f32 %v11406, %v11446
    %v11448 = vpop.f32.mrb[0].mxu0
    %v11449 = vadd.f32 %v11408, %v11448
    %v11450 = vpop.f32.mrb[0].mxu0
    %v11451 = vpop.f32.mrb[0].mxu0
    %11452 = vdwg.mxu0
    %11453 = vmatprep.subr.bf16.mxu0 %v7156
    %11454 = vmatpush1.bf16.msra.mxu0 %v7155
    %11455 = vmatprep.subr.bf16.mxu0 %v7164
    %11456 = vmatpush1.bf16.msra.mxu0 %v7163
    %11457 = vmatprep.subr.bf16.mxu0 %v7172
    %11458 = vmatpush1.bf16.msra.mxu0 %v7171
    %11459 = vmatprep.subr.bf16.mxu0 %v7180
    %11460 = vmatpush1.bf16.msra.mxu0 %v7179
    %11461 = vmatprep.subr.bf16.mxu0 %v7188
    %11462 = vmatpush1.bf16.msra.mxu0 %v7187
    %11463 = vmatprep.subr.bf16.mxu0 %v7196
    %11464 = vmatpush1.bf16.msra.mxu0 %v7195
    %11465 = vmatprep.subr.bf16.mxu0 %v7204
    %11466 = vmatpush1.bf16.msra.mxu0 %v7203
    %11467 = vmatprep.subr.bf16.mxu0 %v7212
    %11468 = vmatpush1.bf16.msra.mxu0 %v7211
    %11469 = vmatprep.subr.bf16.mxu0 %v7220
    %11470 = vmatpush1.bf16.msra.mxu0 %v7219
    %11471 = vmatprep.subr.bf16.mxu0 %v7228
    %11472 = vmatpush1.bf16.msra.mxu0 %v7227
    %11473 = vmatprep.subr.bf16.mxu0 %v7236
    %11474 = vmatpush1.bf16.msra.mxu0 %v7235
    %11475 = vmatprep.subr.bf16.mxu0 %v7244
    %11476 = vmatpush1.bf16.msra.mxu0 %v7243
    %11477 = vmatprep.subr.bf16.mxu0 %v7252
    %11478 = vmatpush1.bf16.msra.mxu0 %v7251
    %11479 = vmatprep.subr.bf16.mxu0 %v7260
    %11480 = vmatpush1.bf16.msra.mxu0 %v7259
    %11481 = vmatprep.subr.bf16.mxu0 %v7268
    %11482 = vmatpush1.bf16.msra.mxu0 %v7267
    %11483 = vmatprep.subr.bf16.mxu0 %v7276
    %11484 = vmatpush1.bf16.msra.mxu0 %v7275
    %11485 = vmatprep.mubr.bf16.mxu0 %v181
    %11486 = vmatmul.mubr.bf16.gmra.mrb[0].mxu0 %v180
    %v11487 = vpop.f32.mrb[0].mxu0
    %v11488 = vadd.f32 %v11447, %v11487
    %v11489 = vpop.f32.mrb[0].mxu0
    %v11490 = vadd.f32 %v11449, %v11489
    %v11491 = vpop.f32.mrb[0].mxu0
    %v11492 = vpop.f32.mrb[0].mxu0
    %11493 = vdwg.mxu0
    %11494 = vmatprep.subr.bf16.mxu0 %v7284
    %11495 = vmatpush1.bf16.msra.mxu0 %v7283
    %11496 = vmatprep.subr.bf16.mxu0 %v7292
    %11497 = vmatpush1.bf16.msra.mxu0 %v7291
    %11498 = vmatprep.subr.bf16.mxu0 %v7300
    %11499 = vmatpush1.bf16.msra.mxu0 %v7299
    %11500 = vmatprep.subr.bf16.mxu0 %v7308
    %11501 = vmatpush1.bf16.msra.mxu0 %v7307
    %11502 = vmatprep.subr.bf16.mxu0 %v7316
    %11503 = vmatpush1.bf16.msra.mxu0 %v7315
    %11504 = vmatprep.subr.bf16.mxu0 %v7324
    %11505 = vmatpush1.bf16.msra.mxu0 %v7323
    %11506 = vmatprep.subr.bf16.mxu0 %v7332
    %11507 = vmatpush1.bf16.msra.mxu0 %v7331
    %11508 = vmatprep.subr.bf16.mxu0 %v7340
    %11509 = vmatpush1.bf16.msra.mxu0 %v7339
    %11510 = vmatprep.subr.bf16.mxu0 %v7348
    %11511 = vmatpush1.bf16.msra.mxu0 %v7347
    %11512 = vmatprep.subr.bf16.mxu0 %v7356
    %11513 = vmatpush1.bf16.msra.mxu0 %v7355
    %11514 = vmatprep.subr.bf16.mxu0 %v7364
    %11515 = vmatpush1.bf16.msra.mxu0 %v7363
    %11516 = vmatprep.subr.bf16.mxu0 %v7372
    %11517 = vmatpush1.bf16.msra.mxu0 %v7371
    %11518 = vmatprep.subr.bf16.mxu0 %v7380
    %11519 = vmatpush1.bf16.msra.mxu0 %v7379
    %11520 = vmatprep.subr.bf16.mxu0 %v7388
    %11521 = vmatpush1.bf16.msra.mxu0 %v7387
    %11522 = vmatprep.subr.bf16.mxu0 %v7396
    %11523 = vmatpush1.bf16.msra.mxu0 %v7395
    %11524 = vmatprep.subr.bf16.mxu0 %v7404
    %11525 = vmatpush1.bf16.msra.mxu0 %v7403
    %11526 = vmatprep.mubr.bf16.mxu0 %v183
    %11527 = vmatmul.mubr.bf16.gmra.mrb[0].mxu0 %v182
    %v11528 = vpop.f32.mrb[0].mxu0
    %v11529 = vadd.f32 %v11488, %v11528
    %v11530 = vpop.f32.mrb[0].mxu0
    %v11531 = vadd.f32 %v11490, %v11530
    %v11532 = vpop.f32.mrb[0].mxu0
    %v11533 = vpop.f32.mrb[0].mxu0
    %11534 = vdwg.mxu0
    %11535 = vmatprep.subr.bf16.mxu0 %v7412
    %11536 = vmatpush1.bf16.msra.mxu0 %v7411
    %11537 = vmatprep.subr.bf16.mxu0 %v7420
    %11538 = vmatpush1.bf16.msra.mxu0 %v7419
    %11539 = vmatprep.subr.bf16.mxu0 %v7428
    %11540 = vmatpush1.bf16.msra.mxu0 %v7427
    %11541 = vmatprep.subr.bf16.mxu0 %v7436
    %11542 = vmatpush1.bf16.msra.mxu0 %v7435
    %11543 = vmatprep.subr.bf16.mxu0 %v7444
    %11544 = vmatpush1.bf16.msra.mxu0 %v7443
    %11545 = vmatprep.subr.bf16.mxu0 %v7452
    %11546 = vmatpush1.bf16.msra.mxu0 %v7451
    %11547 = vmatprep.subr.bf16.mxu0 %v7460
    %11548 = vmatpush1.bf16.msra.mxu0 %v7459
    %11549 = vmatprep.subr.bf16.mxu0 %v7468
    %11550 = vmatpush1.bf16.msra.mxu0 %v7467
    %11551 = vmatprep.subr.bf16.mxu0 %v7476
    %11552 = vmatpush1.bf16.msra.mxu0 %v7475
    %11553 = vmatprep.subr.bf16.mxu0 %v7484
    %11554 = vmatpush1.bf16.msra.mxu0 %v7483
    %11555 = vmatprep.subr.bf16.mxu0 %v7492
    %11556 = vmatpush1.bf16.msra.mxu0 %v7491
    %11557 = vmatprep.subr.bf16.mxu0 %v7500
    %11558 = vmatpush1.bf16.msra.mxu0 %v7499
    %11559 = vmatprep.subr.bf16.mxu0 %v7508
    %11560 = vmatpush1.bf16.msra.mxu0 %v7507
    %11561 = vmatprep.subr.bf16.mxu0 %v7516
    %11562 = vmatpush1.bf16.msra.mxu0 %v7515
    %11563 = vmatprep.subr.bf16.mxu0 %v7524
    %11564 = vmatpush1.bf16.msra.mxu0 %v7523
    %11565 = vmatprep.subr.bf16.mxu0 %v7532
    %11566 = vmatpush1.bf16.msra.mxu0 %v7531
    %11567 = vmatprep.mubr.bf16.mxu0 %v185
    %11568 = vmatmul.mubr.bf16.gmra.mrb[0].mxu0 %v184
    %v11569 = vpop.f32.mrb[0].mxu0
    %v11570 = vadd.f32 %v11529, %v11569
    %v11571 = vpop.f32.mrb[0].mxu0
    %v11572 = vadd.f32 %v11531, %v11571
    %v11573 = vpop.f32.mrb[0].mxu0
    %v11574 = vpop.f32.mrb[0].mxu0
    %11575 = vdwg.mxu0
    %11576 = vmatprep.subr.bf16.mxu0 %v7540
    %11577 = vmatpush1.bf16.msra.mxu0 %v7539
    %11578 = vmatprep.subr.bf16.mxu0 %v7548
    %11579 = vmatpush1.bf16.msra.mxu0 %v7547
    %11580 = vmatprep.subr.bf16.mxu0 %v7556
    %11581 = vmatpush1.bf16.msra.mxu0 %v7555
    %11582 = vmatprep.subr.bf16.mxu0 %v7564
    %11583 = vmatpush1.bf16.msra.mxu0 %v7563
    %11584 = vmatprep.subr.bf16.mxu0 %v7572
    %11585 = vmatpush1.bf16.msra.mxu0 %v7571
    %11586 = vmatprep.subr.bf16.mxu0 %v7580
    %11587 = vmatpush1.bf16.msra.mxu0 %v7579
    %11588 = vmatprep.subr.bf16.mxu0 %v7588
    %11589 = vmatpush1.bf16.msra.mxu0 %v7587
    %11590 = vmatprep.subr.bf16.mxu0 %v7596
    %11591 = vmatpush1.bf16.msra.mxu0 %v7595
    %11592 = vmatprep.subr.bf16.mxu0 %v7604
    %11593 = vmatpush1.bf16.msra.mxu0 %v7603
    %11594 = vmatprep.subr.bf16.mxu0 %v7612
    %11595 = vmatpush1.bf16.msra.mxu0 %v7611
    %11596 = vmatprep.subr.bf16.mxu0 %v7620
    %11597 = vmatpush1.bf16.msra.mxu0 %v7619
    %11598 = vmatprep.subr.bf16.mxu0 %v7628
    %11599 = vmatpush1.bf16.msra.mxu0 %v7627
    %11600 = vmatprep.subr.bf16.mxu0 %v7636
    %11601 = vmatpush1.bf16.msra.mxu0 %v7635
    %11602 = vmatprep.subr.bf16.mxu0 %v7644
    %11603 = vmatpush1.bf16.msra.mxu0 %v7643
    %11604 = vmatprep.subr.bf16.mxu0 %v7652
    %11605 = vmatpush1.bf16.msra.mxu0 %v7651
    %11606 = vmatprep.subr.bf16.mxu0 %v7660
    %11607 = vmatpush1.bf16.msra.mxu0 %v7659
    %11608 = vmatprep.mubr.bf16.mxu0 %v187
    %11609 = vmatmul.mubr.bf16.gmra.mrb[0].mxu0 %v186
    %v11610 = vpop.f32.mrb[0].mxu0
    %v11611 = vadd.f32 %v11570, %v11610
    %v11612 = vpop.f32.mrb[0].mxu0
    %v11613 = vadd.f32 %v11572, %v11612
    %v11614 = vpop.f32.mrb[0].mxu0
    %v11615 = vpop.f32.mrb[0].mxu0
    %11616 = vdwg.mxu0
    %11617 = vmatprep.subr.bf16.mxu0 %v7668
    %11618 = vmatpush1.bf16.msra.mxu0 %v7667
    %11619 = vmatprep.subr.bf16.mxu0 %v7676
    %11620 = vmatpush1.bf16.msra.mxu0 %v7675
    %11621 = vmatprep.subr.bf16.mxu0 %v7684
    %11622 = vmatpush1.bf16.msra.mxu0 %v7683
    %11623 = vmatprep.subr.bf16.mxu0 %v7692
    %11624 = vmatpush1.bf16.msra.mxu0 %v7691
    %11625 = vmatprep.subr.bf16.mxu0 %v7700
    %11626 = vmatpush1.bf16.msra.mxu0 %v7699
    %11627 = vmatprep.subr.bf16.mxu0 %v7708
    %11628 = vmatpush1.bf16.msra.mxu0 %v7707
    %11629 = vmatprep.subr.bf16.mxu0 %v7716
    %11630 = vmatpush1.bf16.msra.mxu0 %v7715
    %11631 = vmatprep.subr.bf16.mxu0 %v7724
    %11632 = vmatpush1.bf16.msra.mxu0 %v7723
    %11633 = vmatprep.subr.bf16.mxu0 %v7732
    %11634 = vmatpush1.bf16.msra.mxu0 %v7731
    %11635 = vmatprep.subr.bf16.mxu0 %v7740
    %11636 = vmatpush1.bf16.msra.mxu0 %v7739
    %11637 = vmatprep.subr.bf16.mxu0 %v7748
    %11638 = vmatpush1.bf16.msra.mxu0 %v7747
    %11639 = vmatprep.subr.bf16.mxu0 %v7756
    %11640 = vmatpush1.bf16.msra.mxu0 %v7755
    %11641 = vmatprep.subr.bf16.mxu0 %v7764
    %11642 = vmatpush1.bf16.msra.mxu0 %v7763
    %11643 = vmatprep.subr.bf16.mxu0 %v7772
    %11644 = vmatpush1.bf16.msra.mxu0 %v7771
    %11645 = vmatprep.subr.bf16.mxu0 %v7780
    %11646 = vmatpush1.bf16.msra.mxu0 %v7779
    %11647 = vmatprep.subr.bf16.mxu0 %v7788
    %11648 = vmatpush1.bf16.msra.mxu0 %v7787
    %11649 = vmatprep.mubr.bf16.mxu0 %v189
    %11650 = vmatmul.mubr.bf16.gmra.mrb[0].mxu0 %v188
    %v11651 = vpop.f32.mrb[0].mxu0
    %v11652 = vadd.f32 %v11611, %v11651
    %v11653 = vpop.f32.mrb[0].mxu0
    %v11654 = vadd.f32 %v11613, %v11653
    %v11655 = vpop.f32.mrb[0].mxu0
    %v11656 = vpop.f32.mrb[0].mxu0
    %11657 = vdwg.mxu0
    %11658 = vmatprep.subr.bf16.mxu0 %v7796
    %11659 = vmatpush1.bf16.msra.mxu0 %v7795
    %11660 = vmatprep.subr.bf16.mxu0 %v7804
    %11661 = vmatpush1.bf16.msra.mxu0 %v7803
    %11662 = vmatprep.subr.bf16.mxu0 %v7812
    %11663 = vmatpush1.bf16.msra.mxu0 %v7811
    %11664 = vmatprep.subr.bf16.mxu0 %v7820
    %11665 = vmatpush1.bf16.msra.mxu0 %v7819
    %11666 = vmatprep.subr.bf16.mxu0 %v7828
    %11667 = vmatpush1.bf16.msra.mxu0 %v7827
    %11668 = vmatprep.subr.bf16.mxu0 %v7836
    %11669 = vmatpush1.bf16.msra.mxu0 %v7835
    %11670 = vmatprep.subr.bf16.mxu0 %v7844
    %11671 = vmatpush1.bf16.msra.mxu0 %v7843
    %11672 = vmatprep.subr.bf16.mxu0 %v7852
    %11673 = vmatpush1.bf16.msra.mxu0 %v7851
    %11674 = vmatprep.subr.bf16.mxu0 %v7860
    %11675 = vmatpush1.bf16.msra.mxu0 %v7859
    %11676 = vmatprep.subr.bf16.mxu0 %v7868
    %11677 = vmatpush1.bf16.msra.mxu0 %v7867
    %11678 = vmatprep.subr.bf16.mxu0 %v7876
    %11679 = vmatpush1.bf16.msra.mxu0 %v7875
    %11680 = vmatprep.subr.bf16.mxu0 %v7884
    %11681 = vmatpush1.bf16.msra.mxu0 %v7883
    %11682 = vmatprep.subr.bf16.mxu0 %v7892
    %11683 = vmatpush1.bf16.msra.mxu0 %v7891
    %11684 = vmatprep.subr.bf16.mxu0 %v7900
    %11685 = vmatpush1.bf16.msra.mxu0 %v7899
    %11686 = vmatprep.subr.bf16.mxu0 %v7908
    %11687 = vmatpush1.bf16.msra.mxu0 %v7907
    %11688 = vmatprep.subr.bf16.mxu0 %v7916
    %11689 = vmatpush1.bf16.msra.mxu0 %v7915
    %11690 = vmatprep.mubr.bf16.mxu0 %v191
    %11691 = vmatmul.mubr.bf16.gmra.mrb[0].mxu0 %v190
    %v11692 = vpop.f32.mrb[0].mxu0
    %v11693 = vadd.f32 %v11652, %v11692
    %v11694 = vpop.f32.mrb[0].mxu0
    %v11695 = vadd.f32 %v11654, %v11694
    %v11696 = vpop.f32.mrb[0].mxu0
    %v11697 = vpop.f32.mrb[0].mxu0
    %11698 = vdwg.mxu0
    %11699 = vmatprep.subr.bf16.mxu0 %v7924
    %11700 = vmatpush1.bf16.msra.mxu0 %v7923
    %11701 = vmatprep.subr.bf16.mxu0 %v7932
    %11702 = vmatpush1.bf16.msra.mxu0 %v7931
    %11703 = vmatprep.subr.bf16.mxu0 %v7940
    %11704 = vmatpush1.bf16.msra.mxu0 %v7939
    %11705 = vmatprep.subr.bf16.mxu0 %v7948
    %11706 = vmatpush1.bf16.msra.mxu0 %v7947
    %11707 = vmatprep.subr.bf16.mxu0 %v7956
    %11708 = vmatpush1.bf16.msra.mxu0 %v7955
    %11709 = vmatprep.subr.bf16.mxu0 %v7964
    %11710 = vmatpush1.bf16.msra.mxu0 %v7963
    %11711 = vmatprep.subr.bf16.mxu0 %v7972
    %11712 = vmatpush1.bf16.msra.mxu0 %v7971
    %11713 = vmatprep.subr.bf16.mxu0 %v7980
    %11714 = vmatpush1.bf16.msra.mxu0 %v7979
    %11715 = vmatprep.subr.bf16.mxu0 %v7988
    %11716 = vmatpush1.bf16.msra.mxu0 %v7987
    %11717 = vmatprep.subr.bf16.mxu0 %v7996
    %11718 = vmatpush1.bf16.msra.mxu0 %v7995
    %11719 = vmatprep.subr.bf16.mxu0 %v8004
    %11720 = vmatpush1.bf16.msra.mxu0 %v8003
    %11721 = vmatprep.subr.bf16.mxu0 %v8012
    %11722 = vmatpush1.bf16.msra.mxu0 %v8011
    %11723 = vmatprep.subr.bf16.mxu0 %v8020
    %11724 = vmatpush1.bf16.msra.mxu0 %v8019
    %11725 = vmatprep.subr.bf16.mxu0 %v8028
    %11726 = vmatpush1.bf16.msra.mxu0 %v8027
    %11727 = vmatprep.subr.bf16.mxu0 %v8036
    %11728 = vmatpush1.bf16.msra.mxu0 %v8035
    %11729 = vmatprep.subr.bf16.mxu0 %v8044
    %11730 = vmatpush1.bf16.msra.mxu0 %v8043
    %11731 = vmatprep.mubr.bf16.mxu0 %v193
    %11732 = vmatmul.mubr.bf16.gmra.mrb[0].mxu0 %v192
    %v11733 = vpop.f32.mrb[0].mxu0
    %v11734 = vadd.f32 %v11693, %v11733
    %v11735 = vpop.f32.mrb[0].mxu0
    %v11736 = vadd.f32 %v11695, %v11735
    %v11737 = vpop.f32.mrb[0].mxu0
    %v11738 = vpop.f32.mrb[0].mxu0
    %11739 = vdwg.mxu0
    %11740 = vmatprep.subr.bf16.mxu0 %v8052
    %11741 = vmatpush1.bf16.msra.mxu0 %v8051
    %11742 = vmatprep.subr.bf16.mxu0 %v8060
    %11743 = vmatpush1.bf16.msra.mxu0 %v8059
    %11744 = vmatprep.subr.bf16.mxu0 %v8068
    %11745 = vmatpush1.bf16.msra.mxu0 %v8067
    %11746 = vmatprep.subr.bf16.mxu0 %v8076
    %11747 = vmatpush1.bf16.msra.mxu0 %v8075
    %11748 = vmatprep.subr.bf16.mxu0 0
    %11749 = vmatpush1.bf16.msra.mxu0 0
    %11750 = vmatprep.subr.bf16.mxu0 0
    %11751 = vmatpush1.bf16.msra.mxu0 0
    %11752 = vmatprep.subr.bf16.mxu0 0
    %11753 = vmatpush1.bf16.msra.mxu0 0
    %11754 = vmatprep.subr.bf16.mxu0 0
    %11755 = vmatpush1.bf16.msra.mxu0 0
    %11756 = vmatprep.subr.bf16.mxu0 0
    %11757 = vmatpush1.bf16.msra.mxu0 0
    %11758 = vmatprep.subr.bf16.mxu0 0
    %11759 = vmatpush1.bf16.msra.mxu0 0
    %11760 = vmatprep.subr.bf16.mxu0 0
    %11761 = vmatpush1.bf16.msra.mxu0 0
    %11762 = vmatprep.subr.bf16.mxu0 0
    %11763 = vmatpush1.bf16.msra.mxu0 0
    %11764 = vmatprep.subr.bf16.mxu0 0
    %11765 = vmatpush1.bf16.msra.mxu0 0
    %11766 = vmatprep.subr.bf16.mxu0 0
    %11767 = vmatpush1.bf16.msra.mxu0 0
    %11768 = vmatprep.subr.bf16.mxu0 0
    %11769 = vmatpush1.bf16.msra.mxu0 0
    %11770 = vmatprep.subr.bf16.mxu0 0
    %11771 = vmatpush1.bf16.msra.mxu0 0
    %11772 = vmatprep.mubr.bf16.mxu0 0
    %11773 = vmatmul.mubr.bf16.gmra.mrb[0].mxu0 %v9647
    %v11774 = vpop.f32.mrb[0].mxu0
    %v11775 = vadd.f32 %v11734, %v11774
    %v11776 = vpop.f32.mrb[0].mxu0
    %v11777 = vadd.f32 %v11736, %v11776
    %v11778 = vpop.f32.mrb[0].mxu0
    %v11779 = vpop.f32.mrb[0].mxu0
    %11780 = vdwg.mxu0
    %v11781 = vmax.f32 %v10176, 0.0
    %v11782 = vmax.f32 %v10178, 0.0
    %v11783 = vmax.f32 %v10709, 0.0
    %v11784 = vmax.f32 %v10711, 0.0
    %v11785 = vmax.f32 %v11242, 0.0
    %v11786 = vmax.f32 %v11244, 0.0
    %v11787 = vmax.f32 %v11775, 0.0
    %v11788 = vmax.f32 %v11777, 0.0
    %v11789 = vld [vmem:[%s3] sm:$0xff]
    %v11790 = vld [vmem:[%s3 + $0x8] sm:$0xff]
    %v11791 = vld [vmem:[%s3 + $0x10] sm:$0xff]
    %v11792 = vld [vmem:[%s3 + $0x18] sm:$0xff]
    %v11793 = vld [vmem:[%s3 + $0x20] sm:$0xff]
    %v11794 = vld [vmem:[%s3 + $0x28] sm:$0xff]
    %v11795 = vld [vmem:[%s3 + $0x30] sm:$0xff]
    %v11796 = vld [vmem:[%s3 + $0x38] sm:$0xff]
    %v11797 = vld [vmem:[%s3 + $0x40] sm:$0xff]
    %v11798 = vld [vmem:[%s3 + $0x48] sm:$0xff]
    %v11799 = vld [vmem:[%s3 + $0x50] sm:$0xff]
    %v11800 = vld [vmem:[%s3 + $0x58] sm:$0xff]
    %v11801 = vld [vmem:[%s3 + $0x60] sm:$0xff]
    %v11802 = vld [vmem:[%s3 + $0x68] sm:$0xff]
    %v11803 = vld [vmem:[%s3 + $0x70] sm:$0xff]
    %v11804 = vld [vmem:[%s3 + $0x78] sm:$0xff]
    %v11805 = vld [vmem:[%s3 + $0x80] sm:$0xff]
    %v11806 = vld [vmem:[%s3 + $0x88] sm:$0xff]
    %v11807 = vld [vmem:[%s3 + $0x90] sm:$0xff]
    %v11808 = vld [vmem:[%s3 + $0x98] sm:$0xff]
    %v11809 = vld [vmem:[%s3 + $0xa0] sm:$0xff]
    %v11810 = vld [vmem:[%s3 + $0xa8] sm:$0xff]
    %v11811 = vld [vmem:[%s3 + $0xb0] sm:$0xff]
    %v11812 = vld [vmem:[%s3 + $0xb8] sm:$0xff]
    %v11813 = vld [vmem:[%s3 + $0xc0] sm:$0xff]
    %v11814 = vld [vmem:[%s3 + $0xc8] sm:$0xff]
    %v11815 = vld [vmem:[%s3 + $0xd0] sm:$0xff]
    %v11816 = vld [vmem:[%s3 + $0xd8] sm:$0xff]
    %v11817 = vld [vmem:[%s3 + $0xe0] sm:$0xff]
    %v11818 = vld [vmem:[%s3 + $0xe8] sm:$0xff]
    %v11819 = vld [vmem:[%s3 + $0xf0] sm:$0xff]
    %v11820 = vld [vmem:[%s3 + $0xf8] sm:$0xff]
    %v11821 = vld [vmem:[%s3 + $0x100] sm:$0xff]
    %v11822 = vld [vmem:[%s3 + $0x108] sm:$0xff]
    %v11823 = vld [vmem:[%s3 + $0x110] sm:$0xff]
    %v11824 = vld [vmem:[%s3 + $0x118] sm:$0xff]
    %v11825 = vld [vmem:[%s3 + $0x120] sm:$0xff]
    %v11826 = vld [vmem:[%s3 + $0x128] sm:$0xff]
    %v11827 = vld [vmem:[%s3 + $0x130] sm:$0xff]
    %v11828 = vld [vmem:[%s3 + $0x138] sm:$0xff]
    %v11829 = vld [vmem:[%s3 + $0x140] sm:$0xff]
    %v11830 = vld [vmem:[%s3 + $0x148] sm:$0xff]
    %v11831 = vld [vmem:[%s3 + $0x150] sm:$0xff]
    %v11832 = vld [vmem:[%s3 + $0x158] sm:$0xff]
    %v11833 = vld [vmem:[%s3 + $0x160] sm:$0xff]
    %v11834 = vld [vmem:[%s3 + $0x168] sm:$0xff]
    %v11835 = vld [vmem:[%s3 + $0x170] sm:$0xff]
    %v11836 = vld [vmem:[%s3 + $0x178] sm:$0xff]
    %v11837 = vld [vmem:[%s3 + $0x180] sm:$0xff]
    %v11838 = vld [vmem:[%s3 + $0x188] sm:$0xff]
    %v11839 = vld [vmem:[%s3 + $0x190] sm:$0xff]
    %v11840 = vld [vmem:[%s3 + $0x198] sm:$0xff]
    %v11841 = vld [vmem:[%s3 + $0x1a0] sm:$0xff]
    %v11842 = vld [vmem:[%s3 + $0x1a8] sm:$0xff]
    %v11843 = vld [vmem:[%s3 + $0x1b0] sm:$0xff]
    %v11844 = vld [vmem:[%s3 + $0x1b8] sm:$0xff]
    %v11845 = vld [vmem:[%s3 + $0x1c0] sm:$0xff]
    %v11846 = vld [vmem:[%s3 + $0x1c8] sm:$0xff]
    %v11847 = vld [vmem:[%s3 + $0x1d0] sm:$0xff]
    %v11848 = vld [vmem:[%s3 + $0x1d8] sm:$0xff]
    %v11849 = vld [vmem:[%s3 + $0x1e0] sm:$0xff]
    %v11850 = vld [vmem:[%s3 + $0x1e8] sm:$0xff]
    %v11851 = vld [vmem:[%s3 + $0x1f0] sm:$0xff]
    %v11852 = vld [vmem:[%s3 + $0x1f8] sm:$0xff]
    %v11853 = vld [vmem:[%s3 + $0x200] sm:$0xff]
    %v11854 = vld [vmem:[%s3 + $0x208] sm:$0xff]
    %v11855 = vld [vmem:[%s3 + $0x210] sm:$0xff]
    %v11856 = vld [vmem:[%s3 + $0x218] sm:$0xff]
    %v11857 = vld [vmem:[%s3 + $0x220] sm:$0xff]
    %v11858 = vld [vmem:[%s3 + $0x228] sm:$0xff]
    %v11859 = vld [vmem:[%s3 + $0x230] sm:$0xff]
    %v11860 = vld [vmem:[%s3 + $0x238] sm:$0xff]
    %v11861 = vld [vmem:[%s3 + $0x240] sm:$0xff]
    %v11862 = vld [vmem:[%s3 + $0x248] sm:$0xff]
    %v11863 = vld [vmem:[%s3 + $0x250] sm:$0xff]
    %v11864 = vld [vmem:[%s3 + $0x258] sm:$0xff]
    %v11865 = vld [vmem:[%s3 + $0x260] sm:$0xff]
    %v11866 = vld [vmem:[%s3 + $0x268] sm:$0xff]
    %v11867 = vld [vmem:[%s3 + $0x270] sm:$0xff]
    %v11868 = vld [vmem:[%s3 + $0x278] sm:$0xff]
    %v11869 = vld [vmem:[%s3 + $0x280] sm:$0xff]
    %v11870 = vld [vmem:[%s3 + $0x288] sm:$0xff]
    %v11871 = vld [vmem:[%s3 + $0x290] sm:$0xff]
    %v11872 = vld [vmem:[%s3 + $0x298] sm:$0xff]
    %v11873 = vld [vmem:[%s3 + $0x2a0] sm:$0xff]
    %v11874 = vld [vmem:[%s3 + $0x2a8] sm:$0xff]
    %v11875 = vld [vmem:[%s3 + $0x2b0] sm:$0xff]
    %v11876 = vld [vmem:[%s3 + $0x2b8] sm:$0xff]
    %v11877 = vld [vmem:[%s3 + $0x2c0] sm:$0xff]
    %v11878 = vld [vmem:[%s3 + $0x2c8] sm:$0xff]
    %v11879 = vld [vmem:[%s3 + $0x2d0] sm:$0xff]
    %v11880 = vld [vmem:[%s3 + $0x2d8] sm:$0xff]
    %v11881 = vld [vmem:[%s3 + $0x2e0] sm:$0xff]
    %v11882 = vld [vmem:[%s3 + $0x2e8] sm:$0xff]
    %v11883 = vld [vmem:[%s3 + $0x2f0] sm:$0xff]
    %v11884 = vld [vmem:[%s3 + $0x2f8] sm:$0xff]
    %v11885 = vld [vmem:[%s3 + $0x300] sm:$0xff]
    %v11886 = vld [vmem:[%s3 + $0x308] sm:$0xff]
    %v11887 = vld [vmem:[%s3 + $0x310] sm:$0xff]
    %v11888 = vld [vmem:[%s3 + $0x318] sm:$0xff]
    %v11889 = vld [vmem:[%s3 + $0x320] sm:$0xff]
    %v11890 = vld [vmem:[%s3 + $0x328] sm:$0xff]
    %v11891 = vld [vmem:[%s3 + $0x330] sm:$0xff]
    %v11892 = vld [vmem:[%s3 + $0x338] sm:$0xff]
    %v11893 = vld [vmem:[%s3 + $0x340] sm:$0xff]
    %v11894 = vld [vmem:[%s3 + $0x348] sm:$0xff]
    %v11895 = vld [vmem:[%s3 + $0x350] sm:$0xff]
    %v11896 = vld [vmem:[%s3 + $0x358] sm:$0xff]
    %v11897 = vld [vmem:[%s3 + $0x360] sm:$0xff]
    %v11898 = vld [vmem:[%s3 + $0x368] sm:$0xff]
    %v11899 = vld [vmem:[%s3 + $0x370] sm:$0xff]
    %v11900 = vld [vmem:[%s3 + $0x378] sm:$0xff]
    %v11901 = vld [vmem:[%s3 + $0x380] sm:$0xff]
    %v11902 = vld [vmem:[%s3 + $0x388] sm:$0xff]
    %v11903 = vld [vmem:[%s3 + $0x390] sm:$0xff]
    %v11904 = vld [vmem:[%s3 + $0x398] sm:$0xff]
    %v11905 = vld [vmem:[%s3 + $0x3a0] sm:$0xff]
    %v11906 = vld [vmem:[%s3 + $0x3a8] sm:$0xff]
    %v11907 = vld [vmem:[%s3 + $0x3b0] sm:$0xff]
    %v11908 = vld [vmem:[%s3 + $0x3b8] sm:$0xff]
    %v11909 = vld [vmem:[%s3 + $0x3c0] sm:$0xff]
    %v11910 = vld [vmem:[%s3 + $0x3c8] sm:$0xff]
    %v11911 = vld [vmem:[%s3 + $0x3d0] sm:$0xff]
    %v11912 = vld [vmem:[%s3 + $0x3d8] sm:$0xff]
    %v11913 = vld [vmem:[%s3 + $0x3e0] sm:$0xff]
    %v11914 = vld [vmem:[%s3 + $0x3e8] sm:$0xff]
    %v11915 = vld [vmem:[%s3 + $0x3f0] sm:$0xff]
    %v11916 = vld [vmem:[%s3 + $0x3f8] sm:$0xff]
    %v11917 = vld [vmem:[%s4] sm:$0x1]
    %v11919 = vlaneseq
    %v11920 = vshrl.u32 %v11919, 7
    %v11921 = vsub.s32 0, %v11920
    %v11922 = vrot.slane %v11917, %v11921
    %11924 = vmatprep.subr.mxu0 0.0
    %11925 = vmatpush1.msra.mxu0 %v11789
    %11926 = vmatprep.subr.mxu0 0.0
    %11927 = vmatpush1.msra.mxu0 %v11790
    %11928 = vmatprep.subr.mxu0 0.0
    %11929 = vmatpush1.msra.mxu0 %v11791
    %11930 = vmatprep.subr.mxu0 0.0
    %11931 = vmatpush1.msra.mxu0 %v11792
    %11932 = vmatprep.subr.mxu0 0.0
    %11933 = vmatpush1.msra.mxu0 %v11793
    %11934 = vmatprep.subr.mxu0 0.0
    %11935 = vmatpush1.msra.mxu0 %v11794
    %11936 = vmatprep.subr.mxu0 0.0
    %11937 = vmatpush1.msra.mxu0 %v11795
    %11938 = vmatprep.subr.mxu0 0.0
    %11939 = vmatpush1.msra.mxu0 %v11796
    %11940 = vmatprep.subr.mxu0 0.0
    %11941 = vmatpush1.msra.mxu0 %v11797
    %11942 = vmatprep.subr.mxu0 0.0
    %11943 = vmatpush1.msra.mxu0 %v11798
    %11944 = vmatprep.subr.mxu0 0.0
    %11945 = vmatpush1.msra.mxu0 %v11799
    %11946 = vmatprep.subr.mxu0 0.0
    %11947 = vmatpush1.msra.mxu0 %v11800
    %11948 = vmatprep.subr.mxu0 0.0
    %11949 = vmatpush1.msra.mxu0 %v11801
    %11950 = vmatprep.subr.mxu0 0.0
    %11951 = vmatpush1.msra.mxu0 %v11802
    %11952 = vmatprep.subr.mxu0 0.0
    %11953 = vmatpush1.msra.mxu0 %v11803
    %11954 = vmatprep.subr.mxu0 0.0
    %11955 = vmatpush1.msra.mxu0 %v11804
    %11956 = vmatprep.subr.mxu0 0.0
    %11957 = vmatpush1.msra.mxu0 %v11805
    %11958 = vmatprep.subr.mxu0 0.0
    %11959 = vmatpush1.msra.mxu0 %v11806
    %11960 = vmatprep.subr.mxu0 0.0
    %11961 = vmatpush1.msra.mxu0 %v11807
    %11962 = vmatprep.subr.mxu0 0.0
    %11963 = vmatpush1.msra.mxu0 %v11808
    %11964 = vmatprep.subr.mxu0 0.0
    %11965 = vmatpush1.msra.mxu0 %v11809
    %11966 = vmatprep.subr.mxu0 0.0
    %11967 = vmatpush1.msra.mxu0 %v11810
    %11968 = vmatprep.subr.mxu0 0.0
    %11969 = vmatpush1.msra.mxu0 %v11811
    %11970 = vmatprep.subr.mxu0 0.0
    %11971 = vmatpush1.msra.mxu0 %v11812
    %11972 = vmatprep.subr.mxu0 0.0
    %11973 = vmatpush1.msra.mxu0 %v11813
    %11974 = vmatprep.subr.mxu0 0.0
    %11975 = vmatpush1.msra.mxu0 %v11814
    %11976 = vmatprep.subr.mxu0 0.0
    %11977 = vmatpush1.msra.mxu0 %v11815
    %11978 = vmatprep.subr.mxu0 0.0
    %11979 = vmatpush1.msra.mxu0 %v11816
    %11980 = vmatprep.subr.mxu0 0.0
    %11981 = vmatpush1.msra.mxu0 %v11817
    %11982 = vmatprep.subr.mxu0 0.0
    %11983 = vmatpush1.msra.mxu0 %v11818
    %11984 = vmatprep.subr.mxu0 0.0
    %11985 = vmatpush1.msra.mxu0 %v11819
    %11986 = vmatprep.subr.mxu0 0.0
    %11987 = vmatpush1.msra.mxu0 %v11820
    %11988 = vmatprep.mubr.f32.mxu0 %v11782
    %11989 = vmatmul.mubr.f32.gmra.mrb[0].mxu0 %v11781
    %v11990 = vpop.f32.mrb[0].mxu0
    %v11991 = vadd.f32 %v11922, %v11990
    %v11992 = vpop.f32.mrb[0].mxu0
    %11993 = vdwg.mxu0
    %11994 = vmatprep.subr.mxu0 0.0
    %11995 = vmatpush1.msra.mxu0 %v11821
    %11996 = vmatprep.subr.mxu0 0.0
    %11997 = vmatpush1.msra.mxu0 %v11822
    %11998 = vmatprep.subr.mxu0 0.0
    %11999 = vmatpush1.msra.mxu0 %v11823
    %12000 = vmatprep.subr.mxu0 0.0
    %12001 = vmatpush1.msra.mxu0 %v11824
    %12002 = vmatprep.subr.mxu0 0.0
    %12003 = vmatpush1.msra.mxu0 %v11825
    %12004 = vmatprep.subr.mxu0 0.0
    %12005 = vmatpush1.msra.mxu0 %v11826
    %12006 = vmatprep.subr.mxu0 0.0
    %12007 = vmatpush1.msra.mxu0 %v11827
    %12008 = vmatprep.subr.mxu0 0.0
    %12009 = vmatpush1.msra.mxu0 %v11828
    %12010 = vmatprep.subr.mxu0 0.0
    %12011 = vmatpush1.msra.mxu0 %v11829
    %12012 = vmatprep.subr.mxu0 0.0
    %12013 = vmatpush1.msra.mxu0 %v11830
    %12014 = vmatprep.subr.mxu0 0.0
    %12015 = vmatpush1.msra.mxu0 %v11831
    %12016 = vmatprep.subr.mxu0 0.0
    %12017 = vmatpush1.msra.mxu0 %v11832
    %12018 = vmatprep.subr.mxu0 0.0
    %12019 = vmatpush1.msra.mxu0 %v11833
    %12020 = vmatprep.subr.mxu0 0.0
    %12021 = vmatpush1.msra.mxu0 %v11834
    %12022 = vmatprep.subr.mxu0 0.0
    %12023 = vmatpush1.msra.mxu0 %v11835
    %12024 = vmatprep.subr.mxu0 0.0
    %12025 = vmatpush1.msra.mxu0 %v11836
    %12026 = vmatprep.subr.mxu0 0.0
    %12027 = vmatpush1.msra.mxu0 %v11837
    %12028 = vmatprep.subr.mxu0 0.0
    %12029 = vmatpush1.msra.mxu0 %v11838
    %12030 = vmatprep.subr.mxu0 0.0
    %12031 = vmatpush1.msra.mxu0 %v11839
    %12032 = vmatprep.subr.mxu0 0.0
    %12033 = vmatpush1.msra.mxu0 %v11840
    %12034 = vmatprep.subr.mxu0 0.0
    %12035 = vmatpush1.msra.mxu0 %v11841
    %12036 = vmatprep.subr.mxu0 0.0
    %12037 = vmatpush1.msra.mxu0 %v11842
    %12038 = vmatprep.subr.mxu0 0.0
    %12039 = vmatpush1.msra.mxu0 %v11843
    %12040 = vmatprep.subr.mxu0 0.0
    %12041 = vmatpush1.msra.mxu0 %v11844
    %12042 = vmatprep.subr.mxu0 0.0
    %12043 = vmatpush1.msra.mxu0 %v11845
    %12044 = vmatprep.subr.mxu0 0.0
    %12045 = vmatpush1.msra.mxu0 %v11846
    %12046 = vmatprep.subr.mxu0 0.0
    %12047 = vmatpush1.msra.mxu0 %v11847
    %12048 = vmatprep.subr.mxu0 0.0
    %12049 = vmatpush1.msra.mxu0 %v11848
    %12050 = vmatprep.subr.mxu0 0.0
    %12051 = vmatpush1.msra.mxu0 %v11849
    %12052 = vmatprep.subr.mxu0 0.0
    %12053 = vmatpush1.msra.mxu0 %v11850
    %12054 = vmatprep.subr.mxu0 0.0
    %12055 = vmatpush1.msra.mxu0 %v11851
    %12056 = vmatprep.subr.mxu0 0.0
    %12057 = vmatpush1.msra.mxu0 %v11852
    %12058 = vmatprep.mubr.f32.mxu0 %v11784
    %12059 = vmatmul.mubr.f32.gmra.mrb[0].mxu0 %v11783
    %v12060 = vpop.f32.mrb[0].mxu0
    %v12061 = vadd.f32 %v11991, %v12060
    %v12062 = vpop.f32.mrb[0].mxu0
    %12063 = vdwg.mxu0
    %12064 = vmatprep.subr.mxu0 0.0
    %12065 = vmatpush1.msra.mxu0 %v11853
    %12066 = vmatprep.subr.mxu0 0.0
    %12067 = vmatpush1.msra.mxu0 %v11854
    %12068 = vmatprep.subr.mxu0 0.0
    %12069 = vmatpush1.msra.mxu0 %v11855
    %12070 = vmatprep.subr.mxu0 0.0
    %12071 = vmatpush1.msra.mxu0 %v11856
    %12072 = vmatprep.subr.mxu0 0.0
    %12073 = vmatpush1.msra.mxu0 %v11857
    %12074 = vmatprep.subr.mxu0 0.0
    %12075 = vmatpush1.msra.mxu0 %v11858
    %12076 = vmatprep.subr.mxu0 0.0
    %12077 = vmatpush1.msra.mxu0 %v11859
    %12078 = vmatprep.subr.mxu0 0.0
    %12079 = vmatpush1.msra.mxu0 %v11860
    %12080 = vmatprep.subr.mxu0 0.0
    %12081 = vmatpush1.msra.mxu0 %v11861
    %12082 = vmatprep.subr.mxu0 0.0
    %12083 = vmatpush1.msra.mxu0 %v11862
    %12084 = vmatprep.subr.mxu0 0.0
    %12085 = vmatpush1.msra.mxu0 %v11863
    %12086 = vmatprep.subr.mxu0 0.0
    %12087 = vmatpush1.msra.mxu0 %v11864
    %12088 = vmatprep.subr.mxu0 0.0
    %12089 = vmatpush1.msra.mxu0 %v11865
    %12090 = vmatprep.subr.mxu0 0.0
    %12091 = vmatpush1.msra.mxu0 %v11866
    %12092 = vmatprep.subr.mxu0 0.0
    %12093 = vmatpush1.msra.mxu0 %v11867
    %12094 = vmatprep.subr.mxu0 0.0
    %12095 = vmatpush1.msra.mxu0 %v11868
    %12096 = vmatprep.subr.mxu0 0.0
    %12097 = vmatpush1.msra.mxu0 %v11869
    %12098 = vmatprep.subr.mxu0 0.0
    %12099 = vmatpush1.msra.mxu0 %v11870
    %12100 = vmatprep.subr.mxu0 0.0
    %12101 = vmatpush1.msra.mxu0 %v11871
    %12102 = vmatprep.subr.mxu0 0.0
    %12103 = vmatpush1.msra.mxu0 %v11872
    %12104 = vmatprep.subr.mxu0 0.0
    %12105 = vmatpush1.msra.mxu0 %v11873
    %12106 = vmatprep.subr.mxu0 0.0
    %12107 = vmatpush1.msra.mxu0 %v11874
    %12108 = vmatprep.subr.mxu0 0.0
    %12109 = vmatpush1.msra.mxu0 %v11875
    %12110 = vmatprep.subr.mxu0 0.0
    %12111 = vmatpush1.msra.mxu0 %v11876
    %12112 = vmatprep.subr.mxu0 0.0
    %12113 = vmatpush1.msra.mxu0 %v11877
    %12114 = vmatprep.subr.mxu0 0.0
    %12115 = vmatpush1.msra.mxu0 %v11878
    %12116 = vmatprep.subr.mxu0 0.0
    %12117 = vmatpush1.msra.mxu0 %v11879
    %12118 = vmatprep.subr.mxu0 0.0
    %12119 = vmatpush1.msra.mxu0 %v11880
    %12120 = vmatprep.subr.mxu0 0.0
    %12121 = vmatpush1.msra.mxu0 %v11881
    %12122 = vmatprep.subr.mxu0 0.0
    %12123 = vmatpush1.msra.mxu0 %v11882
    %12124 = vmatprep.subr.mxu0 0.0
    %12125 = vmatpush1.msra.mxu0 %v11883
    %12126 = vmatprep.subr.mxu0 0.0
    %12127 = vmatpush1.msra.mxu0 %v11884
    %12128 = vmatprep.mubr.f32.mxu0 %v11786
    %12129 = vmatmul.mubr.f32.gmra.mrb[0].mxu0 %v11785
    %v12130 = vpop.f32.mrb[0].mxu0
    %v12131 = vadd.f32 %v12061, %v12130
    %v12132 = vpop.f32.mrb[0].mxu0
    %12133 = vdwg.mxu0
    %12134 = vmatprep.subr.mxu0 0.0
    %12135 = vmatpush1.msra.mxu0 %v11885
    %12136 = vmatprep.subr.mxu0 0.0
    %12137 = vmatpush1.msra.mxu0 %v11886
    %12138 = vmatprep.subr.mxu0 0.0
    %12139 = vmatpush1.msra.mxu0 %v11887
    %12140 = vmatprep.subr.mxu0 0.0
    %12141 = vmatpush1.msra.mxu0 %v11888
    %12142 = vmatprep.subr.mxu0 0.0
    %12143 = vmatpush1.msra.mxu0 %v11889
    %12144 = vmatprep.subr.mxu0 0.0
    %12145 = vmatpush1.msra.mxu0 %v11890
    %12146 = vmatprep.subr.mxu0 0.0
    %12147 = vmatpush1.msra.mxu0 %v11891
    %12148 = vmatprep.subr.mxu0 0.0
    %12149 = vmatpush1.msra.mxu0 %v11892
    %12150 = vmatprep.subr.mxu0 0.0
    %12151 = vmatpush1.msra.mxu0 %v11893
    %12152 = vmatprep.subr.mxu0 0.0
    %12153 = vmatpush1.msra.mxu0 %v11894
    %12154 = vmatprep.subr.mxu0 0.0
    %12155 = vmatpush1.msra.mxu0 %v11895
    %12156 = vmatprep.subr.mxu0 0.0
    %12157 = vmatpush1.msra.mxu0 %v11896
    %12158 = vmatprep.subr.mxu0 0.0
    %12159 = vmatpush1.msra.mxu0 %v11897
    %12160 = vmatprep.subr.mxu0 0.0
    %12161 = vmatpush1.msra.mxu0 %v11898
    %12162 = vmatprep.subr.mxu0 0.0
    %12163 = vmatpush1.msra.mxu0 %v11899
    %12164 = vmatprep.subr.mxu0 0.0
    %12165 = vmatpush1.msra.mxu0 %v11900
    %12166 = vmatprep.subr.mxu0 0.0
    %12167 = vmatpush1.msra.mxu0 %v11901
    %12168 = vmatprep.subr.mxu0 0.0
    %12169 = vmatpush1.msra.mxu0 %v11902
    %12170 = vmatprep.subr.mxu0 0.0
    %12171 = vmatpush1.msra.mxu0 %v11903
    %12172 = vmatprep.subr.mxu0 0.0
    %12173 = vmatpush1.msra.mxu0 %v11904
    %12174 = vmatprep.subr.mxu0 0.0
    %12175 = vmatpush1.msra.mxu0 %v11905
    %12176 = vmatprep.subr.mxu0 0.0
    %12177 = vmatpush1.msra.mxu0 %v11906
    %12178 = vmatprep.subr.mxu0 0.0
    %12179 = vmatpush1.msra.mxu0 %v11907
    %12180 = vmatprep.subr.mxu0 0.0
    %12181 = vmatpush1.msra.mxu0 %v11908
    %12182 = vmatprep.subr.mxu0 0.0
    %12183 = vmatpush1.msra.mxu0 %v11909
    %12184 = vmatprep.subr.mxu0 0.0
    %12185 = vmatpush1.msra.mxu0 %v11910
    %12186 = vmatprep.subr.mxu0 0.0
    %12187 = vmatpush1.msra.mxu0 %v11911
    %12188 = vmatprep.subr.mxu0 0.0
    %12189 = vmatpush1.msra.mxu0 %v11912
    %12190 = vmatprep.subr.mxu0 0.0
    %12191 = vmatpush1.msra.mxu0 %v11913
    %12192 = vmatprep.subr.mxu0 0.0
    %12193 = vmatpush1.msra.mxu0 %v11914
    %12194 = vmatprep.subr.mxu0 0.0
    %12195 = vmatpush1.msra.mxu0 %v11915
    %12196 = vmatprep.subr.mxu0 0.0
    %12197 = vmatpush1.msra.mxu0 %v11916
    %12198 = vmatprep.mubr.f32.mxu0 %v11788
    %12199 = vmatmul.mubr.f32.gmra.mrb[0].mxu0 %v11787
    %v12200 = vpop.f32.mrb[0].mxu0
    %v12201 = vadd.f32 %v12131, %v12200
    %v12202 = vpop.f32.mrb[0].mxu0
    %12203 = vdwg.mxu0
    %vm12204 = vcmask 41984
    %v12205 = vsel %vm12204, %v12201, 0.0
    %12206 = vadd.xlane.f32.xlu0 %v12205
    %v12207 = vpop.xlane.xlu0 %12206
    %v12208 = vrcp.pop 6.0
    %v12209 = vmul.f32 %v12207, %v12208
    %12211 = vset.pattern.permute.xlu0 6
    %12212 = vperm.xlu0 %12211, %v12201
    %v12213 = vpop.permute.xlu0 %12212
    %v12215 = vadd.f32 %v12201, %v12213
    %v12216 = vsub.f32 %v12215, %v12209
    %12217 = vst.msk [vmem:[#allocation2] sm:$0x3] %vm12204, %v12216
    // Predicated region
    $region22: #{dueling_q_forward.7} parent=1 // pred_check
      _
    $region23: #{dueling_q_forward.7} parent=1 // pred_check_branch
      %12219 = sbr.rel (0) target = $region25
    $region24: #{dueling_q_forward.7} parent=1 // pred_region
      %s12221 = ssub.s32 32, 32
      %12222 = vsyncadd [#allocation3], %s12221
      %s12224 = sshll.u32 [#allocation2], 4
      %s12225 = int_to_ptr.vmem [resolvable:$true] %s12224
      %12227 = dma.vmem_to_hbm [thread:$0]  %s12225, 32, %s5, [#allocation3]
    $region25: #{dueling_q_forward.7} parent=1 // pred_fallthru
      _
    // Predicated region
    $region26: #{dueling_q_forward.7} parent=1 // pred_check
      _
    $region27: #{dueling_q_forward.7} parent=1 // pred_check_branch
      %12229 = sbr.rel (0) target = $region29
    $region28: #{dueling_q_forward.7} parent=1 // pred_region
      %12230 = dma.done [#allocation3], 32
    $region29: #{dueling_q_forward.7} parent=1 // pred_fallthru
      _
    %12231 = vsyncpa [#allocation3], 1

</llo_original>
